<compile_context>
chip_gen: v7x
topology: tpu7x:2x2x1
jax: 0.10.0
libtpu: 0.0.40
codegen_flags: <defaults>
</compile_context>

<pallas_src>
import functools

import numpy as np
import jax
import jax.numpy as jnp
from jax import lax
from jax.experimental import pallas as pl
from jax.experimental.pallas import tpu as pltpu


# ----------------------------- layout constants ---------------------------- #
_G = 4            # images lane-packed per grid step
_CIN = 3
_C1 = 16
_C2 = 32

# conv1 stage: 28x28 image embedded in a 32x32 zero-padded grid, flattened with
# row stride 32; pixel (y, x) of image g sits at flat row 32*y + x + 33,
# channel column 3*g + c.
_X_ROWS = 1024
_A1 = 896         # conv1 accumulator rows (covers 32*y + x plus pooling shifts)
# conv2 stage: 14x14 pooled map embedded in a 16-wide zero-padded grid (row
# stride 16); pooled pixel (py, px) sits at flat row 16*py + px + 17.
_P1_ROWS = 288
_A2 = 224         # conv2 accumulator rows (covers 16*qy + qx plus pooling shifts)

_OFF1 = tuple(32 * dy + dx for dy in (-1, 0, 1) for dx in (-1, 0, 1))
_OFF2 = tuple(16 * dy + dx for dy in (-1, 0, 1) for dx in (-1, 0, 1))

_K1 = 9 * _CIN * _G       # 108  (conv1 im2col depth)
_K2 = 9 * _C1 * _G        # 576  (conv2 im2col depth)
_N1 = _C1 * _G            # 64   (conv1 packed output channels)
_N2 = _C2 * _G            # 128  (conv2 packed output channels; lane-dense)


# ------------------------- kernel 1: conv/pool stack ------------------------ #

def _conv_pool_kernel(x_ref, w1_ref, b1_ref, w2_ref, b2_ref, out_ref,
                      im1_ref, acc1_ref, p1_ref, im2_ref, acc2_ref):
    cin = _CIN * _G
    c1 = _C1 * _G

    # ---- conv1: build (A1, 108) bf16 im2col, one MXU matmul, bias+ReLU ----
    for k, off in enumerate(_OFF1):
        im1_ref[:, pl.ds(cin * k, cin)] = (
            x_ref[pl.ds(33 + off, _A1), :].astype(jnp.bfloat16))
    acc1_ref[...] = jnp.dot(im1_ref[...], w1_ref[...],
                            preferred_element_type=jnp.float32)
    acc1_ref[...] = jnp.maximum(acc1_ref[...] + b1_ref[...], 0.0)

    # ---- pool1 (2x2 stride 2), fused with scatter into conv2's zero-padded
    #      flat layout: row 16*py + px + 17.  Stride-2 sublane reads replace the
    #      old 0/1 selection matmul.  Unwritten rows stay zero (conv2 padding).
    p1_ref[...] = jnp.zeros_like(p1_ref)
    for py in range(14):
        r = 64 * py
        row = jnp.maximum(
            jnp.maximum(acc1_ref[pl.ds(r, 14, stride=2), :],
                        acc1_ref[pl.ds(r + 1, 14, stride=2), :]),
            jnp.maximum(acc1_ref[pl.ds(r + 32, 14, stride=2), :],
                        acc1_ref[pl.ds(r + 33, 14, stride=2), :]))
        p1_ref[pl.ds(16 * py + 17, 14), :] = row

    # ---- conv2: build (A2, 576) bf16 im2col, one MXU matmul, bias+ReLU ----
    for k, off in enumerate(_OFF2):
        im2_ref[:, pl.ds(c1 * k, c1)] = (
            p1_ref[pl.ds(17 + off, _A2), :].astype(jnp.bfloat16))
    acc2_ref[...] = jnp.dot(im2_ref[...], w2_ref[...],
                            preferred_element_type=jnp.float32)
    acc2_ref[...] = jnp.maximum(acc2_ref[...] + b2_ref[...], 0.0)

    # ---- pool2 -> (49, 128) lane-dense feature block for this 4-image group.
    for qy in range(7):
        r = 32 * qy
        row = jnp.maximum(
            jnp.maximum(acc2_ref[pl.ds(r, 7, stride=2), :],
                        acc2_ref[pl.ds(r + 1, 7, stride=2), :]),
            jnp.maximum(acc2_ref[pl.ds(r + 16, 7, stride=2), :],
                        acc2_ref[pl.ds(r + 17, 7, stride=2), :]))
        out_ref[pl.ds(7 * qy, 7), :] = row


def conv_pool_features(x_packed, prep):
    """x_packed: (NG, 1024, 3*G) f32 lane-packed images -> (NG, 49, 32*G) features."""
    ng = x_packed.shape[0]
    return pl.pallas_call(
        _conv_pool_kernel,
        out_shape=jax.ShapeDtypeStruct((ng, 49, _N2), jnp.float32),
        grid=(ng,),
        in_specs=[
            pl.BlockSpec((None, _X_ROWS, _CIN * _G), lambda i: (i, 0, 0)),  # group i
            pl.BlockSpec((_K1, _N1), lambda i: (0, 0)),   # conv1 packed weight (resident)
            pl.BlockSpec((1, _N1), lambda i: (0, 0)),     # conv1 packed bias
            pl.BlockSpec((_K2, _N2), lambda i: (0, 0)),   # conv2 packed weight
            pl.BlockSpec((1, _N2), lambda i: (0, 0)),     # conv2 packed bias
        ],
        out_specs=pl.BlockSpec((None, 49, _N2), lambda i: (i, 0, 0)),
        scratch_shapes=[
            pltpu.VMEM((_A1, _K1), jnp.bfloat16),   # conv1 im2col
            pltpu.VMEM((_A1, _N1), jnp.float32),    # conv1 relu output
            pltpu.VMEM((_P1_ROWS, _N1), jnp.float32),  # zero-padded pool1 map
            pltpu.VMEM((_A2, _K2), jnp.bfloat16),   # conv2 im2col
            pltpu.VMEM((_A2, _N2), jnp.float32),    # conv2 relu output
        ],
        compiler_params=pltpu.CompilerParams(dimension_semantics=("parallel",)),
    )(x_packed, prep["w1"], prep["b1"], prep["w2"], prep["b2"])


# ----------------------------- kernel 2: FC head ---------------------------- #

def _fc_kernel(x_ref, w1_ref, b1_ref, w2_ref, b2_ref, o_ref):
    h = jnp.dot(x_ref[...].astype(jnp.bfloat16), w1_ref[...],
                preferred_element_type=jnp.float32)
    h = jnp.maximum(h + b1_ref[...], 0.0)
    # TODO(synk): nn.Dropout(p=0.5) is eval-mode identity here; training-mode
    # masking would use pltpu.prng_seed / pltpu.prng_random_bits.
    o_ref[...] = jnp.dot(h.astype(jnp.bfloat16), w2_ref[...],
                         preferred_element_type=jnp.float32) + b2_ref[...]


def fc_head(feats, prep, tile_m=256):
    """feats: (N, 1568) NHWC-flattened features -> (N, 128) padded logits."""
    n, k = feats.shape
    tm = min(tile_m, n)
    n_pad = (-n) % tm
    if n_pad:
        feats = jnp.pad(feats, ((0, n_pad), (0, 0)))
    n_p = feats.shape[0]
    out = pl.pallas_call(
        _fc_kernel,
        out_shape=jax.ShapeDtypeStruct((n_p, 128), jnp.float32),
        grid=(n_p // tm,),
        in_specs=[
            pl.BlockSpec((tm, k), lambda i: (i, 0)),
            pl.BlockSpec((k, 128), lambda i: (0, 0)),      # fc1 weight (bf16, resident)
            pl.BlockSpec((1, 128), lambda i: (0, 0)),
            pl.BlockSpec((128, 128), lambda i: (0, 0)),    # fc2 weight (bf16, resident)
            pl.BlockSpec((1, 128), lambda i: (0, 0)),
        ],
        out_specs=pl.BlockSpec((tm, 128), lambda i: (i, 0)),
        compiler_params=pltpu.CompilerParams(dimension_semantics=("parallel",)),
    )(feats, prep["fc1_w"], prep["fc1_b"], prep["fc2_w"], prep["fc2_b"])
    return out[:n]


# ------------------------------- full forward ------------------------------- #

def blood_mnist_forward(x_nchw, prep, *, n_classes):
    n = x_nchw.shape[0]
    n_pad = (-n) % _G
    x = jnp.transpose(x_nchw, (0, 2, 3, 1)).astype(jnp.float32)       # NCHW -> NHWC
    x = jnp.pad(x, ((0, n_pad), (1, 3), (1, 3), (0, 0)))              # (Np, 32, 32, 3)
    ng = (n + n_pad) // _G
    # lane-pack G images: flat row-major spatial, last dim = 3*g + c
    x = x.reshape(ng, _G, _X_ROWS, _CIN).transpose(0, 2, 1, 3).reshape(ng, _X_ROWS, _CIN * _G)
    feats = conv_pool_features(x, prep)                               # (ng, 49, 128)
    # unpack: image (ngi, g) -> (49*32) features in NHWC flatten order
    feats = feats.reshape(ng, 49, _G, _C2).transpose(0, 2, 1, 3).reshape(ng * _G, 49 * _C2)
    logits = fc_head(feats, prep)                                     # (Np, 128) lane-dense
    return logits[:n, :n_classes]


# ---------------------- parameters (torch layouts) -------------------------- #

def init_torch_params(key, n_classes):
    ks = jax.random.split(key, 8)
    return {
        "conv1_w": 0.10 * jax.random.normal(ks[0], (16, 3, 3, 3), jnp.float32),
        "conv1_b": 0.10 * jax.random.normal(ks[1], (16,), jnp.float32),
        "conv2_w": 0.05 * jax.random.normal(ks[2], (32, 16, 3, 3), jnp.float32),
        "conv2_b": 0.05 * jax.random.normal(ks[3], (32,), jnp.float32),
        "fc1_w": 0.02 * jax.random.normal(ks[4], (128, 32 * 7 * 7), jnp.float32),
        "fc1_b": 0.02 * jax.random.normal(ks[5], (128,), jnp.float32),
        "fc2_w": 0.05 * jax.random.normal(ks[6], (n_classes, 128), jnp.float32),
        "fc2_b": 0.05 * jax.random.normal(ks[7], (n_classes,), jnp.float32),
    }


def _pack_conv_weight(w_oihw, g):
    """Block-diagonal lane-packed im2col weight (tap-major columns).

    Row index = (Cin*g)*tap + Cin*img + ci ; column index = Cout*img + co.
    Matches the im2col column layout built inside the kernel."""
    o, ci, kh, kw = w_oihw.shape
    w = np.asarray(w_oihw, np.float32)
    wp = np.zeros((kh * kw * ci * g, o * g), np.float32)
    for k in range(kh * kw):
        ky, kx = divmod(k, kw)
        blk = w[:, :, ky, kx].T                          # (ci, o)
        for gi in range(g):
            r0 = ci * g * k + ci * gi
            wp[r0:r0 + ci, o * gi:o * (gi + 1)] = blk
    return wp


def prepare_params(tp, n_classes):
    """One-time conversion of torch-layout weights into kernel layouts (bf16 MXU operands)."""
    assert n_classes <= 128
    w1 = jnp.asarray(_pack_conv_weight(tp["conv1_w"], _G), jnp.bfloat16)   # (108, 64)
    w2 = jnp.asarray(_pack_conv_weight(tp["conv2_w"], _G), jnp.bfloat16)   # (576, 128)
    b1 = jnp.tile(tp["conv1_b"].astype(jnp.float32), _G).reshape(1, _N1)
    b2 = jnp.tile(tp["conv2_b"].astype(jnp.float32), _G).reshape(1, _N2)
    # permute fc1 rows to NHWC flatten order (spatial-major, channel-minor)
    fc1_w = jnp.transpose(tp["fc1_w"].reshape(128, _C2, 7, 7), (2, 3, 1, 0)).reshape(1568, 128)
    fc2_w = jnp.pad(tp["fc2_w"].T, ((0, 0), (0, 128 - n_classes)))         # lane-dense out
    fc2_b = jnp.pad(tp["fc2_b"], (0, 128 - n_classes)).reshape(1, 128)
    return {
        "w1": w1, "b1": b1, "w2": w2, "b2": b2,
        "fc1_w": fc1_w.astype(jnp.bfloat16),
        "fc1_b": tp["fc1_b"].reshape(1, 128).astype(jnp.float32),
        "fc2_w": fc2_w.astype(jnp.bfloat16),
        "fc2_b": fc2_b.astype(jnp.float32),
    }


# --------------------------- pure-JAX reference ------------------------------ #

def reference_forward(x_nchw, tp):
    hp = lax.Precision.HIGHEST
    x = lax.conv_general_dilated(x_nchw, tp["conv1_w"], (1, 1), ((1, 1), (1, 1)),
                                 dimension_numbers=("NCHW", "OIHW", "NCHW"), precision=hp)
    x = jax.nn.relu(x + tp["conv1_b"][None, :, None, None])
    n, c, h, w = x.shape
    x = x.reshape(n, c, h // 2, 2, w // 2, 2).max(axis=(3, 5))
    x = lax.conv_general_dilated(x, tp["conv2_w"], (1, 1), ((1, 1), (1, 1)),
                                 dimension_numbers=("NCHW", "OIHW", "NCHW"), precision=hp)
    x = jax.nn.relu(x + tp["conv2_b"][None, :, None, None])
    n, c, h, w = x.shape
    x = x.reshape(n, c, h // 2, 2, w // 2, 2).max(axis=(3, 5))
    x = x.reshape(n, 32 * 7 * 7)
    x = jax.nn.relu(jnp.dot(x, tp["fc1_w"].T, precision=hp) + tp["fc1_b"])
    return jnp.dot(x, tp["fc2_w"].T, precision=hp) + tp["fc2_b"]


if __name__ == "__main__":
    n_classes = 8  # BloodMNIST has 8 classes
    key = jax.random.PRNGKey(0)
    pkey, xkey = jax.random.split(key)

    torch_params = init_torch_params(pkey, n_classes)
    prep = prepare_params(torch_params, n_classes)

    # architecture implies 28x28 RGB inputs (fc1 expects 32*7*7 features)
    x = jax.random.normal(xkey, (8, 3, 28, 28), jnp.float32)

    fwd = jax.jit(functools.partial(blood_mnist_forward, n_classes=n_classes))
    out = jax.block_until_ready(fwd(x, prep))
    assert out.shape == (8, n_classes), out.shape
    assert bool(jnp.all(jnp.isfinite(out)))

    ref = jax.block_until_ready(jax.jit(reference_forward)(x, torch_params))
    max_err = float(jnp.max(jnp.abs(out - ref)))
    # bf16 MXU operands vs HIGHEST-precision f32 reference -> loosened tolerance.
    assert max_err < 2.5e-2, f"mismatch vs reference: max abs err {max_err}"

    print("KERNEL_OK")
</pallas_src>

<mosaic_0001>
module attributes {stable_mosaic.version = 11 : i64} {
  func.func @_conv_pool_kernel(%arg0: i32, %arg1: memref<1x1024x12xf32, #tpu.memory_space<vmem>>, %arg2: memref<108x64xbf16, #tpu.memory_space<vmem>>, %arg3: memref<1x64xf32, #tpu.memory_space<vmem>>, %arg4: memref<576x128xbf16, #tpu.memory_space<vmem>>, %arg5: memref<1x128xf32, #tpu.memory_space<vmem>>, %arg6: memref<1x49x128xf32, #tpu.memory_space<vmem>>, %arg7: memref<896x108xbf16, #tpu.memory_space<vmem>>, %arg8: memref<896x64xf32, #tpu.memory_space<vmem>>, %arg9: memref<288x64xf32, #tpu.memory_space<vmem>>, %arg10: memref<224x576xbf16, #tpu.memory_space<vmem>>, %arg11: memref<224x128xf32, #tpu.memory_space<vmem>>) attributes {dimension_semantics = [#tpu.dimension_semantics<parallel>], iteration_bounds = array<i64: 2>, scalar_prefetch = 0 : i64, scratch_operands = 5 : i64, tpu.core_type = #tpu.core_type<tc>, window_params = [{transform_indices = @transform_0, window_bounds = array<i64: 1, 1024, 12>}, {pipeline_mode = #tpu.pipeline_mode<synchronous>, transform_indices = @transform_1, window_bounds = array<i64: 108, 64>}, {pipeline_mode = #tpu.pipeline_mode<synchronous>, transform_indices = @transform_2, window_bounds = array<i64: 1, 64>}, {pipeline_mode = #tpu.pipeline_mode<synchronous>, transform_indices = @transform_3, window_bounds = array<i64: 576, 128>}, {pipeline_mode = #tpu.pipeline_mode<synchronous>, transform_indices = @transform_4, window_bounds = array<i64: 1, 128>}, {transform_indices = @transform_5, window_bounds = array<i64: 1, 49, 128>}]} {
    %c0 = arith.constant 0 : index
    %c0_0 = arith.constant 0 : index
    %c0_1 = arith.constant 0 : index
    %0 = vector.load %arg1[%c0, %c0_0, %c0_1] : memref<1x1024x12xf32, #tpu.memory_space<vmem>>, vector<1x896x12xf32>
    %1 = vector.shape_cast %0 : vector<1x896x12xf32> to vector<896x12xf32>
    %2 = arith.truncf %1 : vector<896x12xf32> to vector<896x12xbf16>
    %c0_2 = arith.constant 0 : index
    %c0_3 = arith.constant 0 : index
    %3 = vector.load %arg7[%c0_2, %c0_3] : memref<896x108xbf16, #tpu.memory_space<vmem>>, vector<896x12xbf16>
    tpu.vector_store %arg7[%c0_2, %c0_3], %2 {strides = array<i32>} : memref<896x108xbf16, #tpu.memory_space<vmem>>, vector<896x12xbf16>,
    %c0_4 = arith.constant 0 : index
    %c1 = arith.constant 1 : index
    %c0_5 = arith.constant 0 : index
    %4 = vector.load %arg1[%c0_4, %c1, %c0_5] : memref<1x1024x12xf32, #tpu.memory_space<vmem>>, vector<1x896x12xf32>
    %5 = vector.shape_cast %4 : vector<1x896x12xf32> to vector<896x12xf32>
    %6 = arith.truncf %5 : vector<896x12xf32> to vector<896x12xbf16>
    %c0_6 = arith.constant 0 : index
    %c12 = arith.constant 12 : index
    %7 = vector.load %arg7[%c0_6, %c12] : memref<896x108xbf16, #tpu.memory_space<vmem>>, vector<896x12xbf16>
    tpu.vector_store %arg7[%c0_6, %c12], %6 {strides = array<i32>} : memref<896x108xbf16, #tpu.memory_space<vmem>>, vector<896x12xbf16>,
    %c0_7 = arith.constant 0 : index
    %c2 = arith.constant 2 : index
    %c0_8 = arith.constant 0 : index
    %8 = vector.load %arg1[%c0_7, %c2, %c0_8] : memref<1x1024x12xf32, #tpu.memory_space<vmem>>, vector<1x896x12xf32>
    %9 = vector.shape_cast %8 : vector<1x896x12xf32> to vector<896x12xf32>
    %10 = arith.truncf %9 : vector<896x12xf32> to vector<896x12xbf16>
    %c0_9 = arith.constant 0 : index
    %c24 = arith.constant 24 : index
    %11 = vector.load %arg7[%c0_9, %c24] : memref<896x108xbf16, #tpu.memory_space<vmem>>, vector<896x12xbf16>
    tpu.vector_store %arg7[%c0_9, %c24], %10 {strides = array<i32>} : memref<896x108xbf16, #tpu.memory_space<vmem>>, vector<896x12xbf16>,
    %c0_10 = arith.constant 0 : index
    %c32 = arith.constant 32 : index
    %c0_11 = arith.constant 0 : index
    %12 = vector.load %arg1[%c0_10, %c32, %c0_11] : memref<1x1024x12xf32, #tpu.memory_space<vmem>>, vector<1x896x12xf32>
    %13 = vector.shape_cast %12 : vector<1x896x12xf32> to vector<896x12xf32>
    %14 = arith.truncf %13 : vector<896x12xf32> to vector<896x12xbf16>
    %c0_12 = arith.constant 0 : index
    %c36 = arith.constant 36 : index
    %15 = vector.load %arg7[%c0_12, %c36] : memref<896x108xbf16, #tpu.memory_space<vmem>>, vector<896x12xbf16>
    tpu.vector_store %arg7[%c0_12, %c36], %14 {strides = array<i32>} : memref<896x108xbf16, #tpu.memory_space<vmem>>, vector<896x12xbf16>,
    %c0_13 = arith.constant 0 : index
    %c33 = arith.constant 33 : index
    %c0_14 = arith.constant 0 : index
    %16 = vector.load %arg1[%c0_13, %c33, %c0_14] : memref<1x1024x12xf32, #tpu.memory_space<vmem>>, vector<1x896x12xf32>
    %17 = vector.shape_cast %16 : vector<1x896x12xf32> to vector<896x12xf32>
    %18 = arith.truncf %17 : vector<896x12xf32> to vector<896x12xbf16>
    %c0_15 = arith.constant 0 : index
    %c48 = arith.constant 48 : index
    %19 = vector.load %arg7[%c0_15, %c48] : memref<896x108xbf16, #tpu.memory_space<vmem>>, vector<896x12xbf16>
    tpu.vector_store %arg7[%c0_15, %c48], %18 {strides = array<i32>} : memref<896x108xbf16, #tpu.memory_space<vmem>>, vector<896x12xbf16>,
    %c0_16 = arith.constant 0 : index
    %c34 = arith.constant 34 : index
    %c0_17 = arith.constant 0 : index
    %20 = vector.load %arg1[%c0_16, %c34, %c0_17] : memref<1x1024x12xf32, #tpu.memory_space<vmem>>, vector<1x896x12xf32>
    %21 = vector.shape_cast %20 : vector<1x896x12xf32> to vector<896x12xf32>
    %22 = arith.truncf %21 : vector<896x12xf32> to vector<896x12xbf16>
    %c0_18 = arith.constant 0 : index
    %c60 = arith.constant 60 : index
    %23 = vector.load %arg7[%c0_18, %c60] : memref<896x108xbf16, #tpu.memory_space<vmem>>, vector<896x12xbf16>
    tpu.vector_store %arg7[%c0_18, %c60], %22 {strides = array<i32>} : memref<896x108xbf16, #tpu.memory_space<vmem>>, vector<896x12xbf16>,
    %c0_19 = arith.constant 0 : index
    %c64 = arith.constant 64 : index
    %c0_20 = arith.constant 0 : index
    %24 = vector.load %arg1[%c0_19, %c64, %c0_20] : memref<1x1024x12xf32, #tpu.memory_space<vmem>>, vector<1x896x12xf32>
    %25 = vector.shape_cast %24 : vector<1x896x12xf32> to vector<896x12xf32>
    %26 = arith.truncf %25 : vector<896x12xf32> to vector<896x12xbf16>
    %c0_21 = arith.constant 0 : index
    %c72 = arith.constant 72 : index
    %27 = vector.load %arg7[%c0_21, %c72] : memref<896x108xbf16, #tpu.memory_space<vmem>>, vector<896x12xbf16>
    tpu.vector_store %arg7[%c0_21, %c72], %26 {strides = array<i32>} : memref<896x108xbf16, #tpu.memory_space<vmem>>, vector<896x12xbf16>,
    %c0_22 = arith.constant 0 : index
    %c65 = arith.constant 65 : index
    %c0_23 = arith.constant 0 : index
    %28 = vector.load %arg1[%c0_22, %c65, %c0_23] : memref<1x1024x12xf32, #tpu.memory_space<vmem>>, vector<1x896x12xf32>
    %29 = vector.shape_cast %28 : vector<1x896x12xf32> to vector<896x12xf32>
    %30 = arith.truncf %29 : vector<896x12xf32> to vector<896x12xbf16>
    %c0_24 = arith.constant 0 : index
    %c84 = arith.constant 84 : index
    %31 = vector.load %arg7[%c0_24, %c84] : memref<896x108xbf16, #tpu.memory_space<vmem>>, vector<896x12xbf16>
    tpu.vector_store %arg7[%c0_24, %c84], %30 {strides = array<i32>} : memref<896x108xbf16, #tpu.memory_space<vmem>>, vector<896x12xbf16>,
    %c0_25 = arith.constant 0 : index
    %c66 = arith.constant 66 : index
    %c0_26 = arith.constant 0 : index
    %32 = vector.load %arg1[%c0_25, %c66, %c0_26] : memref<1x1024x12xf32, #tpu.memory_space<vmem>>, vector<1x896x12xf32>
    %33 = vector.shape_cast %32 : vector<1x896x12xf32> to vector<896x12xf32>
    %34 = arith.truncf %33 : vector<896x12xf32> to vector<896x12xbf16>
    %c0_27 = arith.constant 0 : index
    %c96 = arith.constant 96 : index
    %35 = vector.load %arg7[%c0_27, %c96] : memref<896x108xbf16, #tpu.memory_space<vmem>>, vector<896x12xbf16>
    tpu.vector_store %arg7[%c0_27, %c96], %34 {strides = array<i32>} : memref<896x108xbf16, #tpu.memory_space<vmem>>, vector<896x12xbf16>,
    %c0_28 = arith.constant 0 : index
    %c0_29 = arith.constant 0 : index
    %36 = vector.load %arg7[%c0_28, %c0_29] : memref<896x108xbf16, #tpu.memory_space<vmem>>, vector<896x108xbf16>
    %c0_30 = arith.constant 0 : index
    %c0_31 = arith.constant 0 : index
    %37 = vector.load %arg2[%c0_30, %c0_31] : memref<108x64xbf16, #tpu.memory_space<vmem>>, vector<108x64xbf16>
    %cst = arith.constant dense<0.000000e+00> : vector<896x64xf32>
    %38 = tpu.matmul %36, %37, %cst {dimension_numbers = #tpu.dot_dimension_numbers<[1], [0], [0], [1], [0, 0, 1, 1], [], []>} : vector<896x108xbf16>, vector<108x64xbf16>, vector<896x64xf32> -> vector<896x64xf32>
    %c0_32 = arith.constant 0 : index
    %c0_33 = arith.constant 0 : index
    %39 = vector.load %arg8[%c0_32, %c0_33] : memref<896x64xf32, #tpu.memory_space<vmem>>, vector<896x64xf32>
    tpu.vector_store %arg8[%c0_32, %c0_33], %38 {strides = array<i32>} : memref<896x64xf32, #tpu.memory_space<vmem>>, vector<896x64xf32>,
    %c0_34 = arith.constant 0 : index
    %c0_35 = arith.constant 0 : index
    %40 = vector.load %arg8[%c0_34, %c0_35] : memref<896x64xf32, #tpu.memory_space<vmem>>, vector<896x64xf32>
    %c0_36 = arith.constant 0 : index
    %c0_37 = arith.constant 0 : index
    %41 = vector.load %arg3[%c0_36, %c0_37] : memref<1x64xf32, #tpu.memory_space<vmem>>, vector<1x64xf32>
    %42 = vector.broadcast %41 : vector<1x64xf32> to vector<896x64xf32>
    %43 = arith.addf %40, %42 : vector<896x64xf32>
    %cst_38 = arith.constant 0.000000e+00 : f32
    %44 = vector.broadcast %cst_38 : f32 to vector<896x64xf32>
    %45 = arith.maximumf %43, %44 : vector<896x64xf32>
    %c0_39 = arith.constant 0 : index
    %c0_40 = arith.constant 0 : index
    %46 = vector.load %arg8[%c0_39, %c0_40] : memref<896x64xf32, #tpu.memory_space<vmem>>, vector<896x64xf32>
    tpu.vector_store %arg8[%c0_39, %c0_40], %45 {strides = array<i32>} : memref<896x64xf32, #tpu.memory_space<vmem>>, vector<896x64xf32>,
    %cst_41 = arith.constant 0.000000e+00 : f32
    %47 = vector.broadcast %cst_41 : f32 to vector<288x64xf32>
    %c0_42 = arith.constant 0 : index
    %c0_43 = arith.constant 0 : index
    %48 = vector.load %arg9[%c0_42, %c0_43] : memref<288x64xf32, #tpu.memory_space<vmem>>, vector<288x64xf32>
    tpu.vector_store %arg9[%c0_42, %c0_43], %47 {strides = array<i32>} : memref<288x64xf32, #tpu.memory_space<vmem>>, vector<288x64xf32>,
    %c0_44 = arith.constant 0 : index
    %c0_45 = arith.constant 0 : index
    %49 = tpu.strided_load %arg8[%c0_44, %c0_45] {strides = array<i32: 2, 1>} : memref<896x64xf32, #tpu.memory_space<vmem>>, vector<14x64xf32>
    %c1_46 = arith.constant 1 : index
    %c0_47 = arith.constant 0 : index
    %50 = tpu.strided_load %arg8[%c1_46, %c0_47] {strides = array<i32: 2, 1>} : memref<896x64xf32, #tpu.memory_space<vmem>>, vector<14x64xf32>
    %51 = arith.maximumf %49, %50 : vector<14x64xf32>
    %c32_48 = arith.constant 32 : index
    %c0_49 = arith.constant 0 : index
    %52 = tpu.strided_load %arg8[%c32_48, %c0_49] {strides = array<i32: 2, 1>} : memref<896x64xf32, #tpu.memory_space<vmem>>, vector<14x64xf32>
    %c33_50 = arith.constant 33 : index
    %c0_51 = arith.constant 0 : index
    %53 = tpu.strided_load %arg8[%c33_50, %c0_51] {strides = array<i32: 2, 1>} : memref<896x64xf32, #tpu.memory_space<vmem>>, vector<14x64xf32>
    %54 = arith.maximumf %52, %53 : vector<14x64xf32>
    %55 = arith.maximumf %51, %54 : vector<14x64xf32>
    %c17 = arith.constant 17 : index
    %c0_52 = arith.constant 0 : index
    %56 = vector.load %arg9[%c17, %c0_52] : memref<288x64xf32, #tpu.memory_space<vmem>>, vector<14x64xf32>
    tpu.vector_store %arg9[%c17, %c0_52], %55 {strides = array<i32>} : memref<288x64xf32, #tpu.memory_space<vmem>>, vector<14x64xf32>,
    %c64_53 = arith.constant 64 : index
    %c0_54 = arith.constant 0 : index
    %57 = tpu.strided_load %arg8[%c64_53, %c0_54] {strides = array<i32: 2, 1>} : memref<896x64xf32, #tpu.memory_space<vmem>>, vector<14x64xf32>
    %c65_55 = arith.constant 65 : index
    %c0_56 = arith.constant 0 : index
    %58 = tpu.strided_load %arg8[%c65_55, %c0_56] {strides = array<i32: 2, 1>} : memref<896x64xf32, #tpu.memory_space<vmem>>, vector<14x64xf32>
    %59 = arith.maximumf %57, %58 : vector<14x64xf32>
    %c96_57 = arith.constant 96 : index
    %c0_58 = arith.constant 0 : index
    %60 = tpu.strided_load %arg8[%c96_57, %c0_58] {strides = array<i32: 2, 1>} : memref<896x64xf32, #tpu.memory_space<vmem>>, vector<14x64xf32>
    %c97 = arith.constant 97 : index
    %c0_59 = arith.constant 0 : index
    %61 = tpu.strided_load %arg8[%c97, %c0_59] {strides = array<i32: 2, 1>} : memref<896x64xf32, #tpu.memory_space<vmem>>, vector<14x64xf32>
    %62 = arith.maximumf %60, %61 : vector<14x64xf32>
    %63 = arith.maximumf %59, %62 : vector<14x64xf32>
    %c33_60 = arith.constant 33 : index
    %c0_61 = arith.constant 0 : index
    %64 = vector.load %arg9[%c33_60, %c0_61] : memref<288x64xf32, #tpu.memory_space<vmem>>, vector<14x64xf32>
    tpu.vector_store %arg9[%c33_60, %c0_61], %63 {strides = array<i32>} : memref<288x64xf32, #tpu.memory_space<vmem>>, vector<14x64xf32>,
    %c128 = arith.constant 128 : index
    %c0_62 = arith.constant 0 : index
    %65 = tpu.strided_load %arg8[%c128, %c0_62] {strides = array<i32: 2, 1>} : memref<896x64xf32, #tpu.memory_space<vmem>>, vector<14x64xf32>
    %c129 = arith.constant 129 : index
    %c0_63 = arith.constant 0 : index
    %66 = tpu.strided_load %arg8[%c129, %c0_63] {strides = array<i32: 2, 1>} : memref<896x64xf32, #tpu.memory_space<vmem>>, vector<14x64xf32>
    %67 = arith.maximumf %65, %66 : vector<14x64xf32>
    %c160 = arith.constant 160 : index
    %c0_64 = arith.constant 0 : index
    %68 = tpu.strided_load %arg8[%c160, %c0_64] {strides = array<i32: 2, 1>} : memref<896x64xf32, #tpu.memory_space<vmem>>, vector<14x64xf32>
    %c161 = arith.constant 161 : index
    %c0_65 = arith.constant 0 : index
    %69 = tpu.strided_load %arg8[%c161, %c0_65] {strides = array<i32: 2, 1>} : memref<896x64xf32, #tpu.memory_space<vmem>>, vector<14x64xf32>
    %70 = arith.maximumf %68, %69 : vector<14x64xf32>
    %71 = arith.maximumf %67, %70 : vector<14x64xf32>
    %c49 = arith.constant 49 : index
    %c0_66 = arith.constant 0 : index
    %72 = vector.load %arg9[%c49, %c0_66] : memref<288x64xf32, #tpu.memory_space<vmem>>, vector<14x64xf32>
    tpu.vector_store %arg9[%c49, %c0_66], %71 {strides = array<i32>} : memref<288x64xf32, #tpu.memory_space<vmem>>, vector<14x64xf32>,
    %c192 = arith.constant 192 : index
    %c0_67 = arith.constant 0 : index
    %73 = tpu.strided_load %arg8[%c192, %c0_67] {strides = array<i32: 2, 1>} : memref<896x64xf32, #tpu.memory_space<vmem>>, vector<14x64xf32>
    %c193 = arith.constant 193 : index
    %c0_68 = arith.constant 0 : index
    %74 = tpu.strided_load %arg8[%c193, %c0_68] {strides = array<i32: 2, 1>} : memref<896x64xf32, #tpu.memory_space<vmem>>, vector<14x64xf32>
    %75 = arith.maximumf %73, %74 : vector<14x64xf32>
    %c224 = arith.constant 224 : index
    %c0_69 = arith.constant 0 : index
    %76 = tpu.strided_load %arg8[%c224, %c0_69] {strides = array<i32: 2, 1>} : memref<896x64xf32, #tpu.memory_space<vmem>>, vector<14x64xf32>
    %c225 = arith.constant 225 : index
    %c0_70 = arith.constant 0 : index
    %77 = tpu.strided_load %arg8[%c225, %c0_70] {strides = array<i32: 2, 1>} : memref<896x64xf32, #tpu.memory_space<vmem>>, vector<14x64xf32>
    %78 = arith.maximumf %76, %77 : vector<14x64xf32>
    %79 = arith.maximumf %75, %78 : vector<14x64xf32>
    %c65_71 = arith.constant 65 : index
    %c0_72 = arith.constant 0 : index
    %80 = vector.load %arg9[%c65_71, %c0_72] : memref<288x64xf32, #tpu.memory_space<vmem>>, vector<14x64xf32>
    tpu.vector_store %arg9[%c65_71, %c0_72], %79 {strides = array<i32>} : memref<288x64xf32, #tpu.memory_space<vmem>>, vector<14x64xf32>,
    %c256 = arith.constant 256 : index
    %c0_73 = arith.constant 0 : index
    %81 = tpu.strided_load %arg8[%c256, %c0_73] {strides = array<i32: 2, 1>} : memref<896x64xf32, #tpu.memory_space<vmem>>, vector<14x64xf32>
    %c257 = arith.constant 257 : index
    %c0_74 = arith.constant 0 : index
    %82 = tpu.strided_load %arg8[%c257, %c0_74] {strides = array<i32: 2, 1>} : memref<896x64xf32, #tpu.memory_space<vmem>>, vector<14x64xf32>
    %83 = arith.maximumf %81, %82 : vector<14x64xf32>
    %c288 = arith.constant 288 : index
    %c0_75 = arith.constant 0 : index
    %84 = tpu.strided_load %arg8[%c288, %c0_75] {strides = array<i32: 2, 1>} : memref<896x64xf32, #tpu.memory_space<vmem>>, vector<14x64xf32>
    %c289 = arith.constant 289 : index
    %c0_76 = arith.constant 0 : index
    %85 = tpu.strided_load %arg8[%c289, %c0_76] {strides = array<i32: 2, 1>} : memref<896x64xf32, #tpu.memory_space<vmem>>, vector<14x64xf32>
    %86 = arith.maximumf %84, %85 : vector<14x64xf32>
    %87 = arith.maximumf %83, %86 : vector<14x64xf32>
    %c81 = arith.constant 81 : index
    %c0_77 = arith.constant 0 : index
    %88 = vector.load %arg9[%c81, %c0_77] : memref<288x64xf32, #tpu.memory_space<vmem>>, vector<14x64xf32>
    tpu.vector_store %arg9[%c81, %c0_77], %87 {strides = array<i32>} : memref<288x64xf32, #tpu.memory_space<vmem>>, vector<14x64xf32>,
    %c320 = arith.constant 320 : index
    %c0_78 = arith.constant 0 : index
    %89 = tpu.strided_load %arg8[%c320, %c0_78] {strides = array<i32: 2, 1>} : memref<896x64xf32, #tpu.memory_space<vmem>>, vector<14x64xf32>
    %c321 = arith.constant 321 : index
    %c0_79 = arith.constant 0 : index
    %90 = tpu.strided_load %arg8[%c321, %c0_79] {strides = array<i32: 2, 1>} : memref<896x64xf32, #tpu.memory_space<vmem>>, vector<14x64xf32>
    %91 = arith.maximumf %89, %90 : vector<14x64xf32>
    %c352 = arith.constant 352 : index
    %c0_80 = arith.constant 0 : index
    %92 = tpu.strided_load %arg8[%c352, %c0_80] {strides = array<i32: 2, 1>} : memref<896x64xf32, #tpu.memory_space<vmem>>, vector<14x64xf32>
    %c353 = arith.constant 353 : index
    %c0_81 = arith.constant 0 : index
    %93 = tpu.strided_load %arg8[%c353, %c0_81] {strides = array<i32: 2, 1>} : memref<896x64xf32, #tpu.memory_space<vmem>>, vector<14x64xf32>
    %94 = arith.maximumf %92, %93 : vector<14x64xf32>
    %95 = arith.maximumf %91, %94 : vector<14x64xf32>
    %c97_82 = arith.constant 97 : index
    %c0_83 = arith.constant 0 : index
    %96 = vector.load %arg9[%c97_82, %c0_83] : memref<288x64xf32, #tpu.memory_space<vmem>>, vector<14x64xf32>
    tpu.vector_store %arg9[%c97_82, %c0_83], %95 {strides = array<i32>} : memref<288x64xf32, #tpu.memory_space<vmem>>, vector<14x64xf32>,
    %c384 = arith.constant 384 : index
    %c0_84 = arith.constant 0 : index
    %97 = tpu.strided_load %arg8[%c384, %c0_84] {strides = array<i32: 2, 1>} : memref<896x64xf32, #tpu.memory_space<vmem>>, vector<14x64xf32>
    %c385 = arith.constant 385 : index
    %c0_85 = arith.constant 0 : index
    %98 = tpu.strided_load %arg8[%c385, %c0_85] {strides = array<i32: 2, 1>} : memref<896x64xf32, #tpu.memory_space<vmem>>, vector<14x64xf32>
    %99 = arith.maximumf %97, %98 : vector<14x64xf32>
    %c416 = arith.constant 416 : index
    %c0_86 = arith.constant 0 : index
    %100 = tpu.strided_load %arg8[%c416, %c0_86] {strides = array<i32: 2, 1>} : memref<896x64xf32, #tpu.memory_space<vmem>>, vector<14x64xf32>
    %c417 = arith.constant 417 : index
    %c0_87 = arith.constant 0 : index
    %101 = tpu.strided_load %arg8[%c417, %c0_87] {strides = array<i32: 2, 1>} : memref<896x64xf32, #tpu.memory_space<vmem>>, vector<14x64xf32>
    %102 = arith.maximumf %100, %101 : vector<14x64xf32>
    %103 = arith.maximumf %99, %102 : vector<14x64xf32>
    %c113 = arith.constant 113 : index
    %c0_88 = arith.constant 0 : index
    %104 = vector.load %arg9[%c113, %c0_88] : memref<288x64xf32, #tpu.memory_space<vmem>>, vector<14x64xf32>
    tpu.vector_store %arg9[%c113, %c0_88], %103 {strides = array<i32>} : memref<288x64xf32, #tpu.memory_space<vmem>>, vector<14x64xf32>,
    %c448 = arith.constant 448 : index
    %c0_89 = arith.constant 0 : index
    %105 = tpu.strided_load %arg8[%c448, %c0_89] {strides = array<i32: 2, 1>} : memref<896x64xf32, #tpu.memory_space<vmem>>, vector<14x64xf32>
    %c449 = arith.constant 449 : index
    %c0_90 = arith.constant 0 : index
    %106 = tpu.strided_load %arg8[%c449, %c0_90] {strides = array<i32: 2, 1>} : memref<896x64xf32, #tpu.memory_space<vmem>>, vector<14x64xf32>
    %107 = arith.maximumf %105, %106 : vector<14x64xf32>
    %c480 = arith.constant 480 : index
    %c0_91 = arith.constant 0 : index
    %108 = tpu.strided_load %arg8[%c480, %c0_91] {strides = array<i32: 2, 1>} : memref<896x64xf32, #tpu.memory_space<vmem>>, vector<14x64xf32>
    %c481 = arith.constant 481 : index
    %c0_92 = arith.constant 0 : index
    %109 = tpu.strided_load %arg8[%c481, %c0_92] {strides = array<i32: 2, 1>} : memref<896x64xf32, #tpu.memory_space<vmem>>, vector<14x64xf32>
    %110 = arith.maximumf %108, %109 : vector<14x64xf32>
    %111 = arith.maximumf %107, %110 : vector<14x64xf32>
    %c129_93 = arith.constant 129 : index
    %c0_94 = arith.constant 0 : index
    %112 = vector.load %arg9[%c129_93, %c0_94] : memref<288x64xf32, #tpu.memory_space<vmem>>, vector<14x64xf32>
    tpu.vector_store %arg9[%c129_93, %c0_94], %111 {strides = array<i32>} : memref<288x64xf32, #tpu.memory_space<vmem>>, vector<14x64xf32>,
    %c512 = arith.constant 512 : index
    %c0_95 = arith.constant 0 : index
    %113 = tpu.strided_load %arg8[%c512, %c0_95] {strides = array<i32: 2, 1>} : memref<896x64xf32, #tpu.memory_space<vmem>>, vector<14x64xf32>
    %c513 = arith.constant 513 : index
    %c0_96 = arith.constant 0 : index
    %114 = tpu.strided_load %arg8[%c513, %c0_96] {strides = array<i32: 2, 1>} : memref<896x64xf32, #tpu.memory_space<vmem>>, vector<14x64xf32>
    %115 = arith.maximumf %113, %114 : vector<14x64xf32>
    %c544 = arith.constant 544 : index
    %c0_97 = arith.constant 0 : index
    %116 = tpu.strided_load %arg8[%c544, %c0_97] {strides = array<i32: 2, 1>} : memref<896x64xf32, #tpu.memory_space<vmem>>, vector<14x64xf32>
    %c545 = arith.constant 545 : index
    %c0_98 = arith.constant 0 : index
    %117 = tpu.strided_load %arg8[%c545, %c0_98] {strides = array<i32: 2, 1>} : memref<896x64xf32, #tpu.memory_space<vmem>>, vector<14x64xf32>
    %118 = arith.maximumf %116, %117 : vector<14x64xf32>
    %119 = arith.maximumf %115, %118 : vector<14x64xf32>
    %c145 = arith.constant 145 : index
    %c0_99 = arith.constant 0 : index
    %120 = vector.load %arg9[%c145, %c0_99] : memref<288x64xf32, #tpu.memory_space<vmem>>, vector<14x64xf32>
    tpu.vector_store %arg9[%c145, %c0_99], %119 {strides = array<i32>} : memref<288x64xf32, #tpu.memory_space<vmem>>, vector<14x64xf32>,
    %c576 = arith.constant 576 : index
    %c0_100 = arith.constant 0 : index
    %121 = tpu.strided_load %arg8[%c576, %c0_100] {strides = array<i32: 2, 1>} : memref<896x64xf32, #tpu.memory_space<vmem>>, vector<14x64xf32>
    %c577 = arith.constant 577 : index
    %c0_101 = arith.constant 0 : index
    %122 = tpu.strided_load %arg8[%c577, %c0_101] {strides = array<i32: 2, 1>} : memref<896x64xf32, #tpu.memory_space<vmem>>, vector<14x64xf32>
    %123 = arith.maximumf %121, %122 : vector<14x64xf32>
    %c608 = arith.constant 608 : index
    %c0_102 = arith.constant 0 : index
    %124 = tpu.strided_load %arg8[%c608, %c0_102] {strides = array<i32: 2, 1>} : memref<896x64xf32, #tpu.memory_space<vmem>>, vector<14x64xf32>
    %c609 = arith.constant 609 : index
    %c0_103 = arith.constant 0 : index
    %125 = tpu.strided_load %arg8[%c609, %c0_103] {strides = array<i32: 2, 1>} : memref<896x64xf32, #tpu.memory_space<vmem>>, vector<14x64xf32>
    %126 = arith.maximumf %124, %125 : vector<14x64xf32>
    %127 = arith.maximumf %123, %126 : vector<14x64xf32>
    %c161_104 = arith.constant 161 : index
    %c0_105 = arith.constant 0 : index
    %128 = vector.load %arg9[%c161_104, %c0_105] : memref<288x64xf32, #tpu.memory_space<vmem>>, vector<14x64xf32>
    tpu.vector_store %arg9[%c161_104, %c0_105], %127 {strides = array<i32>} : memref<288x64xf32, #tpu.memory_space<vmem>>, vector<14x64xf32>,
    %c640 = arith.constant 640 : index
    %c0_106 = arith.constant 0 : index
    %129 = tpu.strided_load %arg8[%c640, %c0_106] {strides = array<i32: 2, 1>} : memref<896x64xf32, #tpu.memory_space<vmem>>, vector<14x64xf32>
    %c641 = arith.constant 641 : index
    %c0_107 = arith.constant 0 : index
    %130 = tpu.strided_load %arg8[%c641, %c0_107] {strides = array<i32: 2, 1>} : memref<896x64xf32, #tpu.memory_space<vmem>>, vector<14x64xf32>
    %131 = arith.maximumf %129, %130 : vector<14x64xf32>
    %c672 = arith.constant 672 : index
    %c0_108 = arith.constant 0 : index
    %132 = tpu.strided_load %arg8[%c672, %c0_108] {strides = array<i32: 2, 1>} : memref<896x64xf32, #tpu.memory_space<vmem>>, vector<14x64xf32>
    %c673 = arith.constant 673 : index
    %c0_109 = arith.constant 0 : index
    %133 = tpu.strided_load %arg8[%c673, %c0_109] {strides = array<i32: 2, 1>} : memref<896x64xf32, #tpu.memory_space<vmem>>, vector<14x64xf32>
    %134 = arith.maximumf %132, %133 : vector<14x64xf32>
    %135 = arith.maximumf %131, %134 : vector<14x64xf32>
    %c177 = arith.constant 177 : index
    %c0_110 = arith.constant 0 : index
    %136 = vector.load %arg9[%c177, %c0_110] : memref<288x64xf32, #tpu.memory_space<vmem>>, vector<14x64xf32>
    tpu.vector_store %arg9[%c177, %c0_110], %135 {strides = array<i32>} : memref<288x64xf32, #tpu.memory_space<vmem>>, vector<14x64xf32>,
    %c704 = arith.constant 704 : index
    %c0_111 = arith.constant 0 : index
    %137 = tpu.strided_load %arg8[%c704, %c0_111] {strides = array<i32: 2, 1>} : memref<896x64xf32, #tpu.memory_space<vmem>>, vector<14x64xf32>
    %c705 = arith.constant 705 : index
    %c0_112 = arith.constant 0 : index
    %138 = tpu.strided_load %arg8[%c705, %c0_112] {strides = array<i32: 2, 1>} : memref<896x64xf32, #tpu.memory_space<vmem>>, vector<14x64xf32>
    %139 = arith.maximumf %137, %138 : vector<14x64xf32>
    %c736 = arith.constant 736 : index
    %c0_113 = arith.constant 0 : index
    %140 = tpu.strided_load %arg8[%c736, %c0_113] {strides = array<i32: 2, 1>} : memref<896x64xf32, #tpu.memory_space<vmem>>, vector<14x64xf32>
    %c737 = arith.constant 737 : index
    %c0_114 = arith.constant 0 : index
    %141 = tpu.strided_load %arg8[%c737, %c0_114] {strides = array<i32: 2, 1>} : memref<896x64xf32, #tpu.memory_space<vmem>>, vector<14x64xf32>
    %142 = arith.maximumf %140, %141 : vector<14x64xf32>
    %143 = arith.maximumf %139, %142 : vector<14x64xf32>
    %c193_115 = arith.constant 193 : index
    %c0_116 = arith.constant 0 : index
    %144 = vector.load %arg9[%c193_115, %c0_116] : memref<288x64xf32, #tpu.memory_space<vmem>>, vector<14x64xf32>
    tpu.vector_store %arg9[%c193_115, %c0_116], %143 {strides = array<i32>} : memref<288x64xf32, #tpu.memory_space<vmem>>, vector<14x64xf32>,
    %c768 = arith.constant 768 : index
    %c0_117 = arith.constant 0 : index
    %145 = tpu.strided_load %arg8[%c768, %c0_117] {strides = array<i32: 2, 1>} : memref<896x64xf32, #tpu.memory_space<vmem>>, vector<14x64xf32>
    %c769 = arith.constant 769 : index
    %c0_118 = arith.constant 0 : index
    %146 = tpu.strided_load %arg8[%c769, %c0_118] {strides = array<i32: 2, 1>} : memref<896x64xf32, #tpu.memory_space<vmem>>, vector<14x64xf32>
    %147 = arith.maximumf %145, %146 : vector<14x64xf32>
    %c800 = arith.constant 800 : index
    %c0_119 = arith.constant 0 : index
    %148 = tpu.strided_load %arg8[%c800, %c0_119] {strides = array<i32: 2, 1>} : memref<896x64xf32, #tpu.memory_space<vmem>>, vector<14x64xf32>
    %c801 = arith.constant 801 : index
    %c0_120 = arith.constant 0 : index
    %149 = tpu.strided_load %arg8[%c801, %c0_120] {strides = array<i32: 2, 1>} : memref<896x64xf32, #tpu.memory_space<vmem>>, vector<14x64xf32>
    %150 = arith.maximumf %148, %149 : vector<14x64xf32>
    %151 = arith.maximumf %147, %150 : vector<14x64xf32>
    %c209 = arith.constant 209 : index
    %c0_121 = arith.constant 0 : index
    %152 = vector.load %arg9[%c209, %c0_121] : memref<288x64xf32, #tpu.memory_space<vmem>>, vector<14x64xf32>
    tpu.vector_store %arg9[%c209, %c0_121], %151 {strides = array<i32>} : memref<288x64xf32, #tpu.memory_space<vmem>>, vector<14x64xf32>,
    %c832 = arith.constant 832 : index
    %c0_122 = arith.constant 0 : index
    %153 = tpu.strided_load %arg8[%c832, %c0_122] {strides = array<i32: 2, 1>} : memref<896x64xf32, #tpu.memory_space<vmem>>, vector<14x64xf32>
    %c833 = arith.constant 833 : index
    %c0_123 = arith.constant 0 : index
    %154 = tpu.strided_load %arg8[%c833, %c0_123] {strides = array<i32: 2, 1>} : memref<896x64xf32, #tpu.memory_space<vmem>>, vector<14x64xf32>
    %155 = arith.maximumf %153, %154 : vector<14x64xf32>
    %c864 = arith.constant 864 : index
    %c0_124 = arith.constant 0 : index
    %156 = tpu.strided_load %arg8[%c864, %c0_124] {strides = array<i32: 2, 1>} : memref<896x64xf32, #tpu.memory_space<vmem>>, vector<14x64xf32>
    %c865 = arith.constant 865 : index
    %c0_125 = arith.constant 0 : index
    %157 = tpu.strided_load %arg8[%c865, %c0_125] {strides = array<i32: 2, 1>} : memref<896x64xf32, #tpu.memory_space<vmem>>, vector<14x64xf32>
    %158 = arith.maximumf %156, %157 : vector<14x64xf32>
    %159 = arith.maximumf %155, %158 : vector<14x64xf32>
    %c225_126 = arith.constant 225 : index
    %c0_127 = arith.constant 0 : index
    %160 = vector.load %arg9[%c225_126, %c0_127] : memref<288x64xf32, #tpu.memory_space<vmem>>, vector<14x64xf32>
    tpu.vector_store %arg9[%c225_126, %c0_127], %159 {strides = array<i32>} : memref<288x64xf32, #tpu.memory_space<vmem>>, vector<14x64xf32>,
    %c0_128 = arith.constant 0 : index
    %c0_129 = arith.constant 0 : index
    %161 = vector.load %arg9[%c0_128, %c0_129] : memref<288x64xf32, #tpu.memory_space<vmem>>, vector<224x64xf32>
    %162 = arith.truncf %161 : vector<224x64xf32> to vector<224x64xbf16>
    %c0_130 = arith.constant 0 : index
    %c0_131 = arith.constant 0 : index
    %163 = vector.load %arg10[%c0_130, %c0_131] : memref<224x576xbf16, #tpu.memory_space<vmem>>, vector<224x64xbf16>
    tpu.vector_store %arg10[%c0_130, %c0_131], %162 {strides = array<i32>} : memref<224x576xbf16, #tpu.memory_space<vmem>>, vector<224x64xbf16>,
    %c1_132 = arith.constant 1 : index
    %c0_133 = arith.constant 0 : index
    %164 = vector.load %arg9[%c1_132, %c0_133] : memref<288x64xf32, #tpu.memory_space<vmem>>, vector<224x64xf32>
    %165 = arith.truncf %164 : vector<224x64xf32> to vector<224x64xbf16>
    %c0_134 = arith.constant 0 : index
    %c64_135 = arith.constant 64 : index
    %166 = vector.load %arg10[%c0_134, %c64_135] : memref<224x576xbf16, #tpu.memory_space<vmem>>, vector<224x64xbf16>
    tpu.vector_store %arg10[%c0_134, %c64_135], %165 {strides = array<i32>} : memref<224x576xbf16, #tpu.memory_space<vmem>>, vector<224x64xbf16>,
    %c2_136 = arith.constant 2 : index
    %c0_137 = arith.constant 0 : index
    %167 = vector.load %arg9[%c2_136, %c0_137] : memref<288x64xf32, #tpu.memory_space<vmem>>, vector<224x64xf32>
    %168 = arith.truncf %167 : vector<224x64xf32> to vector<224x64xbf16>
    %c0_138 = arith.constant 0 : index
    %c128_139 = arith.constant 128 : index
    %169 = vector.load %arg10[%c0_138, %c128_139] : memref<224x576xbf16, #tpu.memory_space<vmem>>, vector<224x64xbf16>
    tpu.vector_store %arg10[%c0_138, %c128_139], %168 {strides = array<i32>} : memref<224x576xbf16, #tpu.memory_space<vmem>>, vector<224x64xbf16>,
    %c16 = arith.constant 16 : index
    %c0_140 = arith.constant 0 : index
    %170 = vector.load %arg9[%c16, %c0_140] : memref<288x64xf32, #tpu.memory_space<vmem>>, vector<224x64xf32>
    %171 = arith.truncf %170 : vector<224x64xf32> to vector<224x64xbf16>
    %c0_141 = arith.constant 0 : index
    %c192_142 = arith.constant 192 : index
    %172 = vector.load %arg10[%c0_141, %c192_142] : memref<224x576xbf16, #tpu.memory_space<vmem>>, vector<224x64xbf16>
    tpu.vector_store %arg10[%c0_141, %c192_142], %171 {strides = array<i32>} : memref<224x576xbf16, #tpu.memory_space<vmem>>, vector<224x64xbf16>,
    %c17_143 = arith.constant 17 : index
    %c0_144 = arith.constant 0 : index
    %173 = vector.load %arg9[%c17_143, %c0_144] : memref<288x64xf32, #tpu.memory_space<vmem>>, vector<224x64xf32>
    %174 = arith.truncf %173 : vector<224x64xf32> to vector<224x64xbf16>
    %c0_145 = arith.constant 0 : index
    %c256_146 = arith.constant 256 : index
    %175 = vector.load %arg10[%c0_145, %c256_146] : memref<224x576xbf16, #tpu.memory_space<vmem>>, vector<224x64xbf16>
    tpu.vector_store %arg10[%c0_145, %c256_146], %174 {strides = array<i32>} : memref<224x576xbf16, #tpu.memory_space<vmem>>, vector<224x64xbf16>,
    %c18 = arith.constant 18 : index
    %c0_147 = arith.constant 0 : index
    %176 = vector.load %arg9[%c18, %c0_147] : memref<288x64xf32, #tpu.memory_space<vmem>>, vector<224x64xf32>
    %177 = arith.truncf %176 : vector<224x64xf32> to vector<224x64xbf16>
    %c0_148 = arith.constant 0 : index
    %c320_149 = arith.constant 320 : index
    %178 = vector.load %arg10[%c0_148, %c320_149] : memref<224x576xbf16, #tpu.memory_space<vmem>>, vector<224x64xbf16>
    tpu.vector_store %arg10[%c0_148, %c320_149], %177 {strides = array<i32>} : memref<224x576xbf16, #tpu.memory_space<vmem>>, vector<224x64xbf16>,
    %c32_150 = arith.constant 32 : index
    %c0_151 = arith.constant 0 : index
    %179 = vector.load %arg9[%c32_150, %c0_151] : memref<288x64xf32, #tpu.memory_space<vmem>>, vector<224x64xf32>
    %180 = arith.truncf %179 : vector<224x64xf32> to vector<224x64xbf16>
    %c0_152 = arith.constant 0 : index
    %c384_153 = arith.constant 384 : index
    %181 = vector.load %arg10[%c0_152, %c384_153] : memref<224x576xbf16, #tpu.memory_space<vmem>>, vector<224x64xbf16>
    tpu.vector_store %arg10[%c0_152, %c384_153], %180 {strides = array<i32>} : memref<224x576xbf16, #tpu.memory_space<vmem>>, vector<224x64xbf16>,
    %c33_154 = arith.constant 33 : index
    %c0_155 = arith.constant 0 : index
    %182 = vector.load %arg9[%c33_154, %c0_155] : memref<288x64xf32, #tpu.memory_space<vmem>>, vector<224x64xf32>
    %183 = arith.truncf %182 : vector<224x64xf32> to vector<224x64xbf16>
    %c0_156 = arith.constant 0 : index
    %c448_157 = arith.constant 448 : index
    %184 = vector.load %arg10[%c0_156, %c448_157] : memref<224x576xbf16, #tpu.memory_space<vmem>>, vector<224x64xbf16>
    tpu.vector_store %arg10[%c0_156, %c448_157], %183 {strides = array<i32>} : memref<224x576xbf16, #tpu.memory_space<vmem>>, vector<224x64xbf16>,
    %c34_158 = arith.constant 34 : index
    %c0_159 = arith.constant 0 : index
    %185 = vector.load %arg9[%c34_158, %c0_159] : memref<288x64xf32, #tpu.memory_space<vmem>>, vector<224x64xf32>
    %186 = arith.truncf %185 : vector<224x64xf32> to vector<224x64xbf16>
    %c0_160 = arith.constant 0 : index
    %c512_161 = arith.constant 512 : index
    %187 = vector.load %arg10[%c0_160, %c512_161] : memref<224x576xbf16, #tpu.memory_space<vmem>>, vector<224x64xbf16>
    tpu.vector_store %arg10[%c0_160, %c512_161], %186 {strides = array<i32>} : memref<224x576xbf16, #tpu.memory_space<vmem>>, vector<224x64xbf16>,
    %c0_162 = arith.constant 0 : index
    %c0_163 = arith.constant 0 : index
    %188 = vector.load %arg10[%c0_162, %c0_163] : memref<224x576xbf16, #tpu.memory_space<vmem>>, vector<224x576xbf16>
    %c0_164 = arith.constant 0 : index
    %c0_165 = arith.constant 0 : index
    %189 = vector.load %arg4[%c0_164, %c0_165] : memref<576x128xbf16, #tpu.memory_space<vmem>>, vector<576x128xbf16>
    %cst_166 = arith.constant dense<0.000000e+00> : vector<224x128xf32>
    %190 = tpu.matmul %188, %189, %cst_166 {dimension_numbers = #tpu.dot_dimension_numbers<[1], [0], [0], [1], [0, 0, 1, 1], [], []>} : vector<224x576xbf16>, vector<576x128xbf16>, vector<224x128xf32> -> vector<224x128xf32>
    %c0_167 = arith.constant 0 : index
    %c0_168 = arith.constant 0 : index
    %191 = vector.load %arg11[%c0_167, %c0_168] : memref<224x128xf32, #tpu.memory_space<vmem>>, vector<224x128xf32>
    tpu.vector_store %arg11[%c0_167, %c0_168], %190 {strides = array<i32>} : memref<224x128xf32, #tpu.memory_space<vmem>>, vector<224x128xf32>,
    %c0_169 = arith.constant 0 : index
    %c0_170 = arith.constant 0 : index
    %192 = vector.load %arg11[%c0_169, %c0_170] : memref<224x128xf32, #tpu.memory_space<vmem>>, vector<224x128xf32>
    %c0_171 = arith.constant 0 : index
    %c0_172 = arith.constant 0 : index
    %193 = vector.load %arg5[%c0_171, %c0_172] : memref<1x128xf32, #tpu.memory_space<vmem>>, vector<1x128xf32>
    %194 = vector.broadcast %193 : vector<1x128xf32> to vector<224x128xf32>
    %195 = arith.addf %192, %194 : vector<224x128xf32>
    %cst_173 = arith.constant 0.000000e+00 : f32
    %196 = vector.broadcast %cst_173 : f32 to vector<224x128xf32>
    %197 = arith.maximumf %195, %196 : vector<224x128xf32>
    %c0_174 = arith.constant 0 : index
    %c0_175 = arith.constant 0 : index
    %198 = vector.load %arg11[%c0_174, %c0_175] : memref<224x128xf32, #tpu.memory_space<vmem>>, vector<224x128xf32>
    tpu.vector_store %arg11[%c0_174, %c0_175], %197 {strides = array<i32>} : memref<224x128xf32, #tpu.memory_space<vmem>>, vector<224x128xf32>,
    %c0_176 = arith.constant 0 : index
    %c0_177 = arith.constant 0 : index
    %199 = tpu.strided_load %arg11[%c0_176, %c0_177] {strides = array<i32: 2, 1>} : memref<224x128xf32, #tpu.memory_space<vmem>>, vector<7x128xf32>
    %c1_178 = arith.constant 1 : index
    %c0_179 = arith.constant 0 : index
    %200 = tpu.strided_load %arg11[%c1_178, %c0_179] {strides = array<i32: 2, 1>} : memref<224x128xf32, #tpu.memory_space<vmem>>, vector<7x128xf32>
    %201 = arith.maximumf %199, %200 : vector<7x128xf32>
    %c16_180 = arith.constant 16 : index
    %c0_181 = arith.constant 0 : index
    %202 = tpu.strided_load %arg11[%c16_180, %c0_181] {strides = array<i32: 2, 1>} : memref<224x128xf32, #tpu.memory_space<vmem>>, vector<7x128xf32>
    %c17_182 = arith.constant 17 : index
    %c0_183 = arith.constant 0 : index
    %203 = tpu.strided_load %arg11[%c17_182, %c0_183] {strides = array<i32: 2, 1>} : memref<224x128xf32, #tpu.memory_space<vmem>>, vector<7x128xf32>
    %204 = arith.maximumf %202, %203 : vector<7x128xf32>
    %205 = arith.maximumf %201, %204 : vector<7x128xf32>
    %c0_184 = arith.constant 0 : index
    %c0_185 = arith.constant 0 : index
    %c0_186 = arith.constant 0 : index
    %206 = vector.load %arg6[%c0_184, %c0_185, %c0_186] : memref<1x49x128xf32, #tpu.memory_space<vmem>>, vector<1x7x128xf32>
    %207 = vector.shape_cast %206 : vector<1x7x128xf32> to vector<7x128xf32>
    %208 = vector.shape_cast %205 : vector<7x128xf32> to vector<1x7x128xf32>
    tpu.vector_store %arg6[%c0_184, %c0_185, %c0_186], %208 {strides = array<i32>} : memref<1x49x128xf32, #tpu.memory_space<vmem>>, vector<1x7x128xf32>,
    %c32_187 = arith.constant 32 : index
    %c0_188 = arith.constant 0 : index
    %209 = tpu.strided_load %arg11[%c32_187, %c0_188] {strides = array<i32: 2, 1>} : memref<224x128xf32, #tpu.memory_space<vmem>>, vector<7x128xf32>
    %c33_189 = arith.constant 33 : index
    %c0_190 = arith.constant 0 : index
    %210 = tpu.strided_load %arg11[%c33_189, %c0_190] {strides = array<i32: 2, 1>} : memref<224x128xf32, #tpu.memory_space<vmem>>, vector<7x128xf32>
    %211 = arith.maximumf %209, %210 : vector<7x128xf32>
    %c48_191 = arith.constant 48 : index
    %c0_192 = arith.constant 0 : index
    %212 = tpu.strided_load %arg11[%c48_191, %c0_192] {strides = array<i32: 2, 1>} : memref<224x128xf32, #tpu.memory_space<vmem>>, vector<7x128xf32>
    %c49_193 = arith.constant 49 : index
    %c0_194 = arith.constant 0 : index
    %213 = tpu.strided_load %arg11[%c49_193, %c0_194] {strides = array<i32: 2, 1>} : memref<224x128xf32, #tpu.memory_space<vmem>>, vector<7x128xf32>
    %214 = arith.maximumf %212, %213 : vector<7x128xf32>
    %215 = arith.maximumf %211, %214 : vector<7x128xf32>
    %c0_195 = arith.constant 0 : index
    %c7 = arith.constant 7 : index
    %c0_196 = arith.constant 0 : index
    %216 = vector.load %arg6[%c0_195, %c7, %c0_196] : memref<1x49x128xf32, #tpu.memory_space<vmem>>, vector<1x7x128xf32>
    %217 = vector.shape_cast %216 : vector<1x7x128xf32> to vector<7x128xf32>
    %218 = vector.shape_cast %215 : vector<7x128xf32> to vector<1x7x128xf32>
    tpu.vector_store %arg6[%c0_195, %c7, %c0_196], %218 {strides = array<i32>} : memref<1x49x128xf32, #tpu.memory_space<vmem>>, vector<1x7x128xf32>,
    %c64_197 = arith.constant 64 : index
    %c0_198 = arith.constant 0 : index
    %219 = tpu.strided_load %arg11[%c64_197, %c0_198] {strides = array<i32: 2, 1>} : memref<224x128xf32, #tpu.memory_space<vmem>>, vector<7x128xf32>
    %c65_199 = arith.constant 65 : index
    %c0_200 = arith.constant 0 : index
    %220 = tpu.strided_load %arg11[%c65_199, %c0_200] {strides = array<i32: 2, 1>} : memref<224x128xf32, #tpu.memory_space<vmem>>, vector<7x128xf32>
    %221 = arith.maximumf %219, %220 : vector<7x128xf32>
    %c80 = arith.constant 80 : index
    %c0_201 = arith.constant 0 : index
    %222 = tpu.strided_load %arg11[%c80, %c0_201] {strides = array<i32: 2, 1>} : memref<224x128xf32, #tpu.memory_space<vmem>>, vector<7x128xf32>
    %c81_202 = arith.constant 81 : index
    %c0_203 = arith.constant 0 : index
    %223 = tpu.strided_load %arg11[%c81_202, %c0_203] {strides = array<i32: 2, 1>} : memref<224x128xf32, #tpu.memory_space<vmem>>, vector<7x128xf32>
    %224 = arith.maximumf %222, %223 : vector<7x128xf32>
    %225 = arith.maximumf %221, %224 : vector<7x128xf32>
    %c0_204 = arith.constant 0 : index
    %c14 = arith.constant 14 : index
    %c0_205 = arith.constant 0 : index
    %226 = vector.load %arg6[%c0_204, %c14, %c0_205] : memref<1x49x128xf32, #tpu.memory_space<vmem>>, vector<1x7x128xf32>
    %227 = vector.shape_cast %226 : vector<1x7x128xf32> to vector<7x128xf32>
    %228 = vector.shape_cast %225 : vector<7x128xf32> to vector<1x7x128xf32>
    tpu.vector_store %arg6[%c0_204, %c14, %c0_205], %228 {strides = array<i32>} : memref<1x49x128xf32, #tpu.memory_space<vmem>>, vector<1x7x128xf32>,
    %c96_206 = arith.constant 96 : index
    %c0_207 = arith.constant 0 : index
    %229 = tpu.strided_load %arg11[%c96_206, %c0_207] {strides = array<i32: 2, 1>} : memref<224x128xf32, #tpu.memory_space<vmem>>, vector<7x128xf32>
    %c97_208 = arith.constant 97 : index
    %c0_209 = arith.constant 0 : index
    %230 = tpu.strided_load %arg11[%c97_208, %c0_209] {strides = array<i32: 2, 1>} : memref<224x128xf32, #tpu.memory_space<vmem>>, vector<7x128xf32>
    %231 = arith.maximumf %229, %230 : vector<7x128xf32>
    %c112 = arith.constant 112 : index
    %c0_210 = arith.constant 0 : index
    %232 = tpu.strided_load %arg11[%c112, %c0_210] {strides = array<i32: 2, 1>} : memref<224x128xf32, #tpu.memory_space<vmem>>, vector<7x128xf32>
    %c113_211 = arith.constant 113 : index
    %c0_212 = arith.constant 0 : index
    %233 = tpu.strided_load %arg11[%c113_211, %c0_212] {strides = array<i32: 2, 1>} : memref<224x128xf32, #tpu.memory_space<vmem>>, vector<7x128xf32>
    %234 = arith.maximumf %232, %233 : vector<7x128xf32>
    %235 = arith.maximumf %231, %234 : vector<7x128xf32>
    %c0_213 = arith.constant 0 : index
    %c21 = arith.constant 21 : index
    %c0_214 = arith.constant 0 : index
    %236 = vector.load %arg6[%c0_213, %c21, %c0_214] : memref<1x49x128xf32, #tpu.memory_space<vmem>>, vector<1x7x128xf32>
    %237 = vector.shape_cast %236 : vector<1x7x128xf32> to vector<7x128xf32>
    %238 = vector.shape_cast %235 : vector<7x128xf32> to vector<1x7x128xf32>
    tpu.vector_store %arg6[%c0_213, %c21, %c0_214], %238 {strides = array<i32>} : memref<1x49x128xf32, #tpu.memory_space<vmem>>, vector<1x7x128xf32>,
    %c128_215 = arith.constant 128 : index
    %c0_216 = arith.constant 0 : index
    %239 = tpu.strided_load %arg11[%c128_215, %c0_216] {strides = array<i32: 2, 1>} : memref<224x128xf32, #tpu.memory_space<vmem>>, vector<7x128xf32>
    %c129_217 = arith.constant 129 : index
    %c0_218 = arith.constant 0 : index
    %240 = tpu.strided_load %arg11[%c129_217, %c0_218] {strides = array<i32: 2, 1>} : memref<224x128xf32, #tpu.memory_space<vmem>>, vector<7x128xf32>
    %241 = arith.maximumf %239, %240 : vector<7x128xf32>
    %c144 = arith.constant 144 : index
    %c0_219 = arith.constant 0 : index
    %242 = tpu.strided_load %arg11[%c144, %c0_219] {strides = array<i32: 2, 1>} : memref<224x128xf32, #tpu.memory_space<vmem>>, vector<7x128xf32>
    %c145_220 = arith.constant 145 : index
    %c0_221 = arith.constant 0 : index
    %243 = tpu.strided_load %arg11[%c145_220, %c0_221] {strides = array<i32: 2, 1>} : memref<224x128xf32, #tpu.memory_space<vmem>>, vector<7x128xf32>
    %244 = arith.maximumf %242, %243 : vector<7x128xf32>
    %245 = arith.maximumf %241, %244 : vector<7x128xf32>
    %c0_222 = arith.constant 0 : index
    %c28 = arith.constant 28 : index
    %c0_223 = arith.constant 0 : index
    %246 = vector.load %arg6[%c0_222, %c28, %c0_223] : memref<1x49x128xf32, #tpu.memory_space<vmem>>, vector<1x7x128xf32>
    %247 = vector.shape_cast %246 : vector<1x7x128xf32> to vector<7x128xf32>
    %248 = vector.shape_cast %245 : vector<7x128xf32> to vector<1x7x128xf32>
    tpu.vector_store %arg6[%c0_222, %c28, %c0_223], %248 {strides = array<i32>} : memref<1x49x128xf32, #tpu.memory_space<vmem>>, vector<1x7x128xf32>,
    %c160_224 = arith.constant 160 : index
    %c0_225 = arith.constant 0 : index
    %249 = tpu.strided_load %arg11[%c160_224, %c0_225] {strides = array<i32: 2, 1>} : memref<224x128xf32, #tpu.memory_space<vmem>>, vector<7x128xf32>
    %c161_226 = arith.constant 161 : index
    %c0_227 = arith.constant 0 : index
    %250 = tpu.strided_load %arg11[%c161_226, %c0_227] {strides = array<i32: 2, 1>} : memref<224x128xf32, #tpu.memory_space<vmem>>, vector<7x128xf32>
    %251 = arith.maximumf %249, %250 : vector<7x128xf32>
    %c176 = arith.constant 176 : index
    %c0_228 = arith.constant 0 : index
    %252 = tpu.strided_load %arg11[%c176, %c0_228] {strides = array<i32: 2, 1>} : memref<224x128xf32, #tpu.memory_space<vmem>>, vector<7x128xf32>
    %c177_229 = arith.constant 177 : index
    %c0_230 = arith.constant 0 : index
    %253 = tpu.strided_load %arg11[%c177_229, %c0_230] {strides = array<i32: 2, 1>} : memref<224x128xf32, #tpu.memory_space<vmem>>, vector<7x128xf32>
    %254 = arith.maximumf %252, %253 : vector<7x128xf32>
    %255 = arith.maximumf %251, %254 : vector<7x128xf32>
    %c0_231 = arith.constant 0 : index
    %c35 = arith.constant 35 : index
    %c0_232 = arith.constant 0 : index
    %256 = vector.load %arg6[%c0_231, %c35, %c0_232] : memref<1x49x128xf32, #tpu.memory_space<vmem>>, vector<1x7x128xf32>
    %257 = vector.shape_cast %256 : vector<1x7x128xf32> to vector<7x128xf32>
    %258 = vector.shape_cast %255 : vector<7x128xf32> to vector<1x7x128xf32>
    tpu.vector_store %arg6[%c0_231, %c35, %c0_232], %258 {strides = array<i32>} : memref<1x49x128xf32, #tpu.memory_space<vmem>>, vector<1x7x128xf32>,
    %c192_233 = arith.constant 192 : index
    %c0_234 = arith.constant 0 : index
    %259 = tpu.strided_load %arg11[%c192_233, %c0_234] {strides = array<i32: 2, 1>} : memref<224x128xf32, #tpu.memory_space<vmem>>, vector<7x128xf32>
    %c193_235 = arith.constant 193 : index
    %c0_236 = arith.constant 0 : index
    %260 = tpu.strided_load %arg11[%c193_235, %c0_236] {strides = array<i32: 2, 1>} : memref<224x128xf32, #tpu.memory_space<vmem>>, vector<7x128xf32>
    %261 = arith.maximumf %259, %260 : vector<7x128xf32>
    %c208 = arith.constant 208 : index
    %c0_237 = arith.constant 0 : index
    %262 = tpu.strided_load %arg11[%c208, %c0_237] {strides = array<i32: 2, 1>} : memref<224x128xf32, #tpu.memory_space<vmem>>, vector<7x128xf32>
    %c209_238 = arith.constant 209 : index
    %c0_239 = arith.constant 0 : index
    %263 = tpu.strided_load %arg11[%c209_238, %c0_239] {strides = array<i32: 2, 1>} : memref<224x128xf32, #tpu.memory_space<vmem>>, vector<7x128xf32>
    %264 = arith.maximumf %262, %263 : vector<7x128xf32>
    %265 = arith.maximumf %261, %264 : vector<7x128xf32>
    %c0_240 = arith.constant 0 : index
    %c42 = arith.constant 42 : index
    %c0_241 = arith.constant 0 : index
    %266 = vector.load %arg6[%c0_240, %c42, %c0_241] : memref<1x49x128xf32, #tpu.memory_space<vmem>>, vector<1x7x128xf32>
    %267 = vector.shape_cast %266 : vector<1x7x128xf32> to vector<7x128xf32>
    %268 = vector.shape_cast %265 : vector<7x128xf32> to vector<1x7x128xf32>
    tpu.vector_store %arg6[%c0_240, %c42, %c0_241], %268 {strides = array<i32>} : memref<1x49x128xf32, #tpu.memory_space<vmem>>, vector<1x7x128xf32>,
    return
  }
  func.func @transform_0(%arg0: i32) -> (i32, i32, i32) {
    %c0_i32 = arith.constant 0 : i32
    %c0_i32_0 = arith.constant 0 : i32
    %c0_i32_1 = arith.constant 0 : i32
    return %arg0, %c0_i32, %c0_i32_0 : i32, i32, i32
  }
  func.func @transform_1(%arg0: i32) -> (i32, i32) {
    %c0_i32 = arith.constant 0 : i32
    %c0_i32_0 = arith.constant 0 : i32
    %c0_i32_1 = arith.constant 0 : i32
    return %c0_i32, %c0_i32_0 : i32, i32
  }
  func.func @transform_2(%arg0: i32) -> (i32, i32) {
    %c0_i32 = arith.constant 0 : i32
    %c0_i32_0 = arith.constant 0 : i32
    %c0_i32_1 = arith.constant 0 : i32
    return %c0_i32, %c0_i32_0 : i32, i32
  }
  func.func @transform_3(%arg0: i32) -> (i32, i32) {
    %c0_i32 = arith.constant 0 : i32
    %c0_i32_0 = arith.constant 0 : i32
    %c0_i32_1 = arith.constant 0 : i32
    return %c0_i32, %c0_i32_0 : i32, i32
  }
  func.func @transform_4(%arg0: i32) -> (i32, i32) {
    %c0_i32 = arith.constant 0 : i32
    %c0_i32_0 = arith.constant 0 : i32
    %c0_i32_1 = arith.constant 0 : i32
    return %c0_i32, %c0_i32_0 : i32, i32
  }
  func.func @transform_5(%arg0: i32) -> (i32, i32, i32) {
    %c0_i32 = arith.constant 0 : i32
    %c0_i32_0 = arith.constant 0 : i32
    %c0_i32_1 = arith.constant 0 : i32
    return %arg0, %c0_i32, %c0_i32_0 : i32, i32, i32
  }
}

module attributes {stable_mosaic.version = 11 : i64} {
  func.func @_fc_kernel(%arg0: i32, %arg1: memref<8x1568xf32, #tpu.memory_space<vmem>>, %arg2: memref<1568x128xbf16, #tpu.memory_space<vmem>>, %arg3: memref<1x128xf32, #tpu.memory_space<vmem>>, %arg4: memref<128x128xbf16, #tpu.memory_space<vmem>>, %arg5: memref<1x128xf32, #tpu.memory_space<vmem>>, %arg6: memref<8x128xf32, #tpu.memory_space<vmem>>) attributes {dimension_semantics = [#tpu.dimension_semantics<parallel>], iteration_bounds = array<i64: 1>, scalar_prefetch = 0 : i64, scratch_operands = 0 : i64, tpu.core_type = #tpu.core_type<tc>, window_params = [{transform_indices = @transform_0, window_bounds = array<i64: 8, 1568>}, {pipeline_mode = #tpu.pipeline_mode<synchronous>, transform_indices = @transform_1, window_bounds = array<i64: 1568, 128>}, {pipeline_mode = #tpu.pipeline_mode<synchronous>, transform_indices = @transform_2, window_bounds = array<i64: 1, 128>}, {pipeline_mode = #tpu.pipeline_mode<synchronous>, transform_indices = @transform_3, window_bounds = array<i64: 128, 128>}, {pipeline_mode = #tpu.pipeline_mode<synchronous>, transform_indices = @transform_4, window_bounds = array<i64: 1, 128>}, {transform_indices = @transform_5, window_bounds = array<i64: 8, 128>}]} {
    %c0 = arith.constant 0 : index
    %c0_0 = arith.constant 0 : index
    %0 = vector.load %arg1[%c0, %c0_0] : memref<8x1568xf32, #tpu.memory_space<vmem>>, vector<8x1568xf32>
    %1 = arith.truncf %0 : vector<8x1568xf32> to vector<8x1568xbf16>
    %c0_1 = arith.constant 0 : index
    %c0_2 = arith.constant 0 : index
    %2 = vector.load %arg2[%c0_1, %c0_2] : memref<1568x128xbf16, #tpu.memory_space<vmem>>, vector<1568x128xbf16>
    %cst = arith.constant dense<0.000000e+00> : vector<8x128xf32>
    %3 = tpu.matmul %1, %2, %cst {dimension_numbers = #tpu.dot_dimension_numbers<[1], [0], [0], [1], [0, 0, 1, 1], [], []>} : vector<8x1568xbf16>, vector<1568x128xbf16>, vector<8x128xf32> -> vector<8x128xf32>
    %c0_3 = arith.constant 0 : index
    %c0_4 = arith.constant 0 : index
    %4 = vector.load %arg3[%c0_3, %c0_4] : memref<1x128xf32, #tpu.memory_space<vmem>>, vector<1x128xf32>
    %5 = vector.broadcast %4 : vector<1x128xf32> to vector<8x128xf32>
    %6 = arith.addf %3, %5 : vector<8x128xf32>
    %cst_5 = arith.constant 0.000000e+00 : f32
    %7 = vector.broadcast %cst_5 : f32 to vector<8x128xf32>
    %8 = arith.maximumf %6, %7 : vector<8x128xf32>
    %9 = arith.truncf %8 : vector<8x128xf32> to vector<8x128xbf16>
    %c0_6 = arith.constant 0 : index
    %c0_7 = arith.constant 0 : index
    %10 = vector.load %arg4[%c0_6, %c0_7] : memref<128x128xbf16, #tpu.memory_space<vmem>>, vector<128x128xbf16>
    %cst_8 = arith.constant dense<0.000000e+00> : vector<8x128xf32>
    %11 = tpu.matmul %9, %10, %cst_8 {dimension_numbers = #tpu.dot_dimension_numbers<[1], [0], [0], [1], [0, 0, 1, 1], [], []>} : vector<8x128xbf16>, vector<128x128xbf16>, vector<8x128xf32> -> vector<8x128xf32>
    %c0_9 = arith.constant 0 : index
    %c0_10 = arith.constant 0 : index
    %12 = vector.load %arg5[%c0_9, %c0_10] : memref<1x128xf32, #tpu.memory_space<vmem>>, vector<1x128xf32>
    %13 = vector.broadcast %12 : vector<1x128xf32> to vector<8x128xf32>
    %14 = arith.addf %11, %13 : vector<8x128xf32>
    %c0_11 = arith.constant 0 : index
    %c0_12 = arith.constant 0 : index
    %15 = vector.load %arg6[%c0_11, %c0_12] : memref<8x128xf32, #tpu.memory_space<vmem>>, vector<8x128xf32>
    tpu.vector_store %arg6[%c0_11, %c0_12], %14 {strides = array<i32>} : memref<8x128xf32, #tpu.memory_space<vmem>>, vector<8x128xf32>,
    return
  }
  func.func @transform_0(%arg0: i32) -> (i32, i32) {
    %c0_i32 = arith.constant 0 : i32
    %c0_i32_0 = arith.constant 0 : i32
    return %arg0, %c0_i32 : i32, i32
  }
  func.func @transform_1(%arg0: i32) -> (i32, i32) {
    %c0_i32 = arith.constant 0 : i32
    %c0_i32_0 = arith.constant 0 : i32
    %c0_i32_1 = arith.constant 0 : i32
    return %c0_i32, %c0_i32_0 : i32, i32
  }
  func.func @transform_2(%arg0: i32) -> (i32, i32) {
    %c0_i32 = arith.constant 0 : i32
    %c0_i32_0 = arith.constant 0 : i32
    %c0_i32_1 = arith.constant 0 : i32
    return %c0_i32, %c0_i32_0 : i32, i32
  }
  func.func @transform_3(%arg0: i32) -> (i32, i32) {
    %c0_i32 = arith.constant 0 : i32
    %c0_i32_0 = arith.constant 0 : i32
    %c0_i32_1 = arith.constant 0 : i32
    return %c0_i32, %c0_i32_0 : i32, i32
  }
  func.func @transform_4(%arg0: i32) -> (i32, i32) {
    %c0_i32 = arith.constant 0 : i32
    %c0_i32_0 = arith.constant 0 : i32
    %c0_i32_1 = arith.constant 0 : i32
    return %c0_i32, %c0_i32_0 : i32, i32
  }
  func.func @transform_5(%arg0: i32) -> (i32, i32) {
    %c0_i32 = arith.constant 0 : i32
    %c0_i32_0 = arith.constant 0 : i32
    return %arg0, %c0_i32 : i32, i32
  }
}

</mosaic_0001>

<llo_original>
// kernel: blood_mnist_forward.3
$region0: #{blood_mnist_forward.3}
  #allocation0 [shape = 'u32[]', space=smem, size = 0x4, offset = 0x4, fixed_abs, tag = 'smem constant byte address 0x4 - core index']
  #allocation1 [shape = 'u32[144,128]{1,0:T(1,128)}', space=vmem, size = 0x12000, scoped, tag = 'internal scratch']
  %s0 = inlined_call_operand.vmem [shape: f32[8,1568], index: 0, kind: input, shape index: {}]
  %s1 = inlined_call_operand.vmem [shape: bf16[1568,128], index: 1, kind: input, shape index: {}]
  %s2 = inlined_call_operand.vmem [shape: f32[1,128], index: 2, kind: input, shape index: {}]
  %s3 = inlined_call_operand.vmem [shape: bf16[128,128], index: 3, kind: input, shape index: {}]
  %s4 = inlined_call_operand.vmem [shape: f32[1,128], index: 4, kind: input, shape index: {}]
  %s5 = inlined_call_operand.hbm [shape: f32[8,128], index: 5, kind: output, shape index: {}]
  %s6 = sld [smem:[#allocation0]]
  $region30: #{blood_mnist_forward.3} parent=0
    _
  %s8 = ssub.s32 1, %s6
  %s9 = scalar_select 0, %s8, %s6
  $region1: #{blood_mnist_forward.3} parent=0
    #allocation2 [shape = 'u8[4096]{0}', space=vmem, size = 0x1000, scoped, tag = 'output window, operand 0, single buffered']
    #allocation3 [shape = 's32[1]{0}', space=sflag, size = 0x4, scoped, tag = 'scoped memory for blood_mnist_forward.3']
    %10 = vsyncpa [#allocation3], 0
    // Predicated region
    $region2: #{blood_mnist_forward.3} parent=1 // pred_check
      _
    $region3: #{blood_mnist_forward.3} parent=1 // pred_check_branch
      %12 = sbr.rel (0) target = $region5
    $region4: #{blood_mnist_forward.3} parent=1 // pred_region
      _
    $region5: #{blood_mnist_forward.3} parent=1 // pred_fallthru
      _
    // Predicated region
    $region6: #{blood_mnist_forward.3} parent=1 // pred_check
      _
    $region7: #{blood_mnist_forward.3} parent=1 // pred_check_branch
      %14 = sbr.rel (0) target = $region9
    $region8: #{blood_mnist_forward.3} parent=1 // pred_region
      _
    $region9: #{blood_mnist_forward.3} parent=1 // pred_fallthru
      _
    // Predicated region
    $region10: #{blood_mnist_forward.3} parent=1 // pred_check
      _
    $region11: #{blood_mnist_forward.3} parent=1 // pred_check_branch
      %16 = sbr.rel (0) target = $region13
    $region12: #{blood_mnist_forward.3} parent=1 // pred_region
      _
    $region13: #{blood_mnist_forward.3} parent=1 // pred_fallthru
      _
    // Predicated region
    $region14: #{blood_mnist_forward.3} parent=1 // pred_check
      _
    $region15: #{blood_mnist_forward.3} parent=1 // pred_check_branch
      %18 = sbr.rel (0) target = $region17
    $region16: #{blood_mnist_forward.3} parent=1 // pred_region
      _
    $region17: #{blood_mnist_forward.3} parent=1 // pred_fallthru
      _
    // Predicated region
    $region18: #{blood_mnist_forward.3} parent=1 // pred_check
      _
    $region19: #{blood_mnist_forward.3} parent=1 // pred_check_branch
      %20 = sbr.rel (0) target = $region21
    $region20: #{blood_mnist_forward.3} parent=1 // pred_region
      _
    $region21: #{blood_mnist_forward.3} parent=1 // pred_fallthru
      _
    %v22 = vld [vmem:[%s0] sm:$0xff]
    %v23 = vld [vmem:[%s0 + $0x8] sm:$0xff]
    %v24 = vld [vmem:[%s0 + $0x10] sm:$0xff]
    %v25 = vld [vmem:[%s0 + $0x18] sm:$0xff]
    %v26 = vld [vmem:[%s0 + $0x20] sm:$0xff]
    %v27 = vld [vmem:[%s0 + $0x28] sm:$0xff]
    %v28 = vld [vmem:[%s0 + $0x30] sm:$0xff]
    %v29 = vld [vmem:[%s0 + $0x38] sm:$0xff]
    %v30 = vld [vmem:[%s0 + $0x40] sm:$0xff]
    %v31 = vld [vmem:[%s0 + $0x48] sm:$0xff]
    %v32 = vld [vmem:[%s0 + $0x50] sm:$0xff]
    %v33 = vld [vmem:[%s0 + $0x58] sm:$0xff]
    %v34 = vld [vmem:[%s0 + $0x60] sm:$0xff]
    %v35 = vpack.c.bf16 %v22, %v22
    %v36 = vpack.c.bf16 %v23, %v23
    %v37 = vpack.c.bf16 %v24, %v24
    %v38 = vpack.c.bf16 %v25, %v25
    %v39 = vpack.c.bf16 %v26, %v26
    %v40 = vpack.c.bf16 %v27, %v27
    %v41 = vpack.c.bf16 %v28, %v28
    %v42 = vpack.c.bf16 %v29, %v29
    %v43 = vpack.c.bf16 %v30, %v30
    %v44 = vpack.c.bf16 %v31, %v31
    %v45 = vpack.c.bf16 %v32, %v32
    %v46 = vpack.c.bf16 %v33, %v33
    %v47 = vpack.c.bf16 %v34, %v34
    %v48 = vld [vmem:[%s1] sm:$0xf]
    %v49 = vld [vmem:[%s1 + $0x4] sm:$0xf]
    %v50 = vld [vmem:[%s1 + $0x8] sm:$0xf]
    %v51 = vld [vmem:[%s1 + $0xc] sm:$0xf]
    %v52 = vld [vmem:[%s1 + $0x10] sm:$0xf]
    %v53 = vld [vmem:[%s1 + $0x14] sm:$0xf]
    %v54 = vld [vmem:[%s1 + $0x18] sm:$0xf]
    %v55 = vld [vmem:[%s1 + $0x1c] sm:$0xf]
    %v56 = vld [vmem:[%s1 + $0x20] sm:$0xf]
    %v57 = vld [vmem:[%s1 + $0x24] sm:$0xf]
    %v58 = vld [vmem:[%s1 + $0x28] sm:$0xf]
    %v59 = vld [vmem:[%s1 + $0x2c] sm:$0xf]
    %v60 = vld [vmem:[%s1 + $0x30] sm:$0xf]
    %v61 = vld [vmem:[%s1 + $0x34] sm:$0xf]
    %v62 = vld [vmem:[%s1 + $0x38] sm:$0xf]
    %v63 = vld [vmem:[%s1 + $0x3c] sm:$0xf]
    %v64 = vld [vmem:[%s1 + $0x40] sm:$0xf]
    %v65 = vld [vmem:[%s1 + $0x44] sm:$0xf]
    %v66 = vld [vmem:[%s1 + $0x48] sm:$0xf]
    %v67 = vld [vmem:[%s1 + $0x4c] sm:$0xf]
    %v68 = vld [vmem:[%s1 + $0x50] sm:$0xf]
    %v69 = vld [vmem:[%s1 + $0x54] sm:$0xf]
    %v70 = vld [vmem:[%s1 + $0x58] sm:$0xf]
    %v71 = vld [vmem:[%s1 + $0x5c] sm:$0xf]
    %v72 = vld [vmem:[%s1 + $0x60] sm:$0xf]
    %v73 = vld [vmem:[%s1 + $0x64] sm:$0xf]
    %v74 = vld [vmem:[%s1 + $0x68] sm:$0xf]
    %v75 = vld [vmem:[%s1 + $0x6c] sm:$0xf]
    %v76 = vld [vmem:[%s1 + $0x70] sm:$0xf]
    %v77 = vld [vmem:[%s1 + $0x74] sm:$0xf]
    %v78 = vld [vmem:[%s1 + $0x78] sm:$0xf]
    %v79 = vld [vmem:[%s1 + $0x7c] sm:$0xf]
    %v80 = vld [vmem:[%s1 + $0x80] sm:$0xf]
    %v81 = vld [vmem:[%s1 + $0x84] sm:$0xf]
    %v82 = vld [vmem:[%s1 + $0x88] sm:$0xf]
    %v83 = vld [vmem:[%s1 + $0x8c] sm:$0xf]
    %v84 = vld [vmem:[%s1 + $0x90] sm:$0xf]
    %v85 = vld [vmem:[%s1 + $0x94] sm:$0xf]
    %v86 = vld [vmem:[%s1 + $0x98] sm:$0xf]
    %v87 = vld [vmem:[%s1 + $0x9c] sm:$0xf]
    %v88 = vld [vmem:[%s1 + $0xa0] sm:$0xf]
    %v89 = vld [vmem:[%s1 + $0xa4] sm:$0xf]
    %v90 = vld [vmem:[%s1 + $0xa8] sm:$0xf]
    %v91 = vld [vmem:[%s1 + $0xac] sm:$0xf]
    %v92 = vld [vmem:[%s1 + $0xb0] sm:$0xf]
    %v93 = vld [vmem:[%s1 + $0xb4] sm:$0xf]
    %v94 = vld [vmem:[%s1 + $0xb8] sm:$0xf]
    %v95 = vld [vmem:[%s1 + $0xbc] sm:$0xf]
    %v96 = vld [vmem:[%s1 + $0xc0] sm:$0xf]
    %v97 = vld [vmem:[%s1 + $0xc4] sm:$0xf]
    %v98 = vld [vmem:[%s1 + $0xc8] sm:$0xf]
    %v99 = vld [vmem:[%s1 + $0xcc] sm:$0xf]
    %v100 = vld [vmem:[%s1 + $0xd0] sm:$0xf]
    %v101 = vld [vmem:[%s1 + $0xd4] sm:$0xf]
    %v102 = vld [vmem:[%s1 + $0xd8] sm:$0xf]
    %v103 = vld [vmem:[%s1 + $0xdc] sm:$0xf]
    %v104 = vld [vmem:[%s1 + $0xe0] sm:$0xf]
    %v105 = vld [vmem:[%s1 + $0xe4] sm:$0xf]
    %v106 = vld [vmem:[%s1 + $0xe8] sm:$0xf]
    %v107 = vld [vmem:[%s1 + $0xec] sm:$0xf]
    %v108 = vld [vmem:[%s1 + $0xf0] sm:$0xf]
    %v109 = vld [vmem:[%s1 + $0xf4] sm:$0xf]
    %v110 = vld [vmem:[%s1 + $0xf8] sm:$0xf]
    %v111 = vld [vmem:[%s1 + $0xfc] sm:$0xf]
    %v112 = vld [vmem:[%s1 + $0x100] sm:$0xf]
    %v113 = vld [vmem:[%s1 + $0x104] sm:$0xf]
    %v114 = vld [vmem:[%s1 + $0x108] sm:$0xf]
    %v115 = vld [vmem:[%s1 + $0x10c] sm:$0xf]
    %v116 = vld [vmem:[%s1 + $0x110] sm:$0xf]
    %v117 = vld [vmem:[%s1 + $0x114] sm:$0xf]
    %v118 = vld [vmem:[%s1 + $0x118] sm:$0xf]
    %v119 = vld [vmem:[%s1 + $0x11c] sm:$0xf]
    %v120 = vld [vmem:[%s1 + $0x120] sm:$0xf]
    %v121 = vld [vmem:[%s1 + $0x124] sm:$0xf]
    %v122 = vld [vmem:[%s1 + $0x128] sm:$0xf]
    %v123 = vld [vmem:[%s1 + $0x12c] sm:$0xf]
    %v124 = vld [vmem:[%s1 + $0x130] sm:$0xf]
    %v125 = vld [vmem:[%s1 + $0x134] sm:$0xf]
    %v126 = vld [vmem:[%s1 + $0x138] sm:$0xf]
    %v127 = vld [vmem:[%s1 + $0x13c] sm:$0xf]
    %v128 = vld [vmem:[%s1 + $0x140] sm:$0xf]
    %v129 = vld [vmem:[%s1 + $0x144] sm:$0xf]
    %v130 = vld [vmem:[%s1 + $0x148] sm:$0xf]
    %v131 = vld [vmem:[%s1 + $0x14c] sm:$0xf]
    %v132 = vld [vmem:[%s1 + $0x150] sm:$0xf]
    %v133 = vld [vmem:[%s1 + $0x154] sm:$0xf]
    %v134 = vld [vmem:[%s1 + $0x158] sm:$0xf]
    %v135 = vld [vmem:[%s1 + $0x15c] sm:$0xf]
    %v136 = vld [vmem:[%s1 + $0x160] sm:$0xf]
    %v137 = vld [vmem:[%s1 + $0x164] sm:$0xf]
    %v138 = vld [vmem:[%s1 + $0x168] sm:$0xf]
    %v139 = vld [vmem:[%s1 + $0x16c] sm:$0xf]
    %v140 = vld [vmem:[%s1 + $0x170] sm:$0xf]
    %v141 = vld [vmem:[%s1 + $0x174] sm:$0xf]
    %v142 = vld [vmem:[%s1 + $0x178] sm:$0xf]
    %v143 = vld [vmem:[%s1 + $0x17c] sm:$0xf]
    %v144 = vld [vmem:[%s1 + $0x180] sm:$0xf]
    %v145 = vld [vmem:[%s1 + $0x184] sm:$0xf]
    %v146 = vld [vmem:[%s1 + $0x188] sm:$0xf]
    %v147 = vld [vmem:[%s1 + $0x18c] sm:$0xf]
    %v148 = vld [vmem:[%s1 + $0x190] sm:$0xf]
    %v149 = vld [vmem:[%s1 + $0x194] sm:$0xf]
    %v150 = vld [vmem:[%s1 + $0x198] sm:$0xf]
    %v151 = vld [vmem:[%s1 + $0x19c] sm:$0xf]
    %v152 = vld [vmem:[%s1 + $0x1a0] sm:$0xf]
    %v153 = vld [vmem:[%s1 + $0x1a4] sm:$0xf]
    %v154 = vld [vmem:[%s1 + $0x1a8] sm:$0xf]
    %v155 = vld [vmem:[%s1 + $0x1ac] sm:$0xf]
    %v156 = vld [vmem:[%s1 + $0x1b0] sm:$0xf]
    %v157 = vld [vmem:[%s1 + $0x1b4] sm:$0xf]
    %v158 = vld [vmem:[%s1 + $0x1b8] sm:$0xf]
    %v159 = vld [vmem:[%s1 + $0x1bc] sm:$0xf]
    %v160 = vld [vmem:[%s1 + $0x1c0] sm:$0xf]
    %v161 = vld [vmem:[%s1 + $0x1c4] sm:$0xf]
    %v162 = vld [vmem:[%s1 + $0x1c8] sm:$0xf]
    %v163 = vld [vmem:[%s1 + $0x1cc] sm:$0xf]
    %v164 = vld [vmem:[%s1 + $0x1d0] sm:$0xf]
    %v165 = vld [vmem:[%s1 + $0x1d4] sm:$0xf]
    %v166 = vld [vmem:[%s1 + $0x1d8] sm:$0xf]
    %v167 = vld [vmem:[%s1 + $0x1dc] sm:$0xf]
    %v168 = vld [vmem:[%s1 + $0x1e0] sm:$0xf]
    %v169 = vld [vmem:[%s1 + $0x1e4] sm:$0xf]
    %v170 = vld [vmem:[%s1 + $0x1e8] sm:$0xf]
    %v171 = vld [vmem:[%s1 + $0x1ec] sm:$0xf]
    %v172 = vld [vmem:[%s1 + $0x1f0] sm:$0xf]
    %v173 = vld [vmem:[%s1 + $0x1f4] sm:$0xf]
    %v174 = vld [vmem:[%s1 + $0x1f8] sm:$0xf]
    %v175 = vld [vmem:[%s1 + $0x1fc] sm:$0xf]
    %v176 = vld [vmem:[%s1 + $0x200] sm:$0xf]
    %v177 = vld [vmem:[%s1 + $0x204] sm:$0xf]
    %v178 = vld [vmem:[%s1 + $0x208] sm:$0xf]
    %v179 = vld [vmem:[%s1 + $0x20c] sm:$0xf]
    %v180 = vld [vmem:[%s1 + $0x210] sm:$0xf]
    %v181 = vld [vmem:[%s1 + $0x214] sm:$0xf]
    %v182 = vld [vmem:[%s1 + $0x218] sm:$0xf]
    %v183 = vld [vmem:[%s1 + $0x21c] sm:$0xf]
    %v184 = vld [vmem:[%s1 + $0x220] sm:$0xf]
    %v185 = vld [vmem:[%s1 + $0x224] sm:$0xf]
    %v186 = vld [vmem:[%s1 + $0x228] sm:$0xf]
    %v187 = vld [vmem:[%s1 + $0x22c] sm:$0xf]
    %v188 = vld [vmem:[%s1 + $0x230] sm:$0xf]
    %v189 = vld [vmem:[%s1 + $0x234] sm:$0xf]
    %v190 = vld [vmem:[%s1 + $0x238] sm:$0xf]
    %v191 = vld [vmem:[%s1 + $0x23c] sm:$0xf]
    %v192 = vld [vmem:[%s1 + $0x240] sm:$0xf]
    %v193 = vld [vmem:[%s1 + $0x244] sm:$0xf]
    %v194 = vld [vmem:[%s1 + $0x248] sm:$0xf]
    %v195 = vld [vmem:[%s1 + $0x24c] sm:$0xf]
    %v196 = vld [vmem:[%s1 + $0x250] sm:$0xf]
    %v197 = vld [vmem:[%s1 + $0x254] sm:$0xf]
    %v198 = vld [vmem:[%s1 + $0x258] sm:$0xf]
    %v199 = vld [vmem:[%s1 + $0x25c] sm:$0xf]
    %v200 = vld [vmem:[%s1 + $0x260] sm:$0xf]
    %v201 = vld [vmem:[%s1 + $0x264] sm:$0xf]
    %v202 = vld [vmem:[%s1 + $0x268] sm:$0xf]
    %v203 = vld [vmem:[%s1 + $0x26c] sm:$0xf]
    %v204 = vld [vmem:[%s1 + $0x270] sm:$0xf]
    %v205 = vld [vmem:[%s1 + $0x274] sm:$0xf]
    %v206 = vld [vmem:[%s1 + $0x278] sm:$0xf]
    %v207 = vld [vmem:[%s1 + $0x27c] sm:$0xf]
    %v208 = vld [vmem:[%s1 + $0x280] sm:$0xf]
    %v209 = vld [vmem:[%s1 + $0x284] sm:$0xf]
    %v210 = vld [vmem:[%s1 + $0x288] sm:$0xf]
    %v211 = vld [vmem:[%s1 + $0x28c] sm:$0xf]
    %v212 = vld [vmem:[%s1 + $0x290] sm:$0xf]
    %v213 = vld [vmem:[%s1 + $0x294] sm:$0xf]
    %v214 = vld [vmem:[%s1 + $0x298] sm:$0xf]
    %v215 = vld [vmem:[%s1 + $0x29c] sm:$0xf]
    %v216 = vld [vmem:[%s1 + $0x2a0] sm:$0xf]
    %v217 = vld [vmem:[%s1 + $0x2a4] sm:$0xf]
    %v218 = vld [vmem:[%s1 + $0x2a8] sm:$0xf]
    %v219 = vld [vmem:[%s1 + $0x2ac] sm:$0xf]
    %v220 = vld [vmem:[%s1 + $0x2b0] sm:$0xf]
    %v221 = vld [vmem:[%s1 + $0x2b4] sm:$0xf]
    %v222 = vld [vmem:[%s1 + $0x2b8] sm:$0xf]
    %v223 = vld [vmem:[%s1 + $0x2bc] sm:$0xf]
    %v224 = vld [vmem:[%s1 + $0x2c0] sm:$0xf]
    %v225 = vld [vmem:[%s1 + $0x2c4] sm:$0xf]
    %v226 = vld [vmem:[%s1 + $0x2c8] sm:$0xf]
    %v227 = vld [vmem:[%s1 + $0x2cc] sm:$0xf]
    %v228 = vld [vmem:[%s1 + $0x2d0] sm:$0xf]
    %v229 = vld [vmem:[%s1 + $0x2d4] sm:$0xf]
    %v230 = vld [vmem:[%s1 + $0x2d8] sm:$0xf]
    %v231 = vld [vmem:[%s1 + $0x2dc] sm:$0xf]
    %v232 = vld [vmem:[%s1 + $0x2e0] sm:$0xf]
    %v233 = vld [vmem:[%s1 + $0x2e4] sm:$0xf]
    %v234 = vld [vmem:[%s1 + $0x2e8] sm:$0xf]
    %v235 = vld [vmem:[%s1 + $0x2ec] sm:$0xf]
    %v236 = vld [vmem:[%s1 + $0x2f0] sm:$0xf]
    %v237 = vld [vmem:[%s1 + $0x2f4] sm:$0xf]
    %v238 = vld [vmem:[%s1 + $0x2f8] sm:$0xf]
    %v239 = vld [vmem:[%s1 + $0x2fc] sm:$0xf]
    %v240 = vld [vmem:[%s1 + $0x300] sm:$0xf]
    %v241 = vld [vmem:[%s1 + $0x304] sm:$0xf]
    %v242 = vld [vmem:[%s1 + $0x308] sm:$0xf]
    %v243 = vld [vmem:[%s1 + $0x30c] sm:$0xf]
    %v244 = vld [vmem:[%s2] sm:$0x1]
    %v246 = vlaneseq
    %v247 = vshrl.u32 %v246, 7
    %v248 = vsub.s32 0, %v247
    %v249 = vrot.slane %v244, %v248
    %v447 = vunpack.c.l.b16 %v48
    %v448 = vunpack.c.l.b16 %v49
    %v449 = vunpack.c.l.b16 %v50
    %v450 = vunpack.c.l.b16 %v51
    %v451 = vunpack.c.l.b16 %v52
    %v452 = vunpack.c.l.b16 %v53
    %v453 = vunpack.c.l.b16 %v54
    %v454 = vunpack.c.l.b16 %v55
    %v455 = vunpack.c.l.b16 %v56
    %v456 = vunpack.c.l.b16 %v57
    %v457 = vunpack.c.l.b16 %v58
    %v458 = vunpack.c.l.b16 %v59
    %v459 = vunpack.c.l.b16 %v60
    %v460 = vunpack.c.l.b16 %v61
    %v461 = vunpack.c.l.b16 %v62
    %v462 = vunpack.c.l.b16 %v63
    %v463 = vunpack.c.l.b16 %v64
    %v464 = vunpack.c.l.b16 %v65
    %v465 = vunpack.c.l.b16 %v66
    %v466 = vunpack.c.l.b16 %v67
    %v467 = vunpack.c.l.b16 %v68
    %v468 = vunpack.c.l.b16 %v69
    %v469 = vunpack.c.l.b16 %v70
    %v470 = vunpack.c.l.b16 %v71
    %v471 = vunpack.c.l.b16 %v72
    %v472 = vunpack.c.l.b16 %v73
    %v473 = vunpack.c.l.b16 %v74
    %v474 = vunpack.c.l.b16 %v75
    %v475 = vunpack.c.l.b16 %v76
    %v476 = vunpack.c.l.b16 %v77
    %v477 = vunpack.c.l.b16 %v78
    %v478 = vunpack.c.l.b16 %v79
    %v479 = vunpack.c.l.b16 %v80
    %v480 = vunpack.c.l.b16 %v81
    %v481 = vunpack.c.l.b16 %v82
    %v482 = vunpack.c.l.b16 %v83
    %v483 = vunpack.c.l.b16 %v84
    %v484 = vunpack.c.l.b16 %v85
    %v485 = vunpack.c.l.b16 %v86
    %v486 = vunpack.c.l.b16 %v87
    %v487 = vunpack.c.l.b16 %v88
    %v488 = vunpack.c.l.b16 %v89
    %v489 = vunpack.c.l.b16 %v90
    %v490 = vunpack.c.l.b16 %v91
    %v491 = vunpack.c.l.b16 %v92
    %v492 = vunpack.c.l.b16 %v93
    %v493 = vunpack.c.l.b16 %v94
    %v494 = vunpack.c.l.b16 %v95
    %v495 = vunpack.c.l.b16 %v96
    %v496 = vunpack.c.l.b16 %v97
    %v497 = vunpack.c.l.b16 %v98
    %v498 = vunpack.c.l.b16 %v99
    %v499 = vunpack.c.l.b16 %v100
    %v500 = vunpack.c.l.b16 %v101
    %v501 = vunpack.c.l.b16 %v102
    %v502 = vunpack.c.l.b16 %v103
    %v503 = vunpack.c.l.b16 %v104
    %v504 = vunpack.c.l.b16 %v105
    %v505 = vunpack.c.l.b16 %v106
    %v506 = vunpack.c.l.b16 %v107
    %v507 = vunpack.c.l.b16 %v108
    %v508 = vunpack.c.l.b16 %v109
    %v509 = vunpack.c.l.b16 %v110
    %v510 = vunpack.c.l.b16 %v111
    %v511 = vunpack.c.l.b16 %v112
    %v512 = vunpack.c.l.b16 %v113
    %v513 = vunpack.c.l.b16 %v114
    %v514 = vunpack.c.l.b16 %v115
    %v515 = vunpack.c.l.b16 %v116
    %v516 = vunpack.c.l.b16 %v117
    %v517 = vunpack.c.l.b16 %v118
    %v518 = vunpack.c.l.b16 %v119
    %v519 = vunpack.c.l.b16 %v120
    %v520 = vunpack.c.l.b16 %v121
    %v521 = vunpack.c.l.b16 %v122
    %v522 = vunpack.c.l.b16 %v123
    %v523 = vunpack.c.l.b16 %v124
    %v524 = vunpack.c.l.b16 %v125
    %v525 = vunpack.c.l.b16 %v126
    %v526 = vunpack.c.l.b16 %v127
    %v527 = vunpack.c.l.b16 %v128
    %v528 = vunpack.c.l.b16 %v129
    %v529 = vunpack.c.l.b16 %v130
    %v530 = vunpack.c.l.b16 %v131
    %v531 = vunpack.c.l.b16 %v132
    %v532 = vunpack.c.l.b16 %v133
    %v533 = vunpack.c.l.b16 %v134
    %v534 = vunpack.c.l.b16 %v135
    %v535 = vunpack.c.l.b16 %v136
    %v536 = vunpack.c.l.b16 %v137
    %v537 = vunpack.c.l.b16 %v138
    %v538 = vunpack.c.l.b16 %v139
    %v539 = vunpack.c.l.b16 %v140
    %v540 = vunpack.c.l.b16 %v141
    %v541 = vunpack.c.l.b16 %v142
    %v542 = vunpack.c.l.b16 %v143
    %v543 = vunpack.c.l.b16 %v144
    %v544 = vunpack.c.l.b16 %v145
    %v545 = vunpack.c.l.b16 %v146
    %v546 = vunpack.c.l.b16 %v147
    %v547 = vunpack.c.l.b16 %v148
    %v548 = vunpack.c.l.b16 %v149
    %v549 = vunpack.c.l.b16 %v150
    %v550 = vunpack.c.l.b16 %v151
    %v551 = vunpack.c.l.b16 %v152
    %v552 = vunpack.c.l.b16 %v153
    %v553 = vunpack.c.l.b16 %v154
    %v554 = vunpack.c.l.b16 %v155
    %v555 = vunpack.c.l.b16 %v156
    %v556 = vunpack.c.l.b16 %v157
    %v557 = vunpack.c.l.b16 %v158
    %v558 = vunpack.c.l.b16 %v159
    %v559 = vunpack.c.l.b16 %v160
    %v560 = vunpack.c.l.b16 %v161
    %v561 = vunpack.c.l.b16 %v162
    %v562 = vunpack.c.l.b16 %v163
    %v563 = vunpack.c.l.b16 %v164
    %v564 = vunpack.c.l.b16 %v165
    %v565 = vunpack.c.l.b16 %v166
    %v566 = vunpack.c.l.b16 %v167
    %v567 = vunpack.c.l.b16 %v168
    %v568 = vunpack.c.l.b16 %v169
    %v569 = vunpack.c.l.b16 %v170
    %v570 = vunpack.c.l.b16 %v171
    %v571 = vunpack.c.l.b16 %v172
    %v572 = vunpack.c.l.b16 %v173
    %v573 = vunpack.c.l.b16 %v174
    %v574 = vunpack.c.l.b16 %v175
    %v575 = vunpack.c.l.b16 %v176
    %v576 = vunpack.c.l.b16 %v177
    %v577 = vunpack.c.l.b16 %v178
    %v578 = vunpack.c.l.b16 %v179
    %v579 = vunpack.c.l.b16 %v180
    %v580 = vunpack.c.l.b16 %v181
    %v581 = vunpack.c.l.b16 %v182
    %v582 = vunpack.c.l.b16 %v183
    %v583 = vunpack.c.l.b16 %v184
    %v584 = vunpack.c.l.b16 %v185
    %v585 = vunpack.c.l.b16 %v186
    %v586 = vunpack.c.l.b16 %v187
    %v587 = vunpack.c.l.b16 %v188
    %v588 = vunpack.c.l.b16 %v189
    %v589 = vunpack.c.l.b16 %v190
    %v590 = vunpack.c.l.b16 %v191
    %v591 = vunpack.c.l.b16 %v192
    %v592 = vunpack.c.l.b16 %v193
    %v593 = vunpack.c.l.b16 %v194
    %v594 = vunpack.c.l.b16 %v195
    %v595 = vunpack.c.l.b16 %v196
    %v596 = vunpack.c.l.b16 %v197
    %v597 = vunpack.c.l.b16 %v198
    %v598 = vunpack.c.l.b16 %v199
    %v599 = vunpack.c.l.b16 %v200
    %v600 = vunpack.c.l.b16 %v201
    %v601 = vunpack.c.l.b16 %v202
    %v602 = vunpack.c.l.b16 %v203
    %v603 = vunpack.c.l.b16 %v204
    %v604 = vunpack.c.l.b16 %v205
    %v605 = vunpack.c.l.b16 %v206
    %v606 = vunpack.c.l.b16 %v207
    %v607 = vunpack.c.l.b16 %v208
    %v608 = vunpack.c.l.b16 %v209
    %v609 = vunpack.c.l.b16 %v210
    %v610 = vunpack.c.l.b16 %v211
    %v611 = vunpack.c.l.b16 %v212
    %v612 = vunpack.c.l.b16 %v213
    %v613 = vunpack.c.l.b16 %v214
    %v614 = vunpack.c.l.b16 %v215
    %v615 = vunpack.c.l.b16 %v216
    %v616 = vunpack.c.l.b16 %v217
    %v617 = vunpack.c.l.b16 %v218
    %v618 = vunpack.c.l.b16 %v219
    %v619 = vunpack.c.l.b16 %v220
    %v620 = vunpack.c.l.b16 %v221
    %v621 = vunpack.c.l.b16 %v222
    %v622 = vunpack.c.l.b16 %v223
    %v623 = vunpack.c.l.b16 %v224
    %v624 = vunpack.c.l.b16 %v225
    %v625 = vunpack.c.l.b16 %v226
    %v626 = vunpack.c.l.b16 %v227
    %v627 = vunpack.c.l.b16 %v228
    %v628 = vunpack.c.l.b16 %v229
    %v629 = vunpack.c.l.b16 %v230
    %v630 = vunpack.c.l.b16 %v231
    %v631 = vunpack.c.l.b16 %v232
    %v632 = vunpack.c.l.b16 %v233
    %v633 = vunpack.c.l.b16 %v234
    %v634 = vunpack.c.l.b16 %v235
    %v635 = vunpack.c.l.b16 %v236
    %v636 = vunpack.c.l.b16 %v237
    %v637 = vunpack.c.l.b16 %v238
    %v638 = vunpack.c.l.b16 %v239
    %v639 = vunpack.c.l.b16 %v240
    %v640 = vunpack.c.l.b16 %v241
    %v641 = vunpack.c.l.b16 %v242
    %v642 = vunpack.c.l.b16 %v243
    %v643 = vpack.c.b16 %v448, %v447
    %v644 = vpack.c.b16 %v450, %v449
    %v645 = vpack.c.b16 %v452, %v451
    %v646 = vpack.c.b16 %v454, %v453
    %v647 = vpack.c.b16 %v456, %v455
    %v648 = vpack.c.b16 %v458, %v457
    %v649 = vpack.c.b16 %v460, %v459
    %v650 = vpack.c.b16 %v462, %v461
    %v651 = vpack.c.b16 %v464, %v463
    %v652 = vpack.c.b16 %v466, %v465
    %v653 = vpack.c.b16 %v468, %v467
    %v654 = vpack.c.b16 %v470, %v469
    %v655 = vpack.c.b16 %v472, %v471
    %v656 = vpack.c.b16 %v474, %v473
    %v657 = vpack.c.b16 %v476, %v475
    %v658 = vpack.c.b16 %v478, %v477
    %v659 = vpack.c.b16 %v480, %v479
    %v660 = vpack.c.b16 %v482, %v481
    %v661 = vpack.c.b16 %v484, %v483
    %v662 = vpack.c.b16 %v486, %v485
    %v663 = vpack.c.b16 %v488, %v487
    %v664 = vpack.c.b16 %v490, %v489
    %v665 = vpack.c.b16 %v492, %v491
    %v666 = vpack.c.b16 %v494, %v493
    %v667 = vpack.c.b16 %v496, %v495
    %v668 = vpack.c.b16 %v498, %v497
    %v669 = vpack.c.b16 %v500, %v499
    %v670 = vpack.c.b16 %v502, %v501
    %v671 = vpack.c.b16 %v504, %v503
    %v672 = vpack.c.b16 %v506, %v505
    %v673 = vpack.c.b16 %v508, %v507
    %v674 = vpack.c.b16 %v510, %v509
    %v675 = vpack.c.b16 %v512, %v511
    %v676 = vpack.c.b16 %v514, %v513
    %v677 = vpack.c.b16 %v516, %v515
    %v678 = vpack.c.b16 %v518, %v517
    %v679 = vpack.c.b16 %v520, %v519
    %v680 = vpack.c.b16 %v522, %v521
    %v681 = vpack.c.b16 %v524, %v523
    %v682 = vpack.c.b16 %v526, %v525
    %v683 = vpack.c.b16 %v528, %v527
    %v684 = vpack.c.b16 %v530, %v529
    %v685 = vpack.c.b16 %v532, %v531
    %v686 = vpack.c.b16 %v534, %v533
    %v687 = vpack.c.b16 %v536, %v535
    %v688 = vpack.c.b16 %v538, %v537
    %v689 = vpack.c.b16 %v540, %v539
    %v690 = vpack.c.b16 %v542, %v541
    %v691 = vpack.c.b16 %v544, %v543
    %v692 = vpack.c.b16 %v546, %v545
    %v693 = vpack.c.b16 %v548, %v547
    %v694 = vpack.c.b16 %v550, %v549
    %v695 = vpack.c.b16 %v552, %v551
    %v696 = vpack.c.b16 %v554, %v553
    %v697 = vpack.c.b16 %v556, %v555
    %v698 = vpack.c.b16 %v558, %v557
    %v699 = vpack.c.b16 %v560, %v559
    %v700 = vpack.c.b16 %v562, %v561
    %v701 = vpack.c.b16 %v564, %v563
    %v702 = vpack.c.b16 %v566, %v565
    %v703 = vpack.c.b16 %v568, %v567
    %v704 = vpack.c.b16 %v570, %v569
    %v705 = vpack.c.b16 %v572, %v571
    %v706 = vpack.c.b16 %v574, %v573
    %v707 = vpack.c.b16 %v576, %v575
    %v708 = vpack.c.b16 %v578, %v577
    %v709 = vpack.c.b16 %v580, %v579
    %v710 = vpack.c.b16 %v582, %v581
    %v711 = vpack.c.b16 %v584, %v583
    %v712 = vpack.c.b16 %v586, %v585
    %v713 = vpack.c.b16 %v588, %v587
    %v714 = vpack.c.b16 %v590, %v589
    %v715 = vpack.c.b16 %v592, %v591
    %v716 = vpack.c.b16 %v594, %v593
    %v717 = vpack.c.b16 %v596, %v595
    %v718 = vpack.c.b16 %v598, %v597
    %v719 = vpack.c.b16 %v600, %v599
    %v720 = vpack.c.b16 %v602, %v601
    %v721 = vpack.c.b16 %v604, %v603
    %v722 = vpack.c.b16 %v606, %v605
    %v723 = vpack.c.b16 %v608, %v607
    %v724 = vpack.c.b16 %v610, %v609
    %v725 = vpack.c.b16 %v612, %v611
    %v726 = vpack.c.b16 %v614, %v613
    %v727 = vpack.c.b16 %v616, %v615
    %v728 = vpack.c.b16 %v618, %v617
    %v729 = vpack.c.b16 %v620, %v619
    %v730 = vpack.c.b16 %v622, %v621
    %v731 = vpack.c.b16 %v624, %v623
    %v732 = vpack.c.b16 %v626, %v625
    %v733 = vpack.c.b16 %v628, %v627
    %v734 = vpack.c.b16 %v630, %v629
    %v735 = vpack.c.b16 %v632, %v631
    %v736 = vpack.c.b16 %v634, %v633
    %v737 = vpack.c.b16 %v636, %v635
    %v738 = vpack.c.b16 %v638, %v637
    %v739 = vpack.c.b16 %v640, %v639
    %v740 = vpack.c.b16 %v642, %v641
    %vm839 = vcmask 261120
    %v841 = vsel %vm839, %v47, 0
    %843 = vmatprep.subr.bf16.mxu0 0
    %844 = vmatpush1.bf16.msra.mxu0 %v643
    %845 = vmatprep.subr.bf16.mxu0 0
    %846 = vmatpush1.bf16.msra.mxu0 %v644
    %847 = vmatprep.subr.bf16.mxu0 0
    %848 = vmatpush1.bf16.msra.mxu0 %v645
    %849 = vmatprep.subr.bf16.mxu0 0
    %850 = vmatpush1.bf16.msra.mxu0 %v646
    %851 = vmatprep.subr.bf16.mxu0 0
    %852 = vmatpush1.bf16.msra.mxu0 %v647
    %853 = vmatprep.subr.bf16.mxu0 0
    %854 = vmatpush1.bf16.msra.mxu0 %v648
    %855 = vmatprep.subr.bf16.mxu0 0
    %856 = vmatpush1.bf16.msra.mxu0 %v649
    %857 = vmatprep.subr.bf16.mxu0 0
    %858 = vmatpush1.bf16.msra.mxu0 %v650
    %859 = vmatprep.subr.bf16.mxu0 0
    %860 = vmatpush1.bf16.msra.mxu0 %v651
    %861 = vmatprep.subr.bf16.mxu0 0
    %862 = vmatpush1.bf16.msra.mxu0 %v652
    %863 = vmatprep.subr.bf16.mxu0 0
    %864 = vmatpush1.bf16.msra.mxu0 %v653
    %865 = vmatprep.subr.bf16.mxu0 0
    %866 = vmatpush1.bf16.msra.mxu0 %v654
    %867 = vmatprep.subr.bf16.mxu0 0
    %868 = vmatpush1.bf16.msra.mxu0 %v655
    %869 = vmatprep.subr.bf16.mxu0 0
    %870 = vmatpush1.bf16.msra.mxu0 %v656
    %871 = vmatprep.subr.bf16.mxu0 0
    %872 = vmatpush1.bf16.msra.mxu0 %v657
    %873 = vmatprep.subr.bf16.mxu0 0
    %874 = vmatpush1.bf16.msra.mxu0 %v658
    %875 = vmatprep.mubr.bf16.mxu0 %v36
    %876 = vmatmul.mubr.bf16.gmra.mrb[0].mxu0 %v35
    %v877 = vpop.f32.mrb[0].mxu0
    %v878 = vadd.f32 %v249, %v877
    %v879 = vpop.f32.mrb[0].mxu0
    %v880 = vpop.f32.mrb[0].mxu0
    %v881 = vpop.f32.mrb[0].mxu0
    %882 = vdwg.mxu0
    %883 = vmatprep.subr.bf16.mxu0 0
    %884 = vmatpush1.bf16.msra.mxu0 %v659
    %885 = vmatprep.subr.bf16.mxu0 0
    %886 = vmatpush1.bf16.msra.mxu0 %v660
    %887 = vmatprep.subr.bf16.mxu0 0
    %888 = vmatpush1.bf16.msra.mxu0 %v661
    %889 = vmatprep.subr.bf16.mxu0 0
    %890 = vmatpush1.bf16.msra.mxu0 %v662
    %891 = vmatprep.subr.bf16.mxu0 0
    %892 = vmatpush1.bf16.msra.mxu0 %v663
    %893 = vmatprep.subr.bf16.mxu0 0
    %894 = vmatpush1.bf16.msra.mxu0 %v664
    %895 = vmatprep.subr.bf16.mxu0 0
    %896 = vmatpush1.bf16.msra.mxu0 %v665
    %897 = vmatprep.subr.bf16.mxu0 0
    %898 = vmatpush1.bf16.msra.mxu0 %v666
    %899 = vmatprep.subr.bf16.mxu0 0
    %900 = vmatpush1.bf16.msra.mxu0 %v667
    %901 = vmatprep.subr.bf16.mxu0 0
    %902 = vmatpush1.bf16.msra.mxu0 %v668
    %903 = vmatprep.subr.bf16.mxu0 0
    %904 = vmatpush1.bf16.msra.mxu0 %v669
    %905 = vmatprep.subr.bf16.mxu0 0
    %906 = vmatpush1.bf16.msra.mxu0 %v670
    %907 = vmatprep.subr.bf16.mxu0 0
    %908 = vmatpush1.bf16.msra.mxu0 %v671
    %909 = vmatprep.subr.bf16.mxu0 0
    %910 = vmatpush1.bf16.msra.mxu0 %v672
    %911 = vmatprep.subr.bf16.mxu0 0
    %912 = vmatpush1.bf16.msra.mxu0 %v673
    %913 = vmatprep.subr.bf16.mxu0 0
    %914 = vmatpush1.bf16.msra.mxu0 %v674
    %915 = vmatprep.mubr.bf16.mxu0 %v38
    %916 = vmatmul.mubr.bf16.gmra.mrb[0].mxu0 %v37
    %v917 = vpop.f32.mrb[0].mxu0
    %v918 = vadd.f32 %v878, %v917
    %v919 = vpop.f32.mrb[0].mxu0
    %v920 = vpop.f32.mrb[0].mxu0
    %v921 = vpop.f32.mrb[0].mxu0
    %922 = vdwg.mxu0
    %923 = vmatprep.subr.bf16.mxu0 0
    %924 = vmatpush1.bf16.msra.mxu0 %v675
    %925 = vmatprep.subr.bf16.mxu0 0
    %926 = vmatpush1.bf16.msra.mxu0 %v676
    %927 = vmatprep.subr.bf16.mxu0 0
    %928 = vmatpush1.bf16.msra.mxu0 %v677
    %929 = vmatprep.subr.bf16.mxu0 0
    %930 = vmatpush1.bf16.msra.mxu0 %v678
    %931 = vmatprep.subr.bf16.mxu0 0
    %932 = vmatpush1.bf16.msra.mxu0 %v679
    %933 = vmatprep.subr.bf16.mxu0 0
    %934 = vmatpush1.bf16.msra.mxu0 %v680
    %935 = vmatprep.subr.bf16.mxu0 0
    %936 = vmatpush1.bf16.msra.mxu0 %v681
    %937 = vmatprep.subr.bf16.mxu0 0
    %938 = vmatpush1.bf16.msra.mxu0 %v682
    %939 = vmatprep.subr.bf16.mxu0 0
    %940 = vmatpush1.bf16.msra.mxu0 %v683
    %941 = vmatprep.subr.bf16.mxu0 0
    %942 = vmatpush1.bf16.msra.mxu0 %v684
    %943 = vmatprep.subr.bf16.mxu0 0
    %944 = vmatpush1.bf16.msra.mxu0 %v685
    %945 = vmatprep.subr.bf16.mxu0 0
    %946 = vmatpush1.bf16.msra.mxu0 %v686
    %947 = vmatprep.subr.bf16.mxu0 0
    %948 = vmatpush1.bf16.msra.mxu0 %v687
    %949 = vmatprep.subr.bf16.mxu0 0
    %950 = vmatpush1.bf16.msra.mxu0 %v688
    %951 = vmatprep.subr.bf16.mxu0 0
    %952 = vmatpush1.bf16.msra.mxu0 %v689
    %953 = vmatprep.subr.bf16.mxu0 0
    %954 = vmatpush1.bf16.msra.mxu0 %v690
    %955 = vmatprep.mubr.bf16.mxu0 %v40
    %956 = vmatmul.mubr.bf16.gmra.mrb[0].mxu0 %v39
    %v957 = vpop.f32.mrb[0].mxu0
    %v958 = vadd.f32 %v918, %v957
    %v959 = vpop.f32.mrb[0].mxu0
    %v960 = vpop.f32.mrb[0].mxu0
    %v961 = vpop.f32.mrb[0].mxu0
    %962 = vdwg.mxu0
    %963 = vmatprep.subr.bf16.mxu0 0
    %964 = vmatpush1.bf16.msra.mxu0 %v691
    %965 = vmatprep.subr.bf16.mxu0 0
    %966 = vmatpush1.bf16.msra.mxu0 %v692
    %967 = vmatprep.subr.bf16.mxu0 0
    %968 = vmatpush1.bf16.msra.mxu0 %v693
    %969 = vmatprep.subr.bf16.mxu0 0
    %970 = vmatpush1.bf16.msra.mxu0 %v694
    %971 = vmatprep.subr.bf16.mxu0 0
    %972 = vmatpush1.bf16.msra.mxu0 %v695
    %973 = vmatprep.subr.bf16.mxu0 0
    %974 = vmatpush1.bf16.msra.mxu0 %v696
    %975 = vmatprep.subr.bf16.mxu0 0
    %976 = vmatpush1.bf16.msra.mxu0 %v697
    %977 = vmatprep.subr.bf16.mxu0 0
    %978 = vmatpush1.bf16.msra.mxu0 %v698
    %979 = vmatprep.subr.bf16.mxu0 0
    %980 = vmatpush1.bf16.msra.mxu0 %v699
    %981 = vmatprep.subr.bf16.mxu0 0
    %982 = vmatpush1.bf16.msra.mxu0 %v700
    %983 = vmatprep.subr.bf16.mxu0 0
    %984 = vmatpush1.bf16.msra.mxu0 %v701
    %985 = vmatprep.subr.bf16.mxu0 0
    %986 = vmatpush1.bf16.msra.mxu0 %v702
    %987 = vmatprep.subr.bf16.mxu0 0
    %988 = vmatpush1.bf16.msra.mxu0 %v703
    %989 = vmatprep.subr.bf16.mxu0 0
    %990 = vmatpush1.bf16.msra.mxu0 %v704
    %991 = vmatprep.subr.bf16.mxu0 0
    %992 = vmatpush1.bf16.msra.mxu0 %v705
    %993 = vmatprep.subr.bf16.mxu0 0
    %994 = vmatpush1.bf16.msra.mxu0 %v706
    %995 = vmatprep.mubr.bf16.mxu0 %v42
    %996 = vmatmul.mubr.bf16.gmra.mrb[0].mxu0 %v41
    %v997 = vpop.f32.mrb[0].mxu0
    %v998 = vadd.f32 %v958, %v997
    %v999 = vpop.f32.mrb[0].mxu0
    %v1000 = vpop.f32.mrb[0].mxu0
    %v1001 = vpop.f32.mrb[0].mxu0
    %1002 = vdwg.mxu0
    %1003 = vmatprep.subr.bf16.mxu0 0
    %1004 = vmatpush1.bf16.msra.mxu0 %v707
    %1005 = vmatprep.subr.bf16.mxu0 0
    %1006 = vmatpush1.bf16.msra.mxu0 %v708
    %1007 = vmatprep.subr.bf16.mxu0 0
    %1008 = vmatpush1.bf16.msra.mxu0 %v709
    %1009 = vmatprep.subr.bf16.mxu0 0
    %1010 = vmatpush1.bf16.msra.mxu0 %v710
    %1011 = vmatprep.subr.bf16.mxu0 0
    %1012 = vmatpush1.bf16.msra.mxu0 %v711
    %1013 = vmatprep.subr.bf16.mxu0 0
    %1014 = vmatpush1.bf16.msra.mxu0 %v712
    %1015 = vmatprep.subr.bf16.mxu0 0
    %1016 = vmatpush1.bf16.msra.mxu0 %v713
    %1017 = vmatprep.subr.bf16.mxu0 0
    %1018 = vmatpush1.bf16.msra.mxu0 %v714
    %1019 = vmatprep.subr.bf16.mxu0 0
    %1020 = vmatpush1.bf16.msra.mxu0 %v715
    %1021 = vmatprep.subr.bf16.mxu0 0
    %1022 = vmatpush1.bf16.msra.mxu0 %v716
    %1023 = vmatprep.subr.bf16.mxu0 0
    %1024 = vmatpush1.bf16.msra.mxu0 %v717
    %1025 = vmatprep.subr.bf16.mxu0 0
    %1026 = vmatpush1.bf16.msra.mxu0 %v718
    %1027 = vmatprep.subr.bf16.mxu0 0
    %1028 = vmatpush1.bf16.msra.mxu0 %v719
    %1029 = vmatprep.subr.bf16.mxu0 0
    %1030 = vmatpush1.bf16.msra.mxu0 %v720
    %1031 = vmatprep.subr.bf16.mxu0 0
    %1032 = vmatpush1.bf16.msra.mxu0 %v721
    %1033 = vmatprep.subr.bf16.mxu0 0
    %1034 = vmatpush1.bf16.msra.mxu0 %v722
    %1035 = vmatprep.mubr.bf16.mxu0 %v44
    %1036 = vmatmul.mubr.bf16.gmra.mrb[0].mxu0 %v43
    %v1037 = vpop.f32.mrb[0].mxu0
    %v1038 = vadd.f32 %v998, %v1037
    %v1039 = vpop.f32.mrb[0].mxu0
    %v1040 = vpop.f32.mrb[0].mxu0
    %v1041 = vpop.f32.mrb[0].mxu0
    %1042 = vdwg.mxu0
    %1043 = vmatprep.subr.bf16.mxu0 0
    %1044 = vmatpush1.bf16.msra.mxu0 %v723
    %1045 = vmatprep.subr.bf16.mxu0 0
    %1046 = vmatpush1.bf16.msra.mxu0 %v724
    %1047 = vmatprep.subr.bf16.mxu0 0
    %1048 = vmatpush1.bf16.msra.mxu0 %v725
    %1049 = vmatprep.subr.bf16.mxu0 0
    %1050 = vmatpush1.bf16.msra.mxu0 %v726
    %1051 = vmatprep.subr.bf16.mxu0 0
    %1052 = vmatpush1.bf16.msra.mxu0 %v727
    %1053 = vmatprep.subr.bf16.mxu0 0
    %1054 = vmatpush1.bf16.msra.mxu0 %v728
    %1055 = vmatprep.subr.bf16.mxu0 0
    %1056 = vmatpush1.bf16.msra.mxu0 %v729
    %1057 = vmatprep.subr.bf16.mxu0 0
    %1058 = vmatpush1.bf16.msra.mxu0 %v730
    %1059 = vmatprep.subr.bf16.mxu0 0
    %1060 = vmatpush1.bf16.msra.mxu0 %v731
    %1061 = vmatprep.subr.bf16.mxu0 0
    %1062 = vmatpush1.bf16.msra.mxu0 %v732
    %1063 = vmatprep.subr.bf16.mxu0 0
    %1064 = vmatpush1.bf16.msra.mxu0 %v733
    %1065 = vmatprep.subr.bf16.mxu0 0
    %1066 = vmatpush1.bf16.msra.mxu0 %v734
    %1067 = vmatprep.subr.bf16.mxu0 0
    %1068 = vmatpush1.bf16.msra.mxu0 %v735
    %1069 = vmatprep.subr.bf16.mxu0 0
    %1070 = vmatpush1.bf16.msra.mxu0 %v736
    %1071 = vmatprep.subr.bf16.mxu0 0
    %1072 = vmatpush1.bf16.msra.mxu0 %v737
    %1073 = vmatprep.subr.bf16.mxu0 0
    %1074 = vmatpush1.bf16.msra.mxu0 %v738
    %1075 = vmatprep.mubr.bf16.mxu0 %v46
    %1076 = vmatmul.mubr.bf16.gmra.mrb[0].mxu0 %v45
    %v1077 = vpop.f32.mrb[0].mxu0
    %v1078 = vadd.f32 %v1038, %v1077
    %v1079 = vpop.f32.mrb[0].mxu0
    %v1080 = vpop.f32.mrb[0].mxu0
    %v1081 = vpop.f32.mrb[0].mxu0
    %1082 = vdwg.mxu0
    %1083 = vmatprep.subr.bf16.mxu0 0
    %1084 = vmatpush1.bf16.msra.mxu0 %v739
    %1085 = vmatprep.subr.bf16.mxu0 0
    %1086 = vmatpush1.bf16.msra.mxu0 %v740
    %1087 = vmatprep.subr.bf16.mxu0 0
    %1088 = vmatpush1.bf16.msra.mxu0 0
    %1089 = vmatprep.subr.bf16.mxu0 0
    %1090 = vmatpush1.bf16.msra.mxu0 0
    %1091 = vmatprep.subr.bf16.mxu0 0
    %1092 = vmatpush1.bf16.msra.mxu0 0
    %1093 = vmatprep.subr.bf16.mxu0 0
    %1094 = vmatpush1.bf16.msra.mxu0 0
    %1095 = vmatprep.subr.bf16.mxu0 0
    %1096 = vmatpush1.bf16.msra.mxu0 0
    %1097 = vmatprep.subr.bf16.mxu0 0
    %1098 = vmatpush1.bf16.msra.mxu0 0
    %1099 = vmatprep.subr.bf16.mxu0 0
    %1100 = vmatpush1.bf16.msra.mxu0 0
    %1101 = vmatprep.subr.bf16.mxu0 0
    %1102 = vmatpush1.bf16.msra.mxu0 0
    %1103 = vmatprep.subr.bf16.mxu0 0
    %1104 = vmatpush1.bf16.msra.mxu0 0
    %1105 = vmatprep.subr.bf16.mxu0 0
    %1106 = vmatpush1.bf16.msra.mxu0 0
    %1107 = vmatprep.subr.bf16.mxu0 0
    %1108 = vmatpush1.bf16.msra.mxu0 0
    %1109 = vmatprep.subr.bf16.mxu0 0
    %1110 = vmatpush1.bf16.msra.mxu0 0
    %1111 = vmatprep.subr.bf16.mxu0 0
    %1112 = vmatpush1.bf16.msra.mxu0 0
    %1113 = vmatprep.subr.bf16.mxu0 0
    %1114 = vmatpush1.bf16.msra.mxu0 0
    %1115 = vmatprep.mubr.bf16.mxu0 0
    %1116 = vmatmul.mubr.bf16.gmra.mrb[0].mxu0 %v841
    %v1117 = vpop.f32.mrb[0].mxu0
    %v1118 = vadd.f32 %v1078, %v1117
    %v1119 = vpop.f32.mrb[0].mxu0
    %v1120 = vpop.f32.mrb[0].mxu0
    %v1121 = vpop.f32.mrb[0].mxu0
    %1122 = vdwg.mxu0
    %v1123 = vmax.f32 %v1118, 0.0
    %v1124 = vpack.c.bf16 %v1123, %v1123
    %v1125 = vld [vmem:[%s3] sm:$0xf]
    %v1126 = vld [vmem:[%s3 + $0x4] sm:$0xf]
    %v1127 = vld [vmem:[%s3 + $0x8] sm:$0xf]
    %v1128 = vld [vmem:[%s3 + $0xc] sm:$0xf]
    %v1129 = vld [vmem:[%s3 + $0x10] sm:$0xf]
    %v1130 = vld [vmem:[%s3 + $0x14] sm:$0xf]
    %v1131 = vld [vmem:[%s3 + $0x18] sm:$0xf]
    %v1132 = vld [vmem:[%s3 + $0x1c] sm:$0xf]
    %v1133 = vld [vmem:[%s3 + $0x20] sm:$0xf]
    %v1134 = vld [vmem:[%s3 + $0x24] sm:$0xf]
    %v1135 = vld [vmem:[%s3 + $0x28] sm:$0xf]
    %v1136 = vld [vmem:[%s3 + $0x2c] sm:$0xf]
    %v1137 = vld [vmem:[%s3 + $0x30] sm:$0xf]
    %v1138 = vld [vmem:[%s3 + $0x34] sm:$0xf]
    %v1139 = vld [vmem:[%s3 + $0x38] sm:$0xf]
    %v1140 = vld [vmem:[%s3 + $0x3c] sm:$0xf]
    %v1141 = vld [vmem:[%s4] sm:$0x1]
    %v1143 = vlaneseq
    %v1144 = vshrl.u32 %v1143, 7
    %v1145 = vsub.s32 0, %v1144
    %v1146 = vrot.slane %v1141, %v1145
    %v1164 = vunpack.c.l.b16 %v1125
    %v1165 = vunpack.c.l.b16 %v1126
    %v1166 = vunpack.c.l.b16 %v1127
    %v1167 = vunpack.c.l.b16 %v1128
    %v1168 = vunpack.c.l.b16 %v1129
    %v1169 = vunpack.c.l.b16 %v1130
    %v1170 = vunpack.c.l.b16 %v1131
    %v1171 = vunpack.c.l.b16 %v1132
    %v1172 = vunpack.c.l.b16 %v1133
    %v1173 = vunpack.c.l.b16 %v1134
    %v1174 = vunpack.c.l.b16 %v1135
    %v1175 = vunpack.c.l.b16 %v1136
    %v1176 = vunpack.c.l.b16 %v1137
    %v1177 = vunpack.c.l.b16 %v1138
    %v1178 = vunpack.c.l.b16 %v1139
    %v1179 = vunpack.c.l.b16 %v1140
    %v1180 = vpack.c.b16 %v1165, %v1164
    %v1181 = vpack.c.b16 %v1167, %v1166
    %v1182 = vpack.c.b16 %v1169, %v1168
    %v1183 = vpack.c.b16 %v1171, %v1170
    %v1184 = vpack.c.b16 %v1173, %v1172
    %v1185 = vpack.c.b16 %v1175, %v1174
    %v1186 = vpack.c.b16 %v1177, %v1176
    %v1187 = vpack.c.b16 %v1179, %v1178
    %1196 = vmatprep.subr.bf16.mxu0 0
    %1197 = vmatpush1.bf16.msra.mxu0 %v1180
    %1198 = vmatprep.subr.bf16.mxu0 0
    %1199 = vmatpush1.bf16.msra.mxu0 %v1181
    %1200 = vmatprep.subr.bf16.mxu0 0
    %1201 = vmatpush1.bf16.msra.mxu0 %v1182
    %1202 = vmatprep.subr.bf16.mxu0 0
    %1203 = vmatpush1.bf16.msra.mxu0 %v1183
    %1204 = vmatprep.subr.bf16.mxu0 0
    %1205 = vmatpush1.bf16.msra.mxu0 %v1184
    %1206 = vmatprep.subr.bf16.mxu0 0
    %1207 = vmatpush1.bf16.msra.mxu0 %v1185
    %1208 = vmatprep.subr.bf16.mxu0 0
    %1209 = vmatpush1.bf16.msra.mxu0 %v1186
    %1210 = vmatprep.subr.bf16.mxu0 0
    %1211 = vmatpush1.bf16.msra.mxu0 %v1187
    %1212 = vmatprep.subr.bf16.mxu0 0
    %1213 = vmatpush1.bf16.msra.mxu0 0
    %1214 = vmatprep.subr.bf16.mxu0 0
    %1215 = vmatpush1.bf16.msra.mxu0 0
    %1216 = vmatprep.subr.bf16.mxu0 0
    %1217 = vmatpush1.bf16.msra.mxu0 0
    %1218 = vmatprep.subr.bf16.mxu0 0
    %1219 = vmatpush1.bf16.msra.mxu0 0
    %1220 = vmatprep.subr.bf16.mxu0 0
    %1221 = vmatpush1.bf16.msra.mxu0 0
    %1222 = vmatprep.subr.bf16.mxu0 0
    %1223 = vmatpush1.bf16.msra.mxu0 0
    %1224 = vmatprep.subr.bf16.mxu0 0
    %1225 = vmatpush1.bf16.msra.mxu0 0
    %1226 = vmatprep.subr.bf16.mxu0 0
    %1227 = vmatpush1.bf16.msra.mxu0 0
    %1228 = vmatprep.mubr.bf16.mxu0 0
    %1229 = vmatmul.mubr.bf16.gmra.mrb[0].mxu0 %v1124
    %v1230 = vpop.f32.mrb[0].mxu0
    %v1231 = vadd.f32 %v1146, %v1230
    %v1232 = vpop.f32.mrb[0].mxu0
    %v1233 = vpop.f32.mrb[0].mxu0
    %v1234 = vpop.f32.mrb[0].mxu0
    %1235 = vdwg.mxu0
    %1236 = vst [vmem:[#allocation2] sm:$0xff] %v1231
    // Predicated region
    $region22: #{blood_mnist_forward.3} parent=1 // pred_check
      _
    $region23: #{blood_mnist_forward.3} parent=1 // pred_check_branch
      %1238 = sbr.rel (0) target = $region25
    $region24: #{blood_mnist_forward.3} parent=1 // pred_region
      %s1240 = ssub.s32 128, 128
      %1241 = vsyncadd [#allocation3], %s1240
      %s1243 = sshll.u32 [#allocation2], 4
      %s1244 = int_to_ptr.vmem [resolvable:$true] %s1243
      %1246 = dma.vmem_to_hbm [thread:$0]  %s1244, 128, %s5, [#allocation3]
    $region25: #{blood_mnist_forward.3} parent=1 // pred_fallthru
      _
    // Predicated region
    $region26: #{blood_mnist_forward.3} parent=1 // pred_check
      _
    $region27: #{blood_mnist_forward.3} parent=1 // pred_check_branch
      %1248 = sbr.rel (0) target = $region29
    $region28: #{blood_mnist_forward.3} parent=1 // pred_region
      %1249 = dma.done [#allocation3], 128
    $region29: #{blood_mnist_forward.3} parent=1 // pred_fallthru
      _
    %1250 = vsyncpa [#allocation3], 1

// kernel: blood_mnist_forward.2
$region0: #{blood_mnist_forward.2}
  #allocation0 [shape = 'u32[]', space=smem, size = 0x4, offset = 0x4, fixed_abs, tag = 'smem constant byte address 0x4 - core index']
  #allocation1 [shape = 'u32[144,128]{1,0:T(1,128)}', space=vmem, size = 0x12000, scoped, tag = 'internal scratch']
  #allocation2 [shape = 'bf16[896,108]{1,0:T(16,128)(2,1)}', space=vmem, size = 0x38000, scoped, tag = 'scratch operand']
  #allocation3 [shape = 'f32[896,64]{1,0:T(8,128)}', space=vmem, size = 0x70000, scoped, tag = 'scratch operand']
  #allocation4 [shape = 'f32[288,64]{1,0:T(8,128)}', space=vmem, size = 0x24000, scoped, tag = 'scratch operand']
  #allocation5 [shape = 'bf16[224,576]{1,0:T(16,128)(2,1)}', space=vmem, size = 0x46000, scoped, tag = 'scratch operand']
  #allocation6 [shape = 'f32[224,128]{1,0:T(8,128)}', space=vmem, size = 0x1c000, scoped, tag = 'scratch operand']
  %s0 = inlined_call_operand.vmem [shape: f32[2,1024,12], index: 0, kind: input, shape index: {}]
  %s1 = inlined_call_operand.vmem [shape: bf16[108,64], index: 1, kind: input, shape index: {}]
  %s2 = inlined_call_operand.vmem [shape: f32[1,64], index: 2, kind: input, shape index: {}]
  %s3 = inlined_call_operand.vmem [shape: bf16[576,128], index: 3, kind: input, shape index: {}]
  %s4 = inlined_call_operand.vmem [shape: f32[1,128], index: 4, kind: input, shape index: {}]
  %s5 = inlined_call_operand.vmem [shape: f32[2,49,128], index: 5, kind: output, shape index: {}]
  %s6 = sld [smem:[#allocation0]]
  $region53: #{blood_mnist_forward.2} parent=0
    _
  %s8 = ssub.s32 1, %s6
  %s9 = scalar_select 0, %s8, %s6
  loop: start=0, step=1, limit=4
  $region2: #{blood_mnist_forward.2} parent=0 // loop_pre_header
    _
  $region3: #{blood_mnist_forward.2} parent=0 // loop_header
    %s11 = sphi 0, %s15
    %p12 = scmp.ge.s32.totalorder %s11, 4
    %s21 = sphi 0, %s23
    %s24 = sphi 0, %s21
    %s25 = sphi 0, %s24
    %s41 = sphi 0, %s25
    %s45 = sphi 0, %s45
    %s47 = sphi 0, %s45
    %s48 = sphi 0, %s47
    %s62 = sphi 0, %s48
    %s66 = sphi 0, %s66
    %s68 = sphi 0, %s66
    %s69 = sphi 0, %s68
    %s83 = sphi 0, %s69
    %s87 = sphi 0, %s87
    %s89 = sphi 0, %s87
    %s90 = sphi 0, %s89
    %s104 = sphi 0, %s90
    %s108 = sphi 0, %s108
    %s110 = sphi 0, %s108
    %s111 = sphi 0, %s110
    %s125 = sphi 0, %s111
    %s131 = sphi 0, %s133
    %s134 = sphi 0, %s131
    %s135 = sphi 0, %s134
    %s151 = sphi 0, %s135
  $region4: #{blood_mnist_forward.2} parent=0 // loop_header_branch
    %14 = sbr.rel (%p12) target = $region8
  $region5: #{blood_mnist_forward.2} parent=0 // loop_body
    %s16 = ssub.s32 %s11, 1
    %s17 = ssub.s32 %s11, 2
    %s18 = sadd.s32 %s11, 1
    %s19 = ssub.s32 %s11, %s18
    %p20 = scmp.eq.s32.totalorder %s19, 0
    %s22 = sadd.s32 %s21, 1
    %s23 = scalar_select %p20, %s21, %s22
    %p26 = pneg %p20
    %p27 = scmp.eq.s32.totalorder %s11, 1
    %p28 = por %p26, %p27
    %p29 = scmp.ne.s32.totalorder %s21, %s24
    %p30 = scmp.eq.s32.totalorder %s11, 0
    %p31 = por %p29, %p30
    %p32 = scmp.ne.s32.totalorder %s21, %s24
    %p33 = scmp.eq.s32.totalorder %s16, 1
    %p34 = por %p32, %p33
    %p35 = scmp.ne.s32.totalorder %s24, %s25
    %p36 = scmp.eq.s32.totalorder %s16, 0
    %p37 = por %p35, %p36
    %p38 = scmp.ne.s32.totalorder %s24, %s25
    %p39 = scmp.eq.s32.totalorder %s17, 1
    %p40 = por %p38, %p39
    %p42 = scmp.ne.s32.totalorder %s25, %s41
    %p43 = scmp.eq.s32.totalorder %s17, 0
    %p44 = por %p42, %p43
    %s46 = sadd.s32 %s45, 1
    %p49 = scmp.eq.s32.totalorder %s11, 1
    %p50 = scmp.ne.s32.totalorder %s45, %s47
    %p51 = scmp.eq.s32.totalorder %s11, 0
    %p52 = por %p50, %p51
    %p53 = scmp.ne.s32.totalorder %s45, %s47
    %p54 = scmp.eq.s32.totalorder %s16, 1
    %p55 = por %p53, %p54
    %p56 = scmp.ne.s32.totalorder %s47, %s48
    %p57 = scmp.eq.s32.totalorder %s16, 0
    %p58 = por %p56, %p57
    %p59 = scmp.ne.s32.totalorder %s47, %s48
    %p60 = scmp.eq.s32.totalorder %s17, 1
    %p61 = por %p59, %p60
    %p63 = scmp.ne.s32.totalorder %s48, %s62
    %p64 = scmp.eq.s32.totalorder %s17, 0
    %p65 = por %p63, %p64
    %s67 = sadd.s32 %s66, 1
    %p70 = scmp.eq.s32.totalorder %s11, 1
    %p71 = scmp.ne.s32.totalorder %s66, %s68
    %p72 = scmp.eq.s32.totalorder %s11, 0
    %p73 = por %p71, %p72
    %p74 = scmp.ne.s32.totalorder %s66, %s68
    %p75 = scmp.eq.s32.totalorder %s16, 1
    %p76 = por %p74, %p75
    %p77 = scmp.ne.s32.totalorder %s68, %s69
    %p78 = scmp.eq.s32.totalorder %s16, 0
    %p79 = por %p77, %p78
    %p80 = scmp.ne.s32.totalorder %s68, %s69
    %p81 = scmp.eq.s32.totalorder %s17, 1
    %p82 = por %p80, %p81
    %p84 = scmp.ne.s32.totalorder %s69, %s83
    %p85 = scmp.eq.s32.totalorder %s17, 0
    %p86 = por %p84, %p85
    %s88 = sadd.s32 %s87, 1
    %p91 = scmp.eq.s32.totalorder %s11, 1
    %p92 = scmp.ne.s32.totalorder %s87, %s89
    %p93 = scmp.eq.s32.totalorder %s11, 0
    %p94 = por %p92, %p93
    %p95 = scmp.ne.s32.totalorder %s87, %s89
    %p96 = scmp.eq.s32.totalorder %s16, 1
    %p97 = por %p95, %p96
    %p98 = scmp.ne.s32.totalorder %s89, %s90
    %p99 = scmp.eq.s32.totalorder %s16, 0
    %p100 = por %p98, %p99
    %p101 = scmp.ne.s32.totalorder %s89, %s90
    %p102 = scmp.eq.s32.totalorder %s17, 1
    %p103 = por %p101, %p102
    %p105 = scmp.ne.s32.totalorder %s90, %s104
    %p106 = scmp.eq.s32.totalorder %s17, 0
    %p107 = por %p105, %p106
    %s109 = sadd.s32 %s108, 1
    %p112 = scmp.eq.s32.totalorder %s11, 1
    %p113 = scmp.ne.s32.totalorder %s108, %s110
    %p114 = scmp.eq.s32.totalorder %s11, 0
    %p115 = por %p113, %p114
    %p116 = scmp.ne.s32.totalorder %s108, %s110
    %p117 = scmp.eq.s32.totalorder %s16, 1
    %p118 = por %p116, %p117
    %p119 = scmp.ne.s32.totalorder %s110, %s111
    %p120 = scmp.eq.s32.totalorder %s16, 0
    %p121 = por %p119, %p120
    %p122 = scmp.ne.s32.totalorder %s110, %s111
    %p123 = scmp.eq.s32.totalorder %s17, 1
    %p124 = por %p122, %p123
    %p126 = scmp.ne.s32.totalorder %s111, %s125
    %p127 = scmp.eq.s32.totalorder %s17, 0
    %p128 = por %p126, %p127
    %s129 = ssub.s32 %s11, %s18
    %p130 = scmp.eq.s32.totalorder %s129, 0
    %s132 = sadd.s32 %s131, 1
    %s133 = scalar_select %p130, %s131, %s132
    %p136 = pneg %p130
    %p137 = scmp.eq.s32.totalorder %s11, 1
    %p138 = por %p136, %p137
    %p139 = scmp.ne.s32.totalorder %s131, %s134
    %p140 = scmp.eq.s32.totalorder %s11, 0
    %p141 = por %p139, %p140
    %p142 = scmp.ne.s32.totalorder %s131, %s134
    %p143 = scmp.eq.s32.totalorder %s16, 1
    %p144 = por %p142, %p143
    %p145 = scmp.ne.s32.totalorder %s134, %s135
    %p146 = scmp.eq.s32.totalorder %s16, 0
    %p147 = por %p145, %p146
    %p148 = scmp.ne.s32.totalorder %s134, %s135
    %p149 = scmp.eq.s32.totalorder %s17, 1
    %p150 = por %p148, %p149
    %p152 = scmp.ne.s32.totalorder %s135, %s151
    %p153 = scmp.eq.s32.totalorder %s17, 0
    %p154 = por %p152, %p153
    %p155 = scmp.le.s32.totalorder 1, %s11
    %p156 = scmp.lt.s32.totalorder %s11, 3
    %p157 = pnand %p155, %p156
    %p158 = pneg %p157
    // Predicated region
    $region9: #{blood_mnist_forward.2} parent=5 // pred_check
      _
    $region10: #{blood_mnist_forward.2} parent=5 // pred_check_branch
      %160 = sbr.rel (%p157) target = $region12
    $region11: #{blood_mnist_forward.2} parent=5 // pred_region
      %s161 = ssub.s32 %s11, 1
      // Predicated region
      $region13: #{blood_mnist_forward.2} parent=11 // pred_check
        %p162 = pneg %p58
      $region14: #{blood_mnist_forward.2} parent=11 // pred_check_branch
        %164 = sbr.rel (%p162) target = $region16
      $region15: #{blood_mnist_forward.2} parent=11 // pred_region
        _
      $region16: #{blood_mnist_forward.2} parent=11 // pred_fallthru
        _
      // Predicated region
      $region17: #{blood_mnist_forward.2} parent=11 // pred_check
        %p165 = pneg %p79
      $region18: #{blood_mnist_forward.2} parent=11 // pred_check_branch
        %167 = sbr.rel (%p165) target = $region20
      $region19: #{blood_mnist_forward.2} parent=11 // pred_region
        _
      $region20: #{blood_mnist_forward.2} parent=11 // pred_fallthru
        _
      // Predicated region
      $region21: #{blood_mnist_forward.2} parent=11 // pred_check
        %p168 = pneg %p100
      $region22: #{blood_mnist_forward.2} parent=11 // pred_check_branch
        %170 = sbr.rel (%p168) target = $region24
      $region23: #{blood_mnist_forward.2} parent=11 // pred_region
        _
      $region24: #{blood_mnist_forward.2} parent=11 // pred_fallthru
        _
      // Predicated region
      $region25: #{blood_mnist_forward.2} parent=11 // pred_check
        %p171 = pneg %p121
      $region26: #{blood_mnist_forward.2} parent=11 // pred_check_branch
        %173 = sbr.rel (%p171) target = $region28
      $region27: #{blood_mnist_forward.2} parent=11 // pred_region
        _
      $region28: #{blood_mnist_forward.2} parent=11 // pred_fallthru
        _
    $region12: #{blood_mnist_forward.2} parent=5 // pred_fallthru
      _
    %p174 = scmp.lt.s32.totalorder %s11, 2
    // Predicated region
    $region29: #{blood_mnist_forward.2} parent=5 // pred_check
      %p175 = pneg %p174
    $region30: #{blood_mnist_forward.2} parent=5 // pred_check_branch
      %177 = sbr.rel (%p175) target = $region32
    $region31: #{blood_mnist_forward.2} parent=5 // pred_region
      // Predicated region
      $region33: #{blood_mnist_forward.2} parent=31 // pred_check
        %p178 = pneg %p31
      $region34: #{blood_mnist_forward.2} parent=31 // pred_check_branch
        %180 = sbr.rel (%p178) target = $region36
      $region35: #{blood_mnist_forward.2} parent=31 // pred_region
        %p181 = scmp.lt.s32.totalorder %s11, 1
        %s182 = scalar_select %p181, %s11, 1
        %s183 = smul.addr %s182, 128
        %s184 = smul.addr %s183, 8
        %s185 = scalar_lea.vmem %s0, %s184
      $region36: #{blood_mnist_forward.2} parent=31 // pred_fallthru
        _
    $region32: #{blood_mnist_forward.2} parent=5 // pred_fallthru
      _
    %p186 = scmp.le.s32.totalorder 1, %s11
    %p187 = scmp.lt.s32.totalorder %s11, 3
    %p188 = pnand %p186, %p187
    %p189 = pneg %p188
    // Predicated region
    $region37: #{blood_mnist_forward.2} parent=5 // pred_check
      _
    $region38: #{blood_mnist_forward.2} parent=5 // pred_check_branch
      %191 = sbr.rel (%p188) target = $region40
    $region39: #{blood_mnist_forward.2} parent=5 // pred_region
      %s192 = ssub.s32 %s11, 1
      %p193 = scmp.lt.s32.totalorder %s16, 1
      %s194 = scalar_select %p193, %s16, 1
      %s195 = smul.addr %s194, 128
      %s196 = smul.addr %s195, 8
      %s197 = scalar_lea.vmem %s0, %s196
      %p198 = pneg %p37
      %p199 = pneg %p34
      %p200 = pneg %p58
      %p201 = pneg %p55
      %p202 = pneg %p79
      %p203 = pneg %p76
      %p204 = pneg %p100
      %p205 = pneg %p97
      %p206 = pneg %p121
      %p207 = pneg %p118
      %p208 = pneg %p147
      %p209 = pneg %p144
      %p210 = scmp.lt.s32.totalorder %s16, 1
      %s211 = scalar_select %p210, %s16, 1
      %s212 = smul.addr %s211, 7
      %s213 = smul.addr %s212, 8
      %s214 = scalar_lea.vmem %s5, %s213
      %p215 = scmp.lt.s32.totalorder %s16, 1
      %s216 = scalar_select %p215, %s16, 1
      %s217 = smul.addr %s216, 128
      %s218 = smul.addr %s217, 8
      %s219 = scalar_lea.vmem %s0, %s218
      %p220 = scmp.lt.s32.totalorder %s16, 1
      %s221 = scalar_select %p220, %s16, 1
      %s222 = smul.addr %s221, 7
      %s223 = smul.addr %s222, 8
      %s224 = scalar_lea.vmem %s5, %s223
      %v226 = vld [vmem:[%s219] sm:$0xff]
      %v227 = vld [vmem:[%s219 + $0x8] sm:$0xff]
      %v228 = vld [vmem:[%s219 + $0x10] sm:$0xff]
      %v229 = vld [vmem:[%s219 + $0x18] sm:$0xff]
      %v230 = vld [vmem:[%s219 + $0x20] sm:$0xff]
      %v231 = vld [vmem:[%s219 + $0x28] sm:$0xff]
      %v232 = vld [vmem:[%s219 + $0x30] sm:$0xff]
      %v233 = vld [vmem:[%s219 + $0x38] sm:$0xff]
      %v234 = vld [vmem:[%s219 + $0x40] sm:$0xff]
      %v235 = vld [vmem:[%s219 + $0x48] sm:$0xff]
      %v236 = vld [vmem:[%s219 + $0x50] sm:$0xff]
      %v237 = vld [vmem:[%s219 + $0x58] sm:$0xff]
      %v238 = vld [vmem:[%s219 + $0x60] sm:$0xff]
      %v239 = vld [vmem:[%s219 + $0x68] sm:$0xff]
      %v240 = vld [vmem:[%s219 + $0x70] sm:$0xff]
      %v241 = vld [vmem:[%s219 + $0x78] sm:$0xff]
      %v242 = vld [vmem:[%s219 + $0x80] sm:$0xff]
      %v243 = vld [vmem:[%s219 + $0x88] sm:$0xff]
      %v244 = vld [vmem:[%s219 + $0x90] sm:$0xff]
      %v245 = vld [vmem:[%s219 + $0x98] sm:$0xff]
      %v246 = vld [vmem:[%s219 + $0xa0] sm:$0xff]
      %v247 = vld [vmem:[%s219 + $0xa8] sm:$0xff]
      %v248 = vld [vmem:[%s219 + $0xb0] sm:$0xff]
      %v249 = vld [vmem:[%s219 + $0xb8] sm:$0xff]
      %v250 = vld [vmem:[%s219 + $0xc0] sm:$0xff]
      %v251 = vld [vmem:[%s219 + $0xc8] sm:$0xff]
      %v252 = vld [vmem:[%s219 + $0xd0] sm:$0xff]
      %v253 = vld [vmem:[%s219 + $0xd8] sm:$0xff]
      %v254 = vld [vmem:[%s219 + $0xe0] sm:$0xff]
      %v255 = vld [vmem:[%s219 + $0xe8] sm:$0xff]
      %v256 = vld [vmem:[%s219 + $0xf0] sm:$0xff]
      %v257 = vld [vmem:[%s219 + $0xf8] sm:$0xff]
      %v258 = vld [vmem:[%s219 + $0x100] sm:$0xff]
      %v259 = vld [vmem:[%s219 + $0x108] sm:$0xff]
      %v260 = vld [vmem:[%s219 + $0x110] sm:$0xff]
      %v261 = vld [vmem:[%s219 + $0x118] sm:$0xff]
      %v262 = vld [vmem:[%s219 + $0x120] sm:$0xff]
      %v263 = vld [vmem:[%s219 + $0x128] sm:$0xff]
      %v264 = vld [vmem:[%s219 + $0x130] sm:$0xff]
      %v265 = vld [vmem:[%s219 + $0x138] sm:$0xff]
      %v266 = vld [vmem:[%s219 + $0x140] sm:$0xff]
      %v267 = vld [vmem:[%s219 + $0x148] sm:$0xff]
      %v268 = vld [vmem:[%s219 + $0x150] sm:$0xff]
      %v269 = vld [vmem:[%s219 + $0x158] sm:$0xff]
      %v270 = vld [vmem:[%s219 + $0x160] sm:$0xff]
      %v271 = vld [vmem:[%s219 + $0x168] sm:$0xff]
      %v272 = vld [vmem:[%s219 + $0x170] sm:$0xff]
      %v273 = vld [vmem:[%s219 + $0x178] sm:$0xff]
      %v274 = vld [vmem:[%s219 + $0x180] sm:$0xff]
      %v275 = vld [vmem:[%s219 + $0x188] sm:$0xff]
      %v276 = vld [vmem:[%s219 + $0x190] sm:$0xff]
      %v277 = vld [vmem:[%s219 + $0x198] sm:$0xff]
      %v278 = vld [vmem:[%s219 + $0x1a0] sm:$0xff]
      %v279 = vld [vmem:[%s219 + $0x1a8] sm:$0xff]
      %v280 = vld [vmem:[%s219 + $0x1b0] sm:$0xff]
      %v281 = vld [vmem:[%s219 + $0x1b8] sm:$0xff]
      %v282 = vld [vmem:[%s219 + $0x1c0] sm:$0xff]
      %v283 = vld [vmem:[%s219 + $0x1c8] sm:$0xff]
      %v284 = vld [vmem:[%s219 + $0x1d0] sm:$0xff]
      %v285 = vld [vmem:[%s219 + $0x1d8] sm:$0xff]
      %v286 = vld [vmem:[%s219 + $0x1e0] sm:$0xff]
      %v287 = vld [vmem:[%s219 + $0x1e8] sm:$0xff]
      %v288 = vld [vmem:[%s219 + $0x1f0] sm:$0xff]
      %v289 = vld [vmem:[%s219 + $0x1f8] sm:$0xff]
      %v290 = vld [vmem:[%s219 + $0x200] sm:$0xff]
      %v291 = vld [vmem:[%s219 + $0x208] sm:$0xff]
      %v292 = vld [vmem:[%s219 + $0x210] sm:$0xff]
      %v293 = vld [vmem:[%s219 + $0x218] sm:$0xff]
      %v294 = vld [vmem:[%s219 + $0x220] sm:$0xff]
      %v295 = vld [vmem:[%s219 + $0x228] sm:$0xff]
      %v296 = vld [vmem:[%s219 + $0x230] sm:$0xff]
      %v297 = vld [vmem:[%s219 + $0x238] sm:$0xff]
      %v298 = vld [vmem:[%s219 + $0x240] sm:$0xff]
      %v299 = vld [vmem:[%s219 + $0x248] sm:$0xff]
      %v300 = vld [vmem:[%s219 + $0x250] sm:$0xff]
      %v301 = vld [vmem:[%s219 + $0x258] sm:$0xff]
      %v302 = vld [vmem:[%s219 + $0x260] sm:$0xff]
      %v303 = vld [vmem:[%s219 + $0x268] sm:$0xff]
      %v304 = vld [vmem:[%s219 + $0x270] sm:$0xff]
      %v305 = vld [vmem:[%s219 + $0x278] sm:$0xff]
      %v306 = vld [vmem:[%s219 + $0x280] sm:$0xff]
      %v307 = vld [vmem:[%s219 + $0x288] sm:$0xff]
      %v308 = vld [vmem:[%s219 + $0x290] sm:$0xff]
      %v309 = vld [vmem:[%s219 + $0x298] sm:$0xff]
      %v310 = vld [vmem:[%s219 + $0x2a0] sm:$0xff]
      %v311 = vld [vmem:[%s219 + $0x2a8] sm:$0xff]
      %v312 = vld [vmem:[%s219 + $0x2b0] sm:$0xff]
      %v313 = vld [vmem:[%s219 + $0x2b8] sm:$0xff]
      %v314 = vld [vmem:[%s219 + $0x2c0] sm:$0xff]
      %v315 = vld [vmem:[%s219 + $0x2c8] sm:$0xff]
      %v316 = vld [vmem:[%s219 + $0x2d0] sm:$0xff]
      %v317 = vld [vmem:[%s219 + $0x2d8] sm:$0xff]
      %v318 = vld [vmem:[%s219 + $0x2e0] sm:$0xff]
      %v319 = vld [vmem:[%s219 + $0x2e8] sm:$0xff]
      %v320 = vld [vmem:[%s219 + $0x2f0] sm:$0xff]
      %v321 = vld [vmem:[%s219 + $0x2f8] sm:$0xff]
      %v322 = vld [vmem:[%s219 + $0x300] sm:$0xff]
      %v323 = vld [vmem:[%s219 + $0x308] sm:$0xff]
      %v324 = vld [vmem:[%s219 + $0x310] sm:$0xff]
      %v325 = vld [vmem:[%s219 + $0x318] sm:$0xff]
      %v326 = vld [vmem:[%s219 + $0x320] sm:$0xff]
      %v327 = vld [vmem:[%s219 + $0x328] sm:$0xff]
      %v328 = vld [vmem:[%s219 + $0x330] sm:$0xff]
      %v329 = vld [vmem:[%s219 + $0x338] sm:$0xff]
      %v330 = vld [vmem:[%s219 + $0x340] sm:$0xff]
      %v331 = vld [vmem:[%s219 + $0x348] sm:$0xff]
      %v332 = vld [vmem:[%s219 + $0x350] sm:$0xff]
      %v333 = vld [vmem:[%s219 + $0x358] sm:$0xff]
      %v334 = vld [vmem:[%s219 + $0x360] sm:$0xff]
      %v335 = vld [vmem:[%s219 + $0x368] sm:$0xff]
      %v336 = vld [vmem:[%s219 + $0x370] sm:$0xff]
      %v337 = vld [vmem:[%s219 + $0x378] sm:$0xff]
      %v338 = vpack.c.bf16 %v227, %v226
      %v339 = vpack.c.bf16 %v229, %v228
      %v340 = vpack.c.bf16 %v231, %v230
      %v341 = vpack.c.bf16 %v233, %v232
      %v342 = vpack.c.bf16 %v235, %v234
      %v343 = vpack.c.bf16 %v237, %v236
      %v344 = vpack.c.bf16 %v239, %v238
      %v345 = vpack.c.bf16 %v241, %v240
      %v346 = vpack.c.bf16 %v243, %v242
      %v347 = vpack.c.bf16 %v245, %v244
      %v348 = vpack.c.bf16 %v247, %v246
      %v349 = vpack.c.bf16 %v249, %v248
      %v350 = vpack.c.bf16 %v251, %v250
      %v351 = vpack.c.bf16 %v253, %v252
      %v352 = vpack.c.bf16 %v255, %v254
      %v353 = vpack.c.bf16 %v257, %v256
      %v354 = vpack.c.bf16 %v259, %v258
      %v355 = vpack.c.bf16 %v261, %v260
      %v356 = vpack.c.bf16 %v263, %v262
      %v357 = vpack.c.bf16 %v265, %v264
      %v358 = vpack.c.bf16 %v267, %v266
      %v359 = vpack.c.bf16 %v269, %v268
      %v360 = vpack.c.bf16 %v271, %v270
      %v361 = vpack.c.bf16 %v273, %v272
      %v362 = vpack.c.bf16 %v275, %v274
      %v363 = vpack.c.bf16 %v277, %v276
      %v364 = vpack.c.bf16 %v279, %v278
      %v365 = vpack.c.bf16 %v281, %v280
      %v366 = vpack.c.bf16 %v283, %v282
      %v367 = vpack.c.bf16 %v285, %v284
      %v368 = vpack.c.bf16 %v287, %v286
      %v369 = vpack.c.bf16 %v289, %v288
      %v370 = vpack.c.bf16 %v291, %v290
      %v371 = vpack.c.bf16 %v293, %v292
      %v372 = vpack.c.bf16 %v295, %v294
      %v373 = vpack.c.bf16 %v297, %v296
      %v374 = vpack.c.bf16 %v299, %v298
      %v375 = vpack.c.bf16 %v301, %v300
      %v376 = vpack.c.bf16 %v303, %v302
      %v377 = vpack.c.bf16 %v305, %v304
      %v378 = vpack.c.bf16 %v307, %v306
      %v379 = vpack.c.bf16 %v309, %v308
      %v380 = vpack.c.bf16 %v311, %v310
      %v381 = vpack.c.bf16 %v313, %v312
      %v382 = vpack.c.bf16 %v315, %v314
      %v383 = vpack.c.bf16 %v317, %v316
      %v384 = vpack.c.bf16 %v319, %v318
      %v385 = vpack.c.bf16 %v321, %v320
      %v386 = vpack.c.bf16 %v323, %v322
      %v387 = vpack.c.bf16 %v325, %v324
      %v388 = vpack.c.bf16 %v327, %v326
      %v389 = vpack.c.bf16 %v329, %v328
      %v390 = vpack.c.bf16 %v331, %v330
      %v391 = vpack.c.bf16 %v333, %v332
      %v392 = vpack.c.bf16 %v335, %v334
      %v393 = vpack.c.bf16 %v337, %v336
      %vm394 = vcmask 97280
      %395 = vst.msk [vmem:[#allocation2] sm:$0xff] %vm394, %v338
      %396 = vst.msk [vmem:[#allocation2 + $0x8] sm:$0xff] %vm394, %v339
      %397 = vst.msk [vmem:[#allocation2 + $0x10] sm:$0xff] %vm394, %v340
      %398 = vst.msk [vmem:[#allocation2 + $0x18] sm:$0xff] %vm394, %v341
      %399 = vst.msk [vmem:[#allocation2 + $0x20] sm:$0xff] %vm394, %v342
      %400 = vst.msk [vmem:[#allocation2 + $0x28] sm:$0xff] %vm394, %v343
      %401 = vst.msk [vmem:[#allocation2 + $0x30] sm:$0xff] %vm394, %v344
      %402 = vst.msk [vmem:[#allocation2 + $0x38] sm:$0xff] %vm394, %v345
      %403 = vst.msk [vmem:[#allocation2 + $0x40] sm:$0xff] %vm394, %v346
      %404 = vst.msk [vmem:[#allocation2 + $0x48] sm:$0xff] %vm394, %v347
      %405 = vst.msk [vmem:[#allocation2 + $0x50] sm:$0xff] %vm394, %v348
      %406 = vst.msk [vmem:[#allocation2 + $0x58] sm:$0xff] %vm394, %v349
      %407 = vst.msk [vmem:[#allocation2 + $0x60] sm:$0xff] %vm394, %v350
      %408 = vst.msk [vmem:[#allocation2 + $0x68] sm:$0xff] %vm394, %v351
      %409 = vst.msk [vmem:[#allocation2 + $0x70] sm:$0xff] %vm394, %v352
      %410 = vst.msk [vmem:[#allocation2 + $0x78] sm:$0xff] %vm394, %v353
      %411 = vst.msk [vmem:[#allocation2 + $0x80] sm:$0xff] %vm394, %v354
      %412 = vst.msk [vmem:[#allocation2 + $0x88] sm:$0xff] %vm394, %v355
      %413 = vst.msk [vmem:[#allocation2 + $0x90] sm:$0xff] %vm394, %v356
      %414 = vst.msk [vmem:[#allocation2 + $0x98] sm:$0xff] %vm394, %v357
      %415 = vst.msk [vmem:[#allocation2 + $0xa0] sm:$0xff] %vm394, %v358
      %416 = vst.msk [vmem:[#allocation2 + $0xa8] sm:$0xff] %vm394, %v359
      %417 = vst.msk [vmem:[#allocation2 + $0xb0] sm:$0xff] %vm394, %v360
      %418 = vst.msk [vmem:[#allocation2 + $0xb8] sm:$0xff] %vm394, %v361
      %419 = vst.msk [vmem:[#allocation2 + $0xc0] sm:$0xff] %vm394, %v362
      %420 = vst.msk [vmem:[#allocation2 + $0xc8] sm:$0xff] %vm394, %v363
      %421 = vst.msk [vmem:[#allocation2 + $0xd0] sm:$0xff] %vm394, %v364
      %422 = vst.msk [vmem:[#allocation2 + $0xd8] sm:$0xff] %vm394, %v365
      %423 = vst.msk [vmem:[#allocation2 + $0xe0] sm:$0xff] %vm394, %v366
      %424 = vst.msk [vmem:[#allocation2 + $0xe8] sm:$0xff] %vm394, %v367
      %425 = vst.msk [vmem:[#allocation2 + $0xf0] sm:$0xff] %vm394, %v368
      %426 = vst.msk [vmem:[#allocation2 + $0xf8] sm:$0xff] %vm394, %v369
      %427 = vst.msk [vmem:[#allocation2 + $0x100] sm:$0xff] %vm394, %v370
      %428 = vst.msk [vmem:[#allocation2 + $0x108] sm:$0xff] %vm394, %v371
      %429 = vst.msk [vmem:[#allocation2 + $0x110] sm:$0xff] %vm394, %v372
      %430 = vst.msk [vmem:[#allocation2 + $0x118] sm:$0xff] %vm394, %v373
      %431 = vst.msk [vmem:[#allocation2 + $0x120] sm:$0xff] %vm394, %v374
      %432 = vst.msk [vmem:[#allocation2 + $0x128] sm:$0xff] %vm394, %v375
      %433 = vst.msk [vmem:[#allocation2 + $0x130] sm:$0xff] %vm394, %v376
      %434 = vst.msk [vmem:[#allocation2 + $0x138] sm:$0xff] %vm394, %v377
      %435 = vst.msk [vmem:[#allocation2 + $0x140] sm:$0xff] %vm394, %v378
      %436 = vst.msk [vmem:[#allocation2 + $0x148] sm:$0xff] %vm394, %v379
      %437 = vst.msk [vmem:[#allocation2 + $0x150] sm:$0xff] %vm394, %v380
      %438 = vst.msk [vmem:[#allocation2 + $0x158] sm:$0xff] %vm394, %v381
      %439 = vst.msk [vmem:[#allocation2 + $0x160] sm:$0xff] %vm394, %v382
      %440 = vst.msk [vmem:[#allocation2 + $0x168] sm:$0xff] %vm394, %v383
      %441 = vst.msk [vmem:[#allocation2 + $0x170] sm:$0xff] %vm394, %v384
      %442 = vst.msk [vmem:[#allocation2 + $0x178] sm:$0xff] %vm394, %v385
      %443 = vst.msk [vmem:[#allocation2 + $0x180] sm:$0xff] %vm394, %v386
      %444 = vst.msk [vmem:[#allocation2 + $0x188] sm:$0xff] %vm394, %v387
      %445 = vst.msk [vmem:[#allocation2 + $0x190] sm:$0xff] %vm394, %v388
      %446 = vst.msk [vmem:[#allocation2 + $0x198] sm:$0xff] %vm394, %v389
      %447 = vst.msk [vmem:[#allocation2 + $0x1a0] sm:$0xff] %vm394, %v390
      %448 = vst.msk [vmem:[#allocation2 + $0x1a8] sm:$0xff] %vm394, %v391
      %449 = vst.msk [vmem:[#allocation2 + $0x1b0] sm:$0xff] %vm394, %v392
      %450 = vst.msk [vmem:[#allocation2 + $0x1b8] sm:$0xff] %vm394, %v393
      %v451 = vld [vmem:[%s219 + $0x1] sm:$0xff]
      %v452 = vld [vmem:[%s219 + $0x9] sm:$0xff]
      %v453 = vld [vmem:[%s219 + $0x11] sm:$0xff]
      %v454 = vld [vmem:[%s219 + $0x19] sm:$0xff]
      %v455 = vld [vmem:[%s219 + $0x21] sm:$0xff]
      %v456 = vld [vmem:[%s219 + $0x29] sm:$0xff]
      %v457 = vld [vmem:[%s219 + $0x31] sm:$0xff]
      %v458 = vld [vmem:[%s219 + $0x39] sm:$0xff]
      %v459 = vld [vmem:[%s219 + $0x41] sm:$0xff]
      %v460 = vld [vmem:[%s219 + $0x49] sm:$0xff]
      %v461 = vld [vmem:[%s219 + $0x51] sm:$0xff]
      %v462 = vld [vmem:[%s219 + $0x59] sm:$0xff]
      %v463 = vld [vmem:[%s219 + $0x61] sm:$0xff]
      %v464 = vld [vmem:[%s219 + $0x69] sm:$0xff]
      %v465 = vld [vmem:[%s219 + $0x71] sm:$0xff]
      %v466 = vld [vmem:[%s219 + $0x79] sm:$0xff]
      %v467 = vld [vmem:[%s219 + $0x81] sm:$0xff]
      %v468 = vld [vmem:[%s219 + $0x89] sm:$0xff]
      %v469 = vld [vmem:[%s219 + $0x91] sm:$0xff]
      %v470 = vld [vmem:[%s219 + $0x99] sm:$0xff]
      %v471 = vld [vmem:[%s219 + $0xa1] sm:$0xff]
      %v472 = vld [vmem:[%s219 + $0xa9] sm:$0xff]
      %v473 = vld [vmem:[%s219 + $0xb1] sm:$0xff]
      %v474 = vld [vmem:[%s219 + $0xb9] sm:$0xff]
      %v475 = vld [vmem:[%s219 + $0xc1] sm:$0xff]
      %v476 = vld [vmem:[%s219 + $0xc9] sm:$0xff]
      %v477 = vld [vmem:[%s219 + $0xd1] sm:$0xff]
      %v478 = vld [vmem:[%s219 + $0xd9] sm:$0xff]
      %v479 = vld [vmem:[%s219 + $0xe1] sm:$0xff]
      %v480 = vld [vmem:[%s219 + $0xe9] sm:$0xff]
      %v481 = vld [vmem:[%s219 + $0xf1] sm:$0xff]
      %v482 = vld [vmem:[%s219 + $0xf9] sm:$0xff]
      %v483 = vld [vmem:[%s219 + $0x101] sm:$0xff]
      %v484 = vld [vmem:[%s219 + $0x109] sm:$0xff]
      %v485 = vld [vmem:[%s219 + $0x111] sm:$0xff]
      %v486 = vld [vmem:[%s219 + $0x119] sm:$0xff]
      %v487 = vld [vmem:[%s219 + $0x121] sm:$0xff]
      %v488 = vld [vmem:[%s219 + $0x129] sm:$0xff]
      %v489 = vld [vmem:[%s219 + $0x131] sm:$0xff]
      %v490 = vld [vmem:[%s219 + $0x139] sm:$0xff]
      %v491 = vld [vmem:[%s219 + $0x141] sm:$0xff]
      %v492 = vld [vmem:[%s219 + $0x149] sm:$0xff]
      %v493 = vld [vmem:[%s219 + $0x151] sm:$0xff]
      %v494 = vld [vmem:[%s219 + $0x159] sm:$0xff]
      %v495 = vld [vmem:[%s219 + $0x161] sm:$0xff]
      %v496 = vld [vmem:[%s219 + $0x169] sm:$0xff]
      %v497 = vld [vmem:[%s219 + $0x171] sm:$0xff]
      %v498 = vld [vmem:[%s219 + $0x179] sm:$0xff]
      %v499 = vld [vmem:[%s219 + $0x181] sm:$0xff]
      %v500 = vld [vmem:[%s219 + $0x189] sm:$0xff]
      %v501 = vld [vmem:[%s219 + $0x191] sm:$0xff]
      %v502 = vld [vmem:[%s219 + $0x199] sm:$0xff]
      %v503 = vld [vmem:[%s219 + $0x1a1] sm:$0xff]
      %v504 = vld [vmem:[%s219 + $0x1a9] sm:$0xff]
      %v505 = vld [vmem:[%s219 + $0x1b1] sm:$0xff]
      %v506 = vld [vmem:[%s219 + $0x1b9] sm:$0xff]
      %v507 = vld [vmem:[%s219 + $0x1c1] sm:$0xff]
      %v508 = vld [vmem:[%s219 + $0x1c9] sm:$0xff]
      %v509 = vld [vmem:[%s219 + $0x1d1] sm:$0xff]
      %v510 = vld [vmem:[%s219 + $0x1d9] sm:$0xff]
      %v511 = vld [vmem:[%s219 + $0x1e1] sm:$0xff]
      %v512 = vld [vmem:[%s219 + $0x1e9] sm:$0xff]
      %v513 = vld [vmem:[%s219 + $0x1f1] sm:$0xff]
      %v514 = vld [vmem:[%s219 + $0x1f9] sm:$0xff]
      %v515 = vld [vmem:[%s219 + $0x201] sm:$0xff]
      %v516 = vld [vmem:[%s219 + $0x209] sm:$0xff]
      %v517 = vld [vmem:[%s219 + $0x211] sm:$0xff]
      %v518 = vld [vmem:[%s219 + $0x219] sm:$0xff]
      %v519 = vld [vmem:[%s219 + $0x221] sm:$0xff]
      %v520 = vld [vmem:[%s219 + $0x229] sm:$0xff]
      %v521 = vld [vmem:[%s219 + $0x231] sm:$0xff]
      %v522 = vld [vmem:[%s219 + $0x239] sm:$0xff]
      %v523 = vld [vmem:[%s219 + $0x241] sm:$0xff]
      %v524 = vld [vmem:[%s219 + $0x249] sm:$0xff]
      %v525 = vld [vmem:[%s219 + $0x251] sm:$0xff]
      %v526 = vld [vmem:[%s219 + $0x259] sm:$0xff]
      %v527 = vld [vmem:[%s219 + $0x261] sm:$0xff]
      %v528 = vld [vmem:[%s219 + $0x269] sm:$0xff]
      %v529 = vld [vmem:[%s219 + $0x271] sm:$0xff]
      %v530 = vld [vmem:[%s219 + $0x279] sm:$0xff]
      %v531 = vld [vmem:[%s219 + $0x281] sm:$0xff]
      %v532 = vld [vmem:[%s219 + $0x289] sm:$0xff]
      %v533 = vld [vmem:[%s219 + $0x291] sm:$0xff]
      %v534 = vld [vmem:[%s219 + $0x299] sm:$0xff]
      %v535 = vld [vmem:[%s219 + $0x2a1] sm:$0xff]
      %v536 = vld [vmem:[%s219 + $0x2a9] sm:$0xff]
      %v537 = vld [vmem:[%s219 + $0x2b1] sm:$0xff]
      %v538 = vld [vmem:[%s219 + $0x2b9] sm:$0xff]
      %v539 = vld [vmem:[%s219 + $0x2c1] sm:$0xff]
      %v540 = vld [vmem:[%s219 + $0x2c9] sm:$0xff]
      %v541 = vld [vmem:[%s219 + $0x2d1] sm:$0xff]
      %v542 = vld [vmem:[%s219 + $0x2d9] sm:$0xff]
      %v543 = vld [vmem:[%s219 + $0x2e1] sm:$0xff]
      %v544 = vld [vmem:[%s219 + $0x2e9] sm:$0xff]
      %v545 = vld [vmem:[%s219 + $0x2f1] sm:$0xff]
      %v546 = vld [vmem:[%s219 + $0x2f9] sm:$0xff]
      %v547 = vld [vmem:[%s219 + $0x301] sm:$0xff]
      %v548 = vld [vmem:[%s219 + $0x309] sm:$0xff]
      %v549 = vld [vmem:[%s219 + $0x311] sm:$0xff]
      %v550 = vld [vmem:[%s219 + $0x319] sm:$0xff]
      %v551 = vld [vmem:[%s219 + $0x321] sm:$0xff]
      %v552 = vld [vmem:[%s219 + $0x329] sm:$0xff]
      %v553 = vld [vmem:[%s219 + $0x331] sm:$0xff]
      %v554 = vld [vmem:[%s219 + $0x339] sm:$0xff]
      %v555 = vld [vmem:[%s219 + $0x341] sm:$0xff]
      %v556 = vld [vmem:[%s219 + $0x349] sm:$0xff]
      %v557 = vld [vmem:[%s219 + $0x351] sm:$0xff]
      %v558 = vld [vmem:[%s219 + $0x359] sm:$0xff]
      %v559 = vld [vmem:[%s219 + $0x361] sm:$0xff]
      %v560 = vld [vmem:[%s219 + $0x369] sm:$0xff]
      %v561 = vld [vmem:[%s219 + $0x371] sm:$0xff]
      %v562 = vld [vmem:[%s219 + $0x379] sm:$0xff]
      %v563 = vpack.c.bf16 %v452, %v451
      %v564 = vpack.c.bf16 %v454, %v453
      %v565 = vpack.c.bf16 %v456, %v455
      %v566 = vpack.c.bf16 %v458, %v457
      %v567 = vpack.c.bf16 %v460, %v459
      %v568 = vpack.c.bf16 %v462, %v461
      %v569 = vpack.c.bf16 %v464, %v463
      %v570 = vpack.c.bf16 %v466, %v465
      %v571 = vpack.c.bf16 %v468, %v467
      %v572 = vpack.c.bf16 %v470, %v469
      %v573 = vpack.c.bf16 %v472, %v471
      %v574 = vpack.c.bf16 %v474, %v473
      %v575 = vpack.c.bf16 %v476, %v475
      %v576 = vpack.c.bf16 %v478, %v477
      %v577 = vpack.c.bf16 %v480, %v479
      %v578 = vpack.c.bf16 %v482, %v481
      %v579 = vpack.c.bf16 %v484, %v483
      %v580 = vpack.c.bf16 %v486, %v485
      %v581 = vpack.c.bf16 %v488, %v487
      %v582 = vpack.c.bf16 %v490, %v489
      %v583 = vpack.c.bf16 %v492, %v491
      %v584 = vpack.c.bf16 %v494, %v493
      %v585 = vpack.c.bf16 %v496, %v495
      %v586 = vpack.c.bf16 %v498, %v497
      %v587 = vpack.c.bf16 %v500, %v499
      %v588 = vpack.c.bf16 %v502, %v501
      %v589 = vpack.c.bf16 %v504, %v503
      %v590 = vpack.c.bf16 %v506, %v505
      %v591 = vpack.c.bf16 %v508, %v507
      %v592 = vpack.c.bf16 %v510, %v509
      %v593 = vpack.c.bf16 %v512, %v511
      %v594 = vpack.c.bf16 %v514, %v513
      %v595 = vpack.c.bf16 %v516, %v515
      %v596 = vpack.c.bf16 %v518, %v517
      %v597 = vpack.c.bf16 %v520, %v519
      %v598 = vpack.c.bf16 %v522, %v521
      %v599 = vpack.c.bf16 %v524, %v523
      %v600 = vpack.c.bf16 %v526, %v525
      %v601 = vpack.c.bf16 %v528, %v527
      %v602 = vpack.c.bf16 %v530, %v529
      %v603 = vpack.c.bf16 %v532, %v531
      %v604 = vpack.c.bf16 %v534, %v533
      %v605 = vpack.c.bf16 %v536, %v535
      %v606 = vpack.c.bf16 %v538, %v537
      %v607 = vpack.c.bf16 %v540, %v539
      %v608 = vpack.c.bf16 %v542, %v541
      %v609 = vpack.c.bf16 %v544, %v543
      %v610 = vpack.c.bf16 %v546, %v545
      %v611 = vpack.c.bf16 %v548, %v547
      %v612 = vpack.c.bf16 %v550, %v549
      %v613 = vpack.c.bf16 %v552, %v551
      %v614 = vpack.c.bf16 %v554, %v553
      %v615 = vpack.c.bf16 %v556, %v555
      %v616 = vpack.c.bf16 %v558, %v557
      %v617 = vpack.c.bf16 %v560, %v559
      %v618 = vpack.c.bf16 %v562, %v561
      %675 = vrot.lane.b32.xlu0 %v563, 12
      %v676 = vpop.permute.xlu0 %675
      %677 = vrot.lane.b32.xlu0 %v564, 12
      %v678 = vpop.permute.xlu0 %677
      %679 = vrot.lane.b32.xlu0 %v565, 12
      %v680 = vpop.permute.xlu0 %679
      %681 = vrot.lane.b32.xlu0 %v566, 12
      %v682 = vpop.permute.xlu0 %681
      %683 = vrot.lane.b32.xlu0 %v567, 12
      %v684 = vpop.permute.xlu0 %683
      %685 = vrot.lane.b32.xlu0 %v568, 12
      %v686 = vpop.permute.xlu0 %685
      %687 = vrot.lane.b32.xlu0 %v569, 12
      %v688 = vpop.permute.xlu0 %687
      %689 = vrot.lane.b32.xlu0 %v570, 12
      %v690 = vpop.permute.xlu0 %689
      %691 = vrot.lane.b32.xlu0 %v571, 12
      %v692 = vpop.permute.xlu0 %691
      %693 = vrot.lane.b32.xlu0 %v572, 12
      %v694 = vpop.permute.xlu0 %693
      %695 = vrot.lane.b32.xlu0 %v573, 12
      %v696 = vpop.permute.xlu0 %695
      %697 = vrot.lane.b32.xlu0 %v574, 12
      %v698 = vpop.permute.xlu0 %697
      %699 = vrot.lane.b32.xlu0 %v575, 12
      %v700 = vpop.permute.xlu0 %699
      %701 = vrot.lane.b32.xlu0 %v576, 12
      %v702 = vpop.permute.xlu0 %701
      %703 = vrot.lane.b32.xlu0 %v577, 12
      %v704 = vpop.permute.xlu0 %703
      %705 = vrot.lane.b32.xlu0 %v578, 12
      %v706 = vpop.permute.xlu0 %705
      %707 = vrot.lane.b32.xlu0 %v579, 12
      %v708 = vpop.permute.xlu0 %707
      %709 = vrot.lane.b32.xlu0 %v580, 12
      %v710 = vpop.permute.xlu0 %709
      %711 = vrot.lane.b32.xlu0 %v581, 12
      %v712 = vpop.permute.xlu0 %711
      %713 = vrot.lane.b32.xlu0 %v582, 12
      %v714 = vpop.permute.xlu0 %713
      %715 = vrot.lane.b32.xlu0 %v583, 12
      %v716 = vpop.permute.xlu0 %715
      %717 = vrot.lane.b32.xlu0 %v584, 12
      %v718 = vpop.permute.xlu0 %717
      %719 = vrot.lane.b32.xlu0 %v585, 12
      %v720 = vpop.permute.xlu0 %719
      %721 = vrot.lane.b32.xlu0 %v586, 12
      %v722 = vpop.permute.xlu0 %721
      %723 = vrot.lane.b32.xlu0 %v587, 12
      %v724 = vpop.permute.xlu0 %723
      %725 = vrot.lane.b32.xlu0 %v588, 12
      %v726 = vpop.permute.xlu0 %725
      %727 = vrot.lane.b32.xlu0 %v589, 12
      %v728 = vpop.permute.xlu0 %727
      %729 = vrot.lane.b32.xlu0 %v590, 12
      %v730 = vpop.permute.xlu0 %729
      %731 = vrot.lane.b32.xlu0 %v591, 12
      %v732 = vpop.permute.xlu0 %731
      %733 = vrot.lane.b32.xlu0 %v592, 12
      %v734 = vpop.permute.xlu0 %733
      %735 = vrot.lane.b32.xlu0 %v593, 12
      %v736 = vpop.permute.xlu0 %735
      %737 = vrot.lane.b32.xlu0 %v594, 12
      %v738 = vpop.permute.xlu0 %737
      %739 = vrot.lane.b32.xlu0 %v595, 12
      %v740 = vpop.permute.xlu0 %739
      %741 = vrot.lane.b32.xlu0 %v596, 12
      %v742 = vpop.permute.xlu0 %741
      %743 = vrot.lane.b32.xlu0 %v597, 12
      %v744 = vpop.permute.xlu0 %743
      %745 = vrot.lane.b32.xlu0 %v598, 12
      %v746 = vpop.permute.xlu0 %745
      %747 = vrot.lane.b32.xlu0 %v599, 12
      %v748 = vpop.permute.xlu0 %747
      %749 = vrot.lane.b32.xlu0 %v600, 12
      %v750 = vpop.permute.xlu0 %749
      %751 = vrot.lane.b32.xlu0 %v601, 12
      %v752 = vpop.permute.xlu0 %751
      %753 = vrot.lane.b32.xlu0 %v602, 12
      %v754 = vpop.permute.xlu0 %753
      %755 = vrot.lane.b32.xlu0 %v603, 12
      %v756 = vpop.permute.xlu0 %755
      %757 = vrot.lane.b32.xlu0 %v604, 12
      %v758 = vpop.permute.xlu0 %757
      %759 = vrot.lane.b32.xlu0 %v605, 12
      %v760 = vpop.permute.xlu0 %759
      %761 = vrot.lane.b32.xlu0 %v606, 12
      %v762 = vpop.permute.xlu0 %761
      %763 = vrot.lane.b32.xlu0 %v607, 12
      %v764 = vpop.permute.xlu0 %763
      %765 = vrot.lane.b32.xlu0 %v608, 12
      %v766 = vpop.permute.xlu0 %765
      %767 = vrot.lane.b32.xlu0 %v609, 12
      %v768 = vpop.permute.xlu0 %767
      %769 = vrot.lane.b32.xlu0 %v610, 12
      %v770 = vpop.permute.xlu0 %769
      %771 = vrot.lane.b32.xlu0 %v611, 12
      %v772 = vpop.permute.xlu0 %771
      %773 = vrot.lane.b32.xlu0 %v612, 12
      %v774 = vpop.permute.xlu0 %773
      %775 = vrot.lane.b32.xlu0 %v613, 12
      %v776 = vpop.permute.xlu0 %775
      %777 = vrot.lane.b32.xlu0 %v614, 12
      %v778 = vpop.permute.xlu0 %777
      %779 = vrot.lane.b32.xlu0 %v615, 12
      %v780 = vpop.permute.xlu0 %779
      %781 = vrot.lane.b32.xlu0 %v616, 12
      %v782 = vpop.permute.xlu0 %781
      %783 = vrot.lane.b32.xlu0 %v617, 12
      %v784 = vpop.permute.xlu0 %783
      %785 = vrot.lane.b32.xlu0 %v618, 12
      %v786 = vpop.permute.xlu0 %785
      %vm843 = vcmask 195680
      %844 = vst.msk [vmem:[#allocation2] sm:$0xff] %vm843, %v676
      %845 = vst.msk [vmem:[#allocation2 + $0x8] sm:$0xff] %vm843, %v678
      %846 = vst.msk [vmem:[#allocation2 + $0x10] sm:$0xff] %vm843, %v680
      %847 = vst.msk [vmem:[#allocation2 + $0x18] sm:$0xff] %vm843, %v682
      %848 = vst.msk [vmem:[#allocation2 + $0x20] sm:$0xff] %vm843, %v684
      %849 = vst.msk [vmem:[#allocation2 + $0x28] sm:$0xff] %vm843, %v686
      %850 = vst.msk [vmem:[#allocation2 + $0x30] sm:$0xff] %vm843, %v688
      %851 = vst.msk [vmem:[#allocation2 + $0x38] sm:$0xff] %vm843, %v690
      %852 = vst.msk [vmem:[#allocation2 + $0x40] sm:$0xff] %vm843, %v692
      %853 = vst.msk [vmem:[#allocation2 + $0x48] sm:$0xff] %vm843, %v694
      %854 = vst.msk [vmem:[#allocation2 + $0x50] sm:$0xff] %vm843, %v696
      %855 = vst.msk [vmem:[#allocation2 + $0x58] sm:$0xff] %vm843, %v698
      %856 = vst.msk [vmem:[#allocation2 + $0x60] sm:$0xff] %vm843, %v700
      %857 = vst.msk [vmem:[#allocation2 + $0x68] sm:$0xff] %vm843, %v702
      %858 = vst.msk [vmem:[#allocation2 + $0x70] sm:$0xff] %vm843, %v704
      %859 = vst.msk [vmem:[#allocation2 + $0x78] sm:$0xff] %vm843, %v706
      %860 = vst.msk [vmem:[#allocation2 + $0x80] sm:$0xff] %vm843, %v708
      %861 = vst.msk [vmem:[#allocation2 + $0x88] sm:$0xff] %vm843, %v710
      %862 = vst.msk [vmem:[#allocation2 + $0x90] sm:$0xff] %vm843, %v712
      %863 = vst.msk [vmem:[#allocation2 + $0x98] sm:$0xff] %vm843, %v714
      %864 = vst.msk [vmem:[#allocation2 + $0xa0] sm:$0xff] %vm843, %v716
      %865 = vst.msk [vmem:[#allocation2 + $0xa8] sm:$0xff] %vm843, %v718
      %866 = vst.msk [vmem:[#allocation2 + $0xb0] sm:$0xff] %vm843, %v720
      %867 = vst.msk [vmem:[#allocation2 + $0xb8] sm:$0xff] %vm843, %v722
      %868 = vst.msk [vmem:[#allocation2 + $0xc0] sm:$0xff] %vm843, %v724
      %869 = vst.msk [vmem:[#allocation2 + $0xc8] sm:$0xff] %vm843, %v726
      %870 = vst.msk [vmem:[#allocation2 + $0xd0] sm:$0xff] %vm843, %v728
      %871 = vst.msk [vmem:[#allocation2 + $0xd8] sm:$0xff] %vm843, %v730
      %872 = vst.msk [vmem:[#allocation2 + $0xe0] sm:$0xff] %vm843, %v732
      %873 = vst.msk [vmem:[#allocation2 + $0xe8] sm:$0xff] %vm843, %v734
      %874 = vst.msk [vmem:[#allocation2 + $0xf0] sm:$0xff] %vm843, %v736
      %875 = vst.msk [vmem:[#allocation2 + $0xf8] sm:$0xff] %vm843, %v738
      %876 = vst.msk [vmem:[#allocation2 + $0x100] sm:$0xff] %vm843, %v740
      %877 = vst.msk [vmem:[#allocation2 + $0x108] sm:$0xff] %vm843, %v742
      %878 = vst.msk [vmem:[#allocation2 + $0x110] sm:$0xff] %vm843, %v744
      %879 = vst.msk [vmem:[#allocation2 + $0x118] sm:$0xff] %vm843, %v746
      %880 = vst.msk [vmem:[#allocation2 + $0x120] sm:$0xff] %vm843, %v748
      %881 = vst.msk [vmem:[#allocation2 + $0x128] sm:$0xff] %vm843, %v750
      %882 = vst.msk [vmem:[#allocation2 + $0x130] sm:$0xff] %vm843, %v752
      %883 = vst.msk [vmem:[#allocation2 + $0x138] sm:$0xff] %vm843, %v754
      %884 = vst.msk [vmem:[#allocation2 + $0x140] sm:$0xff] %vm843, %v756
      %885 = vst.msk [vmem:[#allocation2 + $0x148] sm:$0xff] %vm843, %v758
      %886 = vst.msk [vmem:[#allocation2 + $0x150] sm:$0xff] %vm843, %v760
      %887 = vst.msk [vmem:[#allocation2 + $0x158] sm:$0xff] %vm843, %v762
      %888 = vst.msk [vmem:[#allocation2 + $0x160] sm:$0xff] %vm843, %v764
      %889 = vst.msk [vmem:[#allocation2 + $0x168] sm:$0xff] %vm843, %v766
      %890 = vst.msk [vmem:[#allocation2 + $0x170] sm:$0xff] %vm843, %v768
      %891 = vst.msk [vmem:[#allocation2 + $0x178] sm:$0xff] %vm843, %v770
      %892 = vst.msk [vmem:[#allocation2 + $0x180] sm:$0xff] %vm843, %v772
      %893 = vst.msk [vmem:[#allocation2 + $0x188] sm:$0xff] %vm843, %v774
      %894 = vst.msk [vmem:[#allocation2 + $0x190] sm:$0xff] %vm843, %v776
      %895 = vst.msk [vmem:[#allocation2 + $0x198] sm:$0xff] %vm843, %v778
      %896 = vst.msk [vmem:[#allocation2 + $0x1a0] sm:$0xff] %vm843, %v780
      %897 = vst.msk [vmem:[#allocation2 + $0x1a8] sm:$0xff] %vm843, %v782
      %898 = vst.msk [vmem:[#allocation2 + $0x1b0] sm:$0xff] %vm843, %v784
      %899 = vst.msk [vmem:[#allocation2 + $0x1b8] sm:$0xff] %vm843, %v786
      %v900 = vld [vmem:[%s219 + $0x2] sm:$0xff]
      %v901 = vld [vmem:[%s219 + $0xa] sm:$0xff]
      %v902 = vld [vmem:[%s219 + $0x12] sm:$0xff]
      %v903 = vld [vmem:[%s219 + $0x1a] sm:$0xff]
      %v904 = vld [vmem:[%s219 + $0x22] sm:$0xff]
      %v905 = vld [vmem:[%s219 + $0x2a] sm:$0xff]
      %v906 = vld [vmem:[%s219 + $0x32] sm:$0xff]
      %v907 = vld [vmem:[%s219 + $0x3a] sm:$0xff]
      %v908 = vld [vmem:[%s219 + $0x42] sm:$0xff]
      %v909 = vld [vmem:[%s219 + $0x4a] sm:$0xff]
      %v910 = vld [vmem:[%s219 + $0x52] sm:$0xff]
      %v911 = vld [vmem:[%s219 + $0x5a] sm:$0xff]
      %v912 = vld [vmem:[%s219 + $0x62] sm:$0xff]
      %v913 = vld [vmem:[%s219 + $0x6a] sm:$0xff]
      %v914 = vld [vmem:[%s219 + $0x72] sm:$0xff]
      %v915 = vld [vmem:[%s219 + $0x7a] sm:$0xff]
      %v916 = vld [vmem:[%s219 + $0x82] sm:$0xff]
      %v917 = vld [vmem:[%s219 + $0x8a] sm:$0xff]
      %v918 = vld [vmem:[%s219 + $0x92] sm:$0xff]
      %v919 = vld [vmem:[%s219 + $0x9a] sm:$0xff]
      %v920 = vld [vmem:[%s219 + $0xa2] sm:$0xff]
      %v921 = vld [vmem:[%s219 + $0xaa] sm:$0xff]
      %v922 = vld [vmem:[%s219 + $0xb2] sm:$0xff]
      %v923 = vld [vmem:[%s219 + $0xba] sm:$0xff]
      %v924 = vld [vmem:[%s219 + $0xc2] sm:$0xff]
      %v925 = vld [vmem:[%s219 + $0xca] sm:$0xff]
      %v926 = vld [vmem:[%s219 + $0xd2] sm:$0xff]
      %v927 = vld [vmem:[%s219 + $0xda] sm:$0xff]
      %v928 = vld [vmem:[%s219 + $0xe2] sm:$0xff]
      %v929 = vld [vmem:[%s219 + $0xea] sm:$0xff]
      %v930 = vld [vmem:[%s219 + $0xf2] sm:$0xff]
      %v931 = vld [vmem:[%s219 + $0xfa] sm:$0xff]
      %v932 = vld [vmem:[%s219 + $0x102] sm:$0xff]
      %v933 = vld [vmem:[%s219 + $0x10a] sm:$0xff]
      %v934 = vld [vmem:[%s219 + $0x112] sm:$0xff]
      %v935 = vld [vmem:[%s219 + $0x11a] sm:$0xff]
      %v936 = vld [vmem:[%s219 + $0x122] sm:$0xff]
      %v937 = vld [vmem:[%s219 + $0x12a] sm:$0xff]
      %v938 = vld [vmem:[%s219 + $0x132] sm:$0xff]
      %v939 = vld [vmem:[%s219 + $0x13a] sm:$0xff]
      %v940 = vld [vmem:[%s219 + $0x142] sm:$0xff]
      %v941 = vld [vmem:[%s219 + $0x14a] sm:$0xff]
      %v942 = vld [vmem:[%s219 + $0x152] sm:$0xff]
      %v943 = vld [vmem:[%s219 + $0x15a] sm:$0xff]
      %v944 = vld [vmem:[%s219 + $0x162] sm:$0xff]
      %v945 = vld [vmem:[%s219 + $0x16a] sm:$0xff]
      %v946 = vld [vmem:[%s219 + $0x172] sm:$0xff]
      %v947 = vld [vmem:[%s219 + $0x17a] sm:$0xff]
      %v948 = vld [vmem:[%s219 + $0x182] sm:$0xff]
      %v949 = vld [vmem:[%s219 + $0x18a] sm:$0xff]
      %v950 = vld [vmem:[%s219 + $0x192] sm:$0xff]
      %v951 = vld [vmem:[%s219 + $0x19a] sm:$0xff]
      %v952 = vld [vmem:[%s219 + $0x1a2] sm:$0xff]
      %v953 = vld [vmem:[%s219 + $0x1aa] sm:$0xff]
      %v954 = vld [vmem:[%s219 + $0x1b2] sm:$0xff]
      %v955 = vld [vmem:[%s219 + $0x1ba] sm:$0xff]
      %v956 = vld [vmem:[%s219 + $0x1c2] sm:$0xff]
      %v957 = vld [vmem:[%s219 + $0x1ca] sm:$0xff]
      %v958 = vld [vmem:[%s219 + $0x1d2] sm:$0xff]
      %v959 = vld [vmem:[%s219 + $0x1da] sm:$0xff]
      %v960 = vld [vmem:[%s219 + $0x1e2] sm:$0xff]
      %v961 = vld [vmem:[%s219 + $0x1ea] sm:$0xff]
      %v962 = vld [vmem:[%s219 + $0x1f2] sm:$0xff]
      %v963 = vld [vmem:[%s219 + $0x1fa] sm:$0xff]
      %v964 = vld [vmem:[%s219 + $0x202] sm:$0xff]
      %v965 = vld [vmem:[%s219 + $0x20a] sm:$0xff]
      %v966 = vld [vmem:[%s219 + $0x212] sm:$0xff]
      %v967 = vld [vmem:[%s219 + $0x21a] sm:$0xff]
      %v968 = vld [vmem:[%s219 + $0x222] sm:$0xff]
      %v969 = vld [vmem:[%s219 + $0x22a] sm:$0xff]
      %v970 = vld [vmem:[%s219 + $0x232] sm:$0xff]
      %v971 = vld [vmem:[%s219 + $0x23a] sm:$0xff]
      %v972 = vld [vmem:[%s219 + $0x242] sm:$0xff]
      %v973 = vld [vmem:[%s219 + $0x24a] sm:$0xff]
      %v974 = vld [vmem:[%s219 + $0x252] sm:$0xff]
      %v975 = vld [vmem:[%s219 + $0x25a] sm:$0xff]
      %v976 = vld [vmem:[%s219 + $0x262] sm:$0xff]
      %v977 = vld [vmem:[%s219 + $0x26a] sm:$0xff]
      %v978 = vld [vmem:[%s219 + $0x272] sm:$0xff]
      %v979 = vld [vmem:[%s219 + $0x27a] sm:$0xff]
      %v980 = vld [vmem:[%s219 + $0x282] sm:$0xff]
      %v981 = vld [vmem:[%s219 + $0x28a] sm:$0xff]
      %v982 = vld [vmem:[%s219 + $0x292] sm:$0xff]
      %v983 = vld [vmem:[%s219 + $0x29a] sm:$0xff]
      %v984 = vld [vmem:[%s219 + $0x2a2] sm:$0xff]
      %v985 = vld [vmem:[%s219 + $0x2aa] sm:$0xff]
      %v986 = vld [vmem:[%s219 + $0x2b2] sm:$0xff]
      %v987 = vld [vmem:[%s219 + $0x2ba] sm:$0xff]
      %v988 = vld [vmem:[%s219 + $0x2c2] sm:$0xff]
      %v989 = vld [vmem:[%s219 + $0x2ca] sm:$0xff]
      %v990 = vld [vmem:[%s219 + $0x2d2] sm:$0xff]
      %v991 = vld [vmem:[%s219 + $0x2da] sm:$0xff]
      %v992 = vld [vmem:[%s219 + $0x2e2] sm:$0xff]
      %v993 = vld [vmem:[%s219 + $0x2ea] sm:$0xff]
      %v994 = vld [vmem:[%s219 + $0x2f2] sm:$0xff]
      %v995 = vld [vmem:[%s219 + $0x2fa] sm:$0xff]
      %v996 = vld [vmem:[%s219 + $0x302] sm:$0xff]
      %v997 = vld [vmem:[%s219 + $0x30a] sm:$0xff]
      %v998 = vld [vmem:[%s219 + $0x312] sm:$0xff]
      %v999 = vld [vmem:[%s219 + $0x31a] sm:$0xff]
      %v1000 = vld [vmem:[%s219 + $0x322] sm:$0xff]
      %v1001 = vld [vmem:[%s219 + $0x32a] sm:$0xff]
      %v1002 = vld [vmem:[%s219 + $0x332] sm:$0xff]
      %v1003 = vld [vmem:[%s219 + $0x33a] sm:$0xff]
      %v1004 = vld [vmem:[%s219 + $0x342] sm:$0xff]
      %v1005 = vld [vmem:[%s219 + $0x34a] sm:$0xff]
      %v1006 = vld [vmem:[%s219 + $0x352] sm:$0xff]
      %v1007 = vld [vmem:[%s219 + $0x35a] sm:$0xff]
      %v1008 = vld [vmem:[%s219 + $0x362] sm:$0xff]
      %v1009 = vld [vmem:[%s219 + $0x36a] sm:$0xff]
      %v1010 = vld [vmem:[%s219 + $0x372] sm:$0xff]
      %v1011 = vld [vmem:[%s219 + $0x37a] sm:$0xff]
      %v1012 = vpack.c.bf16 %v901, %v900
      %v1013 = vpack.c.bf16 %v903, %v902
      %v1014 = vpack.c.bf16 %v905, %v904
      %v1015 = vpack.c.bf16 %v907, %v906
      %v1016 = vpack.c.bf16 %v909, %v908
      %v1017 = vpack.c.bf16 %v911, %v910
      %v1018 = vpack.c.bf16 %v913, %v912
      %v1019 = vpack.c.bf16 %v915, %v914
      %v1020 = vpack.c.bf16 %v917, %v916
      %v1021 = vpack.c.bf16 %v919, %v918
      %v1022 = vpack.c.bf16 %v921, %v920
      %v1023 = vpack.c.bf16 %v923, %v922
      %v1024 = vpack.c.bf16 %v925, %v924
      %v1025 = vpack.c.bf16 %v927, %v926
      %v1026 = vpack.c.bf16 %v929, %v928
      %v1027 = vpack.c.bf16 %v931, %v930
      %v1028 = vpack.c.bf16 %v933, %v932
      %v1029 = vpack.c.bf16 %v935, %v934
      %v1030 = vpack.c.bf16 %v937, %v936
      %v1031 = vpack.c.bf16 %v939, %v938
      %v1032 = vpack.c.bf16 %v941, %v940
      %v1033 = vpack.c.bf16 %v943, %v942
      %v1034 = vpack.c.bf16 %v945, %v944
      %v1035 = vpack.c.bf16 %v947, %v946
      %v1036 = vpack.c.bf16 %v949, %v948
      %v1037 = vpack.c.bf16 %v951, %v950
      %v1038 = vpack.c.bf16 %v953, %v952
      %v1039 = vpack.c.bf16 %v955, %v954
      %v1040 = vpack.c.bf16 %v957, %v956
      %v1041 = vpack.c.bf16 %v959, %v958
      %v1042 = vpack.c.bf16 %v961, %v960
      %v1043 = vpack.c.bf16 %v963, %v962
      %v1044 = vpack.c.bf16 %v965, %v964
      %v1045 = vpack.c.bf16 %v967, %v966
      %v1046 = vpack.c.bf16 %v969, %v968
      %v1047 = vpack.c.bf16 %v971, %v970
      %v1048 = vpack.c.bf16 %v973, %v972
      %v1049 = vpack.c.bf16 %v975, %v974
      %v1050 = vpack.c.bf16 %v977, %v976
      %v1051 = vpack.c.bf16 %v979, %v978
      %v1052 = vpack.c.bf16 %v981, %v980
      %v1053 = vpack.c.bf16 %v983, %v982
      %v1054 = vpack.c.bf16 %v985, %v984
      %v1055 = vpack.c.bf16 %v987, %v986
      %v1056 = vpack.c.bf16 %v989, %v988
      %v1057 = vpack.c.bf16 %v991, %v990
      %v1058 = vpack.c.bf16 %v993, %v992
      %v1059 = vpack.c.bf16 %v995, %v994
      %v1060 = vpack.c.bf16 %v997, %v996
      %v1061 = vpack.c.bf16 %v999, %v998
      %v1062 = vpack.c.bf16 %v1001, %v1000
      %v1063 = vpack.c.bf16 %v1003, %v1002
      %v1064 = vpack.c.bf16 %v1005, %v1004
      %v1065 = vpack.c.bf16 %v1007, %v1006
      %v1066 = vpack.c.bf16 %v1009, %v1008
      %v1067 = vpack.c.bf16 %v1011, %v1010
      %1124 = vrot.lane.b32.xlu0 %v1012, 24
      %v1125 = vpop.permute.xlu0 %1124
      %1126 = vrot.lane.b32.xlu0 %v1013, 24
      %v1127 = vpop.permute.xlu0 %1126
      %1128 = vrot.lane.b32.xlu0 %v1014, 24
      %v1129 = vpop.permute.xlu0 %1128
      %1130 = vrot.lane.b32.xlu0 %v1015, 24
      %v1131 = vpop.permute.xlu0 %1130
      %1132 = vrot.lane.b32.xlu0 %v1016, 24
      %v1133 = vpop.permute.xlu0 %1132
      %1134 = vrot.lane.b32.xlu0 %v1017, 24
      %v1135 = vpop.permute.xlu0 %1134
      %1136 = vrot.lane.b32.xlu0 %v1018, 24
      %v1137 = vpop.permute.xlu0 %1136
      %1138 = vrot.lane.b32.xlu0 %v1019, 24
      %v1139 = vpop.permute.xlu0 %1138
      %1140 = vrot.lane.b32.xlu0 %v1020, 24
      %v1141 = vpop.permute.xlu0 %1140
      %1142 = vrot.lane.b32.xlu0 %v1021, 24
      %v1143 = vpop.permute.xlu0 %1142
      %1144 = vrot.lane.b32.xlu0 %v1022, 24
      %v1145 = vpop.permute.xlu0 %1144
      %1146 = vrot.lane.b32.xlu0 %v1023, 24
      %v1147 = vpop.permute.xlu0 %1146
      %1148 = vrot.lane.b32.xlu0 %v1024, 24
      %v1149 = vpop.permute.xlu0 %1148
      %1150 = vrot.lane.b32.xlu0 %v1025, 24
      %v1151 = vpop.permute.xlu0 %1150
      %1152 = vrot.lane.b32.xlu0 %v1026, 24
      %v1153 = vpop.permute.xlu0 %1152
      %1154 = vrot.lane.b32.xlu0 %v1027, 24
      %v1155 = vpop.permute.xlu0 %1154
      %1156 = vrot.lane.b32.xlu0 %v1028, 24
      %v1157 = vpop.permute.xlu0 %1156
      %1158 = vrot.lane.b32.xlu0 %v1029, 24
      %v1159 = vpop.permute.xlu0 %1158
      %1160 = vrot.lane.b32.xlu0 %v1030, 24
      %v1161 = vpop.permute.xlu0 %1160
      %1162 = vrot.lane.b32.xlu0 %v1031, 24
      %v1163 = vpop.permute.xlu0 %1162
      %1164 = vrot.lane.b32.xlu0 %v1032, 24
      %v1165 = vpop.permute.xlu0 %1164
      %1166 = vrot.lane.b32.xlu0 %v1033, 24
      %v1167 = vpop.permute.xlu0 %1166
      %1168 = vrot.lane.b32.xlu0 %v1034, 24
      %v1169 = vpop.permute.xlu0 %1168
      %1170 = vrot.lane.b32.xlu0 %v1035, 24
      %v1171 = vpop.permute.xlu0 %1170
      %1172 = vrot.lane.b32.xlu0 %v1036, 24
      %v1173 = vpop.permute.xlu0 %1172
      %1174 = vrot.lane.b32.xlu0 %v1037, 24
      %v1175 = vpop.permute.xlu0 %1174
      %1176 = vrot.lane.b32.xlu0 %v1038, 24
      %v1177 = vpop.permute.xlu0 %1176
      %1178 = vrot.lane.b32.xlu0 %v1039, 24
      %v1179 = vpop.permute.xlu0 %1178
      %1180 = vrot.lane.b32.xlu0 %v1040, 24
      %v1181 = vpop.permute.xlu0 %1180
      %1182 = vrot.lane.b32.xlu0 %v1041, 24
      %v1183 = vpop.permute.xlu0 %1182
      %1184 = vrot.lane.b32.xlu0 %v1042, 24
      %v1185 = vpop.permute.xlu0 %1184
      %1186 = vrot.lane.b32.xlu0 %v1043, 24
      %v1187 = vpop.permute.xlu0 %1186
      %1188 = vrot.lane.b32.xlu0 %v1044, 24
      %v1189 = vpop.permute.xlu0 %1188
      %1190 = vrot.lane.b32.xlu0 %v1045, 24
      %v1191 = vpop.permute.xlu0 %1190
      %1192 = vrot.lane.b32.xlu0 %v1046, 24
      %v1193 = vpop.permute.xlu0 %1192
      %1194 = vrot.lane.b32.xlu0 %v1047, 24
      %v1195 = vpop.permute.xlu0 %1194
      %1196 = vrot.lane.b32.xlu0 %v1048, 24
      %v1197 = vpop.permute.xlu0 %1196
      %1198 = vrot.lane.b32.xlu0 %v1049, 24
      %v1199 = vpop.permute.xlu0 %1198
      %1200 = vrot.lane.b32.xlu0 %v1050, 24
      %v1201 = vpop.permute.xlu0 %1200
      %1202 = vrot.lane.b32.xlu0 %v1051, 24
      %v1203 = vpop.permute.xlu0 %1202
      %1204 = vrot.lane.b32.xlu0 %v1052, 24
      %v1205 = vpop.permute.xlu0 %1204
      %1206 = vrot.lane.b32.xlu0 %v1053, 24
      %v1207 = vpop.permute.xlu0 %1206
      %1208 = vrot.lane.b32.xlu0 %v1054, 24
      %v1209 = vpop.permute.xlu0 %1208
      %1210 = vrot.lane.b32.xlu0 %v1055, 24
      %v1211 = vpop.permute.xlu0 %1210
      %1212 = vrot.lane.b32.xlu0 %v1056, 24
      %v1213 = vpop.permute.xlu0 %1212
      %1214 = vrot.lane.b32.xlu0 %v1057, 24
      %v1215 = vpop.permute.xlu0 %1214
      %1216 = vrot.lane.b32.xlu0 %v1058, 24
      %v1217 = vpop.permute.xlu0 %1216
      %1218 = vrot.lane.b32.xlu0 %v1059, 24
      %v1219 = vpop.permute.xlu0 %1218
      %1220 = vrot.lane.b32.xlu0 %v1060, 24
      %v1221 = vpop.permute.xlu0 %1220
      %1222 = vrot.lane.b32.xlu0 %v1061, 24
      %v1223 = vpop.permute.xlu0 %1222
      %1224 = vrot.lane.b32.xlu0 %v1062, 24
      %v1225 = vpop.permute.xlu0 %1224
      %1226 = vrot.lane.b32.xlu0 %v1063, 24
      %v1227 = vpop.permute.xlu0 %1226
      %1228 = vrot.lane.b32.xlu0 %v1064, 24
      %v1229 = vpop.permute.xlu0 %1228
      %1230 = vrot.lane.b32.xlu0 %v1065, 24
      %v1231 = vpop.permute.xlu0 %1230
      %1232 = vrot.lane.b32.xlu0 %v1066, 24
      %v1233 = vpop.permute.xlu0 %1232
      %1234 = vrot.lane.b32.xlu0 %v1067, 24
      %v1235 = vpop.permute.xlu0 %1234
      %vm1292 = vcmask 294080
      %1293 = vst.msk [vmem:[#allocation2] sm:$0xff] %vm1292, %v1125
      %1294 = vst.msk [vmem:[#allocation2 + $0x8] sm:$0xff] %vm1292, %v1127
      %1295 = vst.msk [vmem:[#allocation2 + $0x10] sm:$0xff] %vm1292, %v1129
      %1296 = vst.msk [vmem:[#allocation2 + $0x18] sm:$0xff] %vm1292, %v1131
      %1297 = vst.msk [vmem:[#allocation2 + $0x20] sm:$0xff] %vm1292, %v1133
      %1298 = vst.msk [vmem:[#allocation2 + $0x28] sm:$0xff] %vm1292, %v1135
      %1299 = vst.msk [vmem:[#allocation2 + $0x30] sm:$0xff] %vm1292, %v1137
      %1300 = vst.msk [vmem:[#allocation2 + $0x38] sm:$0xff] %vm1292, %v1139
      %1301 = vst.msk [vmem:[#allocation2 + $0x40] sm:$0xff] %vm1292, %v1141
      %1302 = vst.msk [vmem:[#allocation2 + $0x48] sm:$0xff] %vm1292, %v1143
      %1303 = vst.msk [vmem:[#allocation2 + $0x50] sm:$0xff] %vm1292, %v1145
      %1304 = vst.msk [vmem:[#allocation2 + $0x58] sm:$0xff] %vm1292, %v1147
      %1305 = vst.msk [vmem:[#allocation2 + $0x60] sm:$0xff] %vm1292, %v1149
      %1306 = vst.msk [vmem:[#allocation2 + $0x68] sm:$0xff] %vm1292, %v1151
      %1307 = vst.msk [vmem:[#allocation2 + $0x70] sm:$0xff] %vm1292, %v1153
      %1308 = vst.msk [vmem:[#allocation2 + $0x78] sm:$0xff] %vm1292, %v1155
      %1309 = vst.msk [vmem:[#allocation2 + $0x80] sm:$0xff] %vm1292, %v1157
      %1310 = vst.msk [vmem:[#allocation2 + $0x88] sm:$0xff] %vm1292, %v1159
      %1311 = vst.msk [vmem:[#allocation2 + $0x90] sm:$0xff] %vm1292, %v1161
      %1312 = vst.msk [vmem:[#allocation2 + $0x98] sm:$0xff] %vm1292, %v1163
      %1313 = vst.msk [vmem:[#allocation2 + $0xa0] sm:$0xff] %vm1292, %v1165
      %1314 = vst.msk [vmem:[#allocation2 + $0xa8] sm:$0xff] %vm1292, %v1167
      %1315 = vst.msk [vmem:[#allocation2 + $0xb0] sm:$0xff] %vm1292, %v1169
      %1316 = vst.msk [vmem:[#allocation2 + $0xb8] sm:$0xff] %vm1292, %v1171
      %1317 = vst.msk [vmem:[#allocation2 + $0xc0] sm:$0xff] %vm1292, %v1173
      %1318 = vst.msk [vmem:[#allocation2 + $0xc8] sm:$0xff] %vm1292, %v1175
      %1319 = vst.msk [vmem:[#allocation2 + $0xd0] sm:$0xff] %vm1292, %v1177
      %1320 = vst.msk [vmem:[#allocation2 + $0xd8] sm:$0xff] %vm1292, %v1179
      %1321 = vst.msk [vmem:[#allocation2 + $0xe0] sm:$0xff] %vm1292, %v1181
      %1322 = vst.msk [vmem:[#allocation2 + $0xe8] sm:$0xff] %vm1292, %v1183
      %1323 = vst.msk [vmem:[#allocation2 + $0xf0] sm:$0xff] %vm1292, %v1185
      %1324 = vst.msk [vmem:[#allocation2 + $0xf8] sm:$0xff] %vm1292, %v1187
      %1325 = vst.msk [vmem:[#allocation2 + $0x100] sm:$0xff] %vm1292, %v1189
      %1326 = vst.msk [vmem:[#allocation2 + $0x108] sm:$0xff] %vm1292, %v1191
      %1327 = vst.msk [vmem:[#allocation2 + $0x110] sm:$0xff] %vm1292, %v1193
      %1328 = vst.msk [vmem:[#allocation2 + $0x118] sm:$0xff] %vm1292, %v1195
      %1329 = vst.msk [vmem:[#allocation2 + $0x120] sm:$0xff] %vm1292, %v1197
      %1330 = vst.msk [vmem:[#allocation2 + $0x128] sm:$0xff] %vm1292, %v1199
      %1331 = vst.msk [vmem:[#allocation2 + $0x130] sm:$0xff] %vm1292, %v1201
      %1332 = vst.msk [vmem:[#allocation2 + $0x138] sm:$0xff] %vm1292, %v1203
      %1333 = vst.msk [vmem:[#allocation2 + $0x140] sm:$0xff] %vm1292, %v1205
      %1334 = vst.msk [vmem:[#allocation2 + $0x148] sm:$0xff] %vm1292, %v1207
      %1335 = vst.msk [vmem:[#allocation2 + $0x150] sm:$0xff] %vm1292, %v1209
      %1336 = vst.msk [vmem:[#allocation2 + $0x158] sm:$0xff] %vm1292, %v1211
      %1337 = vst.msk [vmem:[#allocation2 + $0x160] sm:$0xff] %vm1292, %v1213
      %1338 = vst.msk [vmem:[#allocation2 + $0x168] sm:$0xff] %vm1292, %v1215
      %1339 = vst.msk [vmem:[#allocation2 + $0x170] sm:$0xff] %vm1292, %v1217
      %1340 = vst.msk [vmem:[#allocation2 + $0x178] sm:$0xff] %vm1292, %v1219
      %1341 = vst.msk [vmem:[#allocation2 + $0x180] sm:$0xff] %vm1292, %v1221
      %1342 = vst.msk [vmem:[#allocation2 + $0x188] sm:$0xff] %vm1292, %v1223
      %1343 = vst.msk [vmem:[#allocation2 + $0x190] sm:$0xff] %vm1292, %v1225
      %1344 = vst.msk [vmem:[#allocation2 + $0x198] sm:$0xff] %vm1292, %v1227
      %1345 = vst.msk [vmem:[#allocation2 + $0x1a0] sm:$0xff] %vm1292, %v1229
      %1346 = vst.msk [vmem:[#allocation2 + $0x1a8] sm:$0xff] %vm1292, %v1231
      %1347 = vst.msk [vmem:[#allocation2 + $0x1b0] sm:$0xff] %vm1292, %v1233
      %1348 = vst.msk [vmem:[#allocation2 + $0x1b8] sm:$0xff] %vm1292, %v1235
      %v1349 = vld [vmem:[%s219 + $0x20] sm:$0xff]
      %v1350 = vld [vmem:[%s219 + $0x28] sm:$0xff]
      %v1351 = vld [vmem:[%s219 + $0x30] sm:$0xff]
      %v1352 = vld [vmem:[%s219 + $0x38] sm:$0xff]
      %v1353 = vld [vmem:[%s219 + $0x40] sm:$0xff]
      %v1354 = vld [vmem:[%s219 + $0x48] sm:$0xff]
      %v1355 = vld [vmem:[%s219 + $0x50] sm:$0xff]
      %v1356 = vld [vmem:[%s219 + $0x58] sm:$0xff]
      %v1357 = vld [vmem:[%s219 + $0x60] sm:$0xff]
      %v1358 = vld [vmem:[%s219 + $0x68] sm:$0xff]
      %v1359 = vld [vmem:[%s219 + $0x70] sm:$0xff]
      %v1360 = vld [vmem:[%s219 + $0x78] sm:$0xff]
      %v1361 = vld [vmem:[%s219 + $0x80] sm:$0xff]
      %v1362 = vld [vmem:[%s219 + $0x88] sm:$0xff]
      %v1363 = vld [vmem:[%s219 + $0x90] sm:$0xff]
      %v1364 = vld [vmem:[%s219 + $0x98] sm:$0xff]
      %v1365 = vld [vmem:[%s219 + $0xa0] sm:$0xff]
      %v1366 = vld [vmem:[%s219 + $0xa8] sm:$0xff]
      %v1367 = vld [vmem:[%s219 + $0xb0] sm:$0xff]
      %v1368 = vld [vmem:[%s219 + $0xb8] sm:$0xff]
      %v1369 = vld [vmem:[%s219 + $0xc0] sm:$0xff]
      %v1370 = vld [vmem:[%s219 + $0xc8] sm:$0xff]
      %v1371 = vld [vmem:[%s219 + $0xd0] sm:$0xff]
      %v1372 = vld [vmem:[%s219 + $0xd8] sm:$0xff]
      %v1373 = vld [vmem:[%s219 + $0xe0] sm:$0xff]
      %v1374 = vld [vmem:[%s219 + $0xe8] sm:$0xff]
      %v1375 = vld [vmem:[%s219 + $0xf0] sm:$0xff]
      %v1376 = vld [vmem:[%s219 + $0xf8] sm:$0xff]
      %v1377 = vld [vmem:[%s219 + $0x100] sm:$0xff]
      %v1378 = vld [vmem:[%s219 + $0x108] sm:$0xff]
      %v1379 = vld [vmem:[%s219 + $0x110] sm:$0xff]
      %v1380 = vld [vmem:[%s219 + $0x118] sm:$0xff]
      %v1381 = vld [vmem:[%s219 + $0x120] sm:$0xff]
      %v1382 = vld [vmem:[%s219 + $0x128] sm:$0xff]
      %v1383 = vld [vmem:[%s219 + $0x130] sm:$0xff]
      %v1384 = vld [vmem:[%s219 + $0x138] sm:$0xff]
      %v1385 = vld [vmem:[%s219 + $0x140] sm:$0xff]
      %v1386 = vld [vmem:[%s219 + $0x148] sm:$0xff]
      %v1387 = vld [vmem:[%s219 + $0x150] sm:$0xff]
      %v1388 = vld [vmem:[%s219 + $0x158] sm:$0xff]
      %v1389 = vld [vmem:[%s219 + $0x160] sm:$0xff]
      %v1390 = vld [vmem:[%s219 + $0x168] sm:$0xff]
      %v1391 = vld [vmem:[%s219 + $0x170] sm:$0xff]
      %v1392 = vld [vmem:[%s219 + $0x178] sm:$0xff]
      %v1393 = vld [vmem:[%s219 + $0x180] sm:$0xff]
      %v1394 = vld [vmem:[%s219 + $0x188] sm:$0xff]
      %v1395 = vld [vmem:[%s219 + $0x190] sm:$0xff]
      %v1396 = vld [vmem:[%s219 + $0x198] sm:$0xff]
      %v1397 = vld [vmem:[%s219 + $0x1a0] sm:$0xff]
      %v1398 = vld [vmem:[%s219 + $0x1a8] sm:$0xff]
      %v1399 = vld [vmem:[%s219 + $0x1b0] sm:$0xff]
      %v1400 = vld [vmem:[%s219 + $0x1b8] sm:$0xff]
      %v1401 = vld [vmem:[%s219 + $0x1c0] sm:$0xff]
      %v1402 = vld [vmem:[%s219 + $0x1c8] sm:$0xff]
      %v1403 = vld [vmem:[%s219 + $0x1d0] sm:$0xff]
      %v1404 = vld [vmem:[%s219 + $0x1d8] sm:$0xff]
      %v1405 = vld [vmem:[%s219 + $0x1e0] sm:$0xff]
      %v1406 = vld [vmem:[%s219 + $0x1e8] sm:$0xff]
      %v1407 = vld [vmem:[%s219 + $0x1f0] sm:$0xff]
      %v1408 = vld [vmem:[%s219 + $0x1f8] sm:$0xff]
      %v1409 = vld [vmem:[%s219 + $0x200] sm:$0xff]
      %v1410 = vld [vmem:[%s219 + $0x208] sm:$0xff]
      %v1411 = vld [vmem:[%s219 + $0x210] sm:$0xff]
      %v1412 = vld [vmem:[%s219 + $0x218] sm:$0xff]
      %v1413 = vld [vmem:[%s219 + $0x220] sm:$0xff]
      %v1414 = vld [vmem:[%s219 + $0x228] sm:$0xff]
      %v1415 = vld [vmem:[%s219 + $0x230] sm:$0xff]
      %v1416 = vld [vmem:[%s219 + $0x238] sm:$0xff]
      %v1417 = vld [vmem:[%s219 + $0x240] sm:$0xff]
      %v1418 = vld [vmem:[%s219 + $0x248] sm:$0xff]
      %v1419 = vld [vmem:[%s219 + $0x250] sm:$0xff]
      %v1420 = vld [vmem:[%s219 + $0x258] sm:$0xff]
      %v1421 = vld [vmem:[%s219 + $0x260] sm:$0xff]
      %v1422 = vld [vmem:[%s219 + $0x268] sm:$0xff]
      %v1423 = vld [vmem:[%s219 + $0x270] sm:$0xff]
      %v1424 = vld [vmem:[%s219 + $0x278] sm:$0xff]
      %v1425 = vld [vmem:[%s219 + $0x280] sm:$0xff]
      %v1426 = vld [vmem:[%s219 + $0x288] sm:$0xff]
      %v1427 = vld [vmem:[%s219 + $0x290] sm:$0xff]
      %v1428 = vld [vmem:[%s219 + $0x298] sm:$0xff]
      %v1429 = vld [vmem:[%s219 + $0x2a0] sm:$0xff]
      %v1430 = vld [vmem:[%s219 + $0x2a8] sm:$0xff]
      %v1431 = vld [vmem:[%s219 + $0x2b0] sm:$0xff]
      %v1432 = vld [vmem:[%s219 + $0x2b8] sm:$0xff]
      %v1433 = vld [vmem:[%s219 + $0x2c0] sm:$0xff]
      %v1434 = vld [vmem:[%s219 + $0x2c8] sm:$0xff]
      %v1435 = vld [vmem:[%s219 + $0x2d0] sm:$0xff]
      %v1436 = vld [vmem:[%s219 + $0x2d8] sm:$0xff]
      %v1437 = vld [vmem:[%s219 + $0x2e0] sm:$0xff]
      %v1438 = vld [vmem:[%s219 + $0x2e8] sm:$0xff]
      %v1439 = vld [vmem:[%s219 + $0x2f0] sm:$0xff]
      %v1440 = vld [vmem:[%s219 + $0x2f8] sm:$0xff]
      %v1441 = vld [vmem:[%s219 + $0x300] sm:$0xff]
      %v1442 = vld [vmem:[%s219 + $0x308] sm:$0xff]
      %v1443 = vld [vmem:[%s219 + $0x310] sm:$0xff]
      %v1444 = vld [vmem:[%s219 + $0x318] sm:$0xff]
      %v1445 = vld [vmem:[%s219 + $0x320] sm:$0xff]
      %v1446 = vld [vmem:[%s219 + $0x328] sm:$0xff]
      %v1447 = vld [vmem:[%s219 + $0x330] sm:$0xff]
      %v1448 = vld [vmem:[%s219 + $0x338] sm:$0xff]
      %v1449 = vld [vmem:[%s219 + $0x340] sm:$0xff]
      %v1450 = vld [vmem:[%s219 + $0x348] sm:$0xff]
      %v1451 = vld [vmem:[%s219 + $0x350] sm:$0xff]
      %v1452 = vld [vmem:[%s219 + $0x358] sm:$0xff]
      %v1453 = vld [vmem:[%s219 + $0x360] sm:$0xff]
      %v1454 = vld [vmem:[%s219 + $0x368] sm:$0xff]
      %v1455 = vld [vmem:[%s219 + $0x370] sm:$0xff]
      %v1456 = vld [vmem:[%s219 + $0x378] sm:$0xff]
      %v1457 = vld [vmem:[%s219 + $0x380] sm:$0xff]
      %v1458 = vld [vmem:[%s219 + $0x388] sm:$0xff]
      %v1459 = vld [vmem:[%s219 + $0x390] sm:$0xff]
      %v1460 = vld [vmem:[%s219 + $0x398] sm:$0xff]
      %v1461 = vpack.c.bf16 %v1350, %v1349
      %v1462 = vpack.c.bf16 %v1352, %v1351
      %v1463 = vpack.c.bf16 %v1354, %v1353
      %v1464 = vpack.c.bf16 %v1356, %v1355
      %v1465 = vpack.c.bf16 %v1358, %v1357
      %v1466 = vpack.c.bf16 %v1360, %v1359
      %v1467 = vpack.c.bf16 %v1362, %v1361
      %v1468 = vpack.c.bf16 %v1364, %v1363
      %v1469 = vpack.c.bf16 %v1366, %v1365
      %v1470 = vpack.c.bf16 %v1368, %v1367
      %v1471 = vpack.c.bf16 %v1370, %v1369
      %v1472 = vpack.c.bf16 %v1372, %v1371
      %v1473 = vpack.c.bf16 %v1374, %v1373
      %v1474 = vpack.c.bf16 %v1376, %v1375
      %v1475 = vpack.c.bf16 %v1378, %v1377
      %v1476 = vpack.c.bf16 %v1380, %v1379
      %v1477 = vpack.c.bf16 %v1382, %v1381
      %v1478 = vpack.c.bf16 %v1384, %v1383
      %v1479 = vpack.c.bf16 %v1386, %v1385
      %v1480 = vpack.c.bf16 %v1388, %v1387
      %v1481 = vpack.c.bf16 %v1390, %v1389
      %v1482 = vpack.c.bf16 %v1392, %v1391
      %v1483 = vpack.c.bf16 %v1394, %v1393
      %v1484 = vpack.c.bf16 %v1396, %v1395
      %v1485 = vpack.c.bf16 %v1398, %v1397
      %v1486 = vpack.c.bf16 %v1400, %v1399
      %v1487 = vpack.c.bf16 %v1402, %v1401
      %v1488 = vpack.c.bf16 %v1404, %v1403
      %v1489 = vpack.c.bf16 %v1406, %v1405
      %v1490 = vpack.c.bf16 %v1408, %v1407
      %v1491 = vpack.c.bf16 %v1410, %v1409
      %v1492 = vpack.c.bf16 %v1412, %v1411
      %v1493 = vpack.c.bf16 %v1414, %v1413
      %v1494 = vpack.c.bf16 %v1416, %v1415
      %v1495 = vpack.c.bf16 %v1418, %v1417
      %v1496 = vpack.c.bf16 %v1420, %v1419
      %v1497 = vpack.c.bf16 %v1422, %v1421
      %v1498 = vpack.c.bf16 %v1424, %v1423
      %v1499 = vpack.c.bf16 %v1426, %v1425
      %v1500 = vpack.c.bf16 %v1428, %v1427
      %v1501 = vpack.c.bf16 %v1430, %v1429
      %v1502 = vpack.c.bf16 %v1432, %v1431
      %v1503 = vpack.c.bf16 %v1434, %v1433
      %v1504 = vpack.c.bf16 %v1436, %v1435
      %v1505 = vpack.c.bf16 %v1438, %v1437
      %v1506 = vpack.c.bf16 %v1440, %v1439
      %v1507 = vpack.c.bf16 %v1442, %v1441
      %v1508 = vpack.c.bf16 %v1444, %v1443
      %v1509 = vpack.c.bf16 %v1446, %v1445
      %v1510 = vpack.c.bf16 %v1448, %v1447
      %v1511 = vpack.c.bf16 %v1450, %v1449
      %v1512 = vpack.c.bf16 %v1452, %v1451
      %v1513 = vpack.c.bf16 %v1454, %v1453
      %v1514 = vpack.c.bf16 %v1456, %v1455
      %v1515 = vpack.c.bf16 %v1458, %v1457
      %v1516 = vpack.c.bf16 %v1460, %v1459
      %1573 = vrot.lane.b32.xlu0 %v1461, 36
      %v1574 = vpop.permute.xlu0 %1573
      %1575 = vrot.lane.b32.xlu0 %v1462, 36
      %v1576 = vpop.permute.xlu0 %1575
      %1577 = vrot.lane.b32.xlu0 %v1463, 36
      %v1578 = vpop.permute.xlu0 %1577
      %1579 = vrot.lane.b32.xlu0 %v1464, 36
      %v1580 = vpop.permute.xlu0 %1579
      %1581 = vrot.lane.b32.xlu0 %v1465, 36
      %v1582 = vpop.permute.xlu0 %1581
      %1583 = vrot.lane.b32.xlu0 %v1466, 36
      %v1584 = vpop.permute.xlu0 %1583
      %1585 = vrot.lane.b32.xlu0 %v1467, 36
      %v1586 = vpop.permute.xlu0 %1585
      %1587 = vrot.lane.b32.xlu0 %v1468, 36
      %v1588 = vpop.permute.xlu0 %1587
      %1589 = vrot.lane.b32.xlu0 %v1469, 36
      %v1590 = vpop.permute.xlu0 %1589
      %1591 = vrot.lane.b32.xlu0 %v1470, 36
      %v1592 = vpop.permute.xlu0 %1591
      %1593 = vrot.lane.b32.xlu0 %v1471, 36
      %v1594 = vpop.permute.xlu0 %1593
      %1595 = vrot.lane.b32.xlu0 %v1472, 36
      %v1596 = vpop.permute.xlu0 %1595
      %1597 = vrot.lane.b32.xlu0 %v1473, 36
      %v1598 = vpop.permute.xlu0 %1597
      %1599 = vrot.lane.b32.xlu0 %v1474, 36
      %v1600 = vpop.permute.xlu0 %1599
      %1601 = vrot.lane.b32.xlu0 %v1475, 36
      %v1602 = vpop.permute.xlu0 %1601
      %1603 = vrot.lane.b32.xlu0 %v1476, 36
      %v1604 = vpop.permute.xlu0 %1603
      %1605 = vrot.lane.b32.xlu0 %v1477, 36
      %v1606 = vpop.permute.xlu0 %1605
      %1607 = vrot.lane.b32.xlu0 %v1478, 36
      %v1608 = vpop.permute.xlu0 %1607
      %1609 = vrot.lane.b32.xlu0 %v1479, 36
      %v1610 = vpop.permute.xlu0 %1609
      %1611 = vrot.lane.b32.xlu0 %v1480, 36
      %v1612 = vpop.permute.xlu0 %1611
      %1613 = vrot.lane.b32.xlu0 %v1481, 36
      %v1614 = vpop.permute.xlu0 %1613
      %1615 = vrot.lane.b32.xlu0 %v1482, 36
      %v1616 = vpop.permute.xlu0 %1615
      %1617 = vrot.lane.b32.xlu0 %v1483, 36
      %v1618 = vpop.permute.xlu0 %1617
      %1619 = vrot.lane.b32.xlu0 %v1484, 36
      %v1620 = vpop.permute.xlu0 %1619
      %1621 = vrot.lane.b32.xlu0 %v1485, 36
      %v1622 = vpop.permute.xlu0 %1621
      %1623 = vrot.lane.b32.xlu0 %v1486, 36
      %v1624 = vpop.permute.xlu0 %1623
      %1625 = vrot.lane.b32.xlu0 %v1487, 36
      %v1626 = vpop.permute.xlu0 %1625
      %1627 = vrot.lane.b32.xlu0 %v1488, 36
      %v1628 = vpop.permute.xlu0 %1627
      %1629 = vrot.lane.b32.xlu0 %v1489, 36
      %v1630 = vpop.permute.xlu0 %1629
      %1631 = vrot.lane.b32.xlu0 %v1490, 36
      %v1632 = vpop.permute.xlu0 %1631
      %1633 = vrot.lane.b32.xlu0 %v1491, 36
      %v1634 = vpop.permute.xlu0 %1633
      %1635 = vrot.lane.b32.xlu0 %v1492, 36
      %v1636 = vpop.permute.xlu0 %1635
      %1637 = vrot.lane.b32.xlu0 %v1493, 36
      %v1638 = vpop.permute.xlu0 %1637
      %1639 = vrot.lane.b32.xlu0 %v1494, 36
      %v1640 = vpop.permute.xlu0 %1639
      %1641 = vrot.lane.b32.xlu0 %v1495, 36
      %v1642 = vpop.permute.xlu0 %1641
      %1643 = vrot.lane.b32.xlu0 %v1496, 36
      %v1644 = vpop.permute.xlu0 %1643
      %1645 = vrot.lane.b32.xlu0 %v1497, 36
      %v1646 = vpop.permute.xlu0 %1645
      %1647 = vrot.lane.b32.xlu0 %v1498, 36
      %v1648 = vpop.permute.xlu0 %1647
      %1649 = vrot.lane.b32.xlu0 %v1499, 36
      %v1650 = vpop.permute.xlu0 %1649
      %1651 = vrot.lane.b32.xlu0 %v1500, 36
      %v1652 = vpop.permute.xlu0 %1651
      %1653 = vrot.lane.b32.xlu0 %v1501, 36
      %v1654 = vpop.permute.xlu0 %1653
      %1655 = vrot.lane.b32.xlu0 %v1502, 36
      %v1656 = vpop.permute.xlu0 %1655
      %1657 = vrot.lane.b32.xlu0 %v1503, 36
      %v1658 = vpop.permute.xlu0 %1657
      %1659 = vrot.lane.b32.xlu0 %v1504, 36
      %v1660 = vpop.permute.xlu0 %1659
      %1661 = vrot.lane.b32.xlu0 %v1505, 36
      %v1662 = vpop.permute.xlu0 %1661
      %1663 = vrot.lane.b32.xlu0 %v1506, 36
      %v1664 = vpop.permute.xlu0 %1663
      %1665 = vrot.lane.b32.xlu0 %v1507, 36
      %v1666 = vpop.permute.xlu0 %1665
      %1667 = vrot.lane.b32.xlu0 %v1508, 36
      %v1668 = vpop.permute.xlu0 %1667
      %1669 = vrot.lane.b32.xlu0 %v1509, 36
      %v1670 = vpop.permute.xlu0 %1669
      %1671 = vrot.lane.b32.xlu0 %v1510, 36
      %v1672 = vpop.permute.xlu0 %1671
      %1673 = vrot.lane.b32.xlu0 %v1511, 36
      %v1674 = vpop.permute.xlu0 %1673
      %1675 = vrot.lane.b32.xlu0 %v1512, 36
      %v1676 = vpop.permute.xlu0 %1675
      %1677 = vrot.lane.b32.xlu0 %v1513, 36
      %v1678 = vpop.permute.xlu0 %1677
      %1679 = vrot.lane.b32.xlu0 %v1514, 36
      %v1680 = vpop.permute.xlu0 %1679
      %1681 = vrot.lane.b32.xlu0 %v1515, 36
      %v1682 = vpop.permute.xlu0 %1681
      %1683 = vrot.lane.b32.xlu0 %v1516, 36
      %v1684 = vpop.permute.xlu0 %1683
      %vm1741 = vcmask 392480
      %1742 = vst.msk [vmem:[#allocation2] sm:$0xff] %vm1741, %v1574
      %1743 = vst.msk [vmem:[#allocation2 + $0x8] sm:$0xff] %vm1741, %v1576
      %1744 = vst.msk [vmem:[#allocation2 + $0x10] sm:$0xff] %vm1741, %v1578
      %1745 = vst.msk [vmem:[#allocation2 + $0x18] sm:$0xff] %vm1741, %v1580
      %1746 = vst.msk [vmem:[#allocation2 + $0x20] sm:$0xff] %vm1741, %v1582
      %1747 = vst.msk [vmem:[#allocation2 + $0x28] sm:$0xff] %vm1741, %v1584
      %1748 = vst.msk [vmem:[#allocation2 + $0x30] sm:$0xff] %vm1741, %v1586
      %1749 = vst.msk [vmem:[#allocation2 + $0x38] sm:$0xff] %vm1741, %v1588
      %1750 = vst.msk [vmem:[#allocation2 + $0x40] sm:$0xff] %vm1741, %v1590
      %1751 = vst.msk [vmem:[#allocation2 + $0x48] sm:$0xff] %vm1741, %v1592
      %1752 = vst.msk [vmem:[#allocation2 + $0x50] sm:$0xff] %vm1741, %v1594
      %1753 = vst.msk [vmem:[#allocation2 + $0x58] sm:$0xff] %vm1741, %v1596
      %1754 = vst.msk [vmem:[#allocation2 + $0x60] sm:$0xff] %vm1741, %v1598
      %1755 = vst.msk [vmem:[#allocation2 + $0x68] sm:$0xff] %vm1741, %v1600
      %1756 = vst.msk [vmem:[#allocation2 + $0x70] sm:$0xff] %vm1741, %v1602
      %1757 = vst.msk [vmem:[#allocation2 + $0x78] sm:$0xff] %vm1741, %v1604
      %1758 = vst.msk [vmem:[#allocation2 + $0x80] sm:$0xff] %vm1741, %v1606
      %1759 = vst.msk [vmem:[#allocation2 + $0x88] sm:$0xff] %vm1741, %v1608
      %1760 = vst.msk [vmem:[#allocation2 + $0x90] sm:$0xff] %vm1741, %v1610
      %1761 = vst.msk [vmem:[#allocation2 + $0x98] sm:$0xff] %vm1741, %v1612
      %1762 = vst.msk [vmem:[#allocation2 + $0xa0] sm:$0xff] %vm1741, %v1614
      %1763 = vst.msk [vmem:[#allocation2 + $0xa8] sm:$0xff] %vm1741, %v1616
      %1764 = vst.msk [vmem:[#allocation2 + $0xb0] sm:$0xff] %vm1741, %v1618
      %1765 = vst.msk [vmem:[#allocation2 + $0xb8] sm:$0xff] %vm1741, %v1620
      %1766 = vst.msk [vmem:[#allocation2 + $0xc0] sm:$0xff] %vm1741, %v1622
      %1767 = vst.msk [vmem:[#allocation2 + $0xc8] sm:$0xff] %vm1741, %v1624
      %1768 = vst.msk [vmem:[#allocation2 + $0xd0] sm:$0xff] %vm1741, %v1626
      %1769 = vst.msk [vmem:[#allocation2 + $0xd8] sm:$0xff] %vm1741, %v1628
      %1770 = vst.msk [vmem:[#allocation2 + $0xe0] sm:$0xff] %vm1741, %v1630
      %1771 = vst.msk [vmem:[#allocation2 + $0xe8] sm:$0xff] %vm1741, %v1632
      %1772 = vst.msk [vmem:[#allocation2 + $0xf0] sm:$0xff] %vm1741, %v1634
      %1773 = vst.msk [vmem:[#allocation2 + $0xf8] sm:$0xff] %vm1741, %v1636
      %1774 = vst.msk [vmem:[#allocation2 + $0x100] sm:$0xff] %vm1741, %v1638
      %1775 = vst.msk [vmem:[#allocation2 + $0x108] sm:$0xff] %vm1741, %v1640
      %1776 = vst.msk [vmem:[#allocation2 + $0x110] sm:$0xff] %vm1741, %v1642
      %1777 = vst.msk [vmem:[#allocation2 + $0x118] sm:$0xff] %vm1741, %v1644
      %1778 = vst.msk [vmem:[#allocation2 + $0x120] sm:$0xff] %vm1741, %v1646
      %1779 = vst.msk [vmem:[#allocation2 + $0x128] sm:$0xff] %vm1741, %v1648
      %1780 = vst.msk [vmem:[#allocation2 + $0x130] sm:$0xff] %vm1741, %v1650
      %1781 = vst.msk [vmem:[#allocation2 + $0x138] sm:$0xff] %vm1741, %v1652
      %1782 = vst.msk [vmem:[#allocation2 + $0x140] sm:$0xff] %vm1741, %v1654
      %1783 = vst.msk [vmem:[#allocation2 + $0x148] sm:$0xff] %vm1741, %v1656
      %1784 = vst.msk [vmem:[#allocation2 + $0x150] sm:$0xff] %vm1741, %v1658
      %1785 = vst.msk [vmem:[#allocation2 + $0x158] sm:$0xff] %vm1741, %v1660
      %1786 = vst.msk [vmem:[#allocation2 + $0x160] sm:$0xff] %vm1741, %v1662
      %1787 = vst.msk [vmem:[#allocation2 + $0x168] sm:$0xff] %vm1741, %v1664
      %1788 = vst.msk [vmem:[#allocation2 + $0x170] sm:$0xff] %vm1741, %v1666
      %1789 = vst.msk [vmem:[#allocation2 + $0x178] sm:$0xff] %vm1741, %v1668
      %1790 = vst.msk [vmem:[#allocation2 + $0x180] sm:$0xff] %vm1741, %v1670
      %1791 = vst.msk [vmem:[#allocation2 + $0x188] sm:$0xff] %vm1741, %v1672
      %1792 = vst.msk [vmem:[#allocation2 + $0x190] sm:$0xff] %vm1741, %v1674
      %1793 = vst.msk [vmem:[#allocation2 + $0x198] sm:$0xff] %vm1741, %v1676
      %1794 = vst.msk [vmem:[#allocation2 + $0x1a0] sm:$0xff] %vm1741, %v1678
      %1795 = vst.msk [vmem:[#allocation2 + $0x1a8] sm:$0xff] %vm1741, %v1680
      %1796 = vst.msk [vmem:[#allocation2 + $0x1b0] sm:$0xff] %vm1741, %v1682
      %1797 = vst.msk [vmem:[#allocation2 + $0x1b8] sm:$0xff] %vm1741, %v1684
      %v1798 = vld [vmem:[%s219 + $0x21] sm:$0xff]
      %v1799 = vld [vmem:[%s219 + $0x29] sm:$0xff]
      %v1800 = vld [vmem:[%s219 + $0x31] sm:$0xff]
      %v1801 = vld [vmem:[%s219 + $0x39] sm:$0xff]
      %v1802 = vld [vmem:[%s219 + $0x41] sm:$0xff]
      %v1803 = vld [vmem:[%s219 + $0x49] sm:$0xff]
      %v1804 = vld [vmem:[%s219 + $0x51] sm:$0xff]
      %v1805 = vld [vmem:[%s219 + $0x59] sm:$0xff]
      %v1806 = vld [vmem:[%s219 + $0x61] sm:$0xff]
      %v1807 = vld [vmem:[%s219 + $0x69] sm:$0xff]
      %v1808 = vld [vmem:[%s219 + $0x71] sm:$0xff]
      %v1809 = vld [vmem:[%s219 + $0x79] sm:$0xff]
      %v1810 = vld [vmem:[%s219 + $0x81] sm:$0xff]
      %v1811 = vld [vmem:[%s219 + $0x89] sm:$0xff]
      %v1812 = vld [vmem:[%s219 + $0x91] sm:$0xff]
      %v1813 = vld [vmem:[%s219 + $0x99] sm:$0xff]
      %v1814 = vld [vmem:[%s219 + $0xa1] sm:$0xff]
      %v1815 = vld [vmem:[%s219 + $0xa9] sm:$0xff]
      %v1816 = vld [vmem:[%s219 + $0xb1] sm:$0xff]
      %v1817 = vld [vmem:[%s219 + $0xb9] sm:$0xff]
      %v1818 = vld [vmem:[%s219 + $0xc1] sm:$0xff]
      %v1819 = vld [vmem:[%s219 + $0xc9] sm:$0xff]
      %v1820 = vld [vmem:[%s219 + $0xd1] sm:$0xff]
      %v1821 = vld [vmem:[%s219 + $0xd9] sm:$0xff]
      %v1822 = vld [vmem:[%s219 + $0xe1] sm:$0xff]
      %v1823 = vld [vmem:[%s219 + $0xe9] sm:$0xff]
      %v1824 = vld [vmem:[%s219 + $0xf1] sm:$0xff]
      %v1825 = vld [vmem:[%s219 + $0xf9] sm:$0xff]
      %v1826 = vld [vmem:[%s219 + $0x101] sm:$0xff]
      %v1827 = vld [vmem:[%s219 + $0x109] sm:$0xff]
      %v1828 = vld [vmem:[%s219 + $0x111] sm:$0xff]
      %v1829 = vld [vmem:[%s219 + $0x119] sm:$0xff]
      %v1830 = vld [vmem:[%s219 + $0x121] sm:$0xff]
      %v1831 = vld [vmem:[%s219 + $0x129] sm:$0xff]
      %v1832 = vld [vmem:[%s219 + $0x131] sm:$0xff]
      %v1833 = vld [vmem:[%s219 + $0x139] sm:$0xff]
      %v1834 = vld [vmem:[%s219 + $0x141] sm:$0xff]
      %v1835 = vld [vmem:[%s219 + $0x149] sm:$0xff]
      %v1836 = vld [vmem:[%s219 + $0x151] sm:$0xff]
      %v1837 = vld [vmem:[%s219 + $0x159] sm:$0xff]
      %v1838 = vld [vmem:[%s219 + $0x161] sm:$0xff]
      %v1839 = vld [vmem:[%s219 + $0x169] sm:$0xff]
      %v1840 = vld [vmem:[%s219 + $0x171] sm:$0xff]
      %v1841 = vld [vmem:[%s219 + $0x179] sm:$0xff]
      %v1842 = vld [vmem:[%s219 + $0x181] sm:$0xff]
      %v1843 = vld [vmem:[%s219 + $0x189] sm:$0xff]
      %v1844 = vld [vmem:[%s219 + $0x191] sm:$0xff]
      %v1845 = vld [vmem:[%s219 + $0x199] sm:$0xff]
      %v1846 = vld [vmem:[%s219 + $0x1a1] sm:$0xff]
      %v1847 = vld [vmem:[%s219 + $0x1a9] sm:$0xff]
      %v1848 = vld [vmem:[%s219 + $0x1b1] sm:$0xff]
      %v1849 = vld [vmem:[%s219 + $0x1b9] sm:$0xff]
      %v1850 = vld [vmem:[%s219 + $0x1c1] sm:$0xff]
      %v1851 = vld [vmem:[%s219 + $0x1c9] sm:$0xff]
      %v1852 = vld [vmem:[%s219 + $0x1d1] sm:$0xff]
      %v1853 = vld [vmem:[%s219 + $0x1d9] sm:$0xff]
      %v1854 = vld [vmem:[%s219 + $0x1e1] sm:$0xff]
      %v1855 = vld [vmem:[%s219 + $0x1e9] sm:$0xff]
      %v1856 = vld [vmem:[%s219 + $0x1f1] sm:$0xff]
      %v1857 = vld [vmem:[%s219 + $0x1f9] sm:$0xff]
      %v1858 = vld [vmem:[%s219 + $0x201] sm:$0xff]
      %v1859 = vld [vmem:[%s219 + $0x209] sm:$0xff]
      %v1860 = vld [vmem:[%s219 + $0x211] sm:$0xff]
      %v1861 = vld [vmem:[%s219 + $0x219] sm:$0xff]
      %v1862 = vld [vmem:[%s219 + $0x221] sm:$0xff]
      %v1863 = vld [vmem:[%s219 + $0x229] sm:$0xff]
      %v1864 = vld [vmem:[%s219 + $0x231] sm:$0xff]
      %v1865 = vld [vmem:[%s219 + $0x239] sm:$0xff]
      %v1866 = vld [vmem:[%s219 + $0x241] sm:$0xff]
      %v1867 = vld [vmem:[%s219 + $0x249] sm:$0xff]
      %v1868 = vld [vmem:[%s219 + $0x251] sm:$0xff]
      %v1869 = vld [vmem:[%s219 + $0x259] sm:$0xff]
      %v1870 = vld [vmem:[%s219 + $0x261] sm:$0xff]
      %v1871 = vld [vmem:[%s219 + $0x269] sm:$0xff]
      %v1872 = vld [vmem:[%s219 + $0x271] sm:$0xff]
      %v1873 = vld [vmem:[%s219 + $0x279] sm:$0xff]
      %v1874 = vld [vmem:[%s219 + $0x281] sm:$0xff]
      %v1875 = vld [vmem:[%s219 + $0x289] sm:$0xff]
      %v1876 = vld [vmem:[%s219 + $0x291] sm:$0xff]
      %v1877 = vld [vmem:[%s219 + $0x299] sm:$0xff]
      %v1878 = vld [vmem:[%s219 + $0x2a1] sm:$0xff]
      %v1879 = vld [vmem:[%s219 + $0x2a9] sm:$0xff]
      %v1880 = vld [vmem:[%s219 + $0x2b1] sm:$0xff]
      %v1881 = vld [vmem:[%s219 + $0x2b9] sm:$0xff]
      %v1882 = vld [vmem:[%s219 + $0x2c1] sm:$0xff]
      %v1883 = vld [vmem:[%s219 + $0x2c9] sm:$0xff]
      %v1884 = vld [vmem:[%s219 + $0x2d1] sm:$0xff]
      %v1885 = vld [vmem:[%s219 + $0x2d9] sm:$0xff]
      %v1886 = vld [vmem:[%s219 + $0x2e1] sm:$0xff]
      %v1887 = vld [vmem:[%s219 + $0x2e9] sm:$0xff]
      %v1888 = vld [vmem:[%s219 + $0x2f1] sm:$0xff]
      %v1889 = vld [vmem:[%s219 + $0x2f9] sm:$0xff]
      %v1890 = vld [vmem:[%s219 + $0x301] sm:$0xff]
      %v1891 = vld [vmem:[%s219 + $0x309] sm:$0xff]
      %v1892 = vld [vmem:[%s219 + $0x311] sm:$0xff]
      %v1893 = vld [vmem:[%s219 + $0x319] sm:$0xff]
      %v1894 = vld [vmem:[%s219 + $0x321] sm:$0xff]
      %v1895 = vld [vmem:[%s219 + $0x329] sm:$0xff]
      %v1896 = vld [vmem:[%s219 + $0x331] sm:$0xff]
      %v1897 = vld [vmem:[%s219 + $0x339] sm:$0xff]
      %v1898 = vld [vmem:[%s219 + $0x341] sm:$0xff]
      %v1899 = vld [vmem:[%s219 + $0x349] sm:$0xff]
      %v1900 = vld [vmem:[%s219 + $0x351] sm:$0xff]
      %v1901 = vld [vmem:[%s219 + $0x359] sm:$0xff]
      %v1902 = vld [vmem:[%s219 + $0x361] sm:$0xff]
      %v1903 = vld [vmem:[%s219 + $0x369] sm:$0xff]
      %v1904 = vld [vmem:[%s219 + $0x371] sm:$0xff]
      %v1905 = vld [vmem:[%s219 + $0x379] sm:$0xff]
      %v1906 = vld [vmem:[%s219 + $0x381] sm:$0xff]
      %v1907 = vld [vmem:[%s219 + $0x389] sm:$0xff]
      %v1908 = vld [vmem:[%s219 + $0x391] sm:$0xff]
      %v1909 = vld [vmem:[%s219 + $0x399] sm:$0xff]
      %v1910 = vpack.c.bf16 %v1799, %v1798
      %v1911 = vpack.c.bf16 %v1801, %v1800
      %v1912 = vpack.c.bf16 %v1803, %v1802
      %v1913 = vpack.c.bf16 %v1805, %v1804
      %v1914 = vpack.c.bf16 %v1807, %v1806
      %v1915 = vpack.c.bf16 %v1809, %v1808
      %v1916 = vpack.c.bf16 %v1811, %v1810
      %v1917 = vpack.c.bf16 %v1813, %v1812
      %v1918 = vpack.c.bf16 %v1815, %v1814
      %v1919 = vpack.c.bf16 %v1817, %v1816
      %v1920 = vpack.c.bf16 %v1819, %v1818
      %v1921 = vpack.c.bf16 %v1821, %v1820
      %v1922 = vpack.c.bf16 %v1823, %v1822
      %v1923 = vpack.c.bf16 %v1825, %v1824
      %v1924 = vpack.c.bf16 %v1827, %v1826
      %v1925 = vpack.c.bf16 %v1829, %v1828
      %v1926 = vpack.c.bf16 %v1831, %v1830
      %v1927 = vpack.c.bf16 %v1833, %v1832
      %v1928 = vpack.c.bf16 %v1835, %v1834
      %v1929 = vpack.c.bf16 %v1837, %v1836
      %v1930 = vpack.c.bf16 %v1839, %v1838
      %v1931 = vpack.c.bf16 %v1841, %v1840
      %v1932 = vpack.c.bf16 %v1843, %v1842
      %v1933 = vpack.c.bf16 %v1845, %v1844
      %v1934 = vpack.c.bf16 %v1847, %v1846
      %v1935 = vpack.c.bf16 %v1849, %v1848
      %v1936 = vpack.c.bf16 %v1851, %v1850
      %v1937 = vpack.c.bf16 %v1853, %v1852
      %v1938 = vpack.c.bf16 %v1855, %v1854
      %v1939 = vpack.c.bf16 %v1857, %v1856
      %v1940 = vpack.c.bf16 %v1859, %v1858
      %v1941 = vpack.c.bf16 %v1861, %v1860
      %v1942 = vpack.c.bf16 %v1863, %v1862
      %v1943 = vpack.c.bf16 %v1865, %v1864
      %v1944 = vpack.c.bf16 %v1867, %v1866
      %v1945 = vpack.c.bf16 %v1869, %v1868
      %v1946 = vpack.c.bf16 %v1871, %v1870
      %v1947 = vpack.c.bf16 %v1873, %v1872
      %v1948 = vpack.c.bf16 %v1875, %v1874
      %v1949 = vpack.c.bf16 %v1877, %v1876
      %v1950 = vpack.c.bf16 %v1879, %v1878
      %v1951 = vpack.c.bf16 %v1881, %v1880
      %v1952 = vpack.c.bf16 %v1883, %v1882
      %v1953 = vpack.c.bf16 %v1885, %v1884
      %v1954 = vpack.c.bf16 %v1887, %v1886
      %v1955 = vpack.c.bf16 %v1889, %v1888
      %v1956 = vpack.c.bf16 %v1891, %v1890
      %v1957 = vpack.c.bf16 %v1893, %v1892
      %v1958 = vpack.c.bf16 %v1895, %v1894
      %v1959 = vpack.c.bf16 %v1897, %v1896
      %v1960 = vpack.c.bf16 %v1899, %v1898
      %v1961 = vpack.c.bf16 %v1901, %v1900
      %v1962 = vpack.c.bf16 %v1903, %v1902
      %v1963 = vpack.c.bf16 %v1905, %v1904
      %v1964 = vpack.c.bf16 %v1907, %v1906
      %v1965 = vpack.c.bf16 %v1909, %v1908
      %2022 = vrot.lane.b32.xlu0 %v1910, 48
      %v2023 = vpop.permute.xlu0 %2022
      %2024 = vrot.lane.b32.xlu0 %v1911, 48
      %v2025 = vpop.permute.xlu0 %2024
      %2026 = vrot.lane.b32.xlu0 %v1912, 48
      %v2027 = vpop.permute.xlu0 %2026
      %2028 = vrot.lane.b32.xlu0 %v1913, 48
      %v2029 = vpop.permute.xlu0 %2028
      %2030 = vrot.lane.b32.xlu0 %v1914, 48
      %v2031 = vpop.permute.xlu0 %2030
      %2032 = vrot.lane.b32.xlu0 %v1915, 48
      %v2033 = vpop.permute.xlu0 %2032
      %2034 = vrot.lane.b32.xlu0 %v1916, 48
      %v2035 = vpop.permute.xlu0 %2034
      %2036 = vrot.lane.b32.xlu0 %v1917, 48
      %v2037 = vpop.permute.xlu0 %2036
      %2038 = vrot.lane.b32.xlu0 %v1918, 48
      %v2039 = vpop.permute.xlu0 %2038
      %2040 = vrot.lane.b32.xlu0 %v1919, 48
      %v2041 = vpop.permute.xlu0 %2040
      %2042 = vrot.lane.b32.xlu0 %v1920, 48
      %v2043 = vpop.permute.xlu0 %2042
      %2044 = vrot.lane.b32.xlu0 %v1921, 48
      %v2045 = vpop.permute.xlu0 %2044
      %2046 = vrot.lane.b32.xlu0 %v1922, 48
      %v2047 = vpop.permute.xlu0 %2046
      %2048 = vrot.lane.b32.xlu0 %v1923, 48
      %v2049 = vpop.permute.xlu0 %2048
      %2050 = vrot.lane.b32.xlu0 %v1924, 48
      %v2051 = vpop.permute.xlu0 %2050
      %2052 = vrot.lane.b32.xlu0 %v1925, 48
      %v2053 = vpop.permute.xlu0 %2052
      %2054 = vrot.lane.b32.xlu0 %v1926, 48
      %v2055 = vpop.permute.xlu0 %2054
      %2056 = vrot.lane.b32.xlu0 %v1927, 48
      %v2057 = vpop.permute.xlu0 %2056
      %2058 = vrot.lane.b32.xlu0 %v1928, 48
      %v2059 = vpop.permute.xlu0 %2058
      %2060 = vrot.lane.b32.xlu0 %v1929, 48
      %v2061 = vpop.permute.xlu0 %2060
      %2062 = vrot.lane.b32.xlu0 %v1930, 48
      %v2063 = vpop.permute.xlu0 %2062
      %2064 = vrot.lane.b32.xlu0 %v1931, 48
      %v2065 = vpop.permute.xlu0 %2064
      %2066 = vrot.lane.b32.xlu0 %v1932, 48
      %v2067 = vpop.permute.xlu0 %2066
      %2068 = vrot.lane.b32.xlu0 %v1933, 48
      %v2069 = vpop.permute.xlu0 %2068
      %2070 = vrot.lane.b32.xlu0 %v1934, 48
      %v2071 = vpop.permute.xlu0 %2070
      %2072 = vrot.lane.b32.xlu0 %v1935, 48
      %v2073 = vpop.permute.xlu0 %2072
      %2074 = vrot.lane.b32.xlu0 %v1936, 48
      %v2075 = vpop.permute.xlu0 %2074
      %2076 = vrot.lane.b32.xlu0 %v1937, 48
      %v2077 = vpop.permute.xlu0 %2076
      %2078 = vrot.lane.b32.xlu0 %v1938, 48
      %v2079 = vpop.permute.xlu0 %2078
      %2080 = vrot.lane.b32.xlu0 %v1939, 48
      %v2081 = vpop.permute.xlu0 %2080
      %2082 = vrot.lane.b32.xlu0 %v1940, 48
      %v2083 = vpop.permute.xlu0 %2082
      %2084 = vrot.lane.b32.xlu0 %v1941, 48
      %v2085 = vpop.permute.xlu0 %2084
      %2086 = vrot.lane.b32.xlu0 %v1942, 48
      %v2087 = vpop.permute.xlu0 %2086
      %2088 = vrot.lane.b32.xlu0 %v1943, 48
      %v2089 = vpop.permute.xlu0 %2088
      %2090 = vrot.lane.b32.xlu0 %v1944, 48
      %v2091 = vpop.permute.xlu0 %2090
      %2092 = vrot.lane.b32.xlu0 %v1945, 48
      %v2093 = vpop.permute.xlu0 %2092
      %2094 = vrot.lane.b32.xlu0 %v1946, 48
      %v2095 = vpop.permute.xlu0 %2094
      %2096 = vrot.lane.b32.xlu0 %v1947, 48
      %v2097 = vpop.permute.xlu0 %2096
      %2098 = vrot.lane.b32.xlu0 %v1948, 48
      %v2099 = vpop.permute.xlu0 %2098
      %2100 = vrot.lane.b32.xlu0 %v1949, 48
      %v2101 = vpop.permute.xlu0 %2100
      %2102 = vrot.lane.b32.xlu0 %v1950, 48
      %v2103 = vpop.permute.xlu0 %2102
      %2104 = vrot.lane.b32.xlu0 %v1951, 48
      %v2105 = vpop.permute.xlu0 %2104
      %2106 = vrot.lane.b32.xlu0 %v1952, 48
      %v2107 = vpop.permute.xlu0 %2106
      %2108 = vrot.lane.b32.xlu0 %v1953, 48
      %v2109 = vpop.permute.xlu0 %2108
      %2110 = vrot.lane.b32.xlu0 %v1954, 48
      %v2111 = vpop.permute.xlu0 %2110
      %2112 = vrot.lane.b32.xlu0 %v1955, 48
      %v2113 = vpop.permute.xlu0 %2112
      %2114 = vrot.lane.b32.xlu0 %v1956, 48
      %v2115 = vpop.permute.xlu0 %2114
      %2116 = vrot.lane.b32.xlu0 %v1957, 48
      %v2117 = vpop.permute.xlu0 %2116
      %2118 = vrot.lane.b32.xlu0 %v1958, 48
      %v2119 = vpop.permute.xlu0 %2118
      %2120 = vrot.lane.b32.xlu0 %v1959, 48
      %v2121 = vpop.permute.xlu0 %2120
      %2122 = vrot.lane.b32.xlu0 %v1960, 48
      %v2123 = vpop.permute.xlu0 %2122
      %2124 = vrot.lane.b32.xlu0 %v1961, 48
      %v2125 = vpop.permute.xlu0 %2124
      %2126 = vrot.lane.b32.xlu0 %v1962, 48
      %v2127 = vpop.permute.xlu0 %2126
      %2128 = vrot.lane.b32.xlu0 %v1963, 48
      %v2129 = vpop.permute.xlu0 %2128
      %2130 = vrot.lane.b32.xlu0 %v1964, 48
      %v2131 = vpop.permute.xlu0 %2130
      %2132 = vrot.lane.b32.xlu0 %v1965, 48
      %v2133 = vpop.permute.xlu0 %2132
      %vm2190 = vcmask 490880
      %2191 = vst.msk [vmem:[#allocation2] sm:$0xff] %vm2190, %v2023
      %2192 = vst.msk [vmem:[#allocation2 + $0x8] sm:$0xff] %vm2190, %v2025
      %2193 = vst.msk [vmem:[#allocation2 + $0x10] sm:$0xff] %vm2190, %v2027
      %2194 = vst.msk [vmem:[#allocation2 + $0x18] sm:$0xff] %vm2190, %v2029
      %2195 = vst.msk [vmem:[#allocation2 + $0x20] sm:$0xff] %vm2190, %v2031
      %2196 = vst.msk [vmem:[#allocation2 + $0x28] sm:$0xff] %vm2190, %v2033
      %2197 = vst.msk [vmem:[#allocation2 + $0x30] sm:$0xff] %vm2190, %v2035
      %2198 = vst.msk [vmem:[#allocation2 + $0x38] sm:$0xff] %vm2190, %v2037
      %2199 = vst.msk [vmem:[#allocation2 + $0x40] sm:$0xff] %vm2190, %v2039
      %2200 = vst.msk [vmem:[#allocation2 + $0x48] sm:$0xff] %vm2190, %v2041
      %2201 = vst.msk [vmem:[#allocation2 + $0x50] sm:$0xff] %vm2190, %v2043
      %2202 = vst.msk [vmem:[#allocation2 + $0x58] sm:$0xff] %vm2190, %v2045
      %2203 = vst.msk [vmem:[#allocation2 + $0x60] sm:$0xff] %vm2190, %v2047
      %2204 = vst.msk [vmem:[#allocation2 + $0x68] sm:$0xff] %vm2190, %v2049
      %2205 = vst.msk [vmem:[#allocation2 + $0x70] sm:$0xff] %vm2190, %v2051
      %2206 = vst.msk [vmem:[#allocation2 + $0x78] sm:$0xff] %vm2190, %v2053
      %2207 = vst.msk [vmem:[#allocation2 + $0x80] sm:$0xff] %vm2190, %v2055
      %2208 = vst.msk [vmem:[#allocation2 + $0x88] sm:$0xff] %vm2190, %v2057
      %2209 = vst.msk [vmem:[#allocation2 + $0x90] sm:$0xff] %vm2190, %v2059
      %2210 = vst.msk [vmem:[#allocation2 + $0x98] sm:$0xff] %vm2190, %v2061
      %2211 = vst.msk [vmem:[#allocation2 + $0xa0] sm:$0xff] %vm2190, %v2063
      %2212 = vst.msk [vmem:[#allocation2 + $0xa8] sm:$0xff] %vm2190, %v2065
      %2213 = vst.msk [vmem:[#allocation2 + $0xb0] sm:$0xff] %vm2190, %v2067
      %2214 = vst.msk [vmem:[#allocation2 + $0xb8] sm:$0xff] %vm2190, %v2069
      %2215 = vst.msk [vmem:[#allocation2 + $0xc0] sm:$0xff] %vm2190, %v2071
      %2216 = vst.msk [vmem:[#allocation2 + $0xc8] sm:$0xff] %vm2190, %v2073
      %2217 = vst.msk [vmem:[#allocation2 + $0xd0] sm:$0xff] %vm2190, %v2075
      %2218 = vst.msk [vmem:[#allocation2 + $0xd8] sm:$0xff] %vm2190, %v2077
      %2219 = vst.msk [vmem:[#allocation2 + $0xe0] sm:$0xff] %vm2190, %v2079
      %2220 = vst.msk [vmem:[#allocation2 + $0xe8] sm:$0xff] %vm2190, %v2081
      %2221 = vst.msk [vmem:[#allocation2 + $0xf0] sm:$0xff] %vm2190, %v2083
      %2222 = vst.msk [vmem:[#allocation2 + $0xf8] sm:$0xff] %vm2190, %v2085
      %2223 = vst.msk [vmem:[#allocation2 + $0x100] sm:$0xff] %vm2190, %v2087
      %2224 = vst.msk [vmem:[#allocation2 + $0x108] sm:$0xff] %vm2190, %v2089
      %2225 = vst.msk [vmem:[#allocation2 + $0x110] sm:$0xff] %vm2190, %v2091
      %2226 = vst.msk [vmem:[#allocation2 + $0x118] sm:$0xff] %vm2190, %v2093
      %2227 = vst.msk [vmem:[#allocation2 + $0x120] sm:$0xff] %vm2190, %v2095
      %2228 = vst.msk [vmem:[#allocation2 + $0x128] sm:$0xff] %vm2190, %v2097
      %2229 = vst.msk [vmem:[#allocation2 + $0x130] sm:$0xff] %vm2190, %v2099
      %2230 = vst.msk [vmem:[#allocation2 + $0x138] sm:$0xff] %vm2190, %v2101
      %2231 = vst.msk [vmem:[#allocation2 + $0x140] sm:$0xff] %vm2190, %v2103
      %2232 = vst.msk [vmem:[#allocation2 + $0x148] sm:$0xff] %vm2190, %v2105
      %2233 = vst.msk [vmem:[#allocation2 + $0x150] sm:$0xff] %vm2190, %v2107
      %2234 = vst.msk [vmem:[#allocation2 + $0x158] sm:$0xff] %vm2190, %v2109
      %2235 = vst.msk [vmem:[#allocation2 + $0x160] sm:$0xff] %vm2190, %v2111
      %2236 = vst.msk [vmem:[#allocation2 + $0x168] sm:$0xff] %vm2190, %v2113
      %2237 = vst.msk [vmem:[#allocation2 + $0x170] sm:$0xff] %vm2190, %v2115
      %2238 = vst.msk [vmem:[#allocation2 + $0x178] sm:$0xff] %vm2190, %v2117
      %2239 = vst.msk [vmem:[#allocation2 + $0x180] sm:$0xff] %vm2190, %v2119
      %2240 = vst.msk [vmem:[#allocation2 + $0x188] sm:$0xff] %vm2190, %v2121
      %2241 = vst.msk [vmem:[#allocation2 + $0x190] sm:$0xff] %vm2190, %v2123
      %2242 = vst.msk [vmem:[#allocation2 + $0x198] sm:$0xff] %vm2190, %v2125
      %2243 = vst.msk [vmem:[#allocation2 + $0x1a0] sm:$0xff] %vm2190, %v2127
      %2244 = vst.msk [vmem:[#allocation2 + $0x1a8] sm:$0xff] %vm2190, %v2129
      %2245 = vst.msk [vmem:[#allocation2 + $0x1b0] sm:$0xff] %vm2190, %v2131
      %2246 = vst.msk [vmem:[#allocation2 + $0x1b8] sm:$0xff] %vm2190, %v2133
      %v2247 = vld [vmem:[%s219 + $0x22] sm:$0xff]
      %v2248 = vld [vmem:[%s219 + $0x2a] sm:$0xff]
      %v2249 = vld [vmem:[%s219 + $0x32] sm:$0xff]
      %v2250 = vld [vmem:[%s219 + $0x3a] sm:$0xff]
      %v2251 = vld [vmem:[%s219 + $0x42] sm:$0xff]
      %v2252 = vld [vmem:[%s219 + $0x4a] sm:$0xff]
      %v2253 = vld [vmem:[%s219 + $0x52] sm:$0xff]
      %v2254 = vld [vmem:[%s219 + $0x5a] sm:$0xff]
      %v2255 = vld [vmem:[%s219 + $0x62] sm:$0xff]
      %v2256 = vld [vmem:[%s219 + $0x6a] sm:$0xff]
      %v2257 = vld [vmem:[%s219 + $0x72] sm:$0xff]
      %v2258 = vld [vmem:[%s219 + $0x7a] sm:$0xff]
      %v2259 = vld [vmem:[%s219 + $0x82] sm:$0xff]
      %v2260 = vld [vmem:[%s219 + $0x8a] sm:$0xff]
      %v2261 = vld [vmem:[%s219 + $0x92] sm:$0xff]
      %v2262 = vld [vmem:[%s219 + $0x9a] sm:$0xff]
      %v2263 = vld [vmem:[%s219 + $0xa2] sm:$0xff]
      %v2264 = vld [vmem:[%s219 + $0xaa] sm:$0xff]
      %v2265 = vld [vmem:[%s219 + $0xb2] sm:$0xff]
      %v2266 = vld [vmem:[%s219 + $0xba] sm:$0xff]
      %v2267 = vld [vmem:[%s219 + $0xc2] sm:$0xff]
      %v2268 = vld [vmem:[%s219 + $0xca] sm:$0xff]
      %v2269 = vld [vmem:[%s219 + $0xd2] sm:$0xff]
      %v2270 = vld [vmem:[%s219 + $0xda] sm:$0xff]
      %v2271 = vld [vmem:[%s219 + $0xe2] sm:$0xff]
      %v2272 = vld [vmem:[%s219 + $0xea] sm:$0xff]
      %v2273 = vld [vmem:[%s219 + $0xf2] sm:$0xff]
      %v2274 = vld [vmem:[%s219 + $0xfa] sm:$0xff]
      %v2275 = vld [vmem:[%s219 + $0x102] sm:$0xff]
      %v2276 = vld [vmem:[%s219 + $0x10a] sm:$0xff]
      %v2277 = vld [vmem:[%s219 + $0x112] sm:$0xff]
      %v2278 = vld [vmem:[%s219 + $0x11a] sm:$0xff]
      %v2279 = vld [vmem:[%s219 + $0x122] sm:$0xff]
      %v2280 = vld [vmem:[%s219 + $0x12a] sm:$0xff]
      %v2281 = vld [vmem:[%s219 + $0x132] sm:$0xff]
      %v2282 = vld [vmem:[%s219 + $0x13a] sm:$0xff]
      %v2283 = vld [vmem:[%s219 + $0x142] sm:$0xff]
      %v2284 = vld [vmem:[%s219 + $0x14a] sm:$0xff]
      %v2285 = vld [vmem:[%s219 + $0x152] sm:$0xff]
      %v2286 = vld [vmem:[%s219 + $0x15a] sm:$0xff]
      %v2287 = vld [vmem:[%s219 + $0x162] sm:$0xff]
      %v2288 = vld [vmem:[%s219 + $0x16a] sm:$0xff]
      %v2289 = vld [vmem:[%s219 + $0x172] sm:$0xff]
      %v2290 = vld [vmem:[%s219 + $0x17a] sm:$0xff]
      %v2291 = vld [vmem:[%s219 + $0x182] sm:$0xff]
      %v2292 = vld [vmem:[%s219 + $0x18a] sm:$0xff]
      %v2293 = vld [vmem:[%s219 + $0x192] sm:$0xff]
      %v2294 = vld [vmem:[%s219 + $0x19a] sm:$0xff]
      %v2295 = vld [vmem:[%s219 + $0x1a2] sm:$0xff]
      %v2296 = vld [vmem:[%s219 + $0x1aa] sm:$0xff]
      %v2297 = vld [vmem:[%s219 + $0x1b2] sm:$0xff]
      %v2298 = vld [vmem:[%s219 + $0x1ba] sm:$0xff]
      %v2299 = vld [vmem:[%s219 + $0x1c2] sm:$0xff]
      %v2300 = vld [vmem:[%s219 + $0x1ca] sm:$0xff]
      %v2301 = vld [vmem:[%s219 + $0x1d2] sm:$0xff]
      %v2302 = vld [vmem:[%s219 + $0x1da] sm:$0xff]
      %v2303 = vld [vmem:[%s219 + $0x1e2] sm:$0xff]
      %v2304 = vld [vmem:[%s219 + $0x1ea] sm:$0xff]
      %v2305 = vld [vmem:[%s219 + $0x1f2] sm:$0xff]
      %v2306 = vld [vmem:[%s219 + $0x1fa] sm:$0xff]
      %v2307 = vld [vmem:[%s219 + $0x202] sm:$0xff]
      %v2308 = vld [vmem:[%s219 + $0x20a] sm:$0xff]
      %v2309 = vld [vmem:[%s219 + $0x212] sm:$0xff]
      %v2310 = vld [vmem:[%s219 + $0x21a] sm:$0xff]
      %v2311 = vld [vmem:[%s219 + $0x222] sm:$0xff]
      %v2312 = vld [vmem:[%s219 + $0x22a] sm:$0xff]
      %v2313 = vld [vmem:[%s219 + $0x232] sm:$0xff]
      %v2314 = vld [vmem:[%s219 + $0x23a] sm:$0xff]
      %v2315 = vld [vmem:[%s219 + $0x242] sm:$0xff]
      %v2316 = vld [vmem:[%s219 + $0x24a] sm:$0xff]
      %v2317 = vld [vmem:[%s219 + $0x252] sm:$0xff]
      %v2318 = vld [vmem:[%s219 + $0x25a] sm:$0xff]
      %v2319 = vld [vmem:[%s219 + $0x262] sm:$0xff]
      %v2320 = vld [vmem:[%s219 + $0x26a] sm:$0xff]
      %v2321 = vld [vmem:[%s219 + $0x272] sm:$0xff]
      %v2322 = vld [vmem:[%s219 + $0x27a] sm:$0xff]
      %v2323 = vld [vmem:[%s219 + $0x282] sm:$0xff]
      %v2324 = vld [vmem:[%s219 + $0x28a] sm:$0xff]
      %v2325 = vld [vmem:[%s219 + $0x292] sm:$0xff]
      %v2326 = vld [vmem:[%s219 + $0x29a] sm:$0xff]
      %v2327 = vld [vmem:[%s219 + $0x2a2] sm:$0xff]
      %v2328 = vld [vmem:[%s219 + $0x2aa] sm:$0xff]
      %v2329 = vld [vmem:[%s219 + $0x2b2] sm:$0xff]
      %v2330 = vld [vmem:[%s219 + $0x2ba] sm:$0xff]
      %v2331 = vld [vmem:[%s219 + $0x2c2] sm:$0xff]
      %v2332 = vld [vmem:[%s219 + $0x2ca] sm:$0xff]
      %v2333 = vld [vmem:[%s219 + $0x2d2] sm:$0xff]
      %v2334 = vld [vmem:[%s219 + $0x2da] sm:$0xff]
      %v2335 = vld [vmem:[%s219 + $0x2e2] sm:$0xff]
      %v2336 = vld [vmem:[%s219 + $0x2ea] sm:$0xff]
      %v2337 = vld [vmem:[%s219 + $0x2f2] sm:$0xff]
      %v2338 = vld [vmem:[%s219 + $0x2fa] sm:$0xff]
      %v2339 = vld [vmem:[%s219 + $0x302] sm:$0xff]
      %v2340 = vld [vmem:[%s219 + $0x30a] sm:$0xff]
      %v2341 = vld [vmem:[%s219 + $0x312] sm:$0xff]
      %v2342 = vld [vmem:[%s219 + $0x31a] sm:$0xff]
      %v2343 = vld [vmem:[%s219 + $0x322] sm:$0xff]
      %v2344 = vld [vmem:[%s219 + $0x32a] sm:$0xff]
      %v2345 = vld [vmem:[%s219 + $0x332] sm:$0xff]
      %v2346 = vld [vmem:[%s219 + $0x33a] sm:$0xff]
      %v2347 = vld [vmem:[%s219 + $0x342] sm:$0xff]
      %v2348 = vld [vmem:[%s219 + $0x34a] sm:$0xff]
      %v2349 = vld [vmem:[%s219 + $0x352] sm:$0xff]
      %v2350 = vld [vmem:[%s219 + $0x35a] sm:$0xff]
      %v2351 = vld [vmem:[%s219 + $0x362] sm:$0xff]
      %v2352 = vld [vmem:[%s219 + $0x36a] sm:$0xff]
      %v2353 = vld [vmem:[%s219 + $0x372] sm:$0xff]
      %v2354 = vld [vmem:[%s219 + $0x37a] sm:$0xff]
      %v2355 = vld [vmem:[%s219 + $0x382] sm:$0xff]
      %v2356 = vld [vmem:[%s219 + $0x38a] sm:$0xff]
      %v2357 = vld [vmem:[%s219 + $0x392] sm:$0xff]
      %v2358 = vld [vmem:[%s219 + $0x39a] sm:$0xff]
      %v2359 = vpack.c.bf16 %v2248, %v2247
      %v2360 = vpack.c.bf16 %v2250, %v2249
      %v2361 = vpack.c.bf16 %v2252, %v2251
      %v2362 = vpack.c.bf16 %v2254, %v2253
      %v2363 = vpack.c.bf16 %v2256, %v2255
      %v2364 = vpack.c.bf16 %v2258, %v2257
      %v2365 = vpack.c.bf16 %v2260, %v2259
      %v2366 = vpack.c.bf16 %v2262, %v2261
      %v2367 = vpack.c.bf16 %v2264, %v2263
      %v2368 = vpack.c.bf16 %v2266, %v2265
      %v2369 = vpack.c.bf16 %v2268, %v2267
      %v2370 = vpack.c.bf16 %v2270, %v2269
      %v2371 = vpack.c.bf16 %v2272, %v2271
      %v2372 = vpack.c.bf16 %v2274, %v2273
      %v2373 = vpack.c.bf16 %v2276, %v2275
      %v2374 = vpack.c.bf16 %v2278, %v2277
      %v2375 = vpack.c.bf16 %v2280, %v2279
      %v2376 = vpack.c.bf16 %v2282, %v2281
      %v2377 = vpack.c.bf16 %v2284, %v2283
      %v2378 = vpack.c.bf16 %v2286, %v2285
      %v2379 = vpack.c.bf16 %v2288, %v2287
      %v2380 = vpack.c.bf16 %v2290, %v2289
      %v2381 = vpack.c.bf16 %v2292, %v2291
      %v2382 = vpack.c.bf16 %v2294, %v2293
      %v2383 = vpack.c.bf16 %v2296, %v2295
      %v2384 = vpack.c.bf16 %v2298, %v2297
      %v2385 = vpack.c.bf16 %v2300, %v2299
      %v2386 = vpack.c.bf16 %v2302, %v2301
      %v2387 = vpack.c.bf16 %v2304, %v2303
      %v2388 = vpack.c.bf16 %v2306, %v2305
      %v2389 = vpack.c.bf16 %v2308, %v2307
      %v2390 = vpack.c.bf16 %v2310, %v2309
      %v2391 = vpack.c.bf16 %v2312, %v2311
      %v2392 = vpack.c.bf16 %v2314, %v2313
      %v2393 = vpack.c.bf16 %v2316, %v2315
      %v2394 = vpack.c.bf16 %v2318, %v2317
      %v2395 = vpack.c.bf16 %v2320, %v2319
      %v2396 = vpack.c.bf16 %v2322, %v2321
      %v2397 = vpack.c.bf16 %v2324, %v2323
      %v2398 = vpack.c.bf16 %v2326, %v2325
      %v2399 = vpack.c.bf16 %v2328, %v2327
      %v2400 = vpack.c.bf16 %v2330, %v2329
      %v2401 = vpack.c.bf16 %v2332, %v2331
      %v2402 = vpack.c.bf16 %v2334, %v2333
      %v2403 = vpack.c.bf16 %v2336, %v2335
      %v2404 = vpack.c.bf16 %v2338, %v2337
      %v2405 = vpack.c.bf16 %v2340, %v2339
      %v2406 = vpack.c.bf16 %v2342, %v2341
      %v2407 = vpack.c.bf16 %v2344, %v2343
      %v2408 = vpack.c.bf16 %v2346, %v2345
      %v2409 = vpack.c.bf16 %v2348, %v2347
      %v2410 = vpack.c.bf16 %v2350, %v2349
      %v2411 = vpack.c.bf16 %v2352, %v2351
      %v2412 = vpack.c.bf16 %v2354, %v2353
      %v2413 = vpack.c.bf16 %v2356, %v2355
      %v2414 = vpack.c.bf16 %v2358, %v2357
      %2471 = vrot.lane.b32.xlu0 %v2359, 60
      %v2472 = vpop.permute.xlu0 %2471
      %2473 = vrot.lane.b32.xlu0 %v2360, 60
      %v2474 = vpop.permute.xlu0 %2473
      %2475 = vrot.lane.b32.xlu0 %v2361, 60
      %v2476 = vpop.permute.xlu0 %2475
      %2477 = vrot.lane.b32.xlu0 %v2362, 60
      %v2478 = vpop.permute.xlu0 %2477
      %2479 = vrot.lane.b32.xlu0 %v2363, 60
      %v2480 = vpop.permute.xlu0 %2479
      %2481 = vrot.lane.b32.xlu0 %v2364, 60
      %v2482 = vpop.permute.xlu0 %2481
      %2483 = vrot.lane.b32.xlu0 %v2365, 60
      %v2484 = vpop.permute.xlu0 %2483
      %2485 = vrot.lane.b32.xlu0 %v2366, 60
      %v2486 = vpop.permute.xlu0 %2485
      %2487 = vrot.lane.b32.xlu0 %v2367, 60
      %v2488 = vpop.permute.xlu0 %2487
      %2489 = vrot.lane.b32.xlu0 %v2368, 60
      %v2490 = vpop.permute.xlu0 %2489
      %2491 = vrot.lane.b32.xlu0 %v2369, 60
      %v2492 = vpop.permute.xlu0 %2491
      %2493 = vrot.lane.b32.xlu0 %v2370, 60
      %v2494 = vpop.permute.xlu0 %2493
      %2495 = vrot.lane.b32.xlu0 %v2371, 60
      %v2496 = vpop.permute.xlu0 %2495
      %2497 = vrot.lane.b32.xlu0 %v2372, 60
      %v2498 = vpop.permute.xlu0 %2497
      %2499 = vrot.lane.b32.xlu0 %v2373, 60
      %v2500 = vpop.permute.xlu0 %2499
      %2501 = vrot.lane.b32.xlu0 %v2374, 60
      %v2502 = vpop.permute.xlu0 %2501
      %2503 = vrot.lane.b32.xlu0 %v2375, 60
      %v2504 = vpop.permute.xlu0 %2503
      %2505 = vrot.lane.b32.xlu0 %v2376, 60
      %v2506 = vpop.permute.xlu0 %2505
      %2507 = vrot.lane.b32.xlu0 %v2377, 60
      %v2508 = vpop.permute.xlu0 %2507
      %2509 = vrot.lane.b32.xlu0 %v2378, 60
      %v2510 = vpop.permute.xlu0 %2509
      %2511 = vrot.lane.b32.xlu0 %v2379, 60
      %v2512 = vpop.permute.xlu0 %2511
      %2513 = vrot.lane.b32.xlu0 %v2380, 60
      %v2514 = vpop.permute.xlu0 %2513
      %2515 = vrot.lane.b32.xlu0 %v2381, 60
      %v2516 = vpop.permute.xlu0 %2515
      %2517 = vrot.lane.b32.xlu0 %v2382, 60
      %v2518 = vpop.permute.xlu0 %2517
      %2519 = vrot.lane.b32.xlu0 %v2383, 60
      %v2520 = vpop.permute.xlu0 %2519
      %2521 = vrot.lane.b32.xlu0 %v2384, 60
      %v2522 = vpop.permute.xlu0 %2521
      %2523 = vrot.lane.b32.xlu0 %v2385, 60
      %v2524 = vpop.permute.xlu0 %2523
      %2525 = vrot.lane.b32.xlu0 %v2386, 60
      %v2526 = vpop.permute.xlu0 %2525
      %2527 = vrot.lane.b32.xlu0 %v2387, 60
      %v2528 = vpop.permute.xlu0 %2527
      %2529 = vrot.lane.b32.xlu0 %v2388, 60
      %v2530 = vpop.permute.xlu0 %2529
      %2531 = vrot.lane.b32.xlu0 %v2389, 60
      %v2532 = vpop.permute.xlu0 %2531
      %2533 = vrot.lane.b32.xlu0 %v2390, 60
      %v2534 = vpop.permute.xlu0 %2533
      %2535 = vrot.lane.b32.xlu0 %v2391, 60
      %v2536 = vpop.permute.xlu0 %2535
      %2537 = vrot.lane.b32.xlu0 %v2392, 60
      %v2538 = vpop.permute.xlu0 %2537
      %2539 = vrot.lane.b32.xlu0 %v2393, 60
      %v2540 = vpop.permute.xlu0 %2539
      %2541 = vrot.lane.b32.xlu0 %v2394, 60
      %v2542 = vpop.permute.xlu0 %2541
      %2543 = vrot.lane.b32.xlu0 %v2395, 60
      %v2544 = vpop.permute.xlu0 %2543
      %2545 = vrot.lane.b32.xlu0 %v2396, 60
      %v2546 = vpop.permute.xlu0 %2545
      %2547 = vrot.lane.b32.xlu0 %v2397, 60
      %v2548 = vpop.permute.xlu0 %2547
      %2549 = vrot.lane.b32.xlu0 %v2398, 60
      %v2550 = vpop.permute.xlu0 %2549
      %2551 = vrot.lane.b32.xlu0 %v2399, 60
      %v2552 = vpop.permute.xlu0 %2551
      %2553 = vrot.lane.b32.xlu0 %v2400, 60
      %v2554 = vpop.permute.xlu0 %2553
      %2555 = vrot.lane.b32.xlu0 %v2401, 60
      %v2556 = vpop.permute.xlu0 %2555
      %2557 = vrot.lane.b32.xlu0 %v2402, 60
      %v2558 = vpop.permute.xlu0 %2557
      %2559 = vrot.lane.b32.xlu0 %v2403, 60
      %v2560 = vpop.permute.xlu0 %2559
      %2561 = vrot.lane.b32.xlu0 %v2404, 60
      %v2562 = vpop.permute.xlu0 %2561
      %2563 = vrot.lane.b32.xlu0 %v2405, 60
      %v2564 = vpop.permute.xlu0 %2563
      %2565 = vrot.lane.b32.xlu0 %v2406, 60
      %v2566 = vpop.permute.xlu0 %2565
      %2567 = vrot.lane.b32.xlu0 %v2407, 60
      %v2568 = vpop.permute.xlu0 %2567
      %2569 = vrot.lane.b32.xlu0 %v2408, 60
      %v2570 = vpop.permute.xlu0 %2569
      %2571 = vrot.lane.b32.xlu0 %v2409, 60
      %v2572 = vpop.permute.xlu0 %2571
      %2573 = vrot.lane.b32.xlu0 %v2410, 60
      %v2574 = vpop.permute.xlu0 %2573
      %2575 = vrot.lane.b32.xlu0 %v2411, 60
      %v2576 = vpop.permute.xlu0 %2575
      %2577 = vrot.lane.b32.xlu0 %v2412, 60
      %v2578 = vpop.permute.xlu0 %2577
      %2579 = vrot.lane.b32.xlu0 %v2413, 60
      %v2580 = vpop.permute.xlu0 %2579
      %2581 = vrot.lane.b32.xlu0 %v2414, 60
      %v2582 = vpop.permute.xlu0 %2581
      %vm2639 = vcmask 589280
      %2640 = vst.msk [vmem:[#allocation2] sm:$0xff] %vm2639, %v2472
      %2641 = vst.msk [vmem:[#allocation2 + $0x8] sm:$0xff] %vm2639, %v2474
      %2642 = vst.msk [vmem:[#allocation2 + $0x10] sm:$0xff] %vm2639, %v2476
      %2643 = vst.msk [vmem:[#allocation2 + $0x18] sm:$0xff] %vm2639, %v2478
      %2644 = vst.msk [vmem:[#allocation2 + $0x20] sm:$0xff] %vm2639, %v2480
      %2645 = vst.msk [vmem:[#allocation2 + $0x28] sm:$0xff] %vm2639, %v2482
      %2646 = vst.msk [vmem:[#allocation2 + $0x30] sm:$0xff] %vm2639, %v2484
      %2647 = vst.msk [vmem:[#allocation2 + $0x38] sm:$0xff] %vm2639, %v2486
      %2648 = vst.msk [vmem:[#allocation2 + $0x40] sm:$0xff] %vm2639, %v2488
      %2649 = vst.msk [vmem:[#allocation2 + $0x48] sm:$0xff] %vm2639, %v2490
      %2650 = vst.msk [vmem:[#allocation2 + $0x50] sm:$0xff] %vm2639, %v2492
      %2651 = vst.msk [vmem:[#allocation2 + $0x58] sm:$0xff] %vm2639, %v2494
      %2652 = vst.msk [vmem:[#allocation2 + $0x60] sm:$0xff] %vm2639, %v2496
      %2653 = vst.msk [vmem:[#allocation2 + $0x68] sm:$0xff] %vm2639, %v2498
      %2654 = vst.msk [vmem:[#allocation2 + $0x70] sm:$0xff] %vm2639, %v2500
      %2655 = vst.msk [vmem:[#allocation2 + $0x78] sm:$0xff] %vm2639, %v2502
      %2656 = vst.msk [vmem:[#allocation2 + $0x80] sm:$0xff] %vm2639, %v2504
      %2657 = vst.msk [vmem:[#allocation2 + $0x88] sm:$0xff] %vm2639, %v2506
      %2658 = vst.msk [vmem:[#allocation2 + $0x90] sm:$0xff] %vm2639, %v2508
      %2659 = vst.msk [vmem:[#allocation2 + $0x98] sm:$0xff] %vm2639, %v2510
      %2660 = vst.msk [vmem:[#allocation2 + $0xa0] sm:$0xff] %vm2639, %v2512
      %2661 = vst.msk [vmem:[#allocation2 + $0xa8] sm:$0xff] %vm2639, %v2514
      %2662 = vst.msk [vmem:[#allocation2 + $0xb0] sm:$0xff] %vm2639, %v2516
      %2663 = vst.msk [vmem:[#allocation2 + $0xb8] sm:$0xff] %vm2639, %v2518
      %2664 = vst.msk [vmem:[#allocation2 + $0xc0] sm:$0xff] %vm2639, %v2520
      %2665 = vst.msk [vmem:[#allocation2 + $0xc8] sm:$0xff] %vm2639, %v2522
      %2666 = vst.msk [vmem:[#allocation2 + $0xd0] sm:$0xff] %vm2639, %v2524
      %2667 = vst.msk [vmem:[#allocation2 + $0xd8] sm:$0xff] %vm2639, %v2526
      %2668 = vst.msk [vmem:[#allocation2 + $0xe0] sm:$0xff] %vm2639, %v2528
      %2669 = vst.msk [vmem:[#allocation2 + $0xe8] sm:$0xff] %vm2639, %v2530
      %2670 = vst.msk [vmem:[#allocation2 + $0xf0] sm:$0xff] %vm2639, %v2532
      %2671 = vst.msk [vmem:[#allocation2 + $0xf8] sm:$0xff] %vm2639, %v2534
      %2672 = vst.msk [vmem:[#allocation2 + $0x100] sm:$0xff] %vm2639, %v2536
      %2673 = vst.msk [vmem:[#allocation2 + $0x108] sm:$0xff] %vm2639, %v2538
      %2674 = vst.msk [vmem:[#allocation2 + $0x110] sm:$0xff] %vm2639, %v2540
      %2675 = vst.msk [vmem:[#allocation2 + $0x118] sm:$0xff] %vm2639, %v2542
      %2676 = vst.msk [vmem:[#allocation2 + $0x120] sm:$0xff] %vm2639, %v2544
      %2677 = vst.msk [vmem:[#allocation2 + $0x128] sm:$0xff] %vm2639, %v2546
      %2678 = vst.msk [vmem:[#allocation2 + $0x130] sm:$0xff] %vm2639, %v2548
      %2679 = vst.msk [vmem:[#allocation2 + $0x138] sm:$0xff] %vm2639, %v2550
      %2680 = vst.msk [vmem:[#allocation2 + $0x140] sm:$0xff] %vm2639, %v2552
      %2681 = vst.msk [vmem:[#allocation2 + $0x148] sm:$0xff] %vm2639, %v2554
      %2682 = vst.msk [vmem:[#allocation2 + $0x150] sm:$0xff] %vm2639, %v2556
      %2683 = vst.msk [vmem:[#allocation2 + $0x158] sm:$0xff] %vm2639, %v2558
      %2684 = vst.msk [vmem:[#allocation2 + $0x160] sm:$0xff] %vm2639, %v2560
      %2685 = vst.msk [vmem:[#allocation2 + $0x168] sm:$0xff] %vm2639, %v2562
      %2686 = vst.msk [vmem:[#allocation2 + $0x170] sm:$0xff] %vm2639, %v2564
      %2687 = vst.msk [vmem:[#allocation2 + $0x178] sm:$0xff] %vm2639, %v2566
      %2688 = vst.msk [vmem:[#allocation2 + $0x180] sm:$0xff] %vm2639, %v2568
      %2689 = vst.msk [vmem:[#allocation2 + $0x188] sm:$0xff] %vm2639, %v2570
      %2690 = vst.msk [vmem:[#allocation2 + $0x190] sm:$0xff] %vm2639, %v2572
      %2691 = vst.msk [vmem:[#allocation2 + $0x198] sm:$0xff] %vm2639, %v2574
      %2692 = vst.msk [vmem:[#allocation2 + $0x1a0] sm:$0xff] %vm2639, %v2576
      %2693 = vst.msk [vmem:[#allocation2 + $0x1a8] sm:$0xff] %vm2639, %v2578
      %2694 = vst.msk [vmem:[#allocation2 + $0x1b0] sm:$0xff] %vm2639, %v2580
      %2695 = vst.msk [vmem:[#allocation2 + $0x1b8] sm:$0xff] %vm2639, %v2582
      %v2696 = vld [vmem:[%s219 + $0x40] sm:$0xff]
      %v2697 = vld [vmem:[%s219 + $0x48] sm:$0xff]
      %v2698 = vld [vmem:[%s219 + $0x50] sm:$0xff]
      %v2699 = vld [vmem:[%s219 + $0x58] sm:$0xff]
      %v2700 = vld [vmem:[%s219 + $0x60] sm:$0xff]
      %v2701 = vld [vmem:[%s219 + $0x68] sm:$0xff]
      %v2702 = vld [vmem:[%s219 + $0x70] sm:$0xff]
      %v2703 = vld [vmem:[%s219 + $0x78] sm:$0xff]
      %v2704 = vld [vmem:[%s219 + $0x80] sm:$0xff]
      %v2705 = vld [vmem:[%s219 + $0x88] sm:$0xff]
      %v2706 = vld [vmem:[%s219 + $0x90] sm:$0xff]
      %v2707 = vld [vmem:[%s219 + $0x98] sm:$0xff]
      %v2708 = vld [vmem:[%s219 + $0xa0] sm:$0xff]
      %v2709 = vld [vmem:[%s219 + $0xa8] sm:$0xff]
      %v2710 = vld [vmem:[%s219 + $0xb0] sm:$0xff]
      %v2711 = vld [vmem:[%s219 + $0xb8] sm:$0xff]
      %v2712 = vld [vmem:[%s219 + $0xc0] sm:$0xff]
      %v2713 = vld [vmem:[%s219 + $0xc8] sm:$0xff]
      %v2714 = vld [vmem:[%s219 + $0xd0] sm:$0xff]
      %v2715 = vld [vmem:[%s219 + $0xd8] sm:$0xff]
      %v2716 = vld [vmem:[%s219 + $0xe0] sm:$0xff]
      %v2717 = vld [vmem:[%s219 + $0xe8] sm:$0xff]
      %v2718 = vld [vmem:[%s219 + $0xf0] sm:$0xff]
      %v2719 = vld [vmem:[%s219 + $0xf8] sm:$0xff]
      %v2720 = vld [vmem:[%s219 + $0x100] sm:$0xff]
      %v2721 = vld [vmem:[%s219 + $0x108] sm:$0xff]
      %v2722 = vld [vmem:[%s219 + $0x110] sm:$0xff]
      %v2723 = vld [vmem:[%s219 + $0x118] sm:$0xff]
      %v2724 = vld [vmem:[%s219 + $0x120] sm:$0xff]
      %v2725 = vld [vmem:[%s219 + $0x128] sm:$0xff]
      %v2726 = vld [vmem:[%s219 + $0x130] sm:$0xff]
      %v2727 = vld [vmem:[%s219 + $0x138] sm:$0xff]
      %v2728 = vld [vmem:[%s219 + $0x140] sm:$0xff]
      %v2729 = vld [vmem:[%s219 + $0x148] sm:$0xff]
      %v2730 = vld [vmem:[%s219 + $0x150] sm:$0xff]
      %v2731 = vld [vmem:[%s219 + $0x158] sm:$0xff]
      %v2732 = vld [vmem:[%s219 + $0x160] sm:$0xff]
      %v2733 = vld [vmem:[%s219 + $0x168] sm:$0xff]
      %v2734 = vld [vmem:[%s219 + $0x170] sm:$0xff]
      %v2735 = vld [vmem:[%s219 + $0x178] sm:$0xff]
      %v2736 = vld [vmem:[%s219 + $0x180] sm:$0xff]
      %v2737 = vld [vmem:[%s219 + $0x188] sm:$0xff]
      %v2738 = vld [vmem:[%s219 + $0x190] sm:$0xff]
      %v2739 = vld [vmem:[%s219 + $0x198] sm:$0xff]
      %v2740 = vld [vmem:[%s219 + $0x1a0] sm:$0xff]
      %v2741 = vld [vmem:[%s219 + $0x1a8] sm:$0xff]
      %v2742 = vld [vmem:[%s219 + $0x1b0] sm:$0xff]
      %v2743 = vld [vmem:[%s219 + $0x1b8] sm:$0xff]
      %v2744 = vld [vmem:[%s219 + $0x1c0] sm:$0xff]
      %v2745 = vld [vmem:[%s219 + $0x1c8] sm:$0xff]
      %v2746 = vld [vmem:[%s219 + $0x1d0] sm:$0xff]
      %v2747 = vld [vmem:[%s219 + $0x1d8] sm:$0xff]
      %v2748 = vld [vmem:[%s219 + $0x1e0] sm:$0xff]
      %v2749 = vld [vmem:[%s219 + $0x1e8] sm:$0xff]
      %v2750 = vld [vmem:[%s219 + $0x1f0] sm:$0xff]
      %v2751 = vld [vmem:[%s219 + $0x1f8] sm:$0xff]
      %v2752 = vld [vmem:[%s219 + $0x200] sm:$0xff]
      %v2753 = vld [vmem:[%s219 + $0x208] sm:$0xff]
      %v2754 = vld [vmem:[%s219 + $0x210] sm:$0xff]
      %v2755 = vld [vmem:[%s219 + $0x218] sm:$0xff]
      %v2756 = vld [vmem:[%s219 + $0x220] sm:$0xff]
      %v2757 = vld [vmem:[%s219 + $0x228] sm:$0xff]
      %v2758 = vld [vmem:[%s219 + $0x230] sm:$0xff]
      %v2759 = vld [vmem:[%s219 + $0x238] sm:$0xff]
      %v2760 = vld [vmem:[%s219 + $0x240] sm:$0xff]
      %v2761 = vld [vmem:[%s219 + $0x248] sm:$0xff]
      %v2762 = vld [vmem:[%s219 + $0x250] sm:$0xff]
      %v2763 = vld [vmem:[%s219 + $0x258] sm:$0xff]
      %v2764 = vld [vmem:[%s219 + $0x260] sm:$0xff]
      %v2765 = vld [vmem:[%s219 + $0x268] sm:$0xff]
      %v2766 = vld [vmem:[%s219 + $0x270] sm:$0xff]
      %v2767 = vld [vmem:[%s219 + $0x278] sm:$0xff]
      %v2768 = vld [vmem:[%s219 + $0x280] sm:$0xff]
      %v2769 = vld [vmem:[%s219 + $0x288] sm:$0xff]
      %v2770 = vld [vmem:[%s219 + $0x290] sm:$0xff]
      %v2771 = vld [vmem:[%s219 + $0x298] sm:$0xff]
      %v2772 = vld [vmem:[%s219 + $0x2a0] sm:$0xff]
      %v2773 = vld [vmem:[%s219 + $0x2a8] sm:$0xff]
      %v2774 = vld [vmem:[%s219 + $0x2b0] sm:$0xff]
      %v2775 = vld [vmem:[%s219 + $0x2b8] sm:$0xff]
      %v2776 = vld [vmem:[%s219 + $0x2c0] sm:$0xff]
      %v2777 = vld [vmem:[%s219 + $0x2c8] sm:$0xff]
      %v2778 = vld [vmem:[%s219 + $0x2d0] sm:$0xff]
      %v2779 = vld [vmem:[%s219 + $0x2d8] sm:$0xff]
      %v2780 = vld [vmem:[%s219 + $0x2e0] sm:$0xff]
      %v2781 = vld [vmem:[%s219 + $0x2e8] sm:$0xff]
      %v2782 = vld [vmem:[%s219 + $0x2f0] sm:$0xff]
      %v2783 = vld [vmem:[%s219 + $0x2f8] sm:$0xff]
      %v2784 = vld [vmem:[%s219 + $0x300] sm:$0xff]
      %v2785 = vld [vmem:[%s219 + $0x308] sm:$0xff]
      %v2786 = vld [vmem:[%s219 + $0x310] sm:$0xff]
      %v2787 = vld [vmem:[%s219 + $0x318] sm:$0xff]
      %v2788 = vld [vmem:[%s219 + $0x320] sm:$0xff]
      %v2789 = vld [vmem:[%s219 + $0x328] sm:$0xff]
      %v2790 = vld [vmem:[%s219 + $0x330] sm:$0xff]
      %v2791 = vld [vmem:[%s219 + $0x338] sm:$0xff]
      %v2792 = vld [vmem:[%s219 + $0x340] sm:$0xff]
      %v2793 = vld [vmem:[%s219 + $0x348] sm:$0xff]
      %v2794 = vld [vmem:[%s219 + $0x350] sm:$0xff]
      %v2795 = vld [vmem:[%s219 + $0x358] sm:$0xff]
      %v2796 = vld [vmem:[%s219 + $0x360] sm:$0xff]
      %v2797 = vld [vmem:[%s219 + $0x368] sm:$0xff]
      %v2798 = vld [vmem:[%s219 + $0x370] sm:$0xff]
      %v2799 = vld [vmem:[%s219 + $0x378] sm:$0xff]
      %v2800 = vld [vmem:[%s219 + $0x380] sm:$0xff]
      %v2801 = vld [vmem:[%s219 + $0x388] sm:$0xff]
      %v2802 = vld [vmem:[%s219 + $0x390] sm:$0xff]
      %v2803 = vld [vmem:[%s219 + $0x398] sm:$0xff]
      %v2804 = vld [vmem:[%s219 + $0x3a0] sm:$0xff]
      %v2805 = vld [vmem:[%s219 + $0x3a8] sm:$0xff]
      %v2806 = vld [vmem:[%s219 + $0x3b0] sm:$0xff]
      %v2807 = vld [vmem:[%s219 + $0x3b8] sm:$0xff]
      %v2808 = vpack.c.bf16 %v2697, %v2696
      %v2809 = vpack.c.bf16 %v2699, %v2698
      %v2810 = vpack.c.bf16 %v2701, %v2700
      %v2811 = vpack.c.bf16 %v2703, %v2702
      %v2812 = vpack.c.bf16 %v2705, %v2704
      %v2813 = vpack.c.bf16 %v2707, %v2706
      %v2814 = vpack.c.bf16 %v2709, %v2708
      %v2815 = vpack.c.bf16 %v2711, %v2710
      %v2816 = vpack.c.bf16 %v2713, %v2712
      %v2817 = vpack.c.bf16 %v2715, %v2714
      %v2818 = vpack.c.bf16 %v2717, %v2716
      %v2819 = vpack.c.bf16 %v2719, %v2718
      %v2820 = vpack.c.bf16 %v2721, %v2720
      %v2821 = vpack.c.bf16 %v2723, %v2722
      %v2822 = vpack.c.bf16 %v2725, %v2724
      %v2823 = vpack.c.bf16 %v2727, %v2726
      %v2824 = vpack.c.bf16 %v2729, %v2728
      %v2825 = vpack.c.bf16 %v2731, %v2730
      %v2826 = vpack.c.bf16 %v2733, %v2732
      %v2827 = vpack.c.bf16 %v2735, %v2734
      %v2828 = vpack.c.bf16 %v2737, %v2736
      %v2829 = vpack.c.bf16 %v2739, %v2738
      %v2830 = vpack.c.bf16 %v2741, %v2740
      %v2831 = vpack.c.bf16 %v2743, %v2742
      %v2832 = vpack.c.bf16 %v2745, %v2744
      %v2833 = vpack.c.bf16 %v2747, %v2746
      %v2834 = vpack.c.bf16 %v2749, %v2748
      %v2835 = vpack.c.bf16 %v2751, %v2750
      %v2836 = vpack.c.bf16 %v2753, %v2752
      %v2837 = vpack.c.bf16 %v2755, %v2754
      %v2838 = vpack.c.bf16 %v2757, %v2756
      %v2839 = vpack.c.bf16 %v2759, %v2758
      %v2840 = vpack.c.bf16 %v2761, %v2760
      %v2841 = vpack.c.bf16 %v2763, %v2762
      %v2842 = vpack.c.bf16 %v2765, %v2764
      %v2843 = vpack.c.bf16 %v2767, %v2766
      %v2844 = vpack.c.bf16 %v2769, %v2768
      %v2845 = vpack.c.bf16 %v2771, %v2770
      %v2846 = vpack.c.bf16 %v2773, %v2772
      %v2847 = vpack.c.bf16 %v2775, %v2774
      %v2848 = vpack.c.bf16 %v2777, %v2776
      %v2849 = vpack.c.bf16 %v2779, %v2778
      %v2850 = vpack.c.bf16 %v2781, %v2780
      %v2851 = vpack.c.bf16 %v2783, %v2782
      %v2852 = vpack.c.bf16 %v2785, %v2784
      %v2853 = vpack.c.bf16 %v2787, %v2786
      %v2854 = vpack.c.bf16 %v2789, %v2788
      %v2855 = vpack.c.bf16 %v2791, %v2790
      %v2856 = vpack.c.bf16 %v2793, %v2792
      %v2857 = vpack.c.bf16 %v2795, %v2794
      %v2858 = vpack.c.bf16 %v2797, %v2796
      %v2859 = vpack.c.bf16 %v2799, %v2798
      %v2860 = vpack.c.bf16 %v2801, %v2800
      %v2861 = vpack.c.bf16 %v2803, %v2802
      %v2862 = vpack.c.bf16 %v2805, %v2804
      %v2863 = vpack.c.bf16 %v2807, %v2806
      %2920 = vrot.lane.b32.xlu0 %v2808, 72
      %v2921 = vpop.permute.xlu0 %2920
      %2922 = vrot.lane.b32.xlu0 %v2809, 72
      %v2923 = vpop.permute.xlu0 %2922
      %2924 = vrot.lane.b32.xlu0 %v2810, 72
      %v2925 = vpop.permute.xlu0 %2924
      %2926 = vrot.lane.b32.xlu0 %v2811, 72
      %v2927 = vpop.permute.xlu0 %2926
      %2928 = vrot.lane.b32.xlu0 %v2812, 72
      %v2929 = vpop.permute.xlu0 %2928
      %2930 = vrot.lane.b32.xlu0 %v2813, 72
      %v2931 = vpop.permute.xlu0 %2930
      %2932 = vrot.lane.b32.xlu0 %v2814, 72
      %v2933 = vpop.permute.xlu0 %2932
      %2934 = vrot.lane.b32.xlu0 %v2815, 72
      %v2935 = vpop.permute.xlu0 %2934
      %2936 = vrot.lane.b32.xlu0 %v2816, 72
      %v2937 = vpop.permute.xlu0 %2936
      %2938 = vrot.lane.b32.xlu0 %v2817, 72
      %v2939 = vpop.permute.xlu0 %2938
      %2940 = vrot.lane.b32.xlu0 %v2818, 72
      %v2941 = vpop.permute.xlu0 %2940
      %2942 = vrot.lane.b32.xlu0 %v2819, 72
      %v2943 = vpop.permute.xlu0 %2942
      %2944 = vrot.lane.b32.xlu0 %v2820, 72
      %v2945 = vpop.permute.xlu0 %2944
      %2946 = vrot.lane.b32.xlu0 %v2821, 72
      %v2947 = vpop.permute.xlu0 %2946
      %2948 = vrot.lane.b32.xlu0 %v2822, 72
      %v2949 = vpop.permute.xlu0 %2948
      %2950 = vrot.lane.b32.xlu0 %v2823, 72
      %v2951 = vpop.permute.xlu0 %2950
      %2952 = vrot.lane.b32.xlu0 %v2824, 72
      %v2953 = vpop.permute.xlu0 %2952
      %2954 = vrot.lane.b32.xlu0 %v2825, 72
      %v2955 = vpop.permute.xlu0 %2954
      %2956 = vrot.lane.b32.xlu0 %v2826, 72
      %v2957 = vpop.permute.xlu0 %2956
      %2958 = vrot.lane.b32.xlu0 %v2827, 72
      %v2959 = vpop.permute.xlu0 %2958
      %2960 = vrot.lane.b32.xlu0 %v2828, 72
      %v2961 = vpop.permute.xlu0 %2960
      %2962 = vrot.lane.b32.xlu0 %v2829, 72
      %v2963 = vpop.permute.xlu0 %2962
      %2964 = vrot.lane.b32.xlu0 %v2830, 72
      %v2965 = vpop.permute.xlu0 %2964
      %2966 = vrot.lane.b32.xlu0 %v2831, 72
      %v2967 = vpop.permute.xlu0 %2966
      %2968 = vrot.lane.b32.xlu0 %v2832, 72
      %v2969 = vpop.permute.xlu0 %2968
      %2970 = vrot.lane.b32.xlu0 %v2833, 72
      %v2971 = vpop.permute.xlu0 %2970
      %2972 = vrot.lane.b32.xlu0 %v2834, 72
      %v2973 = vpop.permute.xlu0 %2972
      %2974 = vrot.lane.b32.xlu0 %v2835, 72
      %v2975 = vpop.permute.xlu0 %2974
      %2976 = vrot.lane.b32.xlu0 %v2836, 72
      %v2977 = vpop.permute.xlu0 %2976
      %2978 = vrot.lane.b32.xlu0 %v2837, 72
      %v2979 = vpop.permute.xlu0 %2978
      %2980 = vrot.lane.b32.xlu0 %v2838, 72
      %v2981 = vpop.permute.xlu0 %2980
      %2982 = vrot.lane.b32.xlu0 %v2839, 72
      %v2983 = vpop.permute.xlu0 %2982
      %2984 = vrot.lane.b32.xlu0 %v2840, 72
      %v2985 = vpop.permute.xlu0 %2984
      %2986 = vrot.lane.b32.xlu0 %v2841, 72
      %v2987 = vpop.permute.xlu0 %2986
      %2988 = vrot.lane.b32.xlu0 %v2842, 72
      %v2989 = vpop.permute.xlu0 %2988
      %2990 = vrot.lane.b32.xlu0 %v2843, 72
      %v2991 = vpop.permute.xlu0 %2990
      %2992 = vrot.lane.b32.xlu0 %v2844, 72
      %v2993 = vpop.permute.xlu0 %2992
      %2994 = vrot.lane.b32.xlu0 %v2845, 72
      %v2995 = vpop.permute.xlu0 %2994
      %2996 = vrot.lane.b32.xlu0 %v2846, 72
      %v2997 = vpop.permute.xlu0 %2996
      %2998 = vrot.lane.b32.xlu0 %v2847, 72
      %v2999 = vpop.permute.xlu0 %2998
      %3000 = vrot.lane.b32.xlu0 %v2848, 72
      %v3001 = vpop.permute.xlu0 %3000
      %3002 = vrot.lane.b32.xlu0 %v2849, 72
      %v3003 = vpop.permute.xlu0 %3002
      %3004 = vrot.lane.b32.xlu0 %v2850, 72
      %v3005 = vpop.permute.xlu0 %3004
      %3006 = vrot.lane.b32.xlu0 %v2851, 72
      %v3007 = vpop.permute.xlu0 %3006
      %3008 = vrot.lane.b32.xlu0 %v2852, 72
      %v3009 = vpop.permute.xlu0 %3008
      %3010 = vrot.lane.b32.xlu0 %v2853, 72
      %v3011 = vpop.permute.xlu0 %3010
      %3012 = vrot.lane.b32.xlu0 %v2854, 72
      %v3013 = vpop.permute.xlu0 %3012
      %3014 = vrot.lane.b32.xlu0 %v2855, 72
      %v3015 = vpop.permute.xlu0 %3014
      %3016 = vrot.lane.b32.xlu0 %v2856, 72
      %v3017 = vpop.permute.xlu0 %3016
      %3018 = vrot.lane.b32.xlu0 %v2857, 72
      %v3019 = vpop.permute.xlu0 %3018
      %3020 = vrot.lane.b32.xlu0 %v2858, 72
      %v3021 = vpop.permute.xlu0 %3020
      %3022 = vrot.lane.b32.xlu0 %v2859, 72
      %v3023 = vpop.permute.xlu0 %3022
      %3024 = vrot.lane.b32.xlu0 %v2860, 72
      %v3025 = vpop.permute.xlu0 %3024
      %3026 = vrot.lane.b32.xlu0 %v2861, 72
      %v3027 = vpop.permute.xlu0 %3026
      %3028 = vrot.lane.b32.xlu0 %v2862, 72
      %v3029 = vpop.permute.xlu0 %3028
      %3030 = vrot.lane.b32.xlu0 %v2863, 72
      %v3031 = vpop.permute.xlu0 %3030
      %vm3088 = vcmask 687680
      %3089 = vst.msk [vmem:[#allocation2] sm:$0xff] %vm3088, %v2921
      %3090 = vst.msk [vmem:[#allocation2 + $0x8] sm:$0xff] %vm3088, %v2923
      %3091 = vst.msk [vmem:[#allocation2 + $0x10] sm:$0xff] %vm3088, %v2925
      %3092 = vst.msk [vmem:[#allocation2 + $0x18] sm:$0xff] %vm3088, %v2927
      %3093 = vst.msk [vmem:[#allocation2 + $0x20] sm:$0xff] %vm3088, %v2929
      %3094 = vst.msk [vmem:[#allocation2 + $0x28] sm:$0xff] %vm3088, %v2931
      %3095 = vst.msk [vmem:[#allocation2 + $0x30] sm:$0xff] %vm3088, %v2933
      %3096 = vst.msk [vmem:[#allocation2 + $0x38] sm:$0xff] %vm3088, %v2935
      %3097 = vst.msk [vmem:[#allocation2 + $0x40] sm:$0xff] %vm3088, %v2937
      %3098 = vst.msk [vmem:[#allocation2 + $0x48] sm:$0xff] %vm3088, %v2939
      %3099 = vst.msk [vmem:[#allocation2 + $0x50] sm:$0xff] %vm3088, %v2941
      %3100 = vst.msk [vmem:[#allocation2 + $0x58] sm:$0xff] %vm3088, %v2943
      %3101 = vst.msk [vmem:[#allocation2 + $0x60] sm:$0xff] %vm3088, %v2945
      %3102 = vst.msk [vmem:[#allocation2 + $0x68] sm:$0xff] %vm3088, %v2947
      %3103 = vst.msk [vmem:[#allocation2 + $0x70] sm:$0xff] %vm3088, %v2949
      %3104 = vst.msk [vmem:[#allocation2 + $0x78] sm:$0xff] %vm3088, %v2951
      %3105 = vst.msk [vmem:[#allocation2 + $0x80] sm:$0xff] %vm3088, %v2953
      %3106 = vst.msk [vmem:[#allocation2 + $0x88] sm:$0xff] %vm3088, %v2955
      %3107 = vst.msk [vmem:[#allocation2 + $0x90] sm:$0xff] %vm3088, %v2957
      %3108 = vst.msk [vmem:[#allocation2 + $0x98] sm:$0xff] %vm3088, %v2959
      %3109 = vst.msk [vmem:[#allocation2 + $0xa0] sm:$0xff] %vm3088, %v2961
      %3110 = vst.msk [vmem:[#allocation2 + $0xa8] sm:$0xff] %vm3088, %v2963
      %3111 = vst.msk [vmem:[#allocation2 + $0xb0] sm:$0xff] %vm3088, %v2965
      %3112 = vst.msk [vmem:[#allocation2 + $0xb8] sm:$0xff] %vm3088, %v2967
      %3113 = vst.msk [vmem:[#allocation2 + $0xc0] sm:$0xff] %vm3088, %v2969
      %3114 = vst.msk [vmem:[#allocation2 + $0xc8] sm:$0xff] %vm3088, %v2971
      %3115 = vst.msk [vmem:[#allocation2 + $0xd0] sm:$0xff] %vm3088, %v2973
      %3116 = vst.msk [vmem:[#allocation2 + $0xd8] sm:$0xff] %vm3088, %v2975
      %3117 = vst.msk [vmem:[#allocation2 + $0xe0] sm:$0xff] %vm3088, %v2977
      %3118 = vst.msk [vmem:[#allocation2 + $0xe8] sm:$0xff] %vm3088, %v2979
      %3119 = vst.msk [vmem:[#allocation2 + $0xf0] sm:$0xff] %vm3088, %v2981
      %3120 = vst.msk [vmem:[#allocation2 + $0xf8] sm:$0xff] %vm3088, %v2983
      %3121 = vst.msk [vmem:[#allocation2 + $0x100] sm:$0xff] %vm3088, %v2985
      %3122 = vst.msk [vmem:[#allocation2 + $0x108] sm:$0xff] %vm3088, %v2987
      %3123 = vst.msk [vmem:[#allocation2 + $0x110] sm:$0xff] %vm3088, %v2989
      %3124 = vst.msk [vmem:[#allocation2 + $0x118] sm:$0xff] %vm3088, %v2991
      %3125 = vst.msk [vmem:[#allocation2 + $0x120] sm:$0xff] %vm3088, %v2993
      %3126 = vst.msk [vmem:[#allocation2 + $0x128] sm:$0xff] %vm3088, %v2995
      %3127 = vst.msk [vmem:[#allocation2 + $0x130] sm:$0xff] %vm3088, %v2997
      %3128 = vst.msk [vmem:[#allocation2 + $0x138] sm:$0xff] %vm3088, %v2999
      %3129 = vst.msk [vmem:[#allocation2 + $0x140] sm:$0xff] %vm3088, %v3001
      %3130 = vst.msk [vmem:[#allocation2 + $0x148] sm:$0xff] %vm3088, %v3003
      %3131 = vst.msk [vmem:[#allocation2 + $0x150] sm:$0xff] %vm3088, %v3005
      %3132 = vst.msk [vmem:[#allocation2 + $0x158] sm:$0xff] %vm3088, %v3007
      %3133 = vst.msk [vmem:[#allocation2 + $0x160] sm:$0xff] %vm3088, %v3009
      %3134 = vst.msk [vmem:[#allocation2 + $0x168] sm:$0xff] %vm3088, %v3011
      %3135 = vst.msk [vmem:[#allocation2 + $0x170] sm:$0xff] %vm3088, %v3013
      %3136 = vst.msk [vmem:[#allocation2 + $0x178] sm:$0xff] %vm3088, %v3015
      %3137 = vst.msk [vmem:[#allocation2 + $0x180] sm:$0xff] %vm3088, %v3017
      %3138 = vst.msk [vmem:[#allocation2 + $0x188] sm:$0xff] %vm3088, %v3019
      %3139 = vst.msk [vmem:[#allocation2 + $0x190] sm:$0xff] %vm3088, %v3021
      %3140 = vst.msk [vmem:[#allocation2 + $0x198] sm:$0xff] %vm3088, %v3023
      %3141 = vst.msk [vmem:[#allocation2 + $0x1a0] sm:$0xff] %vm3088, %v3025
      %3142 = vst.msk [vmem:[#allocation2 + $0x1a8] sm:$0xff] %vm3088, %v3027
      %3143 = vst.msk [vmem:[#allocation2 + $0x1b0] sm:$0xff] %vm3088, %v3029
      %3144 = vst.msk [vmem:[#allocation2 + $0x1b8] sm:$0xff] %vm3088, %v3031
      %v3145 = vld [vmem:[%s219 + $0x41] sm:$0xff]
      %v3146 = vld [vmem:[%s219 + $0x49] sm:$0xff]
      %v3147 = vld [vmem:[%s219 + $0x51] sm:$0xff]
      %v3148 = vld [vmem:[%s219 + $0x59] sm:$0xff]
      %v3149 = vld [vmem:[%s219 + $0x61] sm:$0xff]
      %v3150 = vld [vmem:[%s219 + $0x69] sm:$0xff]
      %v3151 = vld [vmem:[%s219 + $0x71] sm:$0xff]
      %v3152 = vld [vmem:[%s219 + $0x79] sm:$0xff]
      %v3153 = vld [vmem:[%s219 + $0x81] sm:$0xff]
      %v3154 = vld [vmem:[%s219 + $0x89] sm:$0xff]
      %v3155 = vld [vmem:[%s219 + $0x91] sm:$0xff]
      %v3156 = vld [vmem:[%s219 + $0x99] sm:$0xff]
      %v3157 = vld [vmem:[%s219 + $0xa1] sm:$0xff]
      %v3158 = vld [vmem:[%s219 + $0xa9] sm:$0xff]
      %v3159 = vld [vmem:[%s219 + $0xb1] sm:$0xff]
      %v3160 = vld [vmem:[%s219 + $0xb9] sm:$0xff]
      %v3161 = vld [vmem:[%s219 + $0xc1] sm:$0xff]
      %v3162 = vld [vmem:[%s219 + $0xc9] sm:$0xff]
      %v3163 = vld [vmem:[%s219 + $0xd1] sm:$0xff]
      %v3164 = vld [vmem:[%s219 + $0xd9] sm:$0xff]
      %v3165 = vld [vmem:[%s219 + $0xe1] sm:$0xff]
      %v3166 = vld [vmem:[%s219 + $0xe9] sm:$0xff]
      %v3167 = vld [vmem:[%s219 + $0xf1] sm:$0xff]
      %v3168 = vld [vmem:[%s219 + $0xf9] sm:$0xff]
      %v3169 = vld [vmem:[%s219 + $0x101] sm:$0xff]
      %v3170 = vld [vmem:[%s219 + $0x109] sm:$0xff]
      %v3171 = vld [vmem:[%s219 + $0x111] sm:$0xff]
      %v3172 = vld [vmem:[%s219 + $0x119] sm:$0xff]
      %v3173 = vld [vmem:[%s219 + $0x121] sm:$0xff]
      %v3174 = vld [vmem:[%s219 + $0x129] sm:$0xff]
      %v3175 = vld [vmem:[%s219 + $0x131] sm:$0xff]
      %v3176 = vld [vmem:[%s219 + $0x139] sm:$0xff]
      %v3177 = vld [vmem:[%s219 + $0x141] sm:$0xff]
      %v3178 = vld [vmem:[%s219 + $0x149] sm:$0xff]
      %v3179 = vld [vmem:[%s219 + $0x151] sm:$0xff]
      %v3180 = vld [vmem:[%s219 + $0x159] sm:$0xff]
      %v3181 = vld [vmem:[%s219 + $0x161] sm:$0xff]
      %v3182 = vld [vmem:[%s219 + $0x169] sm:$0xff]
      %v3183 = vld [vmem:[%s219 + $0x171] sm:$0xff]
      %v3184 = vld [vmem:[%s219 + $0x179] sm:$0xff]
      %v3185 = vld [vmem:[%s219 + $0x181] sm:$0xff]
      %v3186 = vld [vmem:[%s219 + $0x189] sm:$0xff]
      %v3187 = vld [vmem:[%s219 + $0x191] sm:$0xff]
      %v3188 = vld [vmem:[%s219 + $0x199] sm:$0xff]
      %v3189 = vld [vmem:[%s219 + $0x1a1] sm:$0xff]
      %v3190 = vld [vmem:[%s219 + $0x1a9] sm:$0xff]
      %v3191 = vld [vmem:[%s219 + $0x1b1] sm:$0xff]
      %v3192 = vld [vmem:[%s219 + $0x1b9] sm:$0xff]
      %v3193 = vld [vmem:[%s219 + $0x1c1] sm:$0xff]
      %v3194 = vld [vmem:[%s219 + $0x1c9] sm:$0xff]
      %v3195 = vld [vmem:[%s219 + $0x1d1] sm:$0xff]
      %v3196 = vld [vmem:[%s219 + $0x1d9] sm:$0xff]
      %v3197 = vld [vmem:[%s219 + $0x1e1] sm:$0xff]
      %v3198 = vld [vmem:[%s219 + $0x1e9] sm:$0xff]
      %v3199 = vld [vmem:[%s219 + $0x1f1] sm:$0xff]
      %v3200 = vld [vmem:[%s219 + $0x1f9] sm:$0xff]
      %v3201 = vld [vmem:[%s219 + $0x201] sm:$0xff]
      %v3202 = vld [vmem:[%s219 + $0x209] sm:$0xff]
      %v3203 = vld [vmem:[%s219 + $0x211] sm:$0xff]
      %v3204 = vld [vmem:[%s219 + $0x219] sm:$0xff]
      %v3205 = vld [vmem:[%s219 + $0x221] sm:$0xff]
      %v3206 = vld [vmem:[%s219 + $0x229] sm:$0xff]
      %v3207 = vld [vmem:[%s219 + $0x231] sm:$0xff]
      %v3208 = vld [vmem:[%s219 + $0x239] sm:$0xff]
      %v3209 = vld [vmem:[%s219 + $0x241] sm:$0xff]
      %v3210 = vld [vmem:[%s219 + $0x249] sm:$0xff]
      %v3211 = vld [vmem:[%s219 + $0x251] sm:$0xff]
      %v3212 = vld [vmem:[%s219 + $0x259] sm:$0xff]
      %v3213 = vld [vmem:[%s219 + $0x261] sm:$0xff]
      %v3214 = vld [vmem:[%s219 + $0x269] sm:$0xff]
      %v3215 = vld [vmem:[%s219 + $0x271] sm:$0xff]
      %v3216 = vld [vmem:[%s219 + $0x279] sm:$0xff]
      %v3217 = vld [vmem:[%s219 + $0x281] sm:$0xff]
      %v3218 = vld [vmem:[%s219 + $0x289] sm:$0xff]
      %v3219 = vld [vmem:[%s219 + $0x291] sm:$0xff]
      %v3220 = vld [vmem:[%s219 + $0x299] sm:$0xff]
      %v3221 = vld [vmem:[%s219 + $0x2a1] sm:$0xff]
      %v3222 = vld [vmem:[%s219 + $0x2a9] sm:$0xff]
      %v3223 = vld [vmem:[%s219 + $0x2b1] sm:$0xff]
      %v3224 = vld [vmem:[%s219 + $0x2b9] sm:$0xff]
      %v3225 = vld [vmem:[%s219 + $0x2c1] sm:$0xff]
      %v3226 = vld [vmem:[%s219 + $0x2c9] sm:$0xff]
      %v3227 = vld [vmem:[%s219 + $0x2d1] sm:$0xff]
      %v3228 = vld [vmem:[%s219 + $0x2d9] sm:$0xff]
      %v3229 = vld [vmem:[%s219 + $0x2e1] sm:$0xff]
      %v3230 = vld [vmem:[%s219 + $0x2e9] sm:$0xff]
      %v3231 = vld [vmem:[%s219 + $0x2f1] sm:$0xff]
      %v3232 = vld [vmem:[%s219 + $0x2f9] sm:$0xff]
      %v3233 = vld [vmem:[%s219 + $0x301] sm:$0xff]
      %v3234 = vld [vmem:[%s219 + $0x309] sm:$0xff]
      %v3235 = vld [vmem:[%s219 + $0x311] sm:$0xff]
      %v3236 = vld [vmem:[%s219 + $0x319] sm:$0xff]
      %v3237 = vld [vmem:[%s219 + $0x321] sm:$0xff]
      %v3238 = vld [vmem:[%s219 + $0x329] sm:$0xff]
      %v3239 = vld [vmem:[%s219 + $0x331] sm:$0xff]
      %v3240 = vld [vmem:[%s219 + $0x339] sm:$0xff]
      %v3241 = vld [vmem:[%s219 + $0x341] sm:$0xff]
      %v3242 = vld [vmem:[%s219 + $0x349] sm:$0xff]
      %v3243 = vld [vmem:[%s219 + $0x351] sm:$0xff]
      %v3244 = vld [vmem:[%s219 + $0x359] sm:$0xff]
      %v3245 = vld [vmem:[%s219 + $0x361] sm:$0xff]
      %v3246 = vld [vmem:[%s219 + $0x369] sm:$0xff]
      %v3247 = vld [vmem:[%s219 + $0x371] sm:$0xff]
      %v3248 = vld [vmem:[%s219 + $0x379] sm:$0xff]
      %v3249 = vld [vmem:[%s219 + $0x381] sm:$0xff]
      %v3250 = vld [vmem:[%s219 + $0x389] sm:$0xff]
      %v3251 = vld [vmem:[%s219 + $0x391] sm:$0xff]
      %v3252 = vld [vmem:[%s219 + $0x399] sm:$0xff]
      %v3253 = vld [vmem:[%s219 + $0x3a1] sm:$0xff]
      %v3254 = vld [vmem:[%s219 + $0x3a9] sm:$0xff]
      %v3255 = vld [vmem:[%s219 + $0x3b1] sm:$0xff]
      %v3256 = vld [vmem:[%s219 + $0x3b9] sm:$0xff]
      %v3257 = vpack.c.bf16 %v3146, %v3145
      %v3258 = vpack.c.bf16 %v3148, %v3147
      %v3259 = vpack.c.bf16 %v3150, %v3149
      %v3260 = vpack.c.bf16 %v3152, %v3151
      %v3261 = vpack.c.bf16 %v3154, %v3153
      %v3262 = vpack.c.bf16 %v3156, %v3155
      %v3263 = vpack.c.bf16 %v3158, %v3157
      %v3264 = vpack.c.bf16 %v3160, %v3159
      %v3265 = vpack.c.bf16 %v3162, %v3161
      %v3266 = vpack.c.bf16 %v3164, %v3163
      %v3267 = vpack.c.bf16 %v3166, %v3165
      %v3268 = vpack.c.bf16 %v3168, %v3167
      %v3269 = vpack.c.bf16 %v3170, %v3169
      %v3270 = vpack.c.bf16 %v3172, %v3171
      %v3271 = vpack.c.bf16 %v3174, %v3173
      %v3272 = vpack.c.bf16 %v3176, %v3175
      %v3273 = vpack.c.bf16 %v3178, %v3177
      %v3274 = vpack.c.bf16 %v3180, %v3179
      %v3275 = vpack.c.bf16 %v3182, %v3181
      %v3276 = vpack.c.bf16 %v3184, %v3183
      %v3277 = vpack.c.bf16 %v3186, %v3185
      %v3278 = vpack.c.bf16 %v3188, %v3187
      %v3279 = vpack.c.bf16 %v3190, %v3189
      %v3280 = vpack.c.bf16 %v3192, %v3191
      %v3281 = vpack.c.bf16 %v3194, %v3193
      %v3282 = vpack.c.bf16 %v3196, %v3195
      %v3283 = vpack.c.bf16 %v3198, %v3197
      %v3284 = vpack.c.bf16 %v3200, %v3199
      %v3285 = vpack.c.bf16 %v3202, %v3201
      %v3286 = vpack.c.bf16 %v3204, %v3203
      %v3287 = vpack.c.bf16 %v3206, %v3205
      %v3288 = vpack.c.bf16 %v3208, %v3207
      %v3289 = vpack.c.bf16 %v3210, %v3209
      %v3290 = vpack.c.bf16 %v3212, %v3211
      %v3291 = vpack.c.bf16 %v3214, %v3213
      %v3292 = vpack.c.bf16 %v3216, %v3215
      %v3293 = vpack.c.bf16 %v3218, %v3217
      %v3294 = vpack.c.bf16 %v3220, %v3219
      %v3295 = vpack.c.bf16 %v3222, %v3221
      %v3296 = vpack.c.bf16 %v3224, %v3223
      %v3297 = vpack.c.bf16 %v3226, %v3225
      %v3298 = vpack.c.bf16 %v3228, %v3227
      %v3299 = vpack.c.bf16 %v3230, %v3229
      %v3300 = vpack.c.bf16 %v3232, %v3231
      %v3301 = vpack.c.bf16 %v3234, %v3233
      %v3302 = vpack.c.bf16 %v3236, %v3235
      %v3303 = vpack.c.bf16 %v3238, %v3237
      %v3304 = vpack.c.bf16 %v3240, %v3239
      %v3305 = vpack.c.bf16 %v3242, %v3241
      %v3306 = vpack.c.bf16 %v3244, %v3243
      %v3307 = vpack.c.bf16 %v3246, %v3245
      %v3308 = vpack.c.bf16 %v3248, %v3247
      %v3309 = vpack.c.bf16 %v3250, %v3249
      %v3310 = vpack.c.bf16 %v3252, %v3251
      %v3311 = vpack.c.bf16 %v3254, %v3253
      %v3312 = vpack.c.bf16 %v3256, %v3255
      %3369 = vrot.lane.b32.xlu0 %v3257, 84
      %v3370 = vpop.permute.xlu0 %3369
      %3371 = vrot.lane.b32.xlu0 %v3258, 84
      %v3372 = vpop.permute.xlu0 %3371
      %3373 = vrot.lane.b32.xlu0 %v3259, 84
      %v3374 = vpop.permute.xlu0 %3373
      %3375 = vrot.lane.b32.xlu0 %v3260, 84
      %v3376 = vpop.permute.xlu0 %3375
      %3377 = vrot.lane.b32.xlu0 %v3261, 84
      %v3378 = vpop.permute.xlu0 %3377
      %3379 = vrot.lane.b32.xlu0 %v3262, 84
      %v3380 = vpop.permute.xlu0 %3379
      %3381 = vrot.lane.b32.xlu0 %v3263, 84
      %v3382 = vpop.permute.xlu0 %3381
      %3383 = vrot.lane.b32.xlu0 %v3264, 84
      %v3384 = vpop.permute.xlu0 %3383
      %3385 = vrot.lane.b32.xlu0 %v3265, 84
      %v3386 = vpop.permute.xlu0 %3385
      %3387 = vrot.lane.b32.xlu0 %v3266, 84
      %v3388 = vpop.permute.xlu0 %3387
      %3389 = vrot.lane.b32.xlu0 %v3267, 84
      %v3390 = vpop.permute.xlu0 %3389
      %3391 = vrot.lane.b32.xlu0 %v3268, 84
      %v3392 = vpop.permute.xlu0 %3391
      %3393 = vrot.lane.b32.xlu0 %v3269, 84
      %v3394 = vpop.permute.xlu0 %3393
      %3395 = vrot.lane.b32.xlu0 %v3270, 84
      %v3396 = vpop.permute.xlu0 %3395
      %3397 = vrot.lane.b32.xlu0 %v3271, 84
      %v3398 = vpop.permute.xlu0 %3397
      %3399 = vrot.lane.b32.xlu0 %v3272, 84
      %v3400 = vpop.permute.xlu0 %3399
      %3401 = vrot.lane.b32.xlu0 %v3273, 84
      %v3402 = vpop.permute.xlu0 %3401
      %3403 = vrot.lane.b32.xlu0 %v3274, 84
      %v3404 = vpop.permute.xlu0 %3403
      %3405 = vrot.lane.b32.xlu0 %v3275, 84
      %v3406 = vpop.permute.xlu0 %3405
      %3407 = vrot.lane.b32.xlu0 %v3276, 84
      %v3408 = vpop.permute.xlu0 %3407
      %3409 = vrot.lane.b32.xlu0 %v3277, 84
      %v3410 = vpop.permute.xlu0 %3409
      %3411 = vrot.lane.b32.xlu0 %v3278, 84
      %v3412 = vpop.permute.xlu0 %3411
      %3413 = vrot.lane.b32.xlu0 %v3279, 84
      %v3414 = vpop.permute.xlu0 %3413
      %3415 = vrot.lane.b32.xlu0 %v3280, 84
      %v3416 = vpop.permute.xlu0 %3415
      %3417 = vrot.lane.b32.xlu0 %v3281, 84
      %v3418 = vpop.permute.xlu0 %3417
      %3419 = vrot.lane.b32.xlu0 %v3282, 84
      %v3420 = vpop.permute.xlu0 %3419
      %3421 = vrot.lane.b32.xlu0 %v3283, 84
      %v3422 = vpop.permute.xlu0 %3421
      %3423 = vrot.lane.b32.xlu0 %v3284, 84
      %v3424 = vpop.permute.xlu0 %3423
      %3425 = vrot.lane.b32.xlu0 %v3285, 84
      %v3426 = vpop.permute.xlu0 %3425
      %3427 = vrot.lane.b32.xlu0 %v3286, 84
      %v3428 = vpop.permute.xlu0 %3427
      %3429 = vrot.lane.b32.xlu0 %v3287, 84
      %v3430 = vpop.permute.xlu0 %3429
      %3431 = vrot.lane.b32.xlu0 %v3288, 84
      %v3432 = vpop.permute.xlu0 %3431
      %3433 = vrot.lane.b32.xlu0 %v3289, 84
      %v3434 = vpop.permute.xlu0 %3433
      %3435 = vrot.lane.b32.xlu0 %v3290, 84
      %v3436 = vpop.permute.xlu0 %3435
      %3437 = vrot.lane.b32.xlu0 %v3291, 84
      %v3438 = vpop.permute.xlu0 %3437
      %3439 = vrot.lane.b32.xlu0 %v3292, 84
      %v3440 = vpop.permute.xlu0 %3439
      %3441 = vrot.lane.b32.xlu0 %v3293, 84
      %v3442 = vpop.permute.xlu0 %3441
      %3443 = vrot.lane.b32.xlu0 %v3294, 84
      %v3444 = vpop.permute.xlu0 %3443
      %3445 = vrot.lane.b32.xlu0 %v3295, 84
      %v3446 = vpop.permute.xlu0 %3445
      %3447 = vrot.lane.b32.xlu0 %v3296, 84
      %v3448 = vpop.permute.xlu0 %3447
      %3449 = vrot.lane.b32.xlu0 %v3297, 84
      %v3450 = vpop.permute.xlu0 %3449
      %3451 = vrot.lane.b32.xlu0 %v3298, 84
      %v3452 = vpop.permute.xlu0 %3451
      %3453 = vrot.lane.b32.xlu0 %v3299, 84
      %v3454 = vpop.permute.xlu0 %3453
      %3455 = vrot.lane.b32.xlu0 %v3300, 84
      %v3456 = vpop.permute.xlu0 %3455
      %3457 = vrot.lane.b32.xlu0 %v3301, 84
      %v3458 = vpop.permute.xlu0 %3457
      %3459 = vrot.lane.b32.xlu0 %v3302, 84
      %v3460 = vpop.permute.xlu0 %3459
      %3461 = vrot.lane.b32.xlu0 %v3303, 84
      %v3462 = vpop.permute.xlu0 %3461
      %3463 = vrot.lane.b32.xlu0 %v3304, 84
      %v3464 = vpop.permute.xlu0 %3463
      %3465 = vrot.lane.b32.xlu0 %v3305, 84
      %v3466 = vpop.permute.xlu0 %3465
      %3467 = vrot.lane.b32.xlu0 %v3306, 84
      %v3468 = vpop.permute.xlu0 %3467
      %3469 = vrot.lane.b32.xlu0 %v3307, 84
      %v3470 = vpop.permute.xlu0 %3469
      %3471 = vrot.lane.b32.xlu0 %v3308, 84
      %v3472 = vpop.permute.xlu0 %3471
      %3473 = vrot.lane.b32.xlu0 %v3309, 84
      %v3474 = vpop.permute.xlu0 %3473
      %3475 = vrot.lane.b32.xlu0 %v3310, 84
      %v3476 = vpop.permute.xlu0 %3475
      %3477 = vrot.lane.b32.xlu0 %v3311, 84
      %v3478 = vpop.permute.xlu0 %3477
      %3479 = vrot.lane.b32.xlu0 %v3312, 84
      %v3480 = vpop.permute.xlu0 %3479
      %vm3537 = vcmask 786080
      %3538 = vst.msk [vmem:[#allocation2] sm:$0xff] %vm3537, %v3370
      %3539 = vst.msk [vmem:[#allocation2 + $0x8] sm:$0xff] %vm3537, %v3372
      %3540 = vst.msk [vmem:[#allocation2 + $0x10] sm:$0xff] %vm3537, %v3374
      %3541 = vst.msk [vmem:[#allocation2 + $0x18] sm:$0xff] %vm3537, %v3376
      %3542 = vst.msk [vmem:[#allocation2 + $0x20] sm:$0xff] %vm3537, %v3378
      %3543 = vst.msk [vmem:[#allocation2 + $0x28] sm:$0xff] %vm3537, %v3380
      %3544 = vst.msk [vmem:[#allocation2 + $0x30] sm:$0xff] %vm3537, %v3382
      %3545 = vst.msk [vmem:[#allocation2 + $0x38] sm:$0xff] %vm3537, %v3384
      %3546 = vst.msk [vmem:[#allocation2 + $0x40] sm:$0xff] %vm3537, %v3386
      %3547 = vst.msk [vmem:[#allocation2 + $0x48] sm:$0xff] %vm3537, %v3388
      %3548 = vst.msk [vmem:[#allocation2 + $0x50] sm:$0xff] %vm3537, %v3390
      %3549 = vst.msk [vmem:[#allocation2 + $0x58] sm:$0xff] %vm3537, %v3392
      %3550 = vst.msk [vmem:[#allocation2 + $0x60] sm:$0xff] %vm3537, %v3394
      %3551 = vst.msk [vmem:[#allocation2 + $0x68] sm:$0xff] %vm3537, %v3396
      %3552 = vst.msk [vmem:[#allocation2 + $0x70] sm:$0xff] %vm3537, %v3398
      %3553 = vst.msk [vmem:[#allocation2 + $0x78] sm:$0xff] %vm3537, %v3400
      %3554 = vst.msk [vmem:[#allocation2 + $0x80] sm:$0xff] %vm3537, %v3402
      %3555 = vst.msk [vmem:[#allocation2 + $0x88] sm:$0xff] %vm3537, %v3404
      %3556 = vst.msk [vmem:[#allocation2 + $0x90] sm:$0xff] %vm3537, %v3406
      %3557 = vst.msk [vmem:[#allocation2 + $0x98] sm:$0xff] %vm3537, %v3408
      %3558 = vst.msk [vmem:[#allocation2 + $0xa0] sm:$0xff] %vm3537, %v3410
      %3559 = vst.msk [vmem:[#allocation2 + $0xa8] sm:$0xff] %vm3537, %v3412
      %3560 = vst.msk [vmem:[#allocation2 + $0xb0] sm:$0xff] %vm3537, %v3414
      %3561 = vst.msk [vmem:[#allocation2 + $0xb8] sm:$0xff] %vm3537, %v3416
      %3562 = vst.msk [vmem:[#allocation2 + $0xc0] sm:$0xff] %vm3537, %v3418
      %3563 = vst.msk [vmem:[#allocation2 + $0xc8] sm:$0xff] %vm3537, %v3420
      %3564 = vst.msk [vmem:[#allocation2 + $0xd0] sm:$0xff] %vm3537, %v3422
      %3565 = vst.msk [vmem:[#allocation2 + $0xd8] sm:$0xff] %vm3537, %v3424
      %3566 = vst.msk [vmem:[#allocation2 + $0xe0] sm:$0xff] %vm3537, %v3426
      %3567 = vst.msk [vmem:[#allocation2 + $0xe8] sm:$0xff] %vm3537, %v3428
      %3568 = vst.msk [vmem:[#allocation2 + $0xf0] sm:$0xff] %vm3537, %v3430
      %3569 = vst.msk [vmem:[#allocation2 + $0xf8] sm:$0xff] %vm3537, %v3432
      %3570 = vst.msk [vmem:[#allocation2 + $0x100] sm:$0xff] %vm3537, %v3434
      %3571 = vst.msk [vmem:[#allocation2 + $0x108] sm:$0xff] %vm3537, %v3436
      %3572 = vst.msk [vmem:[#allocation2 + $0x110] sm:$0xff] %vm3537, %v3438
      %3573 = vst.msk [vmem:[#allocation2 + $0x118] sm:$0xff] %vm3537, %v3440
      %3574 = vst.msk [vmem:[#allocation2 + $0x120] sm:$0xff] %vm3537, %v3442
      %3575 = vst.msk [vmem:[#allocation2 + $0x128] sm:$0xff] %vm3537, %v3444
      %3576 = vst.msk [vmem:[#allocation2 + $0x130] sm:$0xff] %vm3537, %v3446
      %3577 = vst.msk [vmem:[#allocation2 + $0x138] sm:$0xff] %vm3537, %v3448
      %3578 = vst.msk [vmem:[#allocation2 + $0x140] sm:$0xff] %vm3537, %v3450
      %3579 = vst.msk [vmem:[#allocation2 + $0x148] sm:$0xff] %vm3537, %v3452
      %3580 = vst.msk [vmem:[#allocation2 + $0x150] sm:$0xff] %vm3537, %v3454
      %3581 = vst.msk [vmem:[#allocation2 + $0x158] sm:$0xff] %vm3537, %v3456
      %3582 = vst.msk [vmem:[#allocation2 + $0x160] sm:$0xff] %vm3537, %v3458
      %3583 = vst.msk [vmem:[#allocation2 + $0x168] sm:$0xff] %vm3537, %v3460
      %3584 = vst.msk [vmem:[#allocation2 + $0x170] sm:$0xff] %vm3537, %v3462
      %3585 = vst.msk [vmem:[#allocation2 + $0x178] sm:$0xff] %vm3537, %v3464
      %3586 = vst.msk [vmem:[#allocation2 + $0x180] sm:$0xff] %vm3537, %v3466
      %3587 = vst.msk [vmem:[#allocation2 + $0x188] sm:$0xff] %vm3537, %v3468
      %3588 = vst.msk [vmem:[#allocation2 + $0x190] sm:$0xff] %vm3537, %v3470
      %3589 = vst.msk [vmem:[#allocation2 + $0x198] sm:$0xff] %vm3537, %v3472
      %3590 = vst.msk [vmem:[#allocation2 + $0x1a0] sm:$0xff] %vm3537, %v3474
      %3591 = vst.msk [vmem:[#allocation2 + $0x1a8] sm:$0xff] %vm3537, %v3476
      %3592 = vst.msk [vmem:[#allocation2 + $0x1b0] sm:$0xff] %vm3537, %v3478
      %3593 = vst.msk [vmem:[#allocation2 + $0x1b8] sm:$0xff] %vm3537, %v3480
      %v3594 = vld [vmem:[%s219 + $0x42] sm:$0xff]
      %v3595 = vld [vmem:[%s219 + $0x4a] sm:$0xff]
      %v3596 = vld [vmem:[%s219 + $0x52] sm:$0xff]
      %v3597 = vld [vmem:[%s219 + $0x5a] sm:$0xff]
      %v3598 = vld [vmem:[%s219 + $0x62] sm:$0xff]
      %v3599 = vld [vmem:[%s219 + $0x6a] sm:$0xff]
      %v3600 = vld [vmem:[%s219 + $0x72] sm:$0xff]
      %v3601 = vld [vmem:[%s219 + $0x7a] sm:$0xff]
      %v3602 = vld [vmem:[%s219 + $0x82] sm:$0xff]
      %v3603 = vld [vmem:[%s219 + $0x8a] sm:$0xff]
      %v3604 = vld [vmem:[%s219 + $0x92] sm:$0xff]
      %v3605 = vld [vmem:[%s219 + $0x9a] sm:$0xff]
      %v3606 = vld [vmem:[%s219 + $0xa2] sm:$0xff]
      %v3607 = vld [vmem:[%s219 + $0xaa] sm:$0xff]
      %v3608 = vld [vmem:[%s219 + $0xb2] sm:$0xff]
      %v3609 = vld [vmem:[%s219 + $0xba] sm:$0xff]
      %v3610 = vld [vmem:[%s219 + $0xc2] sm:$0xff]
      %v3611 = vld [vmem:[%s219 + $0xca] sm:$0xff]
      %v3612 = vld [vmem:[%s219 + $0xd2] sm:$0xff]
      %v3613 = vld [vmem:[%s219 + $0xda] sm:$0xff]
      %v3614 = vld [vmem:[%s219 + $0xe2] sm:$0xff]
      %v3615 = vld [vmem:[%s219 + $0xea] sm:$0xff]
      %v3616 = vld [vmem:[%s219 + $0xf2] sm:$0xff]
      %v3617 = vld [vmem:[%s219 + $0xfa] sm:$0xff]
      %v3618 = vld [vmem:[%s219 + $0x102] sm:$0xff]
      %v3619 = vld [vmem:[%s219 + $0x10a] sm:$0xff]
      %v3620 = vld [vmem:[%s219 + $0x112] sm:$0xff]
      %v3621 = vld [vmem:[%s219 + $0x11a] sm:$0xff]
      %v3622 = vld [vmem:[%s219 + $0x122] sm:$0xff]
      %v3623 = vld [vmem:[%s219 + $0x12a] sm:$0xff]
      %v3624 = vld [vmem:[%s219 + $0x132] sm:$0xff]
      %v3625 = vld [vmem:[%s219 + $0x13a] sm:$0xff]
      %v3626 = vld [vmem:[%s219 + $0x142] sm:$0xff]
      %v3627 = vld [vmem:[%s219 + $0x14a] sm:$0xff]
      %v3628 = vld [vmem:[%s219 + $0x152] sm:$0xff]
      %v3629 = vld [vmem:[%s219 + $0x15a] sm:$0xff]
      %v3630 = vld [vmem:[%s219 + $0x162] sm:$0xff]
      %v3631 = vld [vmem:[%s219 + $0x16a] sm:$0xff]
      %v3632 = vld [vmem:[%s219 + $0x172] sm:$0xff]
      %v3633 = vld [vmem:[%s219 + $0x17a] sm:$0xff]
      %v3634 = vld [vmem:[%s219 + $0x182] sm:$0xff]
      %v3635 = vld [vmem:[%s219 + $0x18a] sm:$0xff]
      %v3636 = vld [vmem:[%s219 + $0x192] sm:$0xff]
      %v3637 = vld [vmem:[%s219 + $0x19a] sm:$0xff]
      %v3638 = vld [vmem:[%s219 + $0x1a2] sm:$0xff]
      %v3639 = vld [vmem:[%s219 + $0x1aa] sm:$0xff]
      %v3640 = vld [vmem:[%s219 + $0x1b2] sm:$0xff]
      %v3641 = vld [vmem:[%s219 + $0x1ba] sm:$0xff]
      %v3642 = vld [vmem:[%s219 + $0x1c2] sm:$0xff]
      %v3643 = vld [vmem:[%s219 + $0x1ca] sm:$0xff]
      %v3644 = vld [vmem:[%s219 + $0x1d2] sm:$0xff]
      %v3645 = vld [vmem:[%s219 + $0x1da] sm:$0xff]
      %v3646 = vld [vmem:[%s219 + $0x1e2] sm:$0xff]
      %v3647 = vld [vmem:[%s219 + $0x1ea] sm:$0xff]
      %v3648 = vld [vmem:[%s219 + $0x1f2] sm:$0xff]
      %v3649 = vld [vmem:[%s219 + $0x1fa] sm:$0xff]
      %v3650 = vld [vmem:[%s219 + $0x202] sm:$0xff]
      %v3651 = vld [vmem:[%s219 + $0x20a] sm:$0xff]
      %v3652 = vld [vmem:[%s219 + $0x212] sm:$0xff]
      %v3653 = vld [vmem:[%s219 + $0x21a] sm:$0xff]
      %v3654 = vld [vmem:[%s219 + $0x222] sm:$0xff]
      %v3655 = vld [vmem:[%s219 + $0x22a] sm:$0xff]
      %v3656 = vld [vmem:[%s219 + $0x232] sm:$0xff]
      %v3657 = vld [vmem:[%s219 + $0x23a] sm:$0xff]
      %v3658 = vld [vmem:[%s219 + $0x242] sm:$0xff]
      %v3659 = vld [vmem:[%s219 + $0x24a] sm:$0xff]
      %v3660 = vld [vmem:[%s219 + $0x252] sm:$0xff]
      %v3661 = vld [vmem:[%s219 + $0x25a] sm:$0xff]
      %v3662 = vld [vmem:[%s219 + $0x262] sm:$0xff]
      %v3663 = vld [vmem:[%s219 + $0x26a] sm:$0xff]
      %v3664 = vld [vmem:[%s219 + $0x272] sm:$0xff]
      %v3665 = vld [vmem:[%s219 + $0x27a] sm:$0xff]
      %v3666 = vld [vmem:[%s219 + $0x282] sm:$0xff]
      %v3667 = vld [vmem:[%s219 + $0x28a] sm:$0xff]
      %v3668 = vld [vmem:[%s219 + $0x292] sm:$0xff]
      %v3669 = vld [vmem:[%s219 + $0x29a] sm:$0xff]
      %v3670 = vld [vmem:[%s219 + $0x2a2] sm:$0xff]
      %v3671 = vld [vmem:[%s219 + $0x2aa] sm:$0xff]
      %v3672 = vld [vmem:[%s219 + $0x2b2] sm:$0xff]
      %v3673 = vld [vmem:[%s219 + $0x2ba] sm:$0xff]
      %v3674 = vld [vmem:[%s219 + $0x2c2] sm:$0xff]
      %v3675 = vld [vmem:[%s219 + $0x2ca] sm:$0xff]
      %v3676 = vld [vmem:[%s219 + $0x2d2] sm:$0xff]
      %v3677 = vld [vmem:[%s219 + $0x2da] sm:$0xff]
      %v3678 = vld [vmem:[%s219 + $0x2e2] sm:$0xff]
      %v3679 = vld [vmem:[%s219 + $0x2ea] sm:$0xff]
      %v3680 = vld [vmem:[%s219 + $0x2f2] sm:$0xff]
      %v3681 = vld [vmem:[%s219 + $0x2fa] sm:$0xff]
      %v3682 = vld [vmem:[%s219 + $0x302] sm:$0xff]
      %v3683 = vld [vmem:[%s219 + $0x30a] sm:$0xff]
      %v3684 = vld [vmem:[%s219 + $0x312] sm:$0xff]
      %v3685 = vld [vmem:[%s219 + $0x31a] sm:$0xff]
      %v3686 = vld [vmem:[%s219 + $0x322] sm:$0xff]
      %v3687 = vld [vmem:[%s219 + $0x32a] sm:$0xff]
      %v3688 = vld [vmem:[%s219 + $0x332] sm:$0xff]
      %v3689 = vld [vmem:[%s219 + $0x33a] sm:$0xff]
      %v3690 = vld [vmem:[%s219 + $0x342] sm:$0xff]
      %v3691 = vld [vmem:[%s219 + $0x34a] sm:$0xff]
      %v3692 = vld [vmem:[%s219 + $0x352] sm:$0xff]
      %v3693 = vld [vmem:[%s219 + $0x35a] sm:$0xff]
      %v3694 = vld [vmem:[%s219 + $0x362] sm:$0xff]
      %v3695 = vld [vmem:[%s219 + $0x36a] sm:$0xff]
      %v3696 = vld [vmem:[%s219 + $0x372] sm:$0xff]
      %v3697 = vld [vmem:[%s219 + $0x37a] sm:$0xff]
      %v3698 = vld [vmem:[%s219 + $0x382] sm:$0xff]
      %v3699 = vld [vmem:[%s219 + $0x38a] sm:$0xff]
      %v3700 = vld [vmem:[%s219 + $0x392] sm:$0xff]
      %v3701 = vld [vmem:[%s219 + $0x39a] sm:$0xff]
      %v3702 = vld [vmem:[%s219 + $0x3a2] sm:$0xff]
      %v3703 = vld [vmem:[%s219 + $0x3aa] sm:$0xff]
      %v3704 = vld [vmem:[%s219 + $0x3b2] sm:$0xff]
      %v3705 = vld [vmem:[%s219 + $0x3ba] sm:$0xff]
      %v3706 = vpack.c.bf16 %v3595, %v3594
      %v3707 = vpack.c.bf16 %v3597, %v3596
      %v3708 = vpack.c.bf16 %v3599, %v3598
      %v3709 = vpack.c.bf16 %v3601, %v3600
      %v3710 = vpack.c.bf16 %v3603, %v3602
      %v3711 = vpack.c.bf16 %v3605, %v3604
      %v3712 = vpack.c.bf16 %v3607, %v3606
      %v3713 = vpack.c.bf16 %v3609, %v3608
      %v3714 = vpack.c.bf16 %v3611, %v3610
      %v3715 = vpack.c.bf16 %v3613, %v3612
      %v3716 = vpack.c.bf16 %v3615, %v3614
      %v3717 = vpack.c.bf16 %v3617, %v3616
      %v3718 = vpack.c.bf16 %v3619, %v3618
      %v3719 = vpack.c.bf16 %v3621, %v3620
      %v3720 = vpack.c.bf16 %v3623, %v3622
      %v3721 = vpack.c.bf16 %v3625, %v3624
      %v3722 = vpack.c.bf16 %v3627, %v3626
      %v3723 = vpack.c.bf16 %v3629, %v3628
      %v3724 = vpack.c.bf16 %v3631, %v3630
      %v3725 = vpack.c.bf16 %v3633, %v3632
      %v3726 = vpack.c.bf16 %v3635, %v3634
      %v3727 = vpack.c.bf16 %v3637, %v3636
      %v3728 = vpack.c.bf16 %v3639, %v3638
      %v3729 = vpack.c.bf16 %v3641, %v3640
      %v3730 = vpack.c.bf16 %v3643, %v3642
      %v3731 = vpack.c.bf16 %v3645, %v3644
      %v3732 = vpack.c.bf16 %v3647, %v3646
      %v3733 = vpack.c.bf16 %v3649, %v3648
      %v3734 = vpack.c.bf16 %v3651, %v3650
      %v3735 = vpack.c.bf16 %v3653, %v3652
      %v3736 = vpack.c.bf16 %v3655, %v3654
      %v3737 = vpack.c.bf16 %v3657, %v3656
      %v3738 = vpack.c.bf16 %v3659, %v3658
      %v3739 = vpack.c.bf16 %v3661, %v3660
      %v3740 = vpack.c.bf16 %v3663, %v3662
      %v3741 = vpack.c.bf16 %v3665, %v3664
      %v3742 = vpack.c.bf16 %v3667, %v3666
      %v3743 = vpack.c.bf16 %v3669, %v3668
      %v3744 = vpack.c.bf16 %v3671, %v3670
      %v3745 = vpack.c.bf16 %v3673, %v3672
      %v3746 = vpack.c.bf16 %v3675, %v3674
      %v3747 = vpack.c.bf16 %v3677, %v3676
      %v3748 = vpack.c.bf16 %v3679, %v3678
      %v3749 = vpack.c.bf16 %v3681, %v3680
      %v3750 = vpack.c.bf16 %v3683, %v3682
      %v3751 = vpack.c.bf16 %v3685, %v3684
      %v3752 = vpack.c.bf16 %v3687, %v3686
      %v3753 = vpack.c.bf16 %v3689, %v3688
      %v3754 = vpack.c.bf16 %v3691, %v3690
      %v3755 = vpack.c.bf16 %v3693, %v3692
      %v3756 = vpack.c.bf16 %v3695, %v3694
      %v3757 = vpack.c.bf16 %v3697, %v3696
      %v3758 = vpack.c.bf16 %v3699, %v3698
      %v3759 = vpack.c.bf16 %v3701, %v3700
      %v3760 = vpack.c.bf16 %v3703, %v3702
      %v3761 = vpack.c.bf16 %v3705, %v3704
      %3818 = vrot.lane.b32.xlu0 %v3706, 96
      %v3819 = vpop.permute.xlu0 %3818
      %3820 = vrot.lane.b32.xlu0 %v3707, 96
      %v3821 = vpop.permute.xlu0 %3820
      %3822 = vrot.lane.b32.xlu0 %v3708, 96
      %v3823 = vpop.permute.xlu0 %3822
      %3824 = vrot.lane.b32.xlu0 %v3709, 96
      %v3825 = vpop.permute.xlu0 %3824
      %3826 = vrot.lane.b32.xlu0 %v3710, 96
      %v3827 = vpop.permute.xlu0 %3826
      %3828 = vrot.lane.b32.xlu0 %v3711, 96
      %v3829 = vpop.permute.xlu0 %3828
      %3830 = vrot.lane.b32.xlu0 %v3712, 96
      %v3831 = vpop.permute.xlu0 %3830
      %3832 = vrot.lane.b32.xlu0 %v3713, 96
      %v3833 = vpop.permute.xlu0 %3832
      %3834 = vrot.lane.b32.xlu0 %v3714, 96
      %v3835 = vpop.permute.xlu0 %3834
      %3836 = vrot.lane.b32.xlu0 %v3715, 96
      %v3837 = vpop.permute.xlu0 %3836
      %3838 = vrot.lane.b32.xlu0 %v3716, 96
      %v3839 = vpop.permute.xlu0 %3838
      %3840 = vrot.lane.b32.xlu0 %v3717, 96
      %v3841 = vpop.permute.xlu0 %3840
      %3842 = vrot.lane.b32.xlu0 %v3718, 96
      %v3843 = vpop.permute.xlu0 %3842
      %3844 = vrot.lane.b32.xlu0 %v3719, 96
      %v3845 = vpop.permute.xlu0 %3844
      %3846 = vrot.lane.b32.xlu0 %v3720, 96
      %v3847 = vpop.permute.xlu0 %3846
      %3848 = vrot.lane.b32.xlu0 %v3721, 96
      %v3849 = vpop.permute.xlu0 %3848
      %3850 = vrot.lane.b32.xlu0 %v3722, 96
      %v3851 = vpop.permute.xlu0 %3850
      %3852 = vrot.lane.b32.xlu0 %v3723, 96
      %v3853 = vpop.permute.xlu0 %3852
      %3854 = vrot.lane.b32.xlu0 %v3724, 96
      %v3855 = vpop.permute.xlu0 %3854
      %3856 = vrot.lane.b32.xlu0 %v3725, 96
      %v3857 = vpop.permute.xlu0 %3856
      %3858 = vrot.lane.b32.xlu0 %v3726, 96
      %v3859 = vpop.permute.xlu0 %3858
      %3860 = vrot.lane.b32.xlu0 %v3727, 96
      %v3861 = vpop.permute.xlu0 %3860
      %3862 = vrot.lane.b32.xlu0 %v3728, 96
      %v3863 = vpop.permute.xlu0 %3862
      %3864 = vrot.lane.b32.xlu0 %v3729, 96
      %v3865 = vpop.permute.xlu0 %3864
      %3866 = vrot.lane.b32.xlu0 %v3730, 96
      %v3867 = vpop.permute.xlu0 %3866
      %3868 = vrot.lane.b32.xlu0 %v3731, 96
      %v3869 = vpop.permute.xlu0 %3868
      %3870 = vrot.lane.b32.xlu0 %v3732, 96
      %v3871 = vpop.permute.xlu0 %3870
      %3872 = vrot.lane.b32.xlu0 %v3733, 96
      %v3873 = vpop.permute.xlu0 %3872
      %3874 = vrot.lane.b32.xlu0 %v3734, 96
      %v3875 = vpop.permute.xlu0 %3874
      %3876 = vrot.lane.b32.xlu0 %v3735, 96
      %v3877 = vpop.permute.xlu0 %3876
      %3878 = vrot.lane.b32.xlu0 %v3736, 96
      %v3879 = vpop.permute.xlu0 %3878
      %3880 = vrot.lane.b32.xlu0 %v3737, 96
      %v3881 = vpop.permute.xlu0 %3880
      %3882 = vrot.lane.b32.xlu0 %v3738, 96
      %v3883 = vpop.permute.xlu0 %3882
      %3884 = vrot.lane.b32.xlu0 %v3739, 96
      %v3885 = vpop.permute.xlu0 %3884
      %3886 = vrot.lane.b32.xlu0 %v3740, 96
      %v3887 = vpop.permute.xlu0 %3886
      %3888 = vrot.lane.b32.xlu0 %v3741, 96
      %v3889 = vpop.permute.xlu0 %3888
      %3890 = vrot.lane.b32.xlu0 %v3742, 96
      %v3891 = vpop.permute.xlu0 %3890
      %3892 = vrot.lane.b32.xlu0 %v3743, 96
      %v3893 = vpop.permute.xlu0 %3892
      %3894 = vrot.lane.b32.xlu0 %v3744, 96
      %v3895 = vpop.permute.xlu0 %3894
      %3896 = vrot.lane.b32.xlu0 %v3745, 96
      %v3897 = vpop.permute.xlu0 %3896
      %3898 = vrot.lane.b32.xlu0 %v3746, 96
      %v3899 = vpop.permute.xlu0 %3898
      %3900 = vrot.lane.b32.xlu0 %v3747, 96
      %v3901 = vpop.permute.xlu0 %3900
      %3902 = vrot.lane.b32.xlu0 %v3748, 96
      %v3903 = vpop.permute.xlu0 %3902
      %3904 = vrot.lane.b32.xlu0 %v3749, 96
      %v3905 = vpop.permute.xlu0 %3904
      %3906 = vrot.lane.b32.xlu0 %v3750, 96
      %v3907 = vpop.permute.xlu0 %3906
      %3908 = vrot.lane.b32.xlu0 %v3751, 96
      %v3909 = vpop.permute.xlu0 %3908
      %3910 = vrot.lane.b32.xlu0 %v3752, 96
      %v3911 = vpop.permute.xlu0 %3910
      %3912 = vrot.lane.b32.xlu0 %v3753, 96
      %v3913 = vpop.permute.xlu0 %3912
      %3914 = vrot.lane.b32.xlu0 %v3754, 96
      %v3915 = vpop.permute.xlu0 %3914
      %3916 = vrot.lane.b32.xlu0 %v3755, 96
      %v3917 = vpop.permute.xlu0 %3916
      %3918 = vrot.lane.b32.xlu0 %v3756, 96
      %v3919 = vpop.permute.xlu0 %3918
      %3920 = vrot.lane.b32.xlu0 %v3757, 96
      %v3921 = vpop.permute.xlu0 %3920
      %3922 = vrot.lane.b32.xlu0 %v3758, 96
      %v3923 = vpop.permute.xlu0 %3922
      %3924 = vrot.lane.b32.xlu0 %v3759, 96
      %v3925 = vpop.permute.xlu0 %3924
      %3926 = vrot.lane.b32.xlu0 %v3760, 96
      %v3927 = vpop.permute.xlu0 %3926
      %3928 = vrot.lane.b32.xlu0 %v3761, 96
      %v3929 = vpop.permute.xlu0 %3928
      %vm3986 = vcmask 884480
      %3987 = vst.msk [vmem:[#allocation2] sm:$0xff] %vm3986, %v3819
      %3988 = vst.msk [vmem:[#allocation2 + $0x8] sm:$0xff] %vm3986, %v3821
      %3989 = vst.msk [vmem:[#allocation2 + $0x10] sm:$0xff] %vm3986, %v3823
      %3990 = vst.msk [vmem:[#allocation2 + $0x18] sm:$0xff] %vm3986, %v3825
      %3991 = vst.msk [vmem:[#allocation2 + $0x20] sm:$0xff] %vm3986, %v3827
      %3992 = vst.msk [vmem:[#allocation2 + $0x28] sm:$0xff] %vm3986, %v3829
      %3993 = vst.msk [vmem:[#allocation2 + $0x30] sm:$0xff] %vm3986, %v3831
      %3994 = vst.msk [vmem:[#allocation2 + $0x38] sm:$0xff] %vm3986, %v3833
      %3995 = vst.msk [vmem:[#allocation2 + $0x40] sm:$0xff] %vm3986, %v3835
      %3996 = vst.msk [vmem:[#allocation2 + $0x48] sm:$0xff] %vm3986, %v3837
      %3997 = vst.msk [vmem:[#allocation2 + $0x50] sm:$0xff] %vm3986, %v3839
      %3998 = vst.msk [vmem:[#allocation2 + $0x58] sm:$0xff] %vm3986, %v3841
      %3999 = vst.msk [vmem:[#allocation2 + $0x60] sm:$0xff] %vm3986, %v3843
      %4000 = vst.msk [vmem:[#allocation2 + $0x68] sm:$0xff] %vm3986, %v3845
      %4001 = vst.msk [vmem:[#allocation2 + $0x70] sm:$0xff] %vm3986, %v3847
      %4002 = vst.msk [vmem:[#allocation2 + $0x78] sm:$0xff] %vm3986, %v3849
      %4003 = vst.msk [vmem:[#allocation2 + $0x80] sm:$0xff] %vm3986, %v3851
      %4004 = vst.msk [vmem:[#allocation2 + $0x88] sm:$0xff] %vm3986, %v3853
      %4005 = vst.msk [vmem:[#allocation2 + $0x90] sm:$0xff] %vm3986, %v3855
      %4006 = vst.msk [vmem:[#allocation2 + $0x98] sm:$0xff] %vm3986, %v3857
      %4007 = vst.msk [vmem:[#allocation2 + $0xa0] sm:$0xff] %vm3986, %v3859
      %4008 = vst.msk [vmem:[#allocation2 + $0xa8] sm:$0xff] %vm3986, %v3861
      %4009 = vst.msk [vmem:[#allocation2 + $0xb0] sm:$0xff] %vm3986, %v3863
      %4010 = vst.msk [vmem:[#allocation2 + $0xb8] sm:$0xff] %vm3986, %v3865
      %4011 = vst.msk [vmem:[#allocation2 + $0xc0] sm:$0xff] %vm3986, %v3867
      %4012 = vst.msk [vmem:[#allocation2 + $0xc8] sm:$0xff] %vm3986, %v3869
      %4013 = vst.msk [vmem:[#allocation2 + $0xd0] sm:$0xff] %vm3986, %v3871
      %4014 = vst.msk [vmem:[#allocation2 + $0xd8] sm:$0xff] %vm3986, %v3873
      %4015 = vst.msk [vmem:[#allocation2 + $0xe0] sm:$0xff] %vm3986, %v3875
      %4016 = vst.msk [vmem:[#allocation2 + $0xe8] sm:$0xff] %vm3986, %v3877
      %4017 = vst.msk [vmem:[#allocation2 + $0xf0] sm:$0xff] %vm3986, %v3879
      %4018 = vst.msk [vmem:[#allocation2 + $0xf8] sm:$0xff] %vm3986, %v3881
      %4019 = vst.msk [vmem:[#allocation2 + $0x100] sm:$0xff] %vm3986, %v3883
      %4020 = vst.msk [vmem:[#allocation2 + $0x108] sm:$0xff] %vm3986, %v3885
      %4021 = vst.msk [vmem:[#allocation2 + $0x110] sm:$0xff] %vm3986, %v3887
      %4022 = vst.msk [vmem:[#allocation2 + $0x118] sm:$0xff] %vm3986, %v3889
      %4023 = vst.msk [vmem:[#allocation2 + $0x120] sm:$0xff] %vm3986, %v3891
      %4024 = vst.msk [vmem:[#allocation2 + $0x128] sm:$0xff] %vm3986, %v3893
      %4025 = vst.msk [vmem:[#allocation2 + $0x130] sm:$0xff] %vm3986, %v3895
      %4026 = vst.msk [vmem:[#allocation2 + $0x138] sm:$0xff] %vm3986, %v3897
      %4027 = vst.msk [vmem:[#allocation2 + $0x140] sm:$0xff] %vm3986, %v3899
      %4028 = vst.msk [vmem:[#allocation2 + $0x148] sm:$0xff] %vm3986, %v3901
      %4029 = vst.msk [vmem:[#allocation2 + $0x150] sm:$0xff] %vm3986, %v3903
      %4030 = vst.msk [vmem:[#allocation2 + $0x158] sm:$0xff] %vm3986, %v3905
      %4031 = vst.msk [vmem:[#allocation2 + $0x160] sm:$0xff] %vm3986, %v3907
      %4032 = vst.msk [vmem:[#allocation2 + $0x168] sm:$0xff] %vm3986, %v3909
      %4033 = vst.msk [vmem:[#allocation2 + $0x170] sm:$0xff] %vm3986, %v3911
      %4034 = vst.msk [vmem:[#allocation2 + $0x178] sm:$0xff] %vm3986, %v3913
      %4035 = vst.msk [vmem:[#allocation2 + $0x180] sm:$0xff] %vm3986, %v3915
      %4036 = vst.msk [vmem:[#allocation2 + $0x188] sm:$0xff] %vm3986, %v3917
      %4037 = vst.msk [vmem:[#allocation2 + $0x190] sm:$0xff] %vm3986, %v3919
      %4038 = vst.msk [vmem:[#allocation2 + $0x198] sm:$0xff] %vm3986, %v3921
      %4039 = vst.msk [vmem:[#allocation2 + $0x1a0] sm:$0xff] %vm3986, %v3923
      %4040 = vst.msk [vmem:[#allocation2 + $0x1a8] sm:$0xff] %vm3986, %v3925
      %4041 = vst.msk [vmem:[#allocation2 + $0x1b0] sm:$0xff] %vm3986, %v3927
      %4042 = vst.msk [vmem:[#allocation2 + $0x1b8] sm:$0xff] %vm3986, %v3929
      %v4043 = vld [vmem:[#allocation2] sm:$0xff]
      %v4044 = vld [vmem:[#allocation2 + $0x8] sm:$0xff]
      %v4045 = vld [vmem:[#allocation2 + $0x10] sm:$0xff]
      %v4046 = vld [vmem:[#allocation2 + $0x18] sm:$0xff]
      %v4047 = vld [vmem:[#allocation2 + $0x20] sm:$0xff]
      %v4048 = vld [vmem:[#allocation2 + $0x28] sm:$0xff]
      %v4049 = vld [vmem:[#allocation2 + $0x30] sm:$0xff]
      %v4050 = vld [vmem:[#allocation2 + $0x38] sm:$0xff]
      %v4051 = vld [vmem:[#allocation2 + $0x40] sm:$0xff]
      %v4052 = vld [vmem:[#allocation2 + $0x48] sm:$0xff]
      %v4053 = vld [vmem:[#allocation2 + $0x50] sm:$0xff]
      %v4054 = vld [vmem:[#allocation2 + $0x58] sm:$0xff]
      %v4055 = vld [vmem:[#allocation2 + $0x60] sm:$0xff]
      %v4056 = vld [vmem:[#allocation2 + $0x68] sm:$0xff]
      %v4057 = vld [vmem:[#allocation2 + $0x70] sm:$0xff]
      %v4058 = vld [vmem:[#allocation2 + $0x78] sm:$0xff]
      %v4059 = vld [vmem:[#allocation2 + $0x80] sm:$0xff]
      %v4060 = vld [vmem:[#allocation2 + $0x88] sm:$0xff]
      %v4061 = vld [vmem:[#allocation2 + $0x90] sm:$0xff]
      %v4062 = vld [vmem:[#allocation2 + $0x98] sm:$0xff]
      %v4063 = vld [vmem:[#allocation2 + $0xa0] sm:$0xff]
      %v4064 = vld [vmem:[#allocation2 + $0xa8] sm:$0xff]
      %v4065 = vld [vmem:[#allocation2 + $0xb0] sm:$0xff]
      %v4066 = vld [vmem:[#allocation2 + $0xb8] sm:$0xff]
      %v4067 = vld [vmem:[#allocation2 + $0xc0] sm:$0xff]
      %v4068 = vld [vmem:[#allocation2 + $0xc8] sm:$0xff]
      %v4069 = vld [vmem:[#allocation2 + $0xd0] sm:$0xff]
      %v4070 = vld [vmem:[#allocation2 + $0xd8] sm:$0xff]
      %v4071 = vld [vmem:[#allocation2 + $0xe0] sm:$0xff]
      %v4072 = vld [vmem:[#allocation2 + $0xe8] sm:$0xff]
      %v4073 = vld [vmem:[#allocation2 + $0xf0] sm:$0xff]
      %v4074 = vld [vmem:[#allocation2 + $0xf8] sm:$0xff]
      %v4075 = vld [vmem:[#allocation2 + $0x100] sm:$0xff]
      %v4076 = vld [vmem:[#allocation2 + $0x108] sm:$0xff]
      %v4077 = vld [vmem:[#allocation2 + $0x110] sm:$0xff]
      %v4078 = vld [vmem:[#allocation2 + $0x118] sm:$0xff]
      %v4079 = vld [vmem:[#allocation2 + $0x120] sm:$0xff]
      %v4080 = vld [vmem:[#allocation2 + $0x128] sm:$0xff]
      %v4081 = vld [vmem:[#allocation2 + $0x130] sm:$0xff]
      %v4082 = vld [vmem:[#allocation2 + $0x138] sm:$0xff]
      %v4083 = vld [vmem:[#allocation2 + $0x140] sm:$0xff]
      %v4084 = vld [vmem:[#allocation2 + $0x148] sm:$0xff]
      %v4085 = vld [vmem:[#allocation2 + $0x150] sm:$0xff]
      %v4086 = vld [vmem:[#allocation2 + $0x158] sm:$0xff]
      %v4087 = vld [vmem:[#allocation2 + $0x160] sm:$0xff]
      %v4088 = vld [vmem:[#allocation2 + $0x168] sm:$0xff]
      %v4089 = vld [vmem:[#allocation2 + $0x170] sm:$0xff]
      %v4090 = vld [vmem:[#allocation2 + $0x178] sm:$0xff]
      %v4091 = vld [vmem:[#allocation2 + $0x180] sm:$0xff]
      %v4092 = vld [vmem:[#allocation2 + $0x188] sm:$0xff]
      %v4093 = vld [vmem:[#allocation2 + $0x190] sm:$0xff]
      %v4094 = vld [vmem:[#allocation2 + $0x198] sm:$0xff]
      %v4095 = vld [vmem:[#allocation2 + $0x1a0] sm:$0xff]
      %v4096 = vld [vmem:[#allocation2 + $0x1a8] sm:$0xff]
      %v4097 = vld [vmem:[#allocation2 + $0x1b0] sm:$0xff]
      %v4098 = vld [vmem:[#allocation2 + $0x1b8] sm:$0xff]
      %v4099 = vld [vmem:[%s1] sm:$0xf]
      %v4100 = vld [vmem:[%s1 + $0x4] sm:$0xf]
      %v4101 = vld [vmem:[%s1 + $0x8] sm:$0xf]
      %v4102 = vld [vmem:[%s1 + $0xc] sm:$0xf]
      %v4103 = vld [vmem:[%s1 + $0x10] sm:$0xf]
      %v4104 = vld [vmem:[%s1 + $0x14] sm:$0xf]
      %v4105 = vld [vmem:[%s1 + $0x18] sm:$0xf]
      %v4106 = vld [vmem:[%s1 + $0x1c] sm:$0xf]
      %v4107 = vld [vmem:[%s1 + $0x20] sm:$0xf]
      %v4108 = vld [vmem:[%s1 + $0x24] sm:$0xf]
      %v4109 = vld [vmem:[%s1 + $0x28] sm:$0xf]
      %v4110 = vld [vmem:[%s1 + $0x2c] sm:$0xf]
      %v4111 = vld [vmem:[%s1 + $0x30] sm:$0xf]
      %v4112 = vld [vmem:[%s1 + $0x34] sm:$0x3]
      %v4127 = vunpack.c.l.b16 %v4099
      %v4128 = vunpack.c.l.b16 %v4100
      %v4129 = vunpack.c.l.b16 %v4101
      %v4130 = vunpack.c.l.b16 %v4102
      %v4131 = vunpack.c.l.b16 %v4103
      %v4132 = vunpack.c.l.b16 %v4104
      %v4133 = vunpack.c.l.b16 %v4105
      %v4134 = vunpack.c.l.b16 %v4106
      %v4135 = vunpack.c.l.b16 %v4107
      %v4136 = vunpack.c.l.b16 %v4108
      %v4137 = vunpack.c.l.b16 %v4109
      %v4138 = vunpack.c.l.b16 %v4110
      %v4139 = vunpack.c.l.b16 %v4111
      %v4140 = vunpack.c.l.b16 %v4112
      %v4141 = vpack.c.b16 %v4128, %v4127
      %v4142 = vpack.c.b16 %v4130, %v4129
      %v4143 = vpack.c.b16 %v4132, %v4131
      %v4144 = vpack.c.b16 %v4134, %v4133
      %v4145 = vpack.c.b16 %v4136, %v4135
      %v4146 = vpack.c.b16 %v4138, %v4137
      %v4147 = vpack.c.b16 %v4140, %v4139
      %vm4154 = vcmask 883712
      %v4156 = vsel %vm4154, %v4043, 0
      %v4159 = vsel %vm4154, %v4044, 0
      %v4162 = vsel %vm4154, %v4045, 0
      %v4165 = vsel %vm4154, %v4046, 0
      %v4168 = vsel %vm4154, %v4047, 0
      %v4171 = vsel %vm4154, %v4048, 0
      %v4174 = vsel %vm4154, %v4049, 0
      %v4177 = vsel %vm4154, %v4050, 0
      %v4180 = vsel %vm4154, %v4051, 0
      %v4183 = vsel %vm4154, %v4052, 0
      %v4186 = vsel %vm4154, %v4053, 0
      %v4189 = vsel %vm4154, %v4054, 0
      %v4192 = vsel %vm4154, %v4055, 0
      %v4195 = vsel %vm4154, %v4056, 0
      %v4198 = vsel %vm4154, %v4057, 0
      %v4201 = vsel %vm4154, %v4058, 0
      %v4204 = vsel %vm4154, %v4059, 0
      %v4207 = vsel %vm4154, %v4060, 0
      %v4210 = vsel %vm4154, %v4061, 0
      %v4213 = vsel %vm4154, %v4062, 0
      %v4216 = vsel %vm4154, %v4063, 0
      %v4219 = vsel %vm4154, %v4064, 0
      %v4222 = vsel %vm4154, %v4065, 0
      %v4225 = vsel %vm4154, %v4066, 0
      %v4228 = vsel %vm4154, %v4067, 0
      %v4231 = vsel %vm4154, %v4068, 0
      %v4234 = vsel %vm4154, %v4069, 0
      %v4237 = vsel %vm4154, %v4070, 0
      %v4240 = vsel %vm4154, %v4071, 0
      %v4243 = vsel %vm4154, %v4072, 0
      %v4246 = vsel %vm4154, %v4073, 0
      %v4249 = vsel %vm4154, %v4074, 0
      %v4252 = vsel %vm4154, %v4075, 0
      %v4255 = vsel %vm4154, %v4076, 0
      %v4258 = vsel %vm4154, %v4077, 0
      %v4261 = vsel %vm4154, %v4078, 0
      %v4264 = vsel %vm4154, %v4079, 0
      %v4267 = vsel %vm4154, %v4080, 0
      %v4270 = vsel %vm4154, %v4081, 0
      %v4273 = vsel %vm4154, %v4082, 0
      %v4276 = vsel %vm4154, %v4083, 0
      %v4279 = vsel %vm4154, %v4084, 0
      %v4282 = vsel %vm4154, %v4085, 0
      %v4285 = vsel %vm4154, %v4086, 0
      %v4288 = vsel %vm4154, %v4087, 0
      %v4291 = vsel %vm4154, %v4088, 0
      %v4294 = vsel %vm4154, %v4089, 0
      %v4297 = vsel %vm4154, %v4090, 0
      %v4300 = vsel %vm4154, %v4091, 0
      %v4303 = vsel %vm4154, %v4092, 0
      %v4306 = vsel %vm4154, %v4093, 0
      %v4309 = vsel %vm4154, %v4094, 0
      %v4312 = vsel %vm4154, %v4095, 0
      %v4315 = vsel %vm4154, %v4096, 0
      %v4318 = vsel %vm4154, %v4097, 0
      %v4321 = vsel %vm4154, %v4098, 0
      %vm4323 = vcmask 1045504
      %v4325 = vsel %vm4323, %v4147, 0
      %4327 = vmatprep.subr.bf16.mxu0 0
      %4328 = vmatpush1.bf16.msra.mxu0 %v4141
      %4329 = vmatprep.subr.bf16.mxu0 0
      %4330 = vmatpush1.bf16.msra.mxu0 %v4142
      %4331 = vmatprep.subr.bf16.mxu0 0
      %4332 = vmatpush1.bf16.msra.mxu0 %v4143
      %4333 = vmatprep.subr.bf16.mxu0 0
      %4334 = vmatpush1.bf16.msra.mxu0 %v4144
      %4335 = vmatprep.subr.bf16.mxu0 0
      %4336 = vmatpush1.bf16.msra.mxu0 %v4145
      %4337 = vmatprep.subr.bf16.mxu0 0
      %4338 = vmatpush1.bf16.msra.mxu0 %v4146
      %4339 = vmatprep.subr.bf16.mxu0 0
      %4340 = vmatpush1.bf16.msra.mxu0 %v4325
      %4341 = vmatprep.subr.bf16.mxu0 0
      %4342 = vmatpush1.bf16.msra.mxu0 0
      %4343 = vmatprep.subr.bf16.mxu0 0
      %4344 = vmatpush1.bf16.msra.mxu0 0
      %4345 = vmatprep.subr.bf16.mxu0 0
      %4346 = vmatpush1.bf16.msra.mxu0 0
      %4347 = vmatprep.subr.bf16.mxu0 0
      %4348 = vmatpush1.bf16.msra.mxu0 0
      %4349 = vmatprep.subr.bf16.mxu0 0
      %4350 = vmatpush1.bf16.msra.mxu0 0
      %4351 = vmatprep.subr.bf16.mxu0 0
      %4352 = vmatpush1.bf16.msra.mxu0 0
      %4353 = vmatprep.subr.bf16.mxu0 0
      %4354 = vmatpush1.bf16.msra.mxu0 0
      %4355 = vmatprep.subr.bf16.mxu0 0
      %4356 = vmatpush1.bf16.msra.mxu0 0
      %4357 = vmatprep.subr.bf16.mxu0 0
      %4358 = vmatpush1.bf16.msra.mxu0 0
      %4359 = vmatprep.mubr.bf16.mxu0 0
      %4360 = vmatmul.mubr.bf16.gmra.mrb[0].mxu0 %v4156
      %v4361 = vpop.f32.mrb[0].mxu0
      %v4362 = vadd.f32 0.0, %v4361
      %v4363 = vpop.f32.mrb[0].mxu0
      %v4364 = vpop.f32.mrb[0].mxu0
      %v4365 = vadd.f32 0.0, %v4364
      %v4366 = vpop.f32.mrb[0].mxu0
      %4367 = vmatprep.mubr.bf16.mxu0 0
      %4368 = vmatmul.mubr.bf16.gmra.mrb[0].mxu0 %v4159
      %v4369 = vpop.f32.mrb[0].mxu0
      %v4370 = vadd.f32 0.0, %v4369
      %v4371 = vpop.f32.mrb[0].mxu0
      %v4372 = vpop.f32.mrb[0].mxu0
      %v4373 = vadd.f32 0.0, %v4372
      %v4374 = vpop.f32.mrb[0].mxu0
      %4375 = vmatprep.mubr.bf16.mxu0 0
      %4376 = vmatmul.mubr.bf16.gmra.mrb[0].mxu0 %v4162
      %v4377 = vpop.f32.mrb[0].mxu0
      %v4378 = vadd.f32 0.0, %v4377
      %v4379 = vpop.f32.mrb[0].mxu0
      %v4380 = vpop.f32.mrb[0].mxu0
      %v4381 = vadd.f32 0.0, %v4380
      %v4382 = vpop.f32.mrb[0].mxu0
      %4383 = vmatprep.mubr.bf16.mxu0 0
      %4384 = vmatmul.mubr.bf16.gmra.mrb[0].mxu0 %v4165
      %v4385 = vpop.f32.mrb[0].mxu0
      %v4386 = vadd.f32 0.0, %v4385
      %v4387 = vpop.f32.mrb[0].mxu0
      %v4388 = vpop.f32.mrb[0].mxu0
      %v4389 = vadd.f32 0.0, %v4388
      %v4390 = vpop.f32.mrb[0].mxu0
      %4391 = vmatprep.mubr.bf16.mxu0 0
      %4392 = vmatmul.mubr.bf16.gmra.mrb[0].mxu0 %v4168
      %v4393 = vpop.f32.mrb[0].mxu0
      %v4394 = vadd.f32 0.0, %v4393
      %v4395 = vpop.f32.mrb[0].mxu0
      %v4396 = vpop.f32.mrb[0].mxu0
      %v4397 = vadd.f32 0.0, %v4396
      %v4398 = vpop.f32.mrb[0].mxu0
      %4399 = vmatprep.mubr.bf16.mxu0 0
      %4400 = vmatmul.mubr.bf16.gmra.mrb[0].mxu0 %v4171
      %v4401 = vpop.f32.mrb[0].mxu0
      %v4402 = vadd.f32 0.0, %v4401
      %v4403 = vpop.f32.mrb[0].mxu0
      %v4404 = vpop.f32.mrb[0].mxu0
      %v4405 = vadd.f32 0.0, %v4404
      %v4406 = vpop.f32.mrb[0].mxu0
      %4407 = vmatprep.mubr.bf16.mxu0 0
      %4408 = vmatmul.mubr.bf16.gmra.mrb[0].mxu0 %v4174
      %v4409 = vpop.f32.mrb[0].mxu0
      %v4410 = vadd.f32 0.0, %v4409
      %v4411 = vpop.f32.mrb[0].mxu0
      %v4412 = vpop.f32.mrb[0].mxu0
      %v4413 = vadd.f32 0.0, %v4412
      %v4414 = vpop.f32.mrb[0].mxu0
      %4415 = vmatprep.mubr.bf16.mxu0 0
      %4416 = vmatmul.mubr.bf16.gmra.mrb[0].mxu0 %v4177
      %v4417 = vpop.f32.mrb[0].mxu0
      %v4418 = vadd.f32 0.0, %v4417
      %v4419 = vpop.f32.mrb[0].mxu0
      %v4420 = vpop.f32.mrb[0].mxu0
      %v4421 = vadd.f32 0.0, %v4420
      %v4422 = vpop.f32.mrb[0].mxu0
      %4423 = vmatprep.mubr.bf16.mxu0 0
      %4424 = vmatmul.mubr.bf16.gmra.mrb[0].mxu0 %v4180
      %v4425 = vpop.f32.mrb[0].mxu0
      %v4426 = vadd.f32 0.0, %v4425
      %v4427 = vpop.f32.mrb[0].mxu0
      %v4428 = vpop.f32.mrb[0].mxu0
      %v4429 = vadd.f32 0.0, %v4428
      %v4430 = vpop.f32.mrb[0].mxu0
      %4431 = vmatprep.mubr.bf16.mxu0 0
      %4432 = vmatmul.mubr.bf16.gmra.mrb[0].mxu0 %v4183
      %v4433 = vpop.f32.mrb[0].mxu0
      %v4434 = vadd.f32 0.0, %v4433
      %v4435 = vpop.f32.mrb[0].mxu0
      %v4436 = vpop.f32.mrb[0].mxu0
      %v4437 = vadd.f32 0.0, %v4436
      %v4438 = vpop.f32.mrb[0].mxu0
      %4439 = vmatprep.mubr.bf16.mxu0 0
      %4440 = vmatmul.mubr.bf16.gmra.mrb[0].mxu0 %v4186
      %v4441 = vpop.f32.mrb[0].mxu0
      %v4442 = vadd.f32 0.0, %v4441
      %v4443 = vpop.f32.mrb[0].mxu0
      %v4444 = vpop.f32.mrb[0].mxu0
      %v4445 = vadd.f32 0.0, %v4444
      %v4446 = vpop.f32.mrb[0].mxu0
      %4447 = vmatprep.mubr.bf16.mxu0 0
      %4448 = vmatmul.mubr.bf16.gmra.mrb[0].mxu0 %v4189
      %v4449 = vpop.f32.mrb[0].mxu0
      %v4450 = vadd.f32 0.0, %v4449
      %v4451 = vpop.f32.mrb[0].mxu0
      %v4452 = vpop.f32.mrb[0].mxu0
      %v4453 = vadd.f32 0.0, %v4452
      %v4454 = vpop.f32.mrb[0].mxu0
      %4455 = vmatprep.mubr.bf16.mxu0 0
      %4456 = vmatmul.mubr.bf16.gmra.mrb[0].mxu0 %v4192
      %v4457 = vpop.f32.mrb[0].mxu0
      %v4458 = vadd.f32 0.0, %v4457
      %v4459 = vpop.f32.mrb[0].mxu0
      %v4460 = vpop.f32.mrb[0].mxu0
      %v4461 = vadd.f32 0.0, %v4460
      %v4462 = vpop.f32.mrb[0].mxu0
      %4463 = vmatprep.mubr.bf16.mxu0 0
      %4464 = vmatmul.mubr.bf16.gmra.mrb[0].mxu0 %v4195
      %v4465 = vpop.f32.mrb[0].mxu0
      %v4466 = vadd.f32 0.0, %v4465
      %v4467 = vpop.f32.mrb[0].mxu0
      %v4468 = vpop.f32.mrb[0].mxu0
      %v4469 = vadd.f32 0.0, %v4468
      %v4470 = vpop.f32.mrb[0].mxu0
      %4471 = vmatprep.mubr.bf16.mxu0 0
      %4472 = vmatmul.mubr.bf16.gmra.mrb[0].mxu0 %v4198
      %v4473 = vpop.f32.mrb[0].mxu0
      %v4474 = vadd.f32 0.0, %v4473
      %v4475 = vpop.f32.mrb[0].mxu0
      %v4476 = vpop.f32.mrb[0].mxu0
      %v4477 = vadd.f32 0.0, %v4476
      %v4478 = vpop.f32.mrb[0].mxu0
      %4479 = vmatprep.mubr.bf16.mxu0 0
      %4480 = vmatmul.mubr.bf16.gmra.mrb[0].mxu0 %v4201
      %v4481 = vpop.f32.mrb[0].mxu0
      %v4482 = vadd.f32 0.0, %v4481
      %v4483 = vpop.f32.mrb[0].mxu0
      %v4484 = vpop.f32.mrb[0].mxu0
      %v4485 = vadd.f32 0.0, %v4484
      %v4486 = vpop.f32.mrb[0].mxu0
      %4487 = vmatprep.mubr.bf16.mxu0 0
      %4488 = vmatmul.mubr.bf16.gmra.mrb[0].mxu0 %v4204
      %v4489 = vpop.f32.mrb[0].mxu0
      %v4490 = vadd.f32 0.0, %v4489
      %v4491 = vpop.f32.mrb[0].mxu0
      %v4492 = vpop.f32.mrb[0].mxu0
      %v4493 = vadd.f32 0.0, %v4492
      %v4494 = vpop.f32.mrb[0].mxu0
      %4495 = vmatprep.mubr.bf16.mxu0 0
      %4496 = vmatmul.mubr.bf16.gmra.mrb[0].mxu0 %v4207
      %v4497 = vpop.f32.mrb[0].mxu0
      %v4498 = vadd.f32 0.0, %v4497
      %v4499 = vpop.f32.mrb[0].mxu0
      %v4500 = vpop.f32.mrb[0].mxu0
      %v4501 = vadd.f32 0.0, %v4500
      %v4502 = vpop.f32.mrb[0].mxu0
      %4503 = vmatprep.mubr.bf16.mxu0 0
      %4504 = vmatmul.mubr.bf16.gmra.mrb[0].mxu0 %v4210
      %v4505 = vpop.f32.mrb[0].mxu0
      %v4506 = vadd.f32 0.0, %v4505
      %v4507 = vpop.f32.mrb[0].mxu0
      %v4508 = vpop.f32.mrb[0].mxu0
      %v4509 = vadd.f32 0.0, %v4508
      %v4510 = vpop.f32.mrb[0].mxu0
      %4511 = vmatprep.mubr.bf16.mxu0 0
      %4512 = vmatmul.mubr.bf16.gmra.mrb[0].mxu0 %v4213
      %v4513 = vpop.f32.mrb[0].mxu0
      %v4514 = vadd.f32 0.0, %v4513
      %v4515 = vpop.f32.mrb[0].mxu0
      %v4516 = vpop.f32.mrb[0].mxu0
      %v4517 = vadd.f32 0.0, %v4516
      %v4518 = vpop.f32.mrb[0].mxu0
      %4519 = vmatprep.mubr.bf16.mxu0 0
      %4520 = vmatmul.mubr.bf16.gmra.mrb[0].mxu0 %v4216
      %v4521 = vpop.f32.mrb[0].mxu0
      %v4522 = vadd.f32 0.0, %v4521
      %v4523 = vpop.f32.mrb[0].mxu0
      %v4524 = vpop.f32.mrb[0].mxu0
      %v4525 = vadd.f32 0.0, %v4524
      %v4526 = vpop.f32.mrb[0].mxu0
      %4527 = vmatprep.mubr.bf16.mxu0 0
      %4528 = vmatmul.mubr.bf16.gmra.mrb[0].mxu0 %v4219
      %v4529 = vpop.f32.mrb[0].mxu0
      %v4530 = vadd.f32 0.0, %v4529
      %v4531 = vpop.f32.mrb[0].mxu0
      %v4532 = vpop.f32.mrb[0].mxu0
      %v4533 = vadd.f32 0.0, %v4532
      %v4534 = vpop.f32.mrb[0].mxu0
      %4535 = vmatprep.mubr.bf16.mxu0 0
      %4536 = vmatmul.mubr.bf16.gmra.mrb[0].mxu0 %v4222
      %v4537 = vpop.f32.mrb[0].mxu0
      %v4538 = vadd.f32 0.0, %v4537
      %v4539 = vpop.f32.mrb[0].mxu0
      %v4540 = vpop.f32.mrb[0].mxu0
      %v4541 = vadd.f32 0.0, %v4540
      %v4542 = vpop.f32.mrb[0].mxu0
      %4543 = vmatprep.mubr.bf16.mxu0 0
      %4544 = vmatmul.mubr.bf16.gmra.mrb[0].mxu0 %v4225
      %v4545 = vpop.f32.mrb[0].mxu0
      %v4546 = vadd.f32 0.0, %v4545
      %v4547 = vpop.f32.mrb[0].mxu0
      %v4548 = vpop.f32.mrb[0].mxu0
      %v4549 = vadd.f32 0.0, %v4548
      %v4550 = vpop.f32.mrb[0].mxu0
      %4551 = vmatprep.mubr.bf16.mxu0 0
      %4552 = vmatmul.mubr.bf16.gmra.mrb[0].mxu0 %v4228
      %v4553 = vpop.f32.mrb[0].mxu0
      %v4554 = vadd.f32 0.0, %v4553
      %v4555 = vpop.f32.mrb[0].mxu0
      %v4556 = vpop.f32.mrb[0].mxu0
      %v4557 = vadd.f32 0.0, %v4556
      %v4558 = vpop.f32.mrb[0].mxu0
      %4559 = vmatprep.mubr.bf16.mxu0 0
      %4560 = vmatmul.mubr.bf16.gmra.mrb[0].mxu0 %v4231
      %v4561 = vpop.f32.mrb[0].mxu0
      %v4562 = vadd.f32 0.0, %v4561
      %v4563 = vpop.f32.mrb[0].mxu0
      %v4564 = vpop.f32.mrb[0].mxu0
      %v4565 = vadd.f32 0.0, %v4564
      %v4566 = vpop.f32.mrb[0].mxu0
      %4567 = vmatprep.mubr.bf16.mxu0 0
      %4568 = vmatmul.mubr.bf16.gmra.mrb[0].mxu0 %v4234
      %v4569 = vpop.f32.mrb[0].mxu0
      %v4570 = vadd.f32 0.0, %v4569
      %v4571 = vpop.f32.mrb[0].mxu0
      %v4572 = vpop.f32.mrb[0].mxu0
      %v4573 = vadd.f32 0.0, %v4572
      %v4574 = vpop.f32.mrb[0].mxu0
      %4575 = vmatprep.mubr.bf16.mxu0 0
      %4576 = vmatmul.mubr.bf16.gmra.mrb[0].mxu0 %v4237
      %v4577 = vpop.f32.mrb[0].mxu0
      %v4578 = vadd.f32 0.0, %v4577
      %v4579 = vpop.f32.mrb[0].mxu0
      %v4580 = vpop.f32.mrb[0].mxu0
      %v4581 = vadd.f32 0.0, %v4580
      %v4582 = vpop.f32.mrb[0].mxu0
      %4583 = vmatprep.mubr.bf16.mxu0 0
      %4584 = vmatmul.mubr.bf16.gmra.mrb[0].mxu0 %v4240
      %v4585 = vpop.f32.mrb[0].mxu0
      %v4586 = vadd.f32 0.0, %v4585
      %v4587 = vpop.f32.mrb[0].mxu0
      %v4588 = vpop.f32.mrb[0].mxu0
      %v4589 = vadd.f32 0.0, %v4588
      %v4590 = vpop.f32.mrb[0].mxu0
      %4591 = vmatprep.mubr.bf16.mxu0 0
      %4592 = vmatmul.mubr.bf16.gmra.mrb[0].mxu0 %v4243
      %v4593 = vpop.f32.mrb[0].mxu0
      %v4594 = vadd.f32 0.0, %v4593
      %v4595 = vpop.f32.mrb[0].mxu0
      %v4596 = vpop.f32.mrb[0].mxu0
      %v4597 = vadd.f32 0.0, %v4596
      %v4598 = vpop.f32.mrb[0].mxu0
      %4599 = vmatprep.mubr.bf16.mxu0 0
      %4600 = vmatmul.mubr.bf16.gmra.mrb[0].mxu0 %v4246
      %v4601 = vpop.f32.mrb[0].mxu0
      %v4602 = vadd.f32 0.0, %v4601
      %v4603 = vpop.f32.mrb[0].mxu0
      %v4604 = vpop.f32.mrb[0].mxu0
      %v4605 = vadd.f32 0.0, %v4604
      %v4606 = vpop.f32.mrb[0].mxu0
      %4607 = vmatprep.mubr.bf16.mxu0 0
      %4608 = vmatmul.mubr.bf16.gmra.mrb[0].mxu0 %v4249
      %v4609 = vpop.f32.mrb[0].mxu0
      %v4610 = vadd.f32 0.0, %v4609
      %v4611 = vpop.f32.mrb[0].mxu0
      %v4612 = vpop.f32.mrb[0].mxu0
      %v4613 = vadd.f32 0.0, %v4612
      %v4614 = vpop.f32.mrb[0].mxu0
      %4615 = vmatprep.mubr.bf16.mxu0 0
      %4616 = vmatmul.mubr.bf16.gmra.mrb[0].mxu0 %v4252
      %v4617 = vpop.f32.mrb[0].mxu0
      %v4618 = vadd.f32 0.0, %v4617
      %v4619 = vpop.f32.mrb[0].mxu0
      %v4620 = vpop.f32.mrb[0].mxu0
      %v4621 = vadd.f32 0.0, %v4620
      %v4622 = vpop.f32.mrb[0].mxu0
      %4623 = vmatprep.mubr.bf16.mxu0 0
      %4624 = vmatmul.mubr.bf16.gmra.mrb[0].mxu0 %v4255
      %v4625 = vpop.f32.mrb[0].mxu0
      %v4626 = vadd.f32 0.0, %v4625
      %v4627 = vpop.f32.mrb[0].mxu0
      %v4628 = vpop.f32.mrb[0].mxu0
      %v4629 = vadd.f32 0.0, %v4628
      %v4630 = vpop.f32.mrb[0].mxu0
      %4631 = vmatprep.mubr.bf16.mxu0 0
      %4632 = vmatmul.mubr.bf16.gmra.mrb[0].mxu0 %v4258
      %v4633 = vpop.f32.mrb[0].mxu0
      %v4634 = vadd.f32 0.0, %v4633
      %v4635 = vpop.f32.mrb[0].mxu0
      %v4636 = vpop.f32.mrb[0].mxu0
      %v4637 = vadd.f32 0.0, %v4636
      %v4638 = vpop.f32.mrb[0].mxu0
      %4639 = vmatprep.mubr.bf16.mxu0 0
      %4640 = vmatmul.mubr.bf16.gmra.mrb[0].mxu0 %v4261
      %v4641 = vpop.f32.mrb[0].mxu0
      %v4642 = vadd.f32 0.0, %v4641
      %v4643 = vpop.f32.mrb[0].mxu0
      %v4644 = vpop.f32.mrb[0].mxu0
      %v4645 = vadd.f32 0.0, %v4644
      %v4646 = vpop.f32.mrb[0].mxu0
      %4647 = vmatprep.mubr.bf16.mxu0 0
      %4648 = vmatmul.mubr.bf16.gmra.mrb[0].mxu0 %v4264
      %v4649 = vpop.f32.mrb[0].mxu0
      %v4650 = vadd.f32 0.0, %v4649
      %v4651 = vpop.f32.mrb[0].mxu0
      %v4652 = vpop.f32.mrb[0].mxu0
      %v4653 = vadd.f32 0.0, %v4652
      %v4654 = vpop.f32.mrb[0].mxu0
      %4655 = vmatprep.mubr.bf16.mxu0 0
      %4656 = vmatmul.mubr.bf16.gmra.mrb[0].mxu0 %v4267
      %v4657 = vpop.f32.mrb[0].mxu0
      %v4658 = vadd.f32 0.0, %v4657
      %v4659 = vpop.f32.mrb[0].mxu0
      %v4660 = vpop.f32.mrb[0].mxu0
      %v4661 = vadd.f32 0.0, %v4660
      %v4662 = vpop.f32.mrb[0].mxu0
      %4663 = vmatprep.mubr.bf16.mxu0 0
      %4664 = vmatmul.mubr.bf16.gmra.mrb[0].mxu0 %v4270
      %v4665 = vpop.f32.mrb[0].mxu0
      %v4666 = vadd.f32 0.0, %v4665
      %v4667 = vpop.f32.mrb[0].mxu0
      %v4668 = vpop.f32.mrb[0].mxu0
      %v4669 = vadd.f32 0.0, %v4668
      %v4670 = vpop.f32.mrb[0].mxu0
      %4671 = vmatprep.mubr.bf16.mxu0 0
      %4672 = vmatmul.mubr.bf16.gmra.mrb[0].mxu0 %v4273
      %v4673 = vpop.f32.mrb[0].mxu0
      %v4674 = vadd.f32 0.0, %v4673
      %v4675 = vpop.f32.mrb[0].mxu0
      %v4676 = vpop.f32.mrb[0].mxu0
      %v4677 = vadd.f32 0.0, %v4676
      %v4678 = vpop.f32.mrb[0].mxu0
      %4679 = vmatprep.mubr.bf16.mxu0 0
      %4680 = vmatmul.mubr.bf16.gmra.mrb[0].mxu0 %v4276
      %v4681 = vpop.f32.mrb[0].mxu0
      %v4682 = vadd.f32 0.0, %v4681
      %v4683 = vpop.f32.mrb[0].mxu0
      %v4684 = vpop.f32.mrb[0].mxu0
      %v4685 = vadd.f32 0.0, %v4684
      %v4686 = vpop.f32.mrb[0].mxu0
      %4687 = vmatprep.mubr.bf16.mxu0 0
      %4688 = vmatmul.mubr.bf16.gmra.mrb[0].mxu0 %v4279
      %v4689 = vpop.f32.mrb[0].mxu0
      %v4690 = vadd.f32 0.0, %v4689
      %v4691 = vpop.f32.mrb[0].mxu0
      %v4692 = vpop.f32.mrb[0].mxu0
      %v4693 = vadd.f32 0.0, %v4692
      %v4694 = vpop.f32.mrb[0].mxu0
      %4695 = vmatprep.mubr.bf16.mxu0 0
      %4696 = vmatmul.mubr.bf16.gmra.mrb[0].mxu0 %v4282
      %v4697 = vpop.f32.mrb[0].mxu0
      %v4698 = vadd.f32 0.0, %v4697
      %v4699 = vpop.f32.mrb[0].mxu0
      %v4700 = vpop.f32.mrb[0].mxu0
      %v4701 = vadd.f32 0.0, %v4700
      %v4702 = vpop.f32.mrb[0].mxu0
      %4703 = vmatprep.mubr.bf16.mxu0 0
      %4704 = vmatmul.mubr.bf16.gmra.mrb[0].mxu0 %v4285
      %v4705 = vpop.f32.mrb[0].mxu0
      %v4706 = vadd.f32 0.0, %v4705
      %v4707 = vpop.f32.mrb[0].mxu0
      %v4708 = vpop.f32.mrb[0].mxu0
      %v4709 = vadd.f32 0.0, %v4708
      %v4710 = vpop.f32.mrb[0].mxu0
      %4711 = vmatprep.mubr.bf16.mxu0 0
      %4712 = vmatmul.mubr.bf16.gmra.mrb[0].mxu0 %v4288
      %v4713 = vpop.f32.mrb[0].mxu0
      %v4714 = vadd.f32 0.0, %v4713
      %v4715 = vpop.f32.mrb[0].mxu0
      %v4716 = vpop.f32.mrb[0].mxu0
      %v4717 = vadd.f32 0.0, %v4716
      %v4718 = vpop.f32.mrb[0].mxu0
      %4719 = vmatprep.mubr.bf16.mxu0 0
      %4720 = vmatmul.mubr.bf16.gmra.mrb[0].mxu0 %v4291
      %v4721 = vpop.f32.mrb[0].mxu0
      %v4722 = vadd.f32 0.0, %v4721
      %v4723 = vpop.f32.mrb[0].mxu0
      %v4724 = vpop.f32.mrb[0].mxu0
      %v4725 = vadd.f32 0.0, %v4724
      %v4726 = vpop.f32.mrb[0].mxu0
      %4727 = vmatprep.mubr.bf16.mxu0 0
      %4728 = vmatmul.mubr.bf16.gmra.mrb[0].mxu0 %v4294
      %v4729 = vpop.f32.mrb[0].mxu0
      %v4730 = vadd.f32 0.0, %v4729
      %v4731 = vpop.f32.mrb[0].mxu0
      %v4732 = vpop.f32.mrb[0].mxu0
      %v4733 = vadd.f32 0.0, %v4732
      %v4734 = vpop.f32.mrb[0].mxu0
      %4735 = vmatprep.mubr.bf16.mxu0 0
      %4736 = vmatmul.mubr.bf16.gmra.mrb[0].mxu0 %v4297
      %v4737 = vpop.f32.mrb[0].mxu0
      %v4738 = vadd.f32 0.0, %v4737
      %v4739 = vpop.f32.mrb[0].mxu0
      %v4740 = vpop.f32.mrb[0].mxu0
      %v4741 = vadd.f32 0.0, %v4740
      %v4742 = vpop.f32.mrb[0].mxu0
      %4743 = vmatprep.mubr.bf16.mxu0 0
      %4744 = vmatmul.mubr.bf16.gmra.mrb[0].mxu0 %v4300
      %v4745 = vpop.f32.mrb[0].mxu0
      %v4746 = vadd.f32 0.0, %v4745
      %v4747 = vpop.f32.mrb[0].mxu0
      %v4748 = vpop.f32.mrb[0].mxu0
      %v4749 = vadd.f32 0.0, %v4748
      %v4750 = vpop.f32.mrb[0].mxu0
      %4751 = vmatprep.mubr.bf16.mxu0 0
      %4752 = vmatmul.mubr.bf16.gmra.mrb[0].mxu0 %v4303
      %v4753 = vpop.f32.mrb[0].mxu0
      %v4754 = vadd.f32 0.0, %v4753
      %v4755 = vpop.f32.mrb[0].mxu0
      %v4756 = vpop.f32.mrb[0].mxu0
      %v4757 = vadd.f32 0.0, %v4756
      %v4758 = vpop.f32.mrb[0].mxu0
      %4759 = vmatprep.mubr.bf16.mxu0 0
      %4760 = vmatmul.mubr.bf16.gmra.mrb[0].mxu0 %v4306
      %v4761 = vpop.f32.mrb[0].mxu0
      %v4762 = vadd.f32 0.0, %v4761
      %v4763 = vpop.f32.mrb[0].mxu0
      %v4764 = vpop.f32.mrb[0].mxu0
      %v4765 = vadd.f32 0.0, %v4764
      %v4766 = vpop.f32.mrb[0].mxu0
      %4767 = vmatprep.mubr.bf16.mxu0 0
      %4768 = vmatmul.mubr.bf16.gmra.mrb[0].mxu0 %v4309
      %v4769 = vpop.f32.mrb[0].mxu0
      %v4770 = vadd.f32 0.0, %v4769
      %v4771 = vpop.f32.mrb[0].mxu0
      %v4772 = vpop.f32.mrb[0].mxu0
      %v4773 = vadd.f32 0.0, %v4772
      %v4774 = vpop.f32.mrb[0].mxu0
      %4775 = vmatprep.mubr.bf16.mxu0 0
      %4776 = vmatmul.mubr.bf16.gmra.mrb[0].mxu0 %v4312
      %v4777 = vpop.f32.mrb[0].mxu0
      %v4778 = vadd.f32 0.0, %v4777
      %v4779 = vpop.f32.mrb[0].mxu0
      %v4780 = vpop.f32.mrb[0].mxu0
      %v4781 = vadd.f32 0.0, %v4780
      %v4782 = vpop.f32.mrb[0].mxu0
      %4783 = vmatprep.mubr.bf16.mxu0 0
      %4784 = vmatmul.mubr.bf16.gmra.mrb[0].mxu0 %v4315
      %v4785 = vpop.f32.mrb[0].mxu0
      %v4786 = vadd.f32 0.0, %v4785
      %v4787 = vpop.f32.mrb[0].mxu0
      %v4788 = vpop.f32.mrb[0].mxu0
      %v4789 = vadd.f32 0.0, %v4788
      %v4790 = vpop.f32.mrb[0].mxu0
      %4791 = vmatprep.mubr.bf16.mxu0 0
      %4792 = vmatmul.mubr.bf16.gmra.mrb[0].mxu0 %v4318
      %v4793 = vpop.f32.mrb[0].mxu0
      %v4794 = vadd.f32 0.0, %v4793
      %v4795 = vpop.f32.mrb[0].mxu0
      %v4796 = vpop.f32.mrb[0].mxu0
      %v4797 = vadd.f32 0.0, %v4796
      %v4798 = vpop.f32.mrb[0].mxu0
      %4799 = vmatprep.mubr.bf16.mxu0 0
      %4800 = vmatmul.mubr.bf16.gmra.mrb[0].mxu0 %v4321
      %v4801 = vpop.f32.mrb[0].mxu0
      %v4802 = vadd.f32 0.0, %v4801
      %v4803 = vpop.f32.mrb[0].mxu0
      %v4804 = vpop.f32.mrb[0].mxu0
      %v4805 = vadd.f32 0.0, %v4804
      %v4806 = vpop.f32.mrb[0].mxu0
      %4807 = vdwg.mxu0
      %vm4808 = vcmask 523264
      %4809 = vst.msk [vmem:[#allocation3] sm:$0xff] %vm4808, %v4362
      %4810 = vst.msk [vmem:[#allocation3 + $0x8] sm:$0xff] %vm4808, %v4365
      %4811 = vst.msk [vmem:[#allocation3 + $0x10] sm:$0xff] %vm4808, %v4370
      %4812 = vst.msk [vmem:[#allocation3 + $0x18] sm:$0xff] %vm4808, %v4373
      %4813 = vst.msk [vmem:[#allocation3 + $0x20] sm:$0xff] %vm4808, %v4378
      %4814 = vst.msk [vmem:[#allocation3 + $0x28] sm:$0xff] %vm4808, %v4381
      %4815 = vst.msk [vmem:[#allocation3 + $0x30] sm:$0xff] %vm4808, %v4386
      %4816 = vst.msk [vmem:[#allocation3 + $0x38] sm:$0xff] %vm4808, %v4389
      %4817 = vst.msk [vmem:[#allocation3 + $0x40] sm:$0xff] %vm4808, %v4394
      %4818 = vst.msk [vmem:[#allocation3 + $0x48] sm:$0xff] %vm4808, %v4397
      %4819 = vst.msk [vmem:[#allocation3 + $0x50] sm:$0xff] %vm4808, %v4402
      %4820 = vst.msk [vmem:[#allocation3 + $0x58] sm:$0xff] %vm4808, %v4405
      %4821 = vst.msk [vmem:[#allocation3 + $0x60] sm:$0xff] %vm4808, %v4410
      %4822 = vst.msk [vmem:[#allocation3 + $0x68] sm:$0xff] %vm4808, %v4413
      %4823 = vst.msk [vmem:[#allocation3 + $0x70] sm:$0xff] %vm4808, %v4418
      %4824 = vst.msk [vmem:[#allocation3 + $0x78] sm:$0xff] %vm4808, %v4421
      %4825 = vst.msk [vmem:[#allocation3 + $0x80] sm:$0xff] %vm4808, %v4426
      %4826 = vst.msk [vmem:[#allocation3 + $0x88] sm:$0xff] %vm4808, %v4429
      %4827 = vst.msk [vmem:[#allocation3 + $0x90] sm:$0xff] %vm4808, %v4434
      %4828 = vst.msk [vmem:[#allocation3 + $0x98] sm:$0xff] %vm4808, %v4437
      %4829 = vst.msk [vmem:[#allocation3 + $0xa0] sm:$0xff] %vm4808, %v4442
      %4830 = vst.msk [vmem:[#allocation3 + $0xa8] sm:$0xff] %vm4808, %v4445
      %4831 = vst.msk [vmem:[#allocation3 + $0xb0] sm:$0xff] %vm4808, %v4450
      %4832 = vst.msk [vmem:[#allocation3 + $0xb8] sm:$0xff] %vm4808, %v4453
      %4833 = vst.msk [vmem:[#allocation3 + $0xc0] sm:$0xff] %vm4808, %v4458
      %4834 = vst.msk [vmem:[#allocation3 + $0xc8] sm:$0xff] %vm4808, %v4461
      %4835 = vst.msk [vmem:[#allocation3 + $0xd0] sm:$0xff] %vm4808, %v4466
      %4836 = vst.msk [vmem:[#allocation3 + $0xd8] sm:$0xff] %vm4808, %v4469
      %4837 = vst.msk [vmem:[#allocation3 + $0xe0] sm:$0xff] %vm4808, %v4474
      %4838 = vst.msk [vmem:[#allocation3 + $0xe8] sm:$0xff] %vm4808, %v4477
      %4839 = vst.msk [vmem:[#allocation3 + $0xf0] sm:$0xff] %vm4808, %v4482
      %4840 = vst.msk [vmem:[#allocation3 + $0xf8] sm:$0xff] %vm4808, %v4485
      %4841 = vst.msk [vmem:[#allocation3 + $0x100] sm:$0xff] %vm4808, %v4490
      %4842 = vst.msk [vmem:[#allocation3 + $0x108] sm:$0xff] %vm4808, %v4493
      %4843 = vst.msk [vmem:[#allocation3 + $0x110] sm:$0xff] %vm4808, %v4498
      %4844 = vst.msk [vmem:[#allocation3 + $0x118] sm:$0xff] %vm4808, %v4501
      %4845 = vst.msk [vmem:[#allocation3 + $0x120] sm:$0xff] %vm4808, %v4506
      %4846 = vst.msk [vmem:[#allocation3 + $0x128] sm:$0xff] %vm4808, %v4509
      %4847 = vst.msk [vmem:[#allocation3 + $0x130] sm:$0xff] %vm4808, %v4514
      %4848 = vst.msk [vmem:[#allocation3 + $0x138] sm:$0xff] %vm4808, %v4517
      %4849 = vst.msk [vmem:[#allocation3 + $0x140] sm:$0xff] %vm4808, %v4522
      %4850 = vst.msk [vmem:[#allocation3 + $0x148] sm:$0xff] %vm4808, %v4525
      %4851 = vst.msk [vmem:[#allocation3 + $0x150] sm:$0xff] %vm4808, %v4530
      %4852 = vst.msk [vmem:[#allocation3 + $0x158] sm:$0xff] %vm4808, %v4533
      %4853 = vst.msk [vmem:[#allocation3 + $0x160] sm:$0xff] %vm4808, %v4538
      %4854 = vst.msk [vmem:[#allocation3 + $0x168] sm:$0xff] %vm4808, %v4541
      %4855 = vst.msk [vmem:[#allocation3 + $0x170] sm:$0xff] %vm4808, %v4546
      %4856 = vst.msk [vmem:[#allocation3 + $0x178] sm:$0xff] %vm4808, %v4549
      %4857 = vst.msk [vmem:[#allocation3 + $0x180] sm:$0xff] %vm4808, %v4554
      %4858 = vst.msk [vmem:[#allocation3 + $0x188] sm:$0xff] %vm4808, %v4557
      %4859 = vst.msk [vmem:[#allocation3 + $0x190] sm:$0xff] %vm4808, %v4562
      %4860 = vst.msk [vmem:[#allocation3 + $0x198] sm:$0xff] %vm4808, %v4565
      %4861 = vst.msk [vmem:[#allocation3 + $0x1a0] sm:$0xff] %vm4808, %v4570
      %4862 = vst.msk [vmem:[#allocation3 + $0x1a8] sm:$0xff] %vm4808, %v4573
      %4863 = vst.msk [vmem:[#allocation3 + $0x1b0] sm:$0xff] %vm4808, %v4578
      %4864 = vst.msk [vmem:[#allocation3 + $0x1b8] sm:$0xff] %vm4808, %v4581
      %4865 = vst.msk [vmem:[#allocation3 + $0x1c0] sm:$0xff] %vm4808, %v4586
      %4866 = vst.msk [vmem:[#allocation3 + $0x1c8] sm:$0xff] %vm4808, %v4589
      %4867 = vst.msk [vmem:[#allocation3 + $0x1d0] sm:$0xff] %vm4808, %v4594
      %4868 = vst.msk [vmem:[#allocation3 + $0x1d8] sm:$0xff] %vm4808, %v4597
      %4869 = vst.msk [vmem:[#allocation3 + $0x1e0] sm:$0xff] %vm4808, %v4602
      %4870 = vst.msk [vmem:[#allocation3 + $0x1e8] sm:$0xff] %vm4808, %v4605
      %4871 = vst.msk [vmem:[#allocation3 + $0x1f0] sm:$0xff] %vm4808, %v4610
      %4872 = vst.msk [vmem:[#allocation3 + $0x1f8] sm:$0xff] %vm4808, %v4613
      %4873 = vst.msk [vmem:[#allocation3 + $0x200] sm:$0xff] %vm4808, %v4618
      %4874 = vst.msk [vmem:[#allocation3 + $0x208] sm:$0xff] %vm4808, %v4621
      %4875 = vst.msk [vmem:[#allocation3 + $0x210] sm:$0xff] %vm4808, %v4626
      %4876 = vst.msk [vmem:[#allocation3 + $0x218] sm:$0xff] %vm4808, %v4629
      %4877 = vst.msk [vmem:[#allocation3 + $0x220] sm:$0xff] %vm4808, %v4634
      %4878 = vst.msk [vmem:[#allocation3 + $0x228] sm:$0xff] %vm4808, %v4637
      %4879 = vst.msk [vmem:[#allocation3 + $0x230] sm:$0xff] %vm4808, %v4642
      %4880 = vst.msk [vmem:[#allocation3 + $0x238] sm:$0xff] %vm4808, %v4645
      %4881 = vst.msk [vmem:[#allocation3 + $0x240] sm:$0xff] %vm4808, %v4650
      %4882 = vst.msk [vmem:[#allocation3 + $0x248] sm:$0xff] %vm4808, %v4653
      %4883 = vst.msk [vmem:[#allocation3 + $0x250] sm:$0xff] %vm4808, %v4658
      %4884 = vst.msk [vmem:[#allocation3 + $0x258] sm:$0xff] %vm4808, %v4661
      %4885 = vst.msk [vmem:[#allocation3 + $0x260] sm:$0xff] %vm4808, %v4666
      %4886 = vst.msk [vmem:[#allocation3 + $0x268] sm:$0xff] %vm4808, %v4669
      %4887 = vst.msk [vmem:[#allocation3 + $0x270] sm:$0xff] %vm4808, %v4674
      %4888 = vst.msk [vmem:[#allocation3 + $0x278] sm:$0xff] %vm4808, %v4677
      %4889 = vst.msk [vmem:[#allocation3 + $0x280] sm:$0xff] %vm4808, %v4682
      %4890 = vst.msk [vmem:[#allocation3 + $0x288] sm:$0xff] %vm4808, %v4685
      %4891 = vst.msk [vmem:[#allocation3 + $0x290] sm:$0xff] %vm4808, %v4690
      %4892 = vst.msk [vmem:[#allocation3 + $0x298] sm:$0xff] %vm4808, %v4693
      %4893 = vst.msk [vmem:[#allocation3 + $0x2a0] sm:$0xff] %vm4808, %v4698
      %4894 = vst.msk [vmem:[#allocation3 + $0x2a8] sm:$0xff] %vm4808, %v4701
      %4895 = vst.msk [vmem:[#allocation3 + $0x2b0] sm:$0xff] %vm4808, %v4706
      %4896 = vst.msk [vmem:[#allocation3 + $0x2b8] sm:$0xff] %vm4808, %v4709
      %4897 = vst.msk [vmem:[#allocation3 + $0x2c0] sm:$0xff] %vm4808, %v4714
      %4898 = vst.msk [vmem:[#allocation3 + $0x2c8] sm:$0xff] %vm4808, %v4717
      %4899 = vst.msk [vmem:[#allocation3 + $0x2d0] sm:$0xff] %vm4808, %v4722
      %4900 = vst.msk [vmem:[#allocation3 + $0x2d8] sm:$0xff] %vm4808, %v4725
      %4901 = vst.msk [vmem:[#allocation3 + $0x2e0] sm:$0xff] %vm4808, %v4730
      %4902 = vst.msk [vmem:[#allocation3 + $0x2e8] sm:$0xff] %vm4808, %v4733
      %4903 = vst.msk [vmem:[#allocation3 + $0x2f0] sm:$0xff] %vm4808, %v4738
      %4904 = vst.msk [vmem:[#allocation3 + $0x2f8] sm:$0xff] %vm4808, %v4741
      %4905 = vst.msk [vmem:[#allocation3 + $0x300] sm:$0xff] %vm4808, %v4746
      %4906 = vst.msk [vmem:[#allocation3 + $0x308] sm:$0xff] %vm4808, %v4749
      %4907 = vst.msk [vmem:[#allocation3 + $0x310] sm:$0xff] %vm4808, %v4754
      %4908 = vst.msk [vmem:[#allocation3 + $0x318] sm:$0xff] %vm4808, %v4757
      %4909 = vst.msk [vmem:[#allocation3 + $0x320] sm:$0xff] %vm4808, %v4762
      %4910 = vst.msk [vmem:[#allocation3 + $0x328] sm:$0xff] %vm4808, %v4765
      %4911 = vst.msk [vmem:[#allocation3 + $0x330] sm:$0xff] %vm4808, %v4770
      %4912 = vst.msk [vmem:[#allocation3 + $0x338] sm:$0xff] %vm4808, %v4773
      %4913 = vst.msk [vmem:[#allocation3 + $0x340] sm:$0xff] %vm4808, %v4778
      %4914 = vst.msk [vmem:[#allocation3 + $0x348] sm:$0xff] %vm4808, %v4781
      %4915 = vst.msk [vmem:[#allocation3 + $0x350] sm:$0xff] %vm4808, %v4786
      %4916 = vst.msk [vmem:[#allocation3 + $0x358] sm:$0xff] %vm4808, %v4789
      %4917 = vst.msk [vmem:[#allocation3 + $0x360] sm:$0xff] %vm4808, %v4794
      %4918 = vst.msk [vmem:[#allocation3 + $0x368] sm:$0xff] %vm4808, %v4797
      %4919 = vst.msk [vmem:[#allocation3 + $0x370] sm:$0xff] %vm4808, %v4802
      %4920 = vst.msk [vmem:[#allocation3 + $0x378] sm:$0xff] %vm4808, %v4805
      %v4921 = vld [vmem:[#allocation3] sm:$0xff]
      %v4922 = vld [vmem:[#allocation3 + $0x8] sm:$0xff]
      %v4923 = vld [vmem:[#allocation3 + $0x10] sm:$0xff]
      %v4924 = vld [vmem:[#allocation3 + $0x18] sm:$0xff]
      %v4925 = vld [vmem:[#allocation3 + $0x20] sm:$0xff]
      %v4926 = vld [vmem:[#allocation3 + $0x28] sm:$0xff]
      %v4927 = vld [vmem:[#allocation3 + $0x30] sm:$0xff]
      %v4928 = vld [vmem:[#allocation3 + $0x38] sm:$0xff]
      %v4929 = vld [vmem:[#allocation3 + $0x40] sm:$0xff]
      %v4930 = vld [vmem:[#allocation3 + $0x48] sm:$0xff]
      %v4931 = vld [vmem:[#allocation3 + $0x50] sm:$0xff]
      %v4932 = vld [vmem:[#allocation3 + $0x58] sm:$0xff]
      %v4933 = vld [vmem:[#allocation3 + $0x60] sm:$0xff]
      %v4934 = vld [vmem:[#allocation3 + $0x68] sm:$0xff]
      %v4935 = vld [vmem:[#allocation3 + $0x70] sm:$0xff]
      %v4936 = vld [vmem:[#allocation3 + $0x78] sm:$0xff]
      %v4937 = vld [vmem:[#allocation3 + $0x80] sm:$0xff]
      %v4938 = vld [vmem:[#allocation3 + $0x88] sm:$0xff]
      %v4939 = vld [vmem:[#allocation3 + $0x90] sm:$0xff]
      %v4940 = vld [vmem:[#allocation3 + $0x98] sm:$0xff]
      %v4941 = vld [vmem:[#allocation3 + $0xa0] sm:$0xff]
      %v4942 = vld [vmem:[#allocation3 + $0xa8] sm:$0xff]
      %v4943 = vld [vmem:[#allocation3 + $0xb0] sm:$0xff]
      %v4944 = vld [vmem:[#allocation3 + $0xb8] sm:$0xff]
      %v4945 = vld [vmem:[#allocation3 + $0xc0] sm:$0xff]
      %v4946 = vld [vmem:[#allocation3 + $0xc8] sm:$0xff]
      %v4947 = vld [vmem:[#allocation3 + $0xd0] sm:$0xff]
      %v4948 = vld [vmem:[#allocation3 + $0xd8] sm:$0xff]
      %v4949 = vld [vmem:[#allocation3 + $0xe0] sm:$0xff]
      %v4950 = vld [vmem:[#allocation3 + $0xe8] sm:$0xff]
      %v4951 = vld [vmem:[#allocation3 + $0xf0] sm:$0xff]
      %v4952 = vld [vmem:[#allocation3 + $0xf8] sm:$0xff]
      %v4953 = vld [vmem:[#allocation3 + $0x100] sm:$0xff]
      %v4954 = vld [vmem:[#allocation3 + $0x108] sm:$0xff]
      %v4955 = vld [vmem:[#allocation3 + $0x110] sm:$0xff]
      %v4956 = vld [vmem:[#allocation3 + $0x118] sm:$0xff]
      %v4957 = vld [vmem:[#allocation3 + $0x120] sm:$0xff]
      %v4958 = vld [vmem:[#allocation3 + $0x128] sm:$0xff]
      %v4959 = vld [vmem:[#allocation3 + $0x130] sm:$0xff]
      %v4960 = vld [vmem:[#allocation3 + $0x138] sm:$0xff]
      %v4961 = vld [vmem:[#allocation3 + $0x140] sm:$0xff]
      %v4962 = vld [vmem:[#allocation3 + $0x148] sm:$0xff]
      %v4963 = vld [vmem:[#allocation3 + $0x150] sm:$0xff]
      %v4964 = vld [vmem:[#allocation3 + $0x158] sm:$0xff]
      %v4965 = vld [vmem:[#allocation3 + $0x160] sm:$0xff]
      %v4966 = vld [vmem:[#allocation3 + $0x168] sm:$0xff]
      %v4967 = vld [vmem:[#allocation3 + $0x170] sm:$0xff]
      %v4968 = vld [vmem:[#allocation3 + $0x178] sm:$0xff]
      %v4969 = vld [vmem:[#allocation3 + $0x180] sm:$0xff]
      %v4970 = vld [vmem:[#allocation3 + $0x188] sm:$0xff]
      %v4971 = vld [vmem:[#allocation3 + $0x190] sm:$0xff]
      %v4972 = vld [vmem:[#allocation3 + $0x198] sm:$0xff]
      %v4973 = vld [vmem:[#allocation3 + $0x1a0] sm:$0xff]
      %v4974 = vld [vmem:[#allocation3 + $0x1a8] sm:$0xff]
      %v4975 = vld [vmem:[#allocation3 + $0x1b0] sm:$0xff]
      %v4976 = vld [vmem:[#allocation3 + $0x1b8] sm:$0xff]
      %v4977 = vld [vmem:[#allocation3 + $0x1c0] sm:$0xff]
      %v4978 = vld [vmem:[#allocation3 + $0x1c8] sm:$0xff]
      %v4979 = vld [vmem:[#allocation3 + $0x1d0] sm:$0xff]
      %v4980 = vld [vmem:[#allocation3 + $0x1d8] sm:$0xff]
      %v4981 = vld [vmem:[#allocation3 + $0x1e0] sm:$0xff]
      %v4982 = vld [vmem:[#allocation3 + $0x1e8] sm:$0xff]
      %v4983 = vld [vmem:[#allocation3 + $0x1f0] sm:$0xff]
      %v4984 = vld [vmem:[#allocation3 + $0x1f8] sm:$0xff]
      %v4985 = vld [vmem:[#allocation3 + $0x200] sm:$0xff]
      %v4986 = vld [vmem:[#allocation3 + $0x208] sm:$0xff]
      %v4987 = vld [vmem:[#allocation3 + $0x210] sm:$0xff]
      %v4988 = vld [vmem:[#allocation3 + $0x218] sm:$0xff]
      %v4989 = vld [vmem:[#allocation3 + $0x220] sm:$0xff]
      %v4990 = vld [vmem:[#allocation3 + $0x228] sm:$0xff]
      %v4991 = vld [vmem:[#allocation3 + $0x230] sm:$0xff]
      %v4992 = vld [vmem:[#allocation3 + $0x238] sm:$0xff]
      %v4993 = vld [vmem:[#allocation3 + $0x240] sm:$0xff]
      %v4994 = vld [vmem:[#allocation3 + $0x248] sm:$0xff]
      %v4995 = vld [vmem:[#allocation3 + $0x250] sm:$0xff]
      %v4996 = vld [vmem:[#allocation3 + $0x258] sm:$0xff]
      %v4997 = vld [vmem:[#allocation3 + $0x260] sm:$0xff]
      %v4998 = vld [vmem:[#allocation3 + $0x268] sm:$0xff]
      %v4999 = vld [vmem:[#allocation3 + $0x270] sm:$0xff]
      %v5000 = vld [vmem:[#allocation3 + $0x278] sm:$0xff]
      %v5001 = vld [vmem:[#allocation3 + $0x280] sm:$0xff]
      %v5002 = vld [vmem:[#allocation3 + $0x288] sm:$0xff]
      %v5003 = vld [vmem:[#allocation3 + $0x290] sm:$0xff]
      %v5004 = vld [vmem:[#allocation3 + $0x298] sm:$0xff]
      %v5005 = vld [vmem:[#allocation3 + $0x2a0] sm:$0xff]
      %v5006 = vld [vmem:[#allocation3 + $0x2a8] sm:$0xff]
      %v5007 = vld [vmem:[#allocation3 + $0x2b0] sm:$0xff]
      %v5008 = vld [vmem:[#allocation3 + $0x2b8] sm:$0xff]
      %v5009 = vld [vmem:[#allocation3 + $0x2c0] sm:$0xff]
      %v5010 = vld [vmem:[#allocation3 + $0x2c8] sm:$0xff]
      %v5011 = vld [vmem:[#allocation3 + $0x2d0] sm:$0xff]
      %v5012 = vld [vmem:[#allocation3 + $0x2d8] sm:$0xff]
      %v5013 = vld [vmem:[#allocation3 + $0x2e0] sm:$0xff]
      %v5014 = vld [vmem:[#allocation3 + $0x2e8] sm:$0xff]
      %v5015 = vld [vmem:[#allocation3 + $0x2f0] sm:$0xff]
      %v5016 = vld [vmem:[#allocation3 + $0x2f8] sm:$0xff]
      %v5017 = vld [vmem:[#allocation3 + $0x300] sm:$0xff]
      %v5018 = vld [vmem:[#allocation3 + $0x308] sm:$0xff]
      %v5019 = vld [vmem:[#allocation3 + $0x310] sm:$0xff]
      %v5020 = vld [vmem:[#allocation3 + $0x318] sm:$0xff]
      %v5021 = vld [vmem:[#allocation3 + $0x320] sm:$0xff]
      %v5022 = vld [vmem:[#allocation3 + $0x328] sm:$0xff]
      %v5023 = vld [vmem:[#allocation3 + $0x330] sm:$0xff]
      %v5024 = vld [vmem:[#allocation3 + $0x338] sm:$0xff]
      %v5025 = vld [vmem:[#allocation3 + $0x340] sm:$0xff]
      %v5026 = vld [vmem:[#allocation3 + $0x348] sm:$0xff]
      %v5027 = vld [vmem:[#allocation3 + $0x350] sm:$0xff]
      %v5028 = vld [vmem:[#allocation3 + $0x358] sm:$0xff]
      %v5029 = vld [vmem:[#allocation3 + $0x360] sm:$0xff]
      %v5030 = vld [vmem:[#allocation3 + $0x368] sm:$0xff]
      %v5031 = vld [vmem:[#allocation3 + $0x370] sm:$0xff]
      %v5032 = vld [vmem:[#allocation3 + $0x378] sm:$0xff]
      %v5033 = vld [vmem:[%s2] sm:$0x1]
      %v5035 = vlaneseq
      %v5036 = vshrl.u32 %v5035, 7
      %v5037 = vsub.s32 0, %v5036
      %v5038 = vrot.slane %v5033, %v5037
      %v5040 = vadd.f32 %v4921, %v5038
      %v5041 = vadd.f32 %v4922, %v5038
      %v5042 = vadd.f32 %v4923, %v5038
      %v5043 = vadd.f32 %v4924, %v5038
      %v5044 = vadd.f32 %v4925, %v5038
      %v5045 = vadd.f32 %v4926, %v5038
      %v5046 = vadd.f32 %v4927, %v5038
      %v5047 = vadd.f32 %v4928, %v5038
      %v5048 = vadd.f32 %v4929, %v5038
      %v5049 = vadd.f32 %v4930, %v5038
      %v5050 = vadd.f32 %v4931, %v5038
      %v5051 = vadd.f32 %v4932, %v5038
      %v5052 = vadd.f32 %v4933, %v5038
      %v5053 = vadd.f32 %v4934, %v5038
      %v5054 = vadd.f32 %v4935, %v5038
      %v5055 = vadd.f32 %v4936, %v5038
      %v5056 = vadd.f32 %v4937, %v5038
      %v5057 = vadd.f32 %v4938, %v5038
      %v5058 = vadd.f32 %v4939, %v5038
      %v5059 = vadd.f32 %v4940, %v5038
      %v5060 = vadd.f32 %v4941, %v5038
      %v5061 = vadd.f32 %v4942, %v5038
      %v5062 = vadd.f32 %v4943, %v5038
      %v5063 = vadd.f32 %v4944, %v5038
      %v5064 = vadd.f32 %v4945, %v5038
      %v5065 = vadd.f32 %v4946, %v5038
      %v5066 = vadd.f32 %v4947, %v5038
      %v5067 = vadd.f32 %v4948, %v5038
      %v5068 = vadd.f32 %v4949, %v5038
      %v5069 = vadd.f32 %v4950, %v5038
      %v5070 = vadd.f32 %v4951, %v5038
      %v5071 = vadd.f32 %v4952, %v5038
      %v5072 = vadd.f32 %v4953, %v5038
      %v5073 = vadd.f32 %v4954, %v5038
      %v5074 = vadd.f32 %v4955, %v5038
      %v5075 = vadd.f32 %v4956, %v5038
      %v5076 = vadd.f32 %v4957, %v5038
      %v5077 = vadd.f32 %v4958, %v5038
      %v5078 = vadd.f32 %v4959, %v5038
      %v5079 = vadd.f32 %v4960, %v5038
      %v5080 = vadd.f32 %v4961, %v5038
      %v5081 = vadd.f32 %v4962, %v5038
      %v5082 = vadd.f32 %v4963, %v5038
      %v5083 = vadd.f32 %v4964, %v5038
      %v5084 = vadd.f32 %v4965, %v5038
      %v5085 = vadd.f32 %v4966, %v5038
      %v5086 = vadd.f32 %v4967, %v5038
      %v5087 = vadd.f32 %v4968, %v5038
      %v5088 = vadd.f32 %v4969, %v5038
      %v5089 = vadd.f32 %v4970, %v5038
      %v5090 = vadd.f32 %v4971, %v5038
      %v5091 = vadd.f32 %v4972, %v5038
      %v5092 = vadd.f32 %v4973, %v5038
      %v5093 = vadd.f32 %v4974, %v5038
      %v5094 = vadd.f32 %v4975, %v5038
      %v5095 = vadd.f32 %v4976, %v5038
      %v5096 = vadd.f32 %v4977, %v5038
      %v5097 = vadd.f32 %v4978, %v5038
      %v5098 = vadd.f32 %v4979, %v5038
      %v5099 = vadd.f32 %v4980, %v5038
      %v5100 = vadd.f32 %v4981, %v5038
      %v5101 = vadd.f32 %v4982, %v5038
      %v5102 = vadd.f32 %v4983, %v5038
      %v5103 = vadd.f32 %v4984, %v5038
      %v5104 = vadd.f32 %v4985, %v5038
      %v5105 = vadd.f32 %v4986, %v5038
      %v5106 = vadd.f32 %v4987, %v5038
      %v5107 = vadd.f32 %v4988, %v5038
      %v5108 = vadd.f32 %v4989, %v5038
      %v5109 = vadd.f32 %v4990, %v5038
      %v5110 = vadd.f32 %v4991, %v5038
      %v5111 = vadd.f32 %v4992, %v5038
      %v5112 = vadd.f32 %v4993, %v5038
      %v5113 = vadd.f32 %v4994, %v5038
      %v5114 = vadd.f32 %v4995, %v5038
      %v5115 = vadd.f32 %v4996, %v5038
      %v5116 = vadd.f32 %v4997, %v5038
      %v5117 = vadd.f32 %v4998, %v5038
      %v5118 = vadd.f32 %v4999, %v5038
      %v5119 = vadd.f32 %v5000, %v5038
      %v5120 = vadd.f32 %v5001, %v5038
      %v5121 = vadd.f32 %v5002, %v5038
      %v5122 = vadd.f32 %v5003, %v5038
      %v5123 = vadd.f32 %v5004, %v5038
      %v5124 = vadd.f32 %v5005, %v5038
      %v5125 = vadd.f32 %v5006, %v5038
      %v5126 = vadd.f32 %v5007, %v5038
      %v5127 = vadd.f32 %v5008, %v5038
      %v5128 = vadd.f32 %v5009, %v5038
      %v5129 = vadd.f32 %v5010, %v5038
      %v5130 = vadd.f32 %v5011, %v5038
      %v5131 = vadd.f32 %v5012, %v5038
      %v5132 = vadd.f32 %v5013, %v5038
      %v5133 = vadd.f32 %v5014, %v5038
      %v5134 = vadd.f32 %v5015, %v5038
      %v5135 = vadd.f32 %v5016, %v5038
      %v5136 = vadd.f32 %v5017, %v5038
      %v5137 = vadd.f32 %v5018, %v5038
      %v5138 = vadd.f32 %v5019, %v5038
      %v5139 = vadd.f32 %v5020, %v5038
      %v5140 = vadd.f32 %v5021, %v5038
      %v5141 = vadd.f32 %v5022, %v5038
      %v5142 = vadd.f32 %v5023, %v5038
      %v5143 = vadd.f32 %v5024, %v5038
      %v5144 = vadd.f32 %v5025, %v5038
      %v5145 = vadd.f32 %v5026, %v5038
      %v5146 = vadd.f32 %v5027, %v5038
      %v5147 = vadd.f32 %v5028, %v5038
      %v5148 = vadd.f32 %v5029, %v5038
      %v5149 = vadd.f32 %v5030, %v5038
      %v5150 = vadd.f32 %v5031, %v5038
      %v5151 = vadd.f32 %v5032, %v5038
      %v5152 = vmax.f32 %v5040, 0.0
      %v5153 = vmax.f32 %v5041, 0.0
      %v5154 = vmax.f32 %v5042, 0.0
      %v5155 = vmax.f32 %v5043, 0.0
      %v5156 = vmax.f32 %v5044, 0.0
      %v5157 = vmax.f32 %v5045, 0.0
      %v5158 = vmax.f32 %v5046, 0.0
      %v5159 = vmax.f32 %v5047, 0.0
      %v5160 = vmax.f32 %v5048, 0.0
      %v5161 = vmax.f32 %v5049, 0.0
      %v5162 = vmax.f32 %v5050, 0.0
      %v5163 = vmax.f32 %v5051, 0.0
      %v5164 = vmax.f32 %v5052, 0.0
      %v5165 = vmax.f32 %v5053, 0.0
      %v5166 = vmax.f32 %v5054, 0.0
      %v5167 = vmax.f32 %v5055, 0.0
      %v5168 = vmax.f32 %v5056, 0.0
      %v5169 = vmax.f32 %v5057, 0.0
      %v5170 = vmax.f32 %v5058, 0.0
      %v5171 = vmax.f32 %v5059, 0.0
      %v5172 = vmax.f32 %v5060, 0.0
      %v5173 = vmax.f32 %v5061, 0.0
      %v5174 = vmax.f32 %v5062, 0.0
      %v5175 = vmax.f32 %v5063, 0.0
      %v5176 = vmax.f32 %v5064, 0.0
      %v5177 = vmax.f32 %v5065, 0.0
      %v5178 = vmax.f32 %v5066, 0.0
      %v5179 = vmax.f32 %v5067, 0.0
      %v5180 = vmax.f32 %v5068, 0.0
      %v5181 = vmax.f32 %v5069, 0.0
      %v5182 = vmax.f32 %v5070, 0.0
      %v5183 = vmax.f32 %v5071, 0.0
      %v5184 = vmax.f32 %v5072, 0.0
      %v5185 = vmax.f32 %v5073, 0.0
      %v5186 = vmax.f32 %v5074, 0.0
      %v5187 = vmax.f32 %v5075, 0.0
      %v5188 = vmax.f32 %v5076, 0.0
      %v5189 = vmax.f32 %v5077, 0.0
      %v5190 = vmax.f32 %v5078, 0.0
      %v5191 = vmax.f32 %v5079, 0.0
      %v5192 = vmax.f32 %v5080, 0.0
      %v5193 = vmax.f32 %v5081, 0.0
      %v5194 = vmax.f32 %v5082, 0.0
      %v5195 = vmax.f32 %v5083, 0.0
      %v5196 = vmax.f32 %v5084, 0.0
      %v5197 = vmax.f32 %v5085, 0.0
      %v5198 = vmax.f32 %v5086, 0.0
      %v5199 = vmax.f32 %v5087, 0.0
      %v5200 = vmax.f32 %v5088, 0.0
      %v5201 = vmax.f32 %v5089, 0.0
      %v5202 = vmax.f32 %v5090, 0.0
      %v5203 = vmax.f32 %v5091, 0.0
      %v5204 = vmax.f32 %v5092, 0.0
      %v5205 = vmax.f32 %v5093, 0.0
      %v5206 = vmax.f32 %v5094, 0.0
      %v5207 = vmax.f32 %v5095, 0.0
      %v5208 = vmax.f32 %v5096, 0.0
      %v5209 = vmax.f32 %v5097, 0.0
      %v5210 = vmax.f32 %v5098, 0.0
      %v5211 = vmax.f32 %v5099, 0.0
      %v5212 = vmax.f32 %v5100, 0.0
      %v5213 = vmax.f32 %v5101, 0.0
      %v5214 = vmax.f32 %v5102, 0.0
      %v5215 = vmax.f32 %v5103, 0.0
      %v5216 = vmax.f32 %v5104, 0.0
      %v5217 = vmax.f32 %v5105, 0.0
      %v5218 = vmax.f32 %v5106, 0.0
      %v5219 = vmax.f32 %v5107, 0.0
      %v5220 = vmax.f32 %v5108, 0.0
      %v5221 = vmax.f32 %v5109, 0.0
      %v5222 = vmax.f32 %v5110, 0.0
      %v5223 = vmax.f32 %v5111, 0.0
      %v5224 = vmax.f32 %v5112, 0.0
      %v5225 = vmax.f32 %v5113, 0.0
      %v5226 = vmax.f32 %v5114, 0.0
      %v5227 = vmax.f32 %v5115, 0.0
      %v5228 = vmax.f32 %v5116, 0.0
      %v5229 = vmax.f32 %v5117, 0.0
      %v5230 = vmax.f32 %v5118, 0.0
      %v5231 = vmax.f32 %v5119, 0.0
      %v5232 = vmax.f32 %v5120, 0.0
      %v5233 = vmax.f32 %v5121, 0.0
      %v5234 = vmax.f32 %v5122, 0.0
      %v5235 = vmax.f32 %v5123, 0.0
      %v5236 = vmax.f32 %v5124, 0.0
      %v5237 = vmax.f32 %v5125, 0.0
      %v5238 = vmax.f32 %v5126, 0.0
      %v5239 = vmax.f32 %v5127, 0.0
      %v5240 = vmax.f32 %v5128, 0.0
      %v5241 = vmax.f32 %v5129, 0.0
      %v5242 = vmax.f32 %v5130, 0.0
      %v5243 = vmax.f32 %v5131, 0.0
      %v5244 = vmax.f32 %v5132, 0.0
      %v5245 = vmax.f32 %v5133, 0.0
      %v5246 = vmax.f32 %v5134, 0.0
      %v5247 = vmax.f32 %v5135, 0.0
      %v5248 = vmax.f32 %v5136, 0.0
      %v5249 = vmax.f32 %v5137, 0.0
      %v5250 = vmax.f32 %v5138, 0.0
      %v5251 = vmax.f32 %v5139, 0.0
      %v5252 = vmax.f32 %v5140, 0.0
      %v5253 = vmax.f32 %v5141, 0.0
      %v5254 = vmax.f32 %v5142, 0.0
      %v5255 = vmax.f32 %v5143, 0.0
      %v5256 = vmax.f32 %v5144, 0.0
      %v5257 = vmax.f32 %v5145, 0.0
      %v5258 = vmax.f32 %v5146, 0.0
      %v5259 = vmax.f32 %v5147, 0.0
      %v5260 = vmax.f32 %v5148, 0.0
      %v5261 = vmax.f32 %v5149, 0.0
      %v5262 = vmax.f32 %v5150, 0.0
      %v5263 = vmax.f32 %v5151, 0.0
      %5264 = vst.msk [vmem:[#allocation3] sm:$0xff] %vm4808, %v5152
      %5265 = vst.msk [vmem:[#allocation3 + $0x8] sm:$0xff] %vm4808, %v5153
      %5266 = vst.msk [vmem:[#allocation3 + $0x10] sm:$0xff] %vm4808, %v5154
      %5267 = vst.msk [vmem:[#allocation3 + $0x18] sm:$0xff] %vm4808, %v5155
      %5268 = vst.msk [vmem:[#allocation3 + $0x20] sm:$0xff] %vm4808, %v5156
      %5269 = vst.msk [vmem:[#allocation3 + $0x28] sm:$0xff] %vm4808, %v5157
      %5270 = vst.msk [vmem:[#allocation3 + $0x30] sm:$0xff] %vm4808, %v5158
      %5271 = vst.msk [vmem:[#allocation3 + $0x38] sm:$0xff] %vm4808, %v5159
      %5272 = vst.msk [vmem:[#allocation3 + $0x40] sm:$0xff] %vm4808, %v5160
      %5273 = vst.msk [vmem:[#allocation3 + $0x48] sm:$0xff] %vm4808, %v5161
      %5274 = vst.msk [vmem:[#allocation3 + $0x50] sm:$0xff] %vm4808, %v5162
      %5275 = vst.msk [vmem:[#allocation3 + $0x58] sm:$0xff] %vm4808, %v5163
      %5276 = vst.msk [vmem:[#allocation3 + $0x60] sm:$0xff] %vm4808, %v5164
      %5277 = vst.msk [vmem:[#allocation3 + $0x68] sm:$0xff] %vm4808, %v5165
      %5278 = vst.msk [vmem:[#allocation3 + $0x70] sm:$0xff] %vm4808, %v5166
      %5279 = vst.msk [vmem:[#allocation3 + $0x78] sm:$0xff] %vm4808, %v5167
      %5280 = vst.msk [vmem:[#allocation3 + $0x80] sm:$0xff] %vm4808, %v5168
      %5281 = vst.msk [vmem:[#allocation3 + $0x88] sm:$0xff] %vm4808, %v5169
      %5282 = vst.msk [vmem:[#allocation3 + $0x90] sm:$0xff] %vm4808, %v5170
      %5283 = vst.msk [vmem:[#allocation3 + $0x98] sm:$0xff] %vm4808, %v5171
      %5284 = vst.msk [vmem:[#allocation3 + $0xa0] sm:$0xff] %vm4808, %v5172
      %5285 = vst.msk [vmem:[#allocation3 + $0xa8] sm:$0xff] %vm4808, %v5173
      %5286 = vst.msk [vmem:[#allocation3 + $0xb0] sm:$0xff] %vm4808, %v5174
      %5287 = vst.msk [vmem:[#allocation3 + $0xb8] sm:$0xff] %vm4808, %v5175
      %5288 = vst.msk [vmem:[#allocation3 + $0xc0] sm:$0xff] %vm4808, %v5176
      %5289 = vst.msk [vmem:[#allocation3 + $0xc8] sm:$0xff] %vm4808, %v5177
      %5290 = vst.msk [vmem:[#allocation3 + $0xd0] sm:$0xff] %vm4808, %v5178
      %5291 = vst.msk [vmem:[#allocation3 + $0xd8] sm:$0xff] %vm4808, %v5179
      %5292 = vst.msk [vmem:[#allocation3 + $0xe0] sm:$0xff] %vm4808, %v5180
      %5293 = vst.msk [vmem:[#allocation3 + $0xe8] sm:$0xff] %vm4808, %v5181
      %5294 = vst.msk [vmem:[#allocation3 + $0xf0] sm:$0xff] %vm4808, %v5182
      %5295 = vst.msk [vmem:[#allocation3 + $0xf8] sm:$0xff] %vm4808, %v5183
      %5296 = vst.msk [vmem:[#allocation3 + $0x100] sm:$0xff] %vm4808, %v5184
      %5297 = vst.msk [vmem:[#allocation3 + $0x108] sm:$0xff] %vm4808, %v5185
      %5298 = vst.msk [vmem:[#allocation3 + $0x110] sm:$0xff] %vm4808, %v5186
      %5299 = vst.msk [vmem:[#allocation3 + $0x118] sm:$0xff] %vm4808, %v5187
      %5300 = vst.msk [vmem:[#allocation3 + $0x120] sm:$0xff] %vm4808, %v5188
      %5301 = vst.msk [vmem:[#allocation3 + $0x128] sm:$0xff] %vm4808, %v5189
      %5302 = vst.msk [vmem:[#allocation3 + $0x130] sm:$0xff] %vm4808, %v5190
      %5303 = vst.msk [vmem:[#allocation3 + $0x138] sm:$0xff] %vm4808, %v5191
      %5304 = vst.msk [vmem:[#allocation3 + $0x140] sm:$0xff] %vm4808, %v5192
      %5305 = vst.msk [vmem:[#allocation3 + $0x148] sm:$0xff] %vm4808, %v5193
      %5306 = vst.msk [vmem:[#allocation3 + $0x150] sm:$0xff] %vm4808, %v5194
      %5307 = vst.msk [vmem:[#allocation3 + $0x158] sm:$0xff] %vm4808, %v5195
      %5308 = vst.msk [vmem:[#allocation3 + $0x160] sm:$0xff] %vm4808, %v5196
      %5309 = vst.msk [vmem:[#allocation3 + $0x168] sm:$0xff] %vm4808, %v5197
      %5310 = vst.msk [vmem:[#allocation3 + $0x170] sm:$0xff] %vm4808, %v5198
      %5311 = vst.msk [vmem:[#allocation3 + $0x178] sm:$0xff] %vm4808, %v5199
      %5312 = vst.msk [vmem:[#allocation3 + $0x180] sm:$0xff] %vm4808, %v5200
      %5313 = vst.msk [vmem:[#allocation3 + $0x188] sm:$0xff] %vm4808, %v5201
      %5314 = vst.msk [vmem:[#allocation3 + $0x190] sm:$0xff] %vm4808, %v5202
      %5315 = vst.msk [vmem:[#allocation3 + $0x198] sm:$0xff] %vm4808, %v5203
      %5316 = vst.msk [vmem:[#allocation3 + $0x1a0] sm:$0xff] %vm4808, %v5204
      %5317 = vst.msk [vmem:[#allocation3 + $0x1a8] sm:$0xff] %vm4808, %v5205
      %5318 = vst.msk [vmem:[#allocation3 + $0x1b0] sm:$0xff] %vm4808, %v5206
      %5319 = vst.msk [vmem:[#allocation3 + $0x1b8] sm:$0xff] %vm4808, %v5207
      %5320 = vst.msk [vmem:[#allocation3 + $0x1c0] sm:$0xff] %vm4808, %v5208
      %5321 = vst.msk [vmem:[#allocation3 + $0x1c8] sm:$0xff] %vm4808, %v5209
      %5322 = vst.msk [vmem:[#allocation3 + $0x1d0] sm:$0xff] %vm4808, %v5210
      %5323 = vst.msk [vmem:[#allocation3 + $0x1d8] sm:$0xff] %vm4808, %v5211
      %5324 = vst.msk [vmem:[#allocation3 + $0x1e0] sm:$0xff] %vm4808, %v5212
      %5325 = vst.msk [vmem:[#allocation3 + $0x1e8] sm:$0xff] %vm4808, %v5213
      %5326 = vst.msk [vmem:[#allocation3 + $0x1f0] sm:$0xff] %vm4808, %v5214
      %5327 = vst.msk [vmem:[#allocation3 + $0x1f8] sm:$0xff] %vm4808, %v5215
      %5328 = vst.msk [vmem:[#allocation3 + $0x200] sm:$0xff] %vm4808, %v5216
      %5329 = vst.msk [vmem:[#allocation3 + $0x208] sm:$0xff] %vm4808, %v5217
      %5330 = vst.msk [vmem:[#allocation3 + $0x210] sm:$0xff] %vm4808, %v5218
      %5331 = vst.msk [vmem:[#allocation3 + $0x218] sm:$0xff] %vm4808, %v5219
      %5332 = vst.msk [vmem:[#allocation3 + $0x220] sm:$0xff] %vm4808, %v5220
      %5333 = vst.msk [vmem:[#allocation3 + $0x228] sm:$0xff] %vm4808, %v5221
      %5334 = vst.msk [vmem:[#allocation3 + $0x230] sm:$0xff] %vm4808, %v5222
      %5335 = vst.msk [vmem:[#allocation3 + $0x238] sm:$0xff] %vm4808, %v5223
      %5336 = vst.msk [vmem:[#allocation3 + $0x240] sm:$0xff] %vm4808, %v5224
      %5337 = vst.msk [vmem:[#allocation3 + $0x248] sm:$0xff] %vm4808, %v5225
      %5338 = vst.msk [vmem:[#allocation3 + $0x250] sm:$0xff] %vm4808, %v5226
      %5339 = vst.msk [vmem:[#allocation3 + $0x258] sm:$0xff] %vm4808, %v5227
      %5340 = vst.msk [vmem:[#allocation3 + $0x260] sm:$0xff] %vm4808, %v5228
      %5341 = vst.msk [vmem:[#allocation3 + $0x268] sm:$0xff] %vm4808, %v5229
      %5342 = vst.msk [vmem:[#allocation3 + $0x270] sm:$0xff] %vm4808, %v5230
      %5343 = vst.msk [vmem:[#allocation3 + $0x278] sm:$0xff] %vm4808, %v5231
      %5344 = vst.msk [vmem:[#allocation3 + $0x280] sm:$0xff] %vm4808, %v5232
      %5345 = vst.msk [vmem:[#allocation3 + $0x288] sm:$0xff] %vm4808, %v5233
      %5346 = vst.msk [vmem:[#allocation3 + $0x290] sm:$0xff] %vm4808, %v5234
      %5347 = vst.msk [vmem:[#allocation3 + $0x298] sm:$0xff] %vm4808, %v5235
      %5348 = vst.msk [vmem:[#allocation3 + $0x2a0] sm:$0xff] %vm4808, %v5236
      %5349 = vst.msk [vmem:[#allocation3 + $0x2a8] sm:$0xff] %vm4808, %v5237
      %5350 = vst.msk [vmem:[#allocation3 + $0x2b0] sm:$0xff] %vm4808, %v5238
      %5351 = vst.msk [vmem:[#allocation3 + $0x2b8] sm:$0xff] %vm4808, %v5239
      %5352 = vst.msk [vmem:[#allocation3 + $0x2c0] sm:$0xff] %vm4808, %v5240
      %5353 = vst.msk [vmem:[#allocation3 + $0x2c8] sm:$0xff] %vm4808, %v5241
      %5354 = vst.msk [vmem:[#allocation3 + $0x2d0] sm:$0xff] %vm4808, %v5242
      %5355 = vst.msk [vmem:[#allocation3 + $0x2d8] sm:$0xff] %vm4808, %v5243
      %5356 = vst.msk [vmem:[#allocation3 + $0x2e0] sm:$0xff] %vm4808, %v5244
      %5357 = vst.msk [vmem:[#allocation3 + $0x2e8] sm:$0xff] %vm4808, %v5245
      %5358 = vst.msk [vmem:[#allocation3 + $0x2f0] sm:$0xff] %vm4808, %v5246
      %5359 = vst.msk [vmem:[#allocation3 + $0x2f8] sm:$0xff] %vm4808, %v5247
      %5360 = vst.msk [vmem:[#allocation3 + $0x300] sm:$0xff] %vm4808, %v5248
      %5361 = vst.msk [vmem:[#allocation3 + $0x308] sm:$0xff] %vm4808, %v5249
      %5362 = vst.msk [vmem:[#allocation3 + $0x310] sm:$0xff] %vm4808, %v5250
      %5363 = vst.msk [vmem:[#allocation3 + $0x318] sm:$0xff] %vm4808, %v5251
      %5364 = vst.msk [vmem:[#allocation3 + $0x320] sm:$0xff] %vm4808, %v5252
      %5365 = vst.msk [vmem:[#allocation3 + $0x328] sm:$0xff] %vm4808, %v5253
      %5366 = vst.msk [vmem:[#allocation3 + $0x330] sm:$0xff] %vm4808, %v5254
      %5367 = vst.msk [vmem:[#allocation3 + $0x338] sm:$0xff] %vm4808, %v5255
      %5368 = vst.msk [vmem:[#allocation3 + $0x340] sm:$0xff] %vm4808, %v5256
      %5369 = vst.msk [vmem:[#allocation3 + $0x348] sm:$0xff] %vm4808, %v5257
      %5370 = vst.msk [vmem:[#allocation3 + $0x350] sm:$0xff] %vm4808, %v5258
      %5371 = vst.msk [vmem:[#allocation3 + $0x358] sm:$0xff] %vm4808, %v5259
      %5372 = vst.msk [vmem:[#allocation3 + $0x360] sm:$0xff] %vm4808, %v5260
      %5373 = vst.msk [vmem:[#allocation3 + $0x368] sm:$0xff] %vm4808, %v5261
      %5374 = vst.msk [vmem:[#allocation3 + $0x370] sm:$0xff] %vm4808, %v5262
      %5375 = vst.msk [vmem:[#allocation3 + $0x378] sm:$0xff] %vm4808, %v5263
      %5376 = vst.msk [vmem:[#allocation4] sm:$0xff] %vm4808, 0.0
      %5377 = vst.msk [vmem:[#allocation4 + $0x8] sm:$0xff] %vm4808, 0.0
      %5378 = vst.msk [vmem:[#allocation4 + $0x10] sm:$0xff] %vm4808, 0.0
      %5379 = vst.msk [vmem:[#allocation4 + $0x18] sm:$0xff] %vm4808, 0.0
      %5380 = vst.msk [vmem:[#allocation4 + $0x20] sm:$0xff] %vm4808, 0.0
      %5381 = vst.msk [vmem:[#allocation4 + $0x28] sm:$0xff] %vm4808, 0.0
      %5382 = vst.msk [vmem:[#allocation4 + $0x30] sm:$0xff] %vm4808, 0.0
      %5383 = vst.msk [vmem:[#allocation4 + $0x38] sm:$0xff] %vm4808, 0.0
      %5384 = vst.msk [vmem:[#allocation4 + $0x40] sm:$0xff] %vm4808, 0.0
      %5385 = vst.msk [vmem:[#allocation4 + $0x48] sm:$0xff] %vm4808, 0.0
      %5386 = vst.msk [vmem:[#allocation4 + $0x50] sm:$0xff] %vm4808, 0.0
      %5387 = vst.msk [vmem:[#allocation4 + $0x58] sm:$0xff] %vm4808, 0.0
      %5388 = vst.msk [vmem:[#allocation4 + $0x60] sm:$0xff] %vm4808, 0.0
      %5389 = vst.msk [vmem:[#allocation4 + $0x68] sm:$0xff] %vm4808, 0.0
      %5390 = vst.msk [vmem:[#allocation4 + $0x70] sm:$0xff] %vm4808, 0.0
      %5391 = vst.msk [vmem:[#allocation4 + $0x78] sm:$0xff] %vm4808, 0.0
      %5392 = vst.msk [vmem:[#allocation4 + $0x80] sm:$0xff] %vm4808, 0.0
      %5393 = vst.msk [vmem:[#allocation4 + $0x88] sm:$0xff] %vm4808, 0.0
      %5394 = vst.msk [vmem:[#allocation4 + $0x90] sm:$0xff] %vm4808, 0.0
      %5395 = vst.msk [vmem:[#allocation4 + $0x98] sm:$0xff] %vm4808, 0.0
      %5396 = vst.msk [vmem:[#allocation4 + $0xa0] sm:$0xff] %vm4808, 0.0
      %5397 = vst.msk [vmem:[#allocation4 + $0xa8] sm:$0xff] %vm4808, 0.0
      %5398 = vst.msk [vmem:[#allocation4 + $0xb0] sm:$0xff] %vm4808, 0.0
      %5399 = vst.msk [vmem:[#allocation4 + $0xb8] sm:$0xff] %vm4808, 0.0
      %5400 = vst.msk [vmem:[#allocation4 + $0xc0] sm:$0xff] %vm4808, 0.0
      %5401 = vst.msk [vmem:[#allocation4 + $0xc8] sm:$0xff] %vm4808, 0.0
      %5402 = vst.msk [vmem:[#allocation4 + $0xd0] sm:$0xff] %vm4808, 0.0
      %5403 = vst.msk [vmem:[#allocation4 + $0xd8] sm:$0xff] %vm4808, 0.0
      %5404 = vst.msk [vmem:[#allocation4 + $0xe0] sm:$0xff] %vm4808, 0.0
      %5405 = vst.msk [vmem:[#allocation4 + $0xe8] sm:$0xff] %vm4808, 0.0
      %5406 = vst.msk [vmem:[#allocation4 + $0xf0] sm:$0xff] %vm4808, 0.0
      %5407 = vst.msk [vmem:[#allocation4 + $0xf8] sm:$0xff] %vm4808, 0.0
      %5408 = vst.msk [vmem:[#allocation4 + $0x100] sm:$0xff] %vm4808, 0.0
      %5409 = vst.msk [vmem:[#allocation4 + $0x108] sm:$0xff] %vm4808, 0.0
      %5410 = vst.msk [vmem:[#allocation4 + $0x110] sm:$0xff] %vm4808, 0.0
      %5411 = vst.msk [vmem:[#allocation4 + $0x118] sm:$0xff] %vm4808, 0.0
      %v5412 = vld [vmem:[#allocation3] ss:$2 sm:$0xff]
      %s5413 = scalar_lea.vmem [#allocation3], 16
      %v5414 = vld [vmem:[%s5413] ss:$2 sm:$0x3f]
      %s5415 = scalar_lea.vmem [#allocation3], 1
      %v5416 = vld [vmem:[%s5415] ss:$2 sm:$0xff]
      %s5417 = scalar_lea.vmem [#allocation3], 17
      %v5418 = vld [vmem:[%s5417] ss:$2 sm:$0x3f]
      %v5419 = vmax.f32 %v5412, %v5416
      %v5420 = vmax.f32 %v5414, %v5418
      %s5421 = scalar_lea.vmem [#allocation3], 32
      %v5422 = vld [vmem:[%s5421] ss:$2 sm:$0xff]
      %s5423 = scalar_lea.vmem [#allocation3], 48
      %v5424 = vld [vmem:[%s5423] ss:$2 sm:$0x3f]
      %s5425 = scalar_lea.vmem [#allocation3], 33
      %v5426 = vld [vmem:[%s5425] ss:$2 sm:$0xff]
      %s5427 = scalar_lea.vmem [#allocation3], 49
      %v5428 = vld [vmem:[%s5427] ss:$2 sm:$0x3f]
      %v5429 = vmax.f32 %v5422, %v5426
      %v5430 = vmax.f32 %v5424, %v5428
      %v5431 = vmax.f32 %v5419, %v5429
      %v5432 = vmax.f32 %v5420, %v5430
      %5433 = vst.msk [vmem:[#allocation4 + $0x11] sm:$0xff] %vm4808, %v5431
      %vm5434 = vcmask 521216
      %5435 = vst.msk [vmem:[#allocation4 + $0x19] sm:$0x3f] %vm5434, %v5432
      %s5436 = scalar_lea.vmem [#allocation3], 64
      %v5437 = vld [vmem:[%s5436] ss:$2 sm:$0xff]
      %s5438 = scalar_lea.vmem [#allocation3], 80
      %v5439 = vld [vmem:[%s5438] ss:$2 sm:$0x3f]
      %s5440 = scalar_lea.vmem [#allocation3], 65
      %v5441 = vld [vmem:[%s5440] ss:$2 sm:$0xff]
      %s5442 = scalar_lea.vmem [#allocation3], 81
      %v5443 = vld [vmem:[%s5442] ss:$2 sm:$0x3f]
      %v5444 = vmax.f32 %v5437, %v5441
      %v5445 = vmax.f32 %v5439, %v5443
      %s5446 = scalar_lea.vmem [#allocation3], 96
      %v5447 = vld [vmem:[%s5446] ss:$2 sm:$0xff]
      %s5448 = scalar_lea.vmem [#allocation3], 112
      %v5449 = vld [vmem:[%s5448] ss:$2 sm:$0x3f]
      %s5450 = scalar_lea.vmem [#allocation3], 97
      %v5451 = vld [vmem:[%s5450] ss:$2 sm:$0xff]
      %s5452 = scalar_lea.vmem [#allocation3], 113
      %v5453 = vld [vmem:[%s5452] ss:$2 sm:$0x3f]
      %v5454 = vmax.f32 %v5447, %v5451
      %v5455 = vmax.f32 %v5449, %v5453
      %v5456 = vmax.f32 %v5444, %v5454
      %v5457 = vmax.f32 %v5445, %v5455
      %5458 = vst.msk [vmem:[#allocation4 + $0x21] sm:$0xff] %vm4808, %v5456
      %5459 = vst.msk [vmem:[#allocation4 + $0x29] sm:$0x3f] %vm5434, %v5457
      %s5460 = scalar_lea.vmem [#allocation3], 128
      %v5461 = vld [vmem:[%s5460] ss:$2 sm:$0xff]
      %s5462 = scalar_lea.vmem [#allocation3], 144
      %v5463 = vld [vmem:[%s5462] ss:$2 sm:$0x3f]
      %s5464 = scalar_lea.vmem [#allocation3], 129
      %v5465 = vld [vmem:[%s5464] ss:$2 sm:$0xff]
      %s5466 = scalar_lea.vmem [#allocation3], 145
      %v5467 = vld [vmem:[%s5466] ss:$2 sm:$0x3f]
      %v5468 = vmax.f32 %v5461, %v5465
      %v5469 = vmax.f32 %v5463, %v5467
      %s5470 = scalar_lea.vmem [#allocation3], 160
      %v5471 = vld [vmem:[%s5470] ss:$2 sm:$0xff]
      %s5472 = scalar_lea.vmem [#allocation3], 176
      %v5473 = vld [vmem:[%s5472] ss:$2 sm:$0x3f]
      %s5474 = scalar_lea.vmem [#allocation3], 161
      %v5475 = vld [vmem:[%s5474] ss:$2 sm:$0xff]
      %s5476 = scalar_lea.vmem [#allocation3], 177
      %v5477 = vld [vmem:[%s5476] ss:$2 sm:$0x3f]
      %v5478 = vmax.f32 %v5471, %v5475
      %v5479 = vmax.f32 %v5473, %v5477
      %v5480 = vmax.f32 %v5468, %v5478
      %v5481 = vmax.f32 %v5469, %v5479
      %5482 = vst.msk [vmem:[#allocation4 + $0x31] sm:$0xff] %vm4808, %v5480
      %5483 = vst.msk [vmem:[#allocation4 + $0x39] sm:$0x3f] %vm5434, %v5481
      %s5484 = scalar_lea.vmem [#allocation3], 192
      %v5485 = vld [vmem:[%s5484] ss:$2 sm:$0xff]
      %s5486 = scalar_lea.vmem [#allocation3], 208
      %v5487 = vld [vmem:[%s5486] ss:$2 sm:$0x3f]
      %s5488 = scalar_lea.vmem [#allocation3], 193
      %v5489 = vld [vmem:[%s5488] ss:$2 sm:$0xff]
      %s5490 = scalar_lea.vmem [#allocation3], 209
      %v5491 = vld [vmem:[%s5490] ss:$2 sm:$0x3f]
      %v5492 = vmax.f32 %v5485, %v5489
      %v5493 = vmax.f32 %v5487, %v5491
      %s5494 = scalar_lea.vmem [#allocation3], 224
      %v5495 = vld [vmem:[%s5494] ss:$2 sm:$0xff]
      %s5496 = scalar_lea.vmem [#allocation3], 240
      %v5497 = vld [vmem:[%s5496] ss:$2 sm:$0x3f]
      %s5498 = scalar_lea.vmem [#allocation3], 225
      %v5499 = vld [vmem:[%s5498] ss:$2 sm:$0xff]
      %s5500 = scalar_lea.vmem [#allocation3], 241
      %v5501 = vld [vmem:[%s5500] ss:$2 sm:$0x3f]
      %v5502 = vmax.f32 %v5495, %v5499
      %v5503 = vmax.f32 %v5497, %v5501
      %v5504 = vmax.f32 %v5492, %v5502
      %v5505 = vmax.f32 %v5493, %v5503
      %5506 = vst.msk [vmem:[#allocation4 + $0x41] sm:$0xff] %vm4808, %v5504
      %5507 = vst.msk [vmem:[#allocation4 + $0x49] sm:$0x3f] %vm5434, %v5505
      %s5508 = scalar_lea.vmem [#allocation3], 256
      %v5509 = vld [vmem:[%s5508] ss:$2 sm:$0xff]
      %s5510 = scalar_lea.vmem [#allocation3], 272
      %v5511 = vld [vmem:[%s5510] ss:$2 sm:$0x3f]
      %s5512 = scalar_lea.vmem [#allocation3], 257
      %v5513 = vld [vmem:[%s5512] ss:$2 sm:$0xff]
      %s5514 = scalar_lea.vmem [#allocation3], 273
      %v5515 = vld [vmem:[%s5514] ss:$2 sm:$0x3f]
      %v5516 = vmax.f32 %v5509, %v5513
      %v5517 = vmax.f32 %v5511, %v5515
      %s5518 = scalar_lea.vmem [#allocation3], 288
      %v5519 = vld [vmem:[%s5518] ss:$2 sm:$0xff]
      %s5520 = scalar_lea.vmem [#allocation3], 304
      %v5521 = vld [vmem:[%s5520] ss:$2 sm:$0x3f]
      %s5522 = scalar_lea.vmem [#allocation3], 289
      %v5523 = vld [vmem:[%s5522] ss:$2 sm:$0xff]
      %s5524 = scalar_lea.vmem [#allocation3], 305
      %v5525 = vld [vmem:[%s5524] ss:$2 sm:$0x3f]
      %v5526 = vmax.f32 %v5519, %v5523
      %v5527 = vmax.f32 %v5521, %v5525
      %v5528 = vmax.f32 %v5516, %v5526
      %v5529 = vmax.f32 %v5517, %v5527
      %5530 = vst.msk [vmem:[#allocation4 + $0x51] sm:$0xff] %vm4808, %v5528
      %5531 = vst.msk [vmem:[#allocation4 + $0x59] sm:$0x3f] %vm5434, %v5529
      %s5532 = scalar_lea.vmem [#allocation3], 320
      %v5533 = vld [vmem:[%s5532] ss:$2 sm:$0xff]
      %s5534 = scalar_lea.vmem [#allocation3], 336
      %v5535 = vld [vmem:[%s5534] ss:$2 sm:$0x3f]
      %s5536 = scalar_lea.vmem [#allocation3], 321
      %v5537 = vld [vmem:[%s5536] ss:$2 sm:$0xff]
      %s5538 = scalar_lea.vmem [#allocation3], 337
      %v5539 = vld [vmem:[%s5538] ss:$2 sm:$0x3f]
      %v5540 = vmax.f32 %v5533, %v5537
      %v5541 = vmax.f32 %v5535, %v5539
      %s5542 = scalar_lea.vmem [#allocation3], 352
      %v5543 = vld [vmem:[%s5542] ss:$2 sm:$0xff]
      %s5544 = scalar_lea.vmem [#allocation3], 368
      %v5545 = vld [vmem:[%s5544] ss:$2 sm:$0x3f]
      %s5546 = scalar_lea.vmem [#allocation3], 353
      %v5547 = vld [vmem:[%s5546] ss:$2 sm:$0xff]
      %s5548 = scalar_lea.vmem [#allocation3], 369
      %v5549 = vld [vmem:[%s5548] ss:$2 sm:$0x3f]
      %v5550 = vmax.f32 %v5543, %v5547
      %v5551 = vmax.f32 %v5545, %v5549
      %v5552 = vmax.f32 %v5540, %v5550
      %v5553 = vmax.f32 %v5541, %v5551
      %5554 = vst.msk [vmem:[#allocation4 + $0x61] sm:$0xff] %vm4808, %v5552
      %5555 = vst.msk [vmem:[#allocation4 + $0x69] sm:$0x3f] %vm5434, %v5553
      %s5556 = scalar_lea.vmem [#allocation3], 384
      %v5557 = vld [vmem:[%s5556] ss:$2 sm:$0xff]
      %s5558 = scalar_lea.vmem [#allocation3], 400
      %v5559 = vld [vmem:[%s5558] ss:$2 sm:$0x3f]
      %s5560 = scalar_lea.vmem [#allocation3], 385
      %v5561 = vld [vmem:[%s5560] ss:$2 sm:$0xff]
      %s5562 = scalar_lea.vmem [#allocation3], 401
      %v5563 = vld [vmem:[%s5562] ss:$2 sm:$0x3f]
      %v5564 = vmax.f32 %v5557, %v5561
      %v5565 = vmax.f32 %v5559, %v5563
      %s5566 = scalar_lea.vmem [#allocation3], 416
      %v5567 = vld [vmem:[%s5566] ss:$2 sm:$0xff]
      %s5568 = scalar_lea.vmem [#allocation3], 432
      %v5569 = vld [vmem:[%s5568] ss:$2 sm:$0x3f]
      %s5570 = scalar_lea.vmem [#allocation3], 417
      %v5571 = vld [vmem:[%s5570] ss:$2 sm:$0xff]
      %s5572 = scalar_lea.vmem [#allocation3], 433
      %v5573 = vld [vmem:[%s5572] ss:$2 sm:$0x3f]
      %v5574 = vmax.f32 %v5567, %v5571
      %v5575 = vmax.f32 %v5569, %v5573
      %v5576 = vmax.f32 %v5564, %v5574
      %v5577 = vmax.f32 %v5565, %v5575
      %5578 = vst.msk [vmem:[#allocation4 + $0x71] sm:$0xff] %vm4808, %v5576
      %5579 = vst.msk [vmem:[#allocation4 + $0x79] sm:$0x3f] %vm5434, %v5577
      %s5580 = scalar_lea.vmem [#allocation3], 448
      %v5581 = vld [vmem:[%s5580] ss:$2 sm:$0xff]
      %s5582 = scalar_lea.vmem [#allocation3], 464
      %v5583 = vld [vmem:[%s5582] ss:$2 sm:$0x3f]
      %s5584 = scalar_lea.vmem [#allocation3], 449
      %v5585 = vld [vmem:[%s5584] ss:$2 sm:$0xff]
      %s5586 = scalar_lea.vmem [#allocation3], 465
      %v5587 = vld [vmem:[%s5586] ss:$2 sm:$0x3f]
      %v5588 = vmax.f32 %v5581, %v5585
      %v5589 = vmax.f32 %v5583, %v5587
      %s5590 = scalar_lea.vmem [#allocation3], 480
      %v5591 = vld [vmem:[%s5590] ss:$2 sm:$0xff]
      %s5592 = scalar_lea.vmem [#allocation3], 496
      %v5593 = vld [vmem:[%s5592] ss:$2 sm:$0x3f]
      %s5594 = scalar_lea.vmem [#allocation3], 481
      %v5595 = vld [vmem:[%s5594] ss:$2 sm:$0xff]
      %s5596 = scalar_lea.vmem [#allocation3], 497
      %v5597 = vld [vmem:[%s5596] ss:$2 sm:$0x3f]
      %v5598 = vmax.f32 %v5591, %v5595
      %v5599 = vmax.f32 %v5593, %v5597
      %v5600 = vmax.f32 %v5588, %v5598
      %v5601 = vmax.f32 %v5589, %v5599
      %5602 = vst.msk [vmem:[#allocation4 + $0x81] sm:$0xff] %vm4808, %v5600
      %5603 = vst.msk [vmem:[#allocation4 + $0x89] sm:$0x3f] %vm5434, %v5601
      %s5604 = scalar_lea.vmem [#allocation3], 512
      %v5605 = vld [vmem:[%s5604] ss:$2 sm:$0xff]
      %s5606 = scalar_lea.vmem [#allocation3], 528
      %v5607 = vld [vmem:[%s5606] ss:$2 sm:$0x3f]
      %s5608 = scalar_lea.vmem [#allocation3], 513
      %v5609 = vld [vmem:[%s5608] ss:$2 sm:$0xff]
      %s5610 = scalar_lea.vmem [#allocation3], 529
      %v5611 = vld [vmem:[%s5610] ss:$2 sm:$0x3f]
      %v5612 = vmax.f32 %v5605, %v5609
      %v5613 = vmax.f32 %v5607, %v5611
      %s5614 = scalar_lea.vmem [#allocation3], 544
      %v5615 = vld [vmem:[%s5614] ss:$2 sm:$0xff]
      %s5616 = scalar_lea.vmem [#allocation3], 560
      %v5617 = vld [vmem:[%s5616] ss:$2 sm:$0x3f]
      %s5618 = scalar_lea.vmem [#allocation3], 545
      %v5619 = vld [vmem:[%s5618] ss:$2 sm:$0xff]
      %s5620 = scalar_lea.vmem [#allocation3], 561
      %v5621 = vld [vmem:[%s5620] ss:$2 sm:$0x3f]
      %v5622 = vmax.f32 %v5615, %v5619
      %v5623 = vmax.f32 %v5617, %v5621
      %v5624 = vmax.f32 %v5612, %v5622
      %v5625 = vmax.f32 %v5613, %v5623
      %5626 = vst.msk [vmem:[#allocation4 + $0x91] sm:$0xff] %vm4808, %v5624
      %5627 = vst.msk [vmem:[#allocation4 + $0x99] sm:$0x3f] %vm5434, %v5625
      %s5628 = scalar_lea.vmem [#allocation3], 576
      %v5629 = vld [vmem:[%s5628] ss:$2 sm:$0xff]
      %s5630 = scalar_lea.vmem [#allocation3], 592
      %v5631 = vld [vmem:[%s5630] ss:$2 sm:$0x3f]
      %s5632 = scalar_lea.vmem [#allocation3], 577
      %v5633 = vld [vmem:[%s5632] ss:$2 sm:$0xff]
      %s5634 = scalar_lea.vmem [#allocation3], 593
      %v5635 = vld [vmem:[%s5634] ss:$2 sm:$0x3f]
      %v5636 = vmax.f32 %v5629, %v5633
      %v5637 = vmax.f32 %v5631, %v5635
      %s5638 = scalar_lea.vmem [#allocation3], 608
      %v5639 = vld [vmem:[%s5638] ss:$2 sm:$0xff]
      %s5640 = scalar_lea.vmem [#allocation3], 624
      %v5641 = vld [vmem:[%s5640] ss:$2 sm:$0x3f]
      %s5642 = scalar_lea.vmem [#allocation3], 609
      %v5643 = vld [vmem:[%s5642] ss:$2 sm:$0xff]
      %s5644 = scalar_lea.vmem [#allocation3], 625
      %v5645 = vld [vmem:[%s5644] ss:$2 sm:$0x3f]
      %v5646 = vmax.f32 %v5639, %v5643
      %v5647 = vmax.f32 %v5641, %v5645
      %v5648 = vmax.f32 %v5636, %v5646
      %v5649 = vmax.f32 %v5637, %v5647
      %5650 = vst.msk [vmem:[#allocation4 + $0xa1] sm:$0xff] %vm4808, %v5648
      %5651 = vst.msk [vmem:[#allocation4 + $0xa9] sm:$0x3f] %vm5434, %v5649
      %s5652 = scalar_lea.vmem [#allocation3], 640
      %v5653 = vld [vmem:[%s5652] ss:$2 sm:$0xff]
      %s5654 = scalar_lea.vmem [#allocation3], 656
      %v5655 = vld [vmem:[%s5654] ss:$2 sm:$0x3f]
      %s5656 = scalar_lea.vmem [#allocation3], 641
      %v5657 = vld [vmem:[%s5656] ss:$2 sm:$0xff]
      %s5658 = scalar_lea.vmem [#allocation3], 657
      %v5659 = vld [vmem:[%s5658] ss:$2 sm:$0x3f]
      %v5660 = vmax.f32 %v5653, %v5657
      %v5661 = vmax.f32 %v5655, %v5659
      %s5662 = scalar_lea.vmem [#allocation3], 672
      %v5663 = vld [vmem:[%s5662] ss:$2 sm:$0xff]
      %s5664 = scalar_lea.vmem [#allocation3], 688
      %v5665 = vld [vmem:[%s5664] ss:$2 sm:$0x3f]
      %s5666 = scalar_lea.vmem [#allocation3], 673
      %v5667 = vld [vmem:[%s5666] ss:$2 sm:$0xff]
      %s5668 = scalar_lea.vmem [#allocation3], 689
      %v5669 = vld [vmem:[%s5668] ss:$2 sm:$0x3f]
      %v5670 = vmax.f32 %v5663, %v5667
      %v5671 = vmax.f32 %v5665, %v5669
      %v5672 = vmax.f32 %v5660, %v5670
      %v5673 = vmax.f32 %v5661, %v5671
      %5674 = vst.msk [vmem:[#allocation4 + $0xb1] sm:$0xff] %vm4808, %v5672
      %5675 = vst.msk [vmem:[#allocation4 + $0xb9] sm:$0x3f] %vm5434, %v5673
      %s5676 = scalar_lea.vmem [#allocation3], 704
      %v5677 = vld [vmem:[%s5676] ss:$2 sm:$0xff]
      %s5678 = scalar_lea.vmem [#allocation3], 720
      %v5679 = vld [vmem:[%s5678] ss:$2 sm:$0x3f]
      %s5680 = scalar_lea.vmem [#allocation3], 705
      %v5681 = vld [vmem:[%s5680] ss:$2 sm:$0xff]
      %s5682 = scalar_lea.vmem [#allocation3], 721
      %v5683 = vld [vmem:[%s5682] ss:$2 sm:$0x3f]
      %v5684 = vmax.f32 %v5677, %v5681
      %v5685 = vmax.f32 %v5679, %v5683
      %s5686 = scalar_lea.vmem [#allocation3], 736
      %v5687 = vld [vmem:[%s5686] ss:$2 sm:$0xff]
      %s5688 = scalar_lea.vmem [#allocation3], 752
      %v5689 = vld [vmem:[%s5688] ss:$2 sm:$0x3f]
      %s5690 = scalar_lea.vmem [#allocation3], 737
      %v5691 = vld [vmem:[%s5690] ss:$2 sm:$0xff]
      %s5692 = scalar_lea.vmem [#allocation3], 753
      %v5693 = vld [vmem:[%s5692] ss:$2 sm:$0x3f]
      %v5694 = vmax.f32 %v5687, %v5691
      %v5695 = vmax.f32 %v5689, %v5693
      %v5696 = vmax.f32 %v5684, %v5694
      %v5697 = vmax.f32 %v5685, %v5695
      %5698 = vst.msk [vmem:[#allocation4 + $0xc1] sm:$0xff] %vm4808, %v5696
      %5699 = vst.msk [vmem:[#allocation4 + $0xc9] sm:$0x3f] %vm5434, %v5697
      %s5700 = scalar_lea.vmem [#allocation3], 768
      %v5701 = vld [vmem:[%s5700] ss:$2 sm:$0xff]
      %s5702 = scalar_lea.vmem [#allocation3], 784
      %v5703 = vld [vmem:[%s5702] ss:$2 sm:$0x3f]
      %s5704 = scalar_lea.vmem [#allocation3], 769
      %v5705 = vld [vmem:[%s5704] ss:$2 sm:$0xff]
      %s5706 = scalar_lea.vmem [#allocation3], 785
      %v5707 = vld [vmem:[%s5706] ss:$2 sm:$0x3f]
      %v5708 = vmax.f32 %v5701, %v5705
      %v5709 = vmax.f32 %v5703, %v5707
      %s5710 = scalar_lea.vmem [#allocation3], 800
      %v5711 = vld [vmem:[%s5710] ss:$2 sm:$0xff]
      %s5712 = scalar_lea.vmem [#allocation3], 816
      %v5713 = vld [vmem:[%s5712] ss:$2 sm:$0x3f]
      %s5714 = scalar_lea.vmem [#allocation3], 801
      %v5715 = vld [vmem:[%s5714] ss:$2 sm:$0xff]
      %s5716 = scalar_lea.vmem [#allocation3], 817
      %v5717 = vld [vmem:[%s5716] ss:$2 sm:$0x3f]
      %v5718 = vmax.f32 %v5711, %v5715
      %v5719 = vmax.f32 %v5713, %v5717
      %v5720 = vmax.f32 %v5708, %v5718
      %v5721 = vmax.f32 %v5709, %v5719
      %5722 = vst.msk [vmem:[#allocation4 + $0xd1] sm:$0xff] %vm4808, %v5720
      %5723 = vst.msk [vmem:[#allocation4 + $0xd9] sm:$0x3f] %vm5434, %v5721
      %s5724 = scalar_lea.vmem [#allocation3], 832
      %v5725 = vld [vmem:[%s5724] ss:$2 sm:$0xff]
      %s5726 = scalar_lea.vmem [#allocation3], 848
      %v5727 = vld [vmem:[%s5726] ss:$2 sm:$0x3f]
      %s5728 = scalar_lea.vmem [#allocation3], 833
      %v5729 = vld [vmem:[%s5728] ss:$2 sm:$0xff]
      %s5730 = scalar_lea.vmem [#allocation3], 849
      %v5731 = vld [vmem:[%s5730] ss:$2 sm:$0x3f]
      %v5732 = vmax.f32 %v5725, %v5729
      %v5733 = vmax.f32 %v5727, %v5731
      %s5734 = scalar_lea.vmem [#allocation3], 864
      %v5735 = vld [vmem:[%s5734] ss:$2 sm:$0xff]
      %s5736 = scalar_lea.vmem [#allocation3], 880
      %v5737 = vld [vmem:[%s5736] ss:$2 sm:$0x3f]
      %s5738 = scalar_lea.vmem [#allocation3], 865
      %v5739 = vld [vmem:[%s5738] ss:$2 sm:$0xff]
      %s5740 = scalar_lea.vmem [#allocation3], 881
      %v5741 = vld [vmem:[%s5740] ss:$2 sm:$0x3f]
      %v5742 = vmax.f32 %v5735, %v5739
      %v5743 = vmax.f32 %v5737, %v5741
      %v5744 = vmax.f32 %v5732, %v5742
      %v5745 = vmax.f32 %v5733, %v5743
      %5746 = vst.msk [vmem:[#allocation4 + $0xe1] sm:$0xff] %vm4808, %v5744
      %5747 = vst.msk [vmem:[#allocation4 + $0xe9] sm:$0x3f] %vm5434, %v5745
      %v5748 = vld [vmem:[#allocation4] sm:$0xff]
      %v5749 = vld [vmem:[#allocation4 + $0x8] sm:$0xff]
      %v5750 = vld [vmem:[#allocation4 + $0x10] sm:$0xff]
      %v5751 = vld [vmem:[#allocation4 + $0x18] sm:$0xff]
      %v5752 = vld [vmem:[#allocation4 + $0x20] sm:$0xff]
      %v5753 = vld [vmem:[#allocation4 + $0x28] sm:$0xff]
      %v5754 = vld [vmem:[#allocation4 + $0x30] sm:$0xff]
      %v5755 = vld [vmem:[#allocation4 + $0x38] sm:$0xff]
      %v5756 = vld [vmem:[#allocation4 + $0x40] sm:$0xff]
      %v5757 = vld [vmem:[#allocation4 + $0x48] sm:$0xff]
      %v5758 = vld [vmem:[#allocation4 + $0x50] sm:$0xff]
      %v5759 = vld [vmem:[#allocation4 + $0x58] sm:$0xff]
      %v5760 = vld [vmem:[#allocation4 + $0x60] sm:$0xff]
      %v5761 = vld [vmem:[#allocation4 + $0x68] sm:$0xff]
      %v5762 = vld [vmem:[#allocation4 + $0x70] sm:$0xff]
      %v5763 = vld [vmem:[#allocation4 + $0x78] sm:$0xff]
      %v5764 = vld [vmem:[#allocation4 + $0x80] sm:$0xff]
      %v5765 = vld [vmem:[#allocation4 + $0x88] sm:$0xff]
      %v5766 = vld [vmem:[#allocation4 + $0x90] sm:$0xff]
      %v5767 = vld [vmem:[#allocation4 + $0x98] sm:$0xff]
      %v5768 = vld [vmem:[#allocation4 + $0xa0] sm:$0xff]
      %v5769 = vld [vmem:[#allocation4 + $0xa8] sm:$0xff]
      %v5770 = vld [vmem:[#allocation4 + $0xb0] sm:$0xff]
      %v5771 = vld [vmem:[#allocation4 + $0xb8] sm:$0xff]
      %v5772 = vld [vmem:[#allocation4 + $0xc0] sm:$0xff]
      %v5773 = vld [vmem:[#allocation4 + $0xc8] sm:$0xff]
      %v5774 = vld [vmem:[#allocation4 + $0xd0] sm:$0xff]
      %v5775 = vld [vmem:[#allocation4 + $0xd8] sm:$0xff]
      %v5776 = vpack.c.bf16 %v5749, %v5748
      %v5777 = vpack.c.bf16 %v5751, %v5750
      %v5778 = vpack.c.bf16 %v5753, %v5752
      %v5779 = vpack.c.bf16 %v5755, %v5754
      %v5780 = vpack.c.bf16 %v5757, %v5756
      %v5781 = vpack.c.bf16 %v5759, %v5758
      %v5782 = vpack.c.bf16 %v5761, %v5760
      %v5783 = vpack.c.bf16 %v5763, %v5762
      %v5784 = vpack.c.bf16 %v5765, %v5764
      %v5785 = vpack.c.bf16 %v5767, %v5766
      %v5786 = vpack.c.bf16 %v5769, %v5768
      %v5787 = vpack.c.bf16 %v5771, %v5770
      %v5788 = vpack.c.bf16 %v5773, %v5772
      %v5789 = vpack.c.bf16 %v5775, %v5774
      %5790 = vst.msk [vmem:[#allocation5] sm:$0xff] %vm4808, %v5776
      %5791 = vst.msk [vmem:[#allocation5 + $0x28] sm:$0xff] %vm4808, %v5777
      %5792 = vst.msk [vmem:[#allocation5 + $0x50] sm:$0xff] %vm4808, %v5778
      %5793 = vst.msk [vmem:[#allocation5 + $0x78] sm:$0xff] %vm4808, %v5779
      %5794 = vst.msk [vmem:[#allocation5 + $0xa0] sm:$0xff] %vm4808, %v5780
      %5795 = vst.msk [vmem:[#allocation5 + $0xc8] sm:$0xff] %vm4808, %v5781
      %5796 = vst.msk [vmem:[#allocation5 + $0xf0] sm:$0xff] %vm4808, %v5782
      %5797 = vst.msk [vmem:[#allocation5 + $0x118] sm:$0xff] %vm4808, %v5783
      %5798 = vst.msk [vmem:[#allocation5 + $0x140] sm:$0xff] %vm4808, %v5784
      %5799 = vst.msk [vmem:[#allocation5 + $0x168] sm:$0xff] %vm4808, %v5785
      %5800 = vst.msk [vmem:[#allocation5 + $0x190] sm:$0xff] %vm4808, %v5786
      %5801 = vst.msk [vmem:[#allocation5 + $0x1b8] sm:$0xff] %vm4808, %v5787
      %5802 = vst.msk [vmem:[#allocation5 + $0x1e0] sm:$0xff] %vm4808, %v5788
      %5803 = vst.msk [vmem:[#allocation5 + $0x208] sm:$0xff] %vm4808, %v5789
      %v5804 = vld [vmem:[#allocation4 + $0x1] sm:$0xff]
      %v5805 = vld [vmem:[#allocation4 + $0x9] sm:$0xff]
      %v5806 = vld [vmem:[#allocation4 + $0x11] sm:$0xff]
      %v5807 = vld [vmem:[#allocation4 + $0x19] sm:$0xff]
      %v5808 = vld [vmem:[#allocation4 + $0x21] sm:$0xff]
      %v5809 = vld [vmem:[#allocation4 + $0x29] sm:$0xff]
      %v5810 = vld [vmem:[#allocation4 + $0x31] sm:$0xff]
      %v5811 = vld [vmem:[#allocation4 + $0x39] sm:$0xff]
      %v5812 = vld [vmem:[#allocation4 + $0x41] sm:$0xff]
      %v5813 = vld [vmem:[#allocation4 + $0x49] sm:$0xff]
      %v5814 = vld [vmem:[#allocation4 + $0x51] sm:$0xff]
      %v5815 = vld [vmem:[#allocation4 + $0x59] sm:$0xff]
      %v5816 = vld [vmem:[#allocation4 + $0x61] sm:$0xff]
      %v5817 = vld [vmem:[#allocation4 + $0x69] sm:$0xff]
      %v5818 = vld [vmem:[#allocation4 + $0x71] sm:$0xff]
      %v5819 = vld [vmem:[#allocation4 + $0x79] sm:$0xff]
      %v5820 = vld [vmem:[#allocation4 + $0x81] sm:$0xff]
      %v5821 = vld [vmem:[#allocation4 + $0x89] sm:$0xff]
      %v5822 = vld [vmem:[#allocation4 + $0x91] sm:$0xff]
      %v5823 = vld [vmem:[#allocation4 + $0x99] sm:$0xff]
      %v5824 = vld [vmem:[#allocation4 + $0xa1] sm:$0xff]
      %v5825 = vld [vmem:[#allocation4 + $0xa9] sm:$0xff]
      %v5826 = vld [vmem:[#allocation4 + $0xb1] sm:$0xff]
      %v5827 = vld [vmem:[#allocation4 + $0xb9] sm:$0xff]
      %v5828 = vld [vmem:[#allocation4 + $0xc1] sm:$0xff]
      %v5829 = vld [vmem:[#allocation4 + $0xc9] sm:$0xff]
      %v5830 = vld [vmem:[#allocation4 + $0xd1] sm:$0xff]
      %v5831 = vld [vmem:[#allocation4 + $0xd9] sm:$0xff]
      %v5832 = vpack.c.bf16 %v5805, %v5804
      %v5833 = vpack.c.bf16 %v5807, %v5806
      %v5834 = vpack.c.bf16 %v5809, %v5808
      %v5835 = vpack.c.bf16 %v5811, %v5810
      %v5836 = vpack.c.bf16 %v5813, %v5812
      %v5837 = vpack.c.bf16 %v5815, %v5814
      %v5838 = vpack.c.bf16 %v5817, %v5816
      %v5839 = vpack.c.bf16 %v5819, %v5818
      %v5840 = vpack.c.bf16 %v5821, %v5820
      %v5841 = vpack.c.bf16 %v5823, %v5822
      %v5842 = vpack.c.bf16 %v5825, %v5824
      %v5843 = vpack.c.bf16 %v5827, %v5826
      %v5844 = vpack.c.bf16 %v5829, %v5828
      %v5845 = vpack.c.bf16 %v5831, %v5830
      %5860 = vrot.lane.b32.xlu0 %v5832, 64
      %v5861 = vpop.permute.xlu0 %5860
      %5862 = vrot.lane.b32.xlu0 %v5833, 64
      %v5863 = vpop.permute.xlu0 %5862
      %5864 = vrot.lane.b32.xlu0 %v5834, 64
      %v5865 = vpop.permute.xlu0 %5864
      %5866 = vrot.lane.b32.xlu0 %v5835, 64
      %v5867 = vpop.permute.xlu0 %5866
      %5868 = vrot.lane.b32.xlu0 %v5836, 64
      %v5869 = vpop.permute.xlu0 %5868
      %5870 = vrot.lane.b32.xlu0 %v5837, 64
      %v5871 = vpop.permute.xlu0 %5870
      %5872 = vrot.lane.b32.xlu0 %v5838, 64
      %v5873 = vpop.permute.xlu0 %5872
      %5874 = vrot.lane.b32.xlu0 %v5839, 64
      %v5875 = vpop.permute.xlu0 %5874
      %5876 = vrot.lane.b32.xlu0 %v5840, 64
      %v5877 = vpop.permute.xlu0 %5876
      %5878 = vrot.lane.b32.xlu0 %v5841, 64
      %v5879 = vpop.permute.xlu0 %5878
      %5880 = vrot.lane.b32.xlu0 %v5842, 64
      %v5881 = vpop.permute.xlu0 %5880
      %5882 = vrot.lane.b32.xlu0 %v5843, 64
      %v5883 = vpop.permute.xlu0 %5882
      %5884 = vrot.lane.b32.xlu0 %v5844, 64
      %v5885 = vpop.permute.xlu0 %5884
      %5886 = vrot.lane.b32.xlu0 %v5845, 64
      %v5887 = vpop.permute.xlu0 %5886
      %vm5902 = vcmask 1048064
      %5903 = vst.msk [vmem:[#allocation5] sm:$0xff] %vm5902, %v5861
      %5904 = vst.msk [vmem:[#allocation5 + $0x28] sm:$0xff] %vm5902, %v5863
      %5905 = vst.msk [vmem:[#allocation5 + $0x50] sm:$0xff] %vm5902, %v5865
      %5906 = vst.msk [vmem:[#allocation5 + $0x78] sm:$0xff] %vm5902, %v5867
      %5907 = vst.msk [vmem:[#allocation5 + $0xa0] sm:$0xff] %vm5902, %v5869
      %5908 = vst.msk [vmem:[#allocation5 + $0xc8] sm:$0xff] %vm5902, %v5871
      %5909 = vst.msk [vmem:[#allocation5 + $0xf0] sm:$0xff] %vm5902, %v5873
      %5910 = vst.msk [vmem:[#allocation5 + $0x118] sm:$0xff] %vm5902, %v5875
      %5911 = vst.msk [vmem:[#allocation5 + $0x140] sm:$0xff] %vm5902, %v5877
      %5912 = vst.msk [vmem:[#allocation5 + $0x168] sm:$0xff] %vm5902, %v5879
      %5913 = vst.msk [vmem:[#allocation5 + $0x190] sm:$0xff] %vm5902, %v5881
      %5914 = vst.msk [vmem:[#allocation5 + $0x1b8] sm:$0xff] %vm5902, %v5883
      %5915 = vst.msk [vmem:[#allocation5 + $0x1e0] sm:$0xff] %vm5902, %v5885
      %5916 = vst.msk [vmem:[#allocation5 + $0x208] sm:$0xff] %vm5902, %v5887
      %v5917 = vld [vmem:[#allocation4 + $0x2] sm:$0xff]
      %v5918 = vld [vmem:[#allocation4 + $0xa] sm:$0xff]
      %v5919 = vld [vmem:[#allocation4 + $0x12] sm:$0xff]
      %v5920 = vld [vmem:[#allocation4 + $0x1a] sm:$0xff]
      %v5921 = vld [vmem:[#allocation4 + $0x22] sm:$0xff]
      %v5922 = vld [vmem:[#allocation4 + $0x2a] sm:$0xff]
      %v5923 = vld [vmem:[#allocation4 + $0x32] sm:$0xff]
      %v5924 = vld [vmem:[#allocation4 + $0x3a] sm:$0xff]
      %v5925 = vld [vmem:[#allocation4 + $0x42] sm:$0xff]
      %v5926 = vld [vmem:[#allocation4 + $0x4a] sm:$0xff]
      %v5927 = vld [vmem:[#allocation4 + $0x52] sm:$0xff]
      %v5928 = vld [vmem:[#allocation4 + $0x5a] sm:$0xff]
      %v5929 = vld [vmem:[#allocation4 + $0x62] sm:$0xff]
      %v5930 = vld [vmem:[#allocation4 + $0x6a] sm:$0xff]
      %v5931 = vld [vmem:[#allocation4 + $0x72] sm:$0xff]
      %v5932 = vld [vmem:[#allocation4 + $0x7a] sm:$0xff]
      %v5933 = vld [vmem:[#allocation4 + $0x82] sm:$0xff]
      %v5934 = vld [vmem:[#allocation4 + $0x8a] sm:$0xff]
      %v5935 = vld [vmem:[#allocation4 + $0x92] sm:$0xff]
      %v5936 = vld [vmem:[#allocation4 + $0x9a] sm:$0xff]
      %v5937 = vld [vmem:[#allocation4 + $0xa2] sm:$0xff]
      %v5938 = vld [vmem:[#allocation4 + $0xaa] sm:$0xff]
      %v5939 = vld [vmem:[#allocation4 + $0xb2] sm:$0xff]
      %v5940 = vld [vmem:[#allocation4 + $0xba] sm:$0xff]
      %v5941 = vld [vmem:[#allocation4 + $0xc2] sm:$0xff]
      %v5942 = vld [vmem:[#allocation4 + $0xca] sm:$0xff]
      %v5943 = vld [vmem:[#allocation4 + $0xd2] sm:$0xff]
      %v5944 = vld [vmem:[#allocation4 + $0xda] sm:$0xff]
      %v5945 = vpack.c.bf16 %v5918, %v5917
      %v5946 = vpack.c.bf16 %v5920, %v5919
      %v5947 = vpack.c.bf16 %v5922, %v5921
      %v5948 = vpack.c.bf16 %v5924, %v5923
      %v5949 = vpack.c.bf16 %v5926, %v5925
      %v5950 = vpack.c.bf16 %v5928, %v5927
      %v5951 = vpack.c.bf16 %v5930, %v5929
      %v5952 = vpack.c.bf16 %v5932, %v5931
      %v5953 = vpack.c.bf16 %v5934, %v5933
      %v5954 = vpack.c.bf16 %v5936, %v5935
      %v5955 = vpack.c.bf16 %v5938, %v5937
      %v5956 = vpack.c.bf16 %v5940, %v5939
      %v5957 = vpack.c.bf16 %v5942, %v5941
      %v5958 = vpack.c.bf16 %v5944, %v5943
      %5959 = vst.msk [vmem:[#allocation5 + $0x8] sm:$0xff] %vm4808, %v5945
      %5960 = vst.msk [vmem:[#allocation5 + $0x30] sm:$0xff] %vm4808, %v5946
      %5961 = vst.msk [vmem:[#allocation5 + $0x58] sm:$0xff] %vm4808, %v5947
      %5962 = vst.msk [vmem:[#allocation5 + $0x80] sm:$0xff] %vm4808, %v5948
      %5963 = vst.msk [vmem:[#allocation5 + $0xa8] sm:$0xff] %vm4808, %v5949
      %5964 = vst.msk [vmem:[#allocation5 + $0xd0] sm:$0xff] %vm4808, %v5950
      %5965 = vst.msk [vmem:[#allocation5 + $0xf8] sm:$0xff] %vm4808, %v5951
      %5966 = vst.msk [vmem:[#allocation5 + $0x120] sm:$0xff] %vm4808, %v5952
      %5967 = vst.msk [vmem:[#allocation5 + $0x148] sm:$0xff] %vm4808, %v5953
      %5968 = vst.msk [vmem:[#allocation5 + $0x170] sm:$0xff] %vm4808, %v5954
      %5969 = vst.msk [vmem:[#allocation5 + $0x198] sm:$0xff] %vm4808, %v5955
      %5970 = vst.msk [vmem:[#allocation5 + $0x1c0] sm:$0xff] %vm4808, %v5956
      %5971 = vst.msk [vmem:[#allocation5 + $0x1e8] sm:$0xff] %vm4808, %v5957
      %5972 = vst.msk [vmem:[#allocation5 + $0x210] sm:$0xff] %vm4808, %v5958
      %v5973 = vld [vmem:[#allocation4 + $0x10] sm:$0xff]
      %v5974 = vld [vmem:[#allocation4 + $0x18] sm:$0xff]
      %v5975 = vld [vmem:[#allocation4 + $0x20] sm:$0xff]
      %v5976 = vld [vmem:[#allocation4 + $0x28] sm:$0xff]
      %v5977 = vld [vmem:[#allocation4 + $0x30] sm:$0xff]
      %v5978 = vld [vmem:[#allocation4 + $0x38] sm:$0xff]
      %v5979 = vld [vmem:[#allocation4 + $0x40] sm:$0xff]
      %v5980 = vld [vmem:[#allocation4 + $0x48] sm:$0xff]
      %v5981 = vld [vmem:[#allocation4 + $0x50] sm:$0xff]
      %v5982 = vld [vmem:[#allocation4 + $0x58] sm:$0xff]
      %v5983 = vld [vmem:[#allocation4 + $0x60] sm:$0xff]
      %v5984 = vld [vmem:[#allocation4 + $0x68] sm:$0xff]
      %v5985 = vld [vmem:[#allocation4 + $0x70] sm:$0xff]
      %v5986 = vld [vmem:[#allocation4 + $0x78] sm:$0xff]
      %v5987 = vld [vmem:[#allocation4 + $0x80] sm:$0xff]
      %v5988 = vld [vmem:[#allocation4 + $0x88] sm:$0xff]
      %v5989 = vld [vmem:[#allocation4 + $0x90] sm:$0xff]
      %v5990 = vld [vmem:[#allocation4 + $0x98] sm:$0xff]
      %v5991 = vld [vmem:[#allocation4 + $0xa0] sm:$0xff]
      %v5992 = vld [vmem:[#allocation4 + $0xa8] sm:$0xff]
      %v5993 = vld [vmem:[#allocation4 + $0xb0] sm:$0xff]
      %v5994 = vld [vmem:[#allocation4 + $0xb8] sm:$0xff]
      %v5995 = vld [vmem:[#allocation4 + $0xc0] sm:$0xff]
      %v5996 = vld [vmem:[#allocation4 + $0xc8] sm:$0xff]
      %v5997 = vld [vmem:[#allocation4 + $0xd0] sm:$0xff]
      %v5998 = vld [vmem:[#allocation4 + $0xd8] sm:$0xff]
      %v5999 = vld [vmem:[#allocation4 + $0xe0] sm:$0xff]
      %v6000 = vld [vmem:[#allocation4 + $0xe8] sm:$0xff]
      %v6001 = vpack.c.bf16 %v5974, %v5973
      %v6002 = vpack.c.bf16 %v5976, %v5975
      %v6003 = vpack.c.bf16 %v5978, %v5977
      %v6004 = vpack.c.bf16 %v5980, %v5979
      %v6005 = vpack.c.bf16 %v5982, %v5981
      %v6006 = vpack.c.bf16 %v5984, %v5983
      %v6007 = vpack.c.bf16 %v5986, %v5985
      %v6008 = vpack.c.bf16 %v5988, %v5987
      %v6009 = vpack.c.bf16 %v5990, %v5989
      %v6010 = vpack.c.bf16 %v5992, %v5991
      %v6011 = vpack.c.bf16 %v5994, %v5993
      %v6012 = vpack.c.bf16 %v5996, %v5995
      %v6013 = vpack.c.bf16 %v5998, %v5997
      %v6014 = vpack.c.bf16 %v6000, %v5999
      %6029 = vrot.lane.b32.xlu0 %v6001, 64
      %v6030 = vpop.permute.xlu0 %6029
      %6031 = vrot.lane.b32.xlu0 %v6002, 64
      %v6032 = vpop.permute.xlu0 %6031
      %6033 = vrot.lane.b32.xlu0 %v6003, 64
      %v6034 = vpop.permute.xlu0 %6033
      %6035 = vrot.lane.b32.xlu0 %v6004, 64
      %v6036 = vpop.permute.xlu0 %6035
      %6037 = vrot.lane.b32.xlu0 %v6005, 64
      %v6038 = vpop.permute.xlu0 %6037
      %6039 = vrot.lane.b32.xlu0 %v6006, 64
      %v6040 = vpop.permute.xlu0 %6039
      %6041 = vrot.lane.b32.xlu0 %v6007, 64
      %v6042 = vpop.permute.xlu0 %6041
      %6043 = vrot.lane.b32.xlu0 %v6008, 64
      %v6044 = vpop.permute.xlu0 %6043
      %6045 = vrot.lane.b32.xlu0 %v6009, 64
      %v6046 = vpop.permute.xlu0 %6045
      %6047 = vrot.lane.b32.xlu0 %v6010, 64
      %v6048 = vpop.permute.xlu0 %6047
      %6049 = vrot.lane.b32.xlu0 %v6011, 64
      %v6050 = vpop.permute.xlu0 %6049
      %6051 = vrot.lane.b32.xlu0 %v6012, 64
      %v6052 = vpop.permute.xlu0 %6051
      %6053 = vrot.lane.b32.xlu0 %v6013, 64
      %v6054 = vpop.permute.xlu0 %6053
      %6055 = vrot.lane.b32.xlu0 %v6014, 64
      %v6056 = vpop.permute.xlu0 %6055
      %6071 = vst.msk [vmem:[#allocation5 + $0x8] sm:$0xff] %vm5902, %v6030
      %6072 = vst.msk [vmem:[#allocation5 + $0x30] sm:$0xff] %vm5902, %v6032
      %6073 = vst.msk [vmem:[#allocation5 + $0x58] sm:$0xff] %vm5902, %v6034
      %6074 = vst.msk [vmem:[#allocation5 + $0x80] sm:$0xff] %vm5902, %v6036
      %6075 = vst.msk [vmem:[#allocation5 + $0xa8] sm:$0xff] %vm5902, %v6038
      %6076 = vst.msk [vmem:[#allocation5 + $0xd0] sm:$0xff] %vm5902, %v6040
      %6077 = vst.msk [vmem:[#allocation5 + $0xf8] sm:$0xff] %vm5902, %v6042
      %6078 = vst.msk [vmem:[#allocation5 + $0x120] sm:$0xff] %vm5902, %v6044
      %6079 = vst.msk [vmem:[#allocation5 + $0x148] sm:$0xff] %vm5902, %v6046
      %6080 = vst.msk [vmem:[#allocation5 + $0x170] sm:$0xff] %vm5902, %v6048
      %6081 = vst.msk [vmem:[#allocation5 + $0x198] sm:$0xff] %vm5902, %v6050
      %6082 = vst.msk [vmem:[#allocation5 + $0x1c0] sm:$0xff] %vm5902, %v6052
      %6083 = vst.msk [vmem:[#allocation5 + $0x1e8] sm:$0xff] %vm5902, %v6054
      %6084 = vst.msk [vmem:[#allocation5 + $0x210] sm:$0xff] %vm5902, %v6056
      %v6085 = vld [vmem:[#allocation4 + $0x11] sm:$0xff]
      %v6086 = vld [vmem:[#allocation4 + $0x19] sm:$0xff]
      %v6087 = vld [vmem:[#allocation4 + $0x21] sm:$0xff]
      %v6088 = vld [vmem:[#allocation4 + $0x29] sm:$0xff]
      %v6089 = vld [vmem:[#allocation4 + $0x31] sm:$0xff]
      %v6090 = vld [vmem:[#allocation4 + $0x39] sm:$0xff]
      %v6091 = vld [vmem:[#allocation4 + $0x41] sm:$0xff]
      %v6092 = vld [vmem:[#allocation4 + $0x49] sm:$0xff]
      %v6093 = vld [vmem:[#allocation4 + $0x51] sm:$0xff]
      %v6094 = vld [vmem:[#allocation4 + $0x59] sm:$0xff]
      %v6095 = vld [vmem:[#allocation4 + $0x61] sm:$0xff]
      %v6096 = vld [vmem:[#allocation4 + $0x69] sm:$0xff]
      %v6097 = vld [vmem:[#allocation4 + $0x71] sm:$0xff]
      %v6098 = vld [vmem:[#allocation4 + $0x79] sm:$0xff]
      %v6099 = vld [vmem:[#allocation4 + $0x81] sm:$0xff]
      %v6100 = vld [vmem:[#allocation4 + $0x89] sm:$0xff]
      %v6101 = vld [vmem:[#allocation4 + $0x91] sm:$0xff]
      %v6102 = vld [vmem:[#allocation4 + $0x99] sm:$0xff]
      %v6103 = vld [vmem:[#allocation4 + $0xa1] sm:$0xff]
      %v6104 = vld [vmem:[#allocation4 + $0xa9] sm:$0xff]
      %v6105 = vld [vmem:[#allocation4 + $0xb1] sm:$0xff]
      %v6106 = vld [vmem:[#allocation4 + $0xb9] sm:$0xff]
      %v6107 = vld [vmem:[#allocation4 + $0xc1] sm:$0xff]
      %v6108 = vld [vmem:[#allocation4 + $0xc9] sm:$0xff]
      %v6109 = vld [vmem:[#allocation4 + $0xd1] sm:$0xff]
      %v6110 = vld [vmem:[#allocation4 + $0xd9] sm:$0xff]
      %v6111 = vld [vmem:[#allocation4 + $0xe1] sm:$0xff]
      %v6112 = vld [vmem:[#allocation4 + $0xe9] sm:$0xff]
      %v6113 = vpack.c.bf16 %v6086, %v6085
      %v6114 = vpack.c.bf16 %v6088, %v6087
      %v6115 = vpack.c.bf16 %v6090, %v6089
      %v6116 = vpack.c.bf16 %v6092, %v6091
      %v6117 = vpack.c.bf16 %v6094, %v6093
      %v6118 = vpack.c.bf16 %v6096, %v6095
      %v6119 = vpack.c.bf16 %v6098, %v6097
      %v6120 = vpack.c.bf16 %v6100, %v6099
      %v6121 = vpack.c.bf16 %v6102, %v6101
      %v6122 = vpack.c.bf16 %v6104, %v6103
      %v6123 = vpack.c.bf16 %v6106, %v6105
      %v6124 = vpack.c.bf16 %v6108, %v6107
      %v6125 = vpack.c.bf16 %v6110, %v6109
      %v6126 = vpack.c.bf16 %v6112, %v6111
      %6127 = vst.msk [vmem:[#allocation5 + $0x10] sm:$0xff] %vm4808, %v6113
      %6128 = vst.msk [vmem:[#allocation5 + $0x38] sm:$0xff] %vm4808, %v6114
      %6129 = vst.msk [vmem:[#allocation5 + $0x60] sm:$0xff] %vm4808, %v6115
      %6130 = vst.msk [vmem:[#allocation5 + $0x88] sm:$0xff] %vm4808, %v6116
      %6131 = vst.msk [vmem:[#allocation5 + $0xb0] sm:$0xff] %vm4808, %v6117
      %6132 = vst.msk [vmem:[#allocation5 + $0xd8] sm:$0xff] %vm4808, %v6118
      %6133 = vst.msk [vmem:[#allocation5 + $0x100] sm:$0xff] %vm4808, %v6119
      %6134 = vst.msk [vmem:[#allocation5 + $0x128] sm:$0xff] %vm4808, %v6120
      %6135 = vst.msk [vmem:[#allocation5 + $0x150] sm:$0xff] %vm4808, %v6121
      %6136 = vst.msk [vmem:[#allocation5 + $0x178] sm:$0xff] %vm4808, %v6122
      %6137 = vst.msk [vmem:[#allocation5 + $0x1a0] sm:$0xff] %vm4808, %v6123
      %6138 = vst.msk [vmem:[#allocation5 + $0x1c8] sm:$0xff] %vm4808, %v6124
      %6139 = vst.msk [vmem:[#allocation5 + $0x1f0] sm:$0xff] %vm4808, %v6125
      %6140 = vst.msk [vmem:[#allocation5 + $0x218] sm:$0xff] %vm4808, %v6126
      %v6141 = vld [vmem:[#allocation4 + $0x12] sm:$0xff]
      %v6142 = vld [vmem:[#allocation4 + $0x1a] sm:$0xff]
      %v6143 = vld [vmem:[#allocation4 + $0x22] sm:$0xff]
      %v6144 = vld [vmem:[#allocation4 + $0x2a] sm:$0xff]
      %v6145 = vld [vmem:[#allocation4 + $0x32] sm:$0xff]
      %v6146 = vld [vmem:[#allocation4 + $0x3a] sm:$0xff]
      %v6147 = vld [vmem:[#allocation4 + $0x42] sm:$0xff]
      %v6148 = vld [vmem:[#allocation4 + $0x4a] sm:$0xff]
      %v6149 = vld [vmem:[#allocation4 + $0x52] sm:$0xff]
      %v6150 = vld [vmem:[#allocation4 + $0x5a] sm:$0xff]
      %v6151 = vld [vmem:[#allocation4 + $0x62] sm:$0xff]
      %v6152 = vld [vmem:[#allocation4 + $0x6a] sm:$0xff]
      %v6153 = vld [vmem:[#allocation4 + $0x72] sm:$0xff]
      %v6154 = vld [vmem:[#allocation4 + $0x7a] sm:$0xff]
      %v6155 = vld [vmem:[#allocation4 + $0x82] sm:$0xff]
      %v6156 = vld [vmem:[#allocation4 + $0x8a] sm:$0xff]
      %v6157 = vld [vmem:[#allocation4 + $0x92] sm:$0xff]
      %v6158 = vld [vmem:[#allocation4 + $0x9a] sm:$0xff]
      %v6159 = vld [vmem:[#allocation4 + $0xa2] sm:$0xff]
      %v6160 = vld [vmem:[#allocation4 + $0xaa] sm:$0xff]
      %v6161 = vld [vmem:[#allocation4 + $0xb2] sm:$0xff]
      %v6162 = vld [vmem:[#allocation4 + $0xba] sm:$0xff]
      %v6163 = vld [vmem:[#allocation4 + $0xc2] sm:$0xff]
      %v6164 = vld [vmem:[#allocation4 + $0xca] sm:$0xff]
      %v6165 = vld [vmem:[#allocation4 + $0xd2] sm:$0xff]
      %v6166 = vld [vmem:[#allocation4 + $0xda] sm:$0xff]
      %v6167 = vld [vmem:[#allocation4 + $0xe2] sm:$0xff]
      %v6168 = vld [vmem:[#allocation4 + $0xea] sm:$0xff]
      %v6169 = vpack.c.bf16 %v6142, %v6141
      %v6170 = vpack.c.bf16 %v6144, %v6143
      %v6171 = vpack.c.bf16 %v6146, %v6145
      %v6172 = vpack.c.bf16 %v6148, %v6147
      %v6173 = vpack.c.bf16 %v6150, %v6149
      %v6174 = vpack.c.bf16 %v6152, %v6151
      %v6175 = vpack.c.bf16 %v6154, %v6153
      %v6176 = vpack.c.bf16 %v6156, %v6155
      %v6177 = vpack.c.bf16 %v6158, %v6157
      %v6178 = vpack.c.bf16 %v6160, %v6159
      %v6179 = vpack.c.bf16 %v6162, %v6161
      %v6180 = vpack.c.bf16 %v6164, %v6163
      %v6181 = vpack.c.bf16 %v6166, %v6165
      %v6182 = vpack.c.bf16 %v6168, %v6167
      %6197 = vrot.lane.b32.xlu0 %v6169, 64
      %v6198 = vpop.permute.xlu0 %6197
      %6199 = vrot.lane.b32.xlu0 %v6170, 64
      %v6200 = vpop.permute.xlu0 %6199
      %6201 = vrot.lane.b32.xlu0 %v6171, 64
      %v6202 = vpop.permute.xlu0 %6201
      %6203 = vrot.lane.b32.xlu0 %v6172, 64
      %v6204 = vpop.permute.xlu0 %6203
      %6205 = vrot.lane.b32.xlu0 %v6173, 64
      %v6206 = vpop.permute.xlu0 %6205
      %6207 = vrot.lane.b32.xlu0 %v6174, 64
      %v6208 = vpop.permute.xlu0 %6207
      %6209 = vrot.lane.b32.xlu0 %v6175, 64
      %v6210 = vpop.permute.xlu0 %6209
      %6211 = vrot.lane.b32.xlu0 %v6176, 64
      %v6212 = vpop.permute.xlu0 %6211
      %6213 = vrot.lane.b32.xlu0 %v6177, 64
      %v6214 = vpop.permute.xlu0 %6213
      %6215 = vrot.lane.b32.xlu0 %v6178, 64
      %v6216 = vpop.permute.xlu0 %6215
      %6217 = vrot.lane.b32.xlu0 %v6179, 64
      %v6218 = vpop.permute.xlu0 %6217
      %6219 = vrot.lane.b32.xlu0 %v6180, 64
      %v6220 = vpop.permute.xlu0 %6219
      %6221 = vrot.lane.b32.xlu0 %v6181, 64
      %v6222 = vpop.permute.xlu0 %6221
      %6223 = vrot.lane.b32.xlu0 %v6182, 64
      %v6224 = vpop.permute.xlu0 %6223
      %6239 = vst.msk [vmem:[#allocation5 + $0x10] sm:$0xff] %vm5902, %v6198
      %6240 = vst.msk [vmem:[#allocation5 + $0x38] sm:$0xff] %vm5902, %v6200
      %6241 = vst.msk [vmem:[#allocation5 + $0x60] sm:$0xff] %vm5902, %v6202
      %6242 = vst.msk [vmem:[#allocation5 + $0x88] sm:$0xff] %vm5902, %v6204
      %6243 = vst.msk [vmem:[#allocation5 + $0xb0] sm:$0xff] %vm5902, %v6206
      %6244 = vst.msk [vmem:[#allocation5 + $0xd8] sm:$0xff] %vm5902, %v6208
      %6245 = vst.msk [vmem:[#allocation5 + $0x100] sm:$0xff] %vm5902, %v6210
      %6246 = vst.msk [vmem:[#allocation5 + $0x128] sm:$0xff] %vm5902, %v6212
      %6247 = vst.msk [vmem:[#allocation5 + $0x150] sm:$0xff] %vm5902, %v6214
      %6248 = vst.msk [vmem:[#allocation5 + $0x178] sm:$0xff] %vm5902, %v6216
      %6249 = vst.msk [vmem:[#allocation5 + $0x1a0] sm:$0xff] %vm5902, %v6218
      %6250 = vst.msk [vmem:[#allocation5 + $0x1c8] sm:$0xff] %vm5902, %v6220
      %6251 = vst.msk [vmem:[#allocation5 + $0x1f0] sm:$0xff] %vm5902, %v6222
      %6252 = vst.msk [vmem:[#allocation5 + $0x218] sm:$0xff] %vm5902, %v6224
      %v6253 = vld [vmem:[#allocation4 + $0x20] sm:$0xff]
      %v6254 = vld [vmem:[#allocation4 + $0x28] sm:$0xff]
      %v6255 = vld [vmem:[#allocation4 + $0x30] sm:$0xff]
      %v6256 = vld [vmem:[#allocation4 + $0x38] sm:$0xff]
      %v6257 = vld [vmem:[#allocation4 + $0x40] sm:$0xff]
      %v6258 = vld [vmem:[#allocation4 + $0x48] sm:$0xff]
      %v6259 = vld [vmem:[#allocation4 + $0x50] sm:$0xff]
      %v6260 = vld [vmem:[#allocation4 + $0x58] sm:$0xff]
      %v6261 = vld [vmem:[#allocation4 + $0x60] sm:$0xff]
      %v6262 = vld [vmem:[#allocation4 + $0x68] sm:$0xff]
      %v6263 = vld [vmem:[#allocation4 + $0x70] sm:$0xff]
      %v6264 = vld [vmem:[#allocation4 + $0x78] sm:$0xff]
      %v6265 = vld [vmem:[#allocation4 + $0x80] sm:$0xff]
      %v6266 = vld [vmem:[#allocation4 + $0x88] sm:$0xff]
      %v6267 = vld [vmem:[#allocation4 + $0x90] sm:$0xff]
      %v6268 = vld [vmem:[#allocation4 + $0x98] sm:$0xff]
      %v6269 = vld [vmem:[#allocation4 + $0xa0] sm:$0xff]
      %v6270 = vld [vmem:[#allocation4 + $0xa8] sm:$0xff]
      %v6271 = vld [vmem:[#allocation4 + $0xb0] sm:$0xff]
      %v6272 = vld [vmem:[#allocation4 + $0xb8] sm:$0xff]
      %v6273 = vld [vmem:[#allocation4 + $0xc0] sm:$0xff]
      %v6274 = vld [vmem:[#allocation4 + $0xc8] sm:$0xff]
      %v6275 = vld [vmem:[#allocation4 + $0xd0] sm:$0xff]
      %v6276 = vld [vmem:[#allocation4 + $0xd8] sm:$0xff]
      %v6277 = vld [vmem:[#allocation4 + $0xe0] sm:$0xff]
      %v6278 = vld [vmem:[#allocation4 + $0xe8] sm:$0xff]
      %v6279 = vld [vmem:[#allocation4 + $0xf0] sm:$0xff]
      %v6280 = vld [vmem:[#allocation4 + $0xf8] sm:$0xff]
      %v6281 = vpack.c.bf16 %v6254, %v6253
      %v6282 = vpack.c.bf16 %v6256, %v6255
      %v6283 = vpack.c.bf16 %v6258, %v6257
      %v6284 = vpack.c.bf16 %v6260, %v6259
      %v6285 = vpack.c.bf16 %v6262, %v6261
      %v6286 = vpack.c.bf16 %v6264, %v6263
      %v6287 = vpack.c.bf16 %v6266, %v6265
      %v6288 = vpack.c.bf16 %v6268, %v6267
      %v6289 = vpack.c.bf16 %v6270, %v6269
      %v6290 = vpack.c.bf16 %v6272, %v6271
      %v6291 = vpack.c.bf16 %v6274, %v6273
      %v6292 = vpack.c.bf16 %v6276, %v6275
      %v6293 = vpack.c.bf16 %v6278, %v6277
      %v6294 = vpack.c.bf16 %v6280, %v6279
      %6295 = vst.msk [vmem:[#allocation5 + $0x18] sm:$0xff] %vm4808, %v6281
      %6296 = vst.msk [vmem:[#allocation5 + $0x40] sm:$0xff] %vm4808, %v6282
      %6297 = vst.msk [vmem:[#allocation5 + $0x68] sm:$0xff] %vm4808, %v6283
      %6298 = vst.msk [vmem:[#allocation5 + $0x90] sm:$0xff] %vm4808, %v6284
      %6299 = vst.msk [vmem:[#allocation5 + $0xb8] sm:$0xff] %vm4808, %v6285
      %6300 = vst.msk [vmem:[#allocation5 + $0xe0] sm:$0xff] %vm4808, %v6286
      %6301 = vst.msk [vmem:[#allocation5 + $0x108] sm:$0xff] %vm4808, %v6287
      %6302 = vst.msk [vmem:[#allocation5 + $0x130] sm:$0xff] %vm4808, %v6288
      %6303 = vst.msk [vmem:[#allocation5 + $0x158] sm:$0xff] %vm4808, %v6289
      %6304 = vst.msk [vmem:[#allocation5 + $0x180] sm:$0xff] %vm4808, %v6290
      %6305 = vst.msk [vmem:[#allocation5 + $0x1a8] sm:$0xff] %vm4808, %v6291
      %6306 = vst.msk [vmem:[#allocation5 + $0x1d0] sm:$0xff] %vm4808, %v6292
      %6307 = vst.msk [vmem:[#allocation5 + $0x1f8] sm:$0xff] %vm4808, %v6293
      %6308 = vst.msk [vmem:[#allocation5 + $0x220] sm:$0xff] %vm4808, %v6294
      %v6309 = vld [vmem:[#allocation4 + $0x21] sm:$0xff]
      %v6310 = vld [vmem:[#allocation4 + $0x29] sm:$0xff]
      %v6311 = vld [vmem:[#allocation4 + $0x31] sm:$0xff]
      %v6312 = vld [vmem:[#allocation4 + $0x39] sm:$0xff]
      %v6313 = vld [vmem:[#allocation4 + $0x41] sm:$0xff]
      %v6314 = vld [vmem:[#allocation4 + $0x49] sm:$0xff]
      %v6315 = vld [vmem:[#allocation4 + $0x51] sm:$0xff]
      %v6316 = vld [vmem:[#allocation4 + $0x59] sm:$0xff]
      %v6317 = vld [vmem:[#allocation4 + $0x61] sm:$0xff]
      %v6318 = vld [vmem:[#allocation4 + $0x69] sm:$0xff]
      %v6319 = vld [vmem:[#allocation4 + $0x71] sm:$0xff]
      %v6320 = vld [vmem:[#allocation4 + $0x79] sm:$0xff]
      %v6321 = vld [vmem:[#allocation4 + $0x81] sm:$0xff]
      %v6322 = vld [vmem:[#allocation4 + $0x89] sm:$0xff]
      %v6323 = vld [vmem:[#allocation4 + $0x91] sm:$0xff]
      %v6324 = vld [vmem:[#allocation4 + $0x99] sm:$0xff]
      %v6325 = vld [vmem:[#allocation4 + $0xa1] sm:$0xff]
      %v6326 = vld [vmem:[#allocation4 + $0xa9] sm:$0xff]
      %v6327 = vld [vmem:[#allocation4 + $0xb1] sm:$0xff]
      %v6328 = vld [vmem:[#allocation4 + $0xb9] sm:$0xff]
      %v6329 = vld [vmem:[#allocation4 + $0xc1] sm:$0xff]
      %v6330 = vld [vmem:[#allocation4 + $0xc9] sm:$0xff]
      %v6331 = vld [vmem:[#allocation4 + $0xd1] sm:$0xff]
      %v6332 = vld [vmem:[#allocation4 + $0xd9] sm:$0xff]
      %v6333 = vld [vmem:[#allocation4 + $0xe1] sm:$0xff]
      %v6334 = vld [vmem:[#allocation4 + $0xe9] sm:$0xff]
      %v6335 = vld [vmem:[#allocation4 + $0xf1] sm:$0xff]
      %v6336 = vld [vmem:[#allocation4 + $0xf9] sm:$0xff]
      %v6337 = vpack.c.bf16 %v6310, %v6309
      %v6338 = vpack.c.bf16 %v6312, %v6311
      %v6339 = vpack.c.bf16 %v6314, %v6313
      %v6340 = vpack.c.bf16 %v6316, %v6315
      %v6341 = vpack.c.bf16 %v6318, %v6317
      %v6342 = vpack.c.bf16 %v6320, %v6319
      %v6343 = vpack.c.bf16 %v6322, %v6321
      %v6344 = vpack.c.bf16 %v6324, %v6323
      %v6345 = vpack.c.bf16 %v6326, %v6325
      %v6346 = vpack.c.bf16 %v6328, %v6327
      %v6347 = vpack.c.bf16 %v6330, %v6329
      %v6348 = vpack.c.bf16 %v6332, %v6331
      %v6349 = vpack.c.bf16 %v6334, %v6333
      %v6350 = vpack.c.bf16 %v6336, %v6335
      %6365 = vrot.lane.b32.xlu0 %v6337, 64
      %v6366 = vpop.permute.xlu0 %6365
      %6367 = vrot.lane.b32.xlu0 %v6338, 64
      %v6368 = vpop.permute.xlu0 %6367
      %6369 = vrot.lane.b32.xlu0 %v6339, 64
      %v6370 = vpop.permute.xlu0 %6369
      %6371 = vrot.lane.b32.xlu0 %v6340, 64
      %v6372 = vpop.permute.xlu0 %6371
      %6373 = vrot.lane.b32.xlu0 %v6341, 64
      %v6374 = vpop.permute.xlu0 %6373
      %6375 = vrot.lane.b32.xlu0 %v6342, 64
      %v6376 = vpop.permute.xlu0 %6375
      %6377 = vrot.lane.b32.xlu0 %v6343, 64
      %v6378 = vpop.permute.xlu0 %6377
      %6379 = vrot.lane.b32.xlu0 %v6344, 64
      %v6380 = vpop.permute.xlu0 %6379
      %6381 = vrot.lane.b32.xlu0 %v6345, 64
      %v6382 = vpop.permute.xlu0 %6381
      %6383 = vrot.lane.b32.xlu0 %v6346, 64
      %v6384 = vpop.permute.xlu0 %6383
      %6385 = vrot.lane.b32.xlu0 %v6347, 64
      %v6386 = vpop.permute.xlu0 %6385
      %6387 = vrot.lane.b32.xlu0 %v6348, 64
      %v6388 = vpop.permute.xlu0 %6387
      %6389 = vrot.lane.b32.xlu0 %v6349, 64
      %v6390 = vpop.permute.xlu0 %6389
      %6391 = vrot.lane.b32.xlu0 %v6350, 64
      %v6392 = vpop.permute.xlu0 %6391
      %6407 = vst.msk [vmem:[#allocation5 + $0x18] sm:$0xff] %vm5902, %v6366
      %6408 = vst.msk [vmem:[#allocation5 + $0x40] sm:$0xff] %vm5902, %v6368
      %6409 = vst.msk [vmem:[#allocation5 + $0x68] sm:$0xff] %vm5902, %v6370
      %6410 = vst.msk [vmem:[#allocation5 + $0x90] sm:$0xff] %vm5902, %v6372
      %6411 = vst.msk [vmem:[#allocation5 + $0xb8] sm:$0xff] %vm5902, %v6374
      %6412 = vst.msk [vmem:[#allocation5 + $0xe0] sm:$0xff] %vm5902, %v6376
      %6413 = vst.msk [vmem:[#allocation5 + $0x108] sm:$0xff] %vm5902, %v6378
      %6414 = vst.msk [vmem:[#allocation5 + $0x130] sm:$0xff] %vm5902, %v6380
      %6415 = vst.msk [vmem:[#allocation5 + $0x158] sm:$0xff] %vm5902, %v6382
      %6416 = vst.msk [vmem:[#allocation5 + $0x180] sm:$0xff] %vm5902, %v6384
      %6417 = vst.msk [vmem:[#allocation5 + $0x1a8] sm:$0xff] %vm5902, %v6386
      %6418 = vst.msk [vmem:[#allocation5 + $0x1d0] sm:$0xff] %vm5902, %v6388
      %6419 = vst.msk [vmem:[#allocation5 + $0x1f8] sm:$0xff] %vm5902, %v6390
      %6420 = vst.msk [vmem:[#allocation5 + $0x220] sm:$0xff] %vm5902, %v6392
      %v6421 = vld [vmem:[#allocation4 + $0x22] sm:$0xff]
      %v6422 = vld [vmem:[#allocation4 + $0x2a] sm:$0xff]
      %v6423 = vld [vmem:[#allocation4 + $0x32] sm:$0xff]
      %v6424 = vld [vmem:[#allocation4 + $0x3a] sm:$0xff]
      %v6425 = vld [vmem:[#allocation4 + $0x42] sm:$0xff]
      %v6426 = vld [vmem:[#allocation4 + $0x4a] sm:$0xff]
      %v6427 = vld [vmem:[#allocation4 + $0x52] sm:$0xff]
      %v6428 = vld [vmem:[#allocation4 + $0x5a] sm:$0xff]
      %v6429 = vld [vmem:[#allocation4 + $0x62] sm:$0xff]
      %v6430 = vld [vmem:[#allocation4 + $0x6a] sm:$0xff]
      %v6431 = vld [vmem:[#allocation4 + $0x72] sm:$0xff]
      %v6432 = vld [vmem:[#allocation4 + $0x7a] sm:$0xff]
      %v6433 = vld [vmem:[#allocation4 + $0x82] sm:$0xff]
      %v6434 = vld [vmem:[#allocation4 + $0x8a] sm:$0xff]
      %v6435 = vld [vmem:[#allocation4 + $0x92] sm:$0xff]
      %v6436 = vld [vmem:[#allocation4 + $0x9a] sm:$0xff]
      %v6437 = vld [vmem:[#allocation4 + $0xa2] sm:$0xff]
      %v6438 = vld [vmem:[#allocation4 + $0xaa] sm:$0xff]
      %v6439 = vld [vmem:[#allocation4 + $0xb2] sm:$0xff]
      %v6440 = vld [vmem:[#allocation4 + $0xba] sm:$0xff]
      %v6441 = vld [vmem:[#allocation4 + $0xc2] sm:$0xff]
      %v6442 = vld [vmem:[#allocation4 + $0xca] sm:$0xff]
      %v6443 = vld [vmem:[#allocation4 + $0xd2] sm:$0xff]
      %v6444 = vld [vmem:[#allocation4 + $0xda] sm:$0xff]
      %v6445 = vld [vmem:[#allocation4 + $0xe2] sm:$0xff]
      %v6446 = vld [vmem:[#allocation4 + $0xea] sm:$0xff]
      %v6447 = vld [vmem:[#allocation4 + $0xf2] sm:$0xff]
      %v6448 = vld [vmem:[#allocation4 + $0xfa] sm:$0xff]
      %v6449 = vpack.c.bf16 %v6422, %v6421
      %v6450 = vpack.c.bf16 %v6424, %v6423
      %v6451 = vpack.c.bf16 %v6426, %v6425
      %v6452 = vpack.c.bf16 %v6428, %v6427
      %v6453 = vpack.c.bf16 %v6430, %v6429
      %v6454 = vpack.c.bf16 %v6432, %v6431
      %v6455 = vpack.c.bf16 %v6434, %v6433
      %v6456 = vpack.c.bf16 %v6436, %v6435
      %v6457 = vpack.c.bf16 %v6438, %v6437
      %v6458 = vpack.c.bf16 %v6440, %v6439
      %v6459 = vpack.c.bf16 %v6442, %v6441
      %v6460 = vpack.c.bf16 %v6444, %v6443
      %v6461 = vpack.c.bf16 %v6446, %v6445
      %v6462 = vpack.c.bf16 %v6448, %v6447
      %6463 = vst.msk [vmem:[#allocation5 + $0x20] sm:$0xff] %vm4808, %v6449
      %6464 = vst.msk [vmem:[#allocation5 + $0x48] sm:$0xff] %vm4808, %v6450
      %6465 = vst.msk [vmem:[#allocation5 + $0x70] sm:$0xff] %vm4808, %v6451
      %6466 = vst.msk [vmem:[#allocation5 + $0x98] sm:$0xff] %vm4808, %v6452
      %6467 = vst.msk [vmem:[#allocation5 + $0xc0] sm:$0xff] %vm4808, %v6453
      %6468 = vst.msk [vmem:[#allocation5 + $0xe8] sm:$0xff] %vm4808, %v6454
      %6469 = vst.msk [vmem:[#allocation5 + $0x110] sm:$0xff] %vm4808, %v6455
      %6470 = vst.msk [vmem:[#allocation5 + $0x138] sm:$0xff] %vm4808, %v6456
      %6471 = vst.msk [vmem:[#allocation5 + $0x160] sm:$0xff] %vm4808, %v6457
      %6472 = vst.msk [vmem:[#allocation5 + $0x188] sm:$0xff] %vm4808, %v6458
      %6473 = vst.msk [vmem:[#allocation5 + $0x1b0] sm:$0xff] %vm4808, %v6459
      %6474 = vst.msk [vmem:[#allocation5 + $0x1d8] sm:$0xff] %vm4808, %v6460
      %6475 = vst.msk [vmem:[#allocation5 + $0x200] sm:$0xff] %vm4808, %v6461
      %6476 = vst.msk [vmem:[#allocation5 + $0x228] sm:$0xff] %vm4808, %v6462
      %v6477 = vld [vmem:[#allocation5] sm:$0xff]
      %v6478 = vld [vmem:[#allocation5 + $0x8] sm:$0xff]
      %v6479 = vld [vmem:[#allocation5 + $0x10] sm:$0xff]
      %v6480 = vld [vmem:[#allocation5 + $0x18] sm:$0xff]
      %v6481 = vld [vmem:[#allocation5 + $0x20] sm:$0xff]
      %v6482 = vld [vmem:[#allocation5 + $0x28] sm:$0xff]
      %v6483 = vld [vmem:[#allocation5 + $0x30] sm:$0xff]
      %v6484 = vld [vmem:[#allocation5 + $0x38] sm:$0xff]
      %v6485 = vld [vmem:[#allocation5 + $0x40] sm:$0xff]
      %v6486 = vld [vmem:[#allocation5 + $0x48] sm:$0xff]
      %v6487 = vld [vmem:[#allocation5 + $0x50] sm:$0xff]
      %v6488 = vld [vmem:[#allocation5 + $0x58] sm:$0xff]
      %v6489 = vld [vmem:[#allocation5 + $0x60] sm:$0xff]
      %v6490 = vld [vmem:[#allocation5 + $0x68] sm:$0xff]
      %v6491 = vld [vmem:[#allocation5 + $0x70] sm:$0xff]
      %v6492 = vld [vmem:[#allocation5 + $0x78] sm:$0xff]
      %v6493 = vld [vmem:[#allocation5 + $0x80] sm:$0xff]
      %v6494 = vld [vmem:[#allocation5 + $0x88] sm:$0xff]
      %v6495 = vld [vmem:[#allocation5 + $0x90] sm:$0xff]
      %v6496 = vld [vmem:[#allocation5 + $0x98] sm:$0xff]
      %v6497 = vld [vmem:[#allocation5 + $0xa0] sm:$0xff]
      %v6498 = vld [vmem:[#allocation5 + $0xa8] sm:$0xff]
      %v6499 = vld [vmem:[#allocation5 + $0xb0] sm:$0xff]
      %v6500 = vld [vmem:[#allocation5 + $0xb8] sm:$0xff]
      %v6501 = vld [vmem:[#allocation5 + $0xc0] sm:$0xff]
      %v6502 = vld [vmem:[#allocation5 + $0xc8] sm:$0xff]
      %v6503 = vld [vmem:[#allocation5 + $0xd0] sm:$0xff]
      %v6504 = vld [vmem:[#allocation5 + $0xd8] sm:$0xff]
      %v6505 = vld [vmem:[#allocation5 + $0xe0] sm:$0xff]
      %v6506 = vld [vmem:[#allocation5 + $0xe8] sm:$0xff]
      %v6507 = vld [vmem:[#allocation5 + $0xf0] sm:$0xff]
      %v6508 = vld [vmem:[#allocation5 + $0xf8] sm:$0xff]
      %v6509 = vld [vmem:[#allocation5 + $0x100] sm:$0xff]
      %v6510 = vld [vmem:[#allocation5 + $0x108] sm:$0xff]
      %v6511 = vld [vmem:[#allocation5 + $0x110] sm:$0xff]
      %v6512 = vld [vmem:[#allocation5 + $0x118] sm:$0xff]
      %v6513 = vld [vmem:[#allocation5 + $0x120] sm:$0xff]
      %v6514 = vld [vmem:[#allocation5 + $0x128] sm:$0xff]
      %v6515 = vld [vmem:[#allocation5 + $0x130] sm:$0xff]
      %v6516 = vld [vmem:[#allocation5 + $0x138] sm:$0xff]
      %v6517 = vld [vmem:[#allocation5 + $0x140] sm:$0xff]
      %v6518 = vld [vmem:[#allocation5 + $0x148] sm:$0xff]
      %v6519 = vld [vmem:[#allocation5 + $0x150] sm:$0xff]
      %v6520 = vld [vmem:[#allocation5 + $0x158] sm:$0xff]
      %v6521 = vld [vmem:[#allocation5 + $0x160] sm:$0xff]
      %v6522 = vld [vmem:[#allocation5 + $0x168] sm:$0xff]
      %v6523 = vld [vmem:[#allocation5 + $0x170] sm:$0xff]
      %v6524 = vld [vmem:[#allocation5 + $0x178] sm:$0xff]
      %v6525 = vld [vmem:[#allocation5 + $0x180] sm:$0xff]
      %v6526 = vld [vmem:[#allocation5 + $0x188] sm:$0xff]
      %v6527 = vld [vmem:[#allocation5 + $0x190] sm:$0xff]
      %v6528 = vld [vmem:[#allocation5 + $0x198] sm:$0xff]
      %v6529 = vld [vmem:[#allocation5 + $0x1a0] sm:$0xff]
      %v6530 = vld [vmem:[#allocation5 + $0x1a8] sm:$0xff]
      %v6531 = vld [vmem:[#allocation5 + $0x1b0] sm:$0xff]
      %v6532 = vld [vmem:[#allocation5 + $0x1b8] sm:$0xff]
      %v6533 = vld [vmem:[#allocation5 + $0x1c0] sm:$0xff]
      %v6534 = vld [vmem:[#allocation5 + $0x1c8] sm:$0xff]
      %v6535 = vld [vmem:[#allocation5 + $0x1d0] sm:$0xff]
      %v6536 = vld [vmem:[#allocation5 + $0x1d8] sm:$0xff]
      %v6537 = vld [vmem:[#allocation5 + $0x1e0] sm:$0xff]
      %v6538 = vld [vmem:[#allocation5 + $0x1e8] sm:$0xff]
      %v6539 = vld [vmem:[#allocation5 + $0x1f0] sm:$0xff]
      %v6540 = vld [vmem:[#allocation5 + $0x1f8] sm:$0xff]
      %v6541 = vld [vmem:[#allocation5 + $0x200] sm:$0xff]
      %v6542 = vld [vmem:[#allocation5 + $0x208] sm:$0xff]
      %v6543 = vld [vmem:[#allocation5 + $0x210] sm:$0xff]
      %v6544 = vld [vmem:[#allocation5 + $0x218] sm:$0xff]
      %v6545 = vld [vmem:[#allocation5 + $0x220] sm:$0xff]
      %v6546 = vld [vmem:[#allocation5 + $0x228] sm:$0xff]
      %v6547 = vld [vmem:[%s3] sm:$0xf]
      %v6548 = vld [vmem:[%s3 + $0x4] sm:$0xf]
      %v6549 = vld [vmem:[%s3 + $0x8] sm:$0xf]
      %v6550 = vld [vmem:[%s3 + $0xc] sm:$0xf]
      %v6551 = vld [vmem:[%s3 + $0x10] sm:$0xf]
      %v6552 = vld [vmem:[%s3 + $0x14] sm:$0xf]
      %v6553 = vld [vmem:[%s3 + $0x18] sm:$0xf]
      %v6554 = vld [vmem:[%s3 + $0x1c] sm:$0xf]
      %v6555 = vld [vmem:[%s3 + $0x20] sm:$0xf]
      %v6556 = vld [vmem:[%s3 + $0x24] sm:$0xf]
      %v6557 = vld [vmem:[%s3 + $0x28] sm:$0xf]
      %v6558 = vld [vmem:[%s3 + $0x2c] sm:$0xf]
      %v6559 = vld [vmem:[%s3 + $0x30] sm:$0xf]
      %v6560 = vld [vmem:[%s3 + $0x34] sm:$0xf]
      %v6561 = vld [vmem:[%s3 + $0x38] sm:$0xf]
      %v6562 = vld [vmem:[%s3 + $0x3c] sm:$0xf]
      %v6563 = vld [vmem:[%s3 + $0x40] sm:$0xf]
      %v6564 = vld [vmem:[%s3 + $0x44] sm:$0xf]
      %v6565 = vld [vmem:[%s3 + $0x48] sm:$0xf]
      %v6566 = vld [vmem:[%s3 + $0x4c] sm:$0xf]
      %v6567 = vld [vmem:[%s3 + $0x50] sm:$0xf]
      %v6568 = vld [vmem:[%s3 + $0x54] sm:$0xf]
      %v6569 = vld [vmem:[%s3 + $0x58] sm:$0xf]
      %v6570 = vld [vmem:[%s3 + $0x5c] sm:$0xf]
      %v6571 = vld [vmem:[%s3 + $0x60] sm:$0xf]
      %v6572 = vld [vmem:[%s3 + $0x64] sm:$0xf]
      %v6573 = vld [vmem:[%s3 + $0x68] sm:$0xf]
      %v6574 = vld [vmem:[%s3 + $0x6c] sm:$0xf]
      %v6575 = vld [vmem:[%s3 + $0x70] sm:$0xf]
      %v6576 = vld [vmem:[%s3 + $0x74] sm:$0xf]
      %v6577 = vld [vmem:[%s3 + $0x78] sm:$0xf]
      %v6578 = vld [vmem:[%s3 + $0x7c] sm:$0xf]
      %v6579 = vld [vmem:[%s3 + $0x80] sm:$0xf]
      %v6580 = vld [vmem:[%s3 + $0x84] sm:$0xf]
      %v6581 = vld [vmem:[%s3 + $0x88] sm:$0xf]
      %v6582 = vld [vmem:[%s3 + $0x8c] sm:$0xf]
      %v6583 = vld [vmem:[%s3 + $0x90] sm:$0xf]
      %v6584 = vld [vmem:[%s3 + $0x94] sm:$0xf]
      %v6585 = vld [vmem:[%s3 + $0x98] sm:$0xf]
      %v6586 = vld [vmem:[%s3 + $0x9c] sm:$0xf]
      %v6587 = vld [vmem:[%s3 + $0xa0] sm:$0xf]
      %v6588 = vld [vmem:[%s3 + $0xa4] sm:$0xf]
      %v6589 = vld [vmem:[%s3 + $0xa8] sm:$0xf]
      %v6590 = vld [vmem:[%s3 + $0xac] sm:$0xf]
      %v6591 = vld [vmem:[%s3 + $0xb0] sm:$0xf]
      %v6592 = vld [vmem:[%s3 + $0xb4] sm:$0xf]
      %v6593 = vld [vmem:[%s3 + $0xb8] sm:$0xf]
      %v6594 = vld [vmem:[%s3 + $0xbc] sm:$0xf]
      %v6595 = vld [vmem:[%s3 + $0xc0] sm:$0xf]
      %v6596 = vld [vmem:[%s3 + $0xc4] sm:$0xf]
      %v6597 = vld [vmem:[%s3 + $0xc8] sm:$0xf]
      %v6598 = vld [vmem:[%s3 + $0xcc] sm:$0xf]
      %v6599 = vld [vmem:[%s3 + $0xd0] sm:$0xf]
      %v6600 = vld [vmem:[%s3 + $0xd4] sm:$0xf]
      %v6601 = vld [vmem:[%s3 + $0xd8] sm:$0xf]
      %v6602 = vld [vmem:[%s3 + $0xdc] sm:$0xf]
      %v6603 = vld [vmem:[%s3 + $0xe0] sm:$0xf]
      %v6604 = vld [vmem:[%s3 + $0xe4] sm:$0xf]
      %v6605 = vld [vmem:[%s3 + $0xe8] sm:$0xf]
      %v6606 = vld [vmem:[%s3 + $0xec] sm:$0xf]
      %v6607 = vld [vmem:[%s3 + $0xf0] sm:$0xf]
      %v6608 = vld [vmem:[%s3 + $0xf4] sm:$0xf]
      %v6609 = vld [vmem:[%s3 + $0xf8] sm:$0xf]
      %v6610 = vld [vmem:[%s3 + $0xfc] sm:$0xf]
      %v6611 = vld [vmem:[%s3 + $0x100] sm:$0xf]
      %v6612 = vld [vmem:[%s3 + $0x104] sm:$0xf]
      %v6613 = vld [vmem:[%s3 + $0x108] sm:$0xf]
      %v6614 = vld [vmem:[%s3 + $0x10c] sm:$0xf]
      %v6615 = vld [vmem:[%s3 + $0x110] sm:$0xf]
      %v6616 = vld [vmem:[%s3 + $0x114] sm:$0xf]
      %v6617 = vld [vmem:[%s3 + $0x118] sm:$0xf]
      %v6618 = vld [vmem:[%s3 + $0x11c] sm:$0xf]
      %v6691 = vunpack.c.l.b16 %v6547
      %v6692 = vunpack.c.l.b16 %v6548
      %v6693 = vunpack.c.l.b16 %v6549
      %v6694 = vunpack.c.l.b16 %v6550
      %v6695 = vunpack.c.l.b16 %v6551
      %v6696 = vunpack.c.l.b16 %v6552
      %v6697 = vunpack.c.l.b16 %v6553
      %v6698 = vunpack.c.l.b16 %v6554
      %v6699 = vunpack.c.l.b16 %v6555
      %v6700 = vunpack.c.l.b16 %v6556
      %v6701 = vunpack.c.l.b16 %v6557
      %v6702 = vunpack.c.l.b16 %v6558
      %v6703 = vunpack.c.l.b16 %v6559
      %v6704 = vunpack.c.l.b16 %v6560
      %v6705 = vunpack.c.l.b16 %v6561
      %v6706 = vunpack.c.l.b16 %v6562
      %v6707 = vunpack.c.l.b16 %v6563
      %v6708 = vunpack.c.l.b16 %v6564
      %v6709 = vunpack.c.l.b16 %v6565
      %v6710 = vunpack.c.l.b16 %v6566
      %v6711 = vunpack.c.l.b16 %v6567
      %v6712 = vunpack.c.l.b16 %v6568
      %v6713 = vunpack.c.l.b16 %v6569
      %v6714 = vunpack.c.l.b16 %v6570
      %v6715 = vunpack.c.l.b16 %v6571
      %v6716 = vunpack.c.l.b16 %v6572
      %v6717 = vunpack.c.l.b16 %v6573
      %v6718 = vunpack.c.l.b16 %v6574
      %v6719 = vunpack.c.l.b16 %v6575
      %v6720 = vunpack.c.l.b16 %v6576
      %v6721 = vunpack.c.l.b16 %v6577
      %v6722 = vunpack.c.l.b16 %v6578
      %v6723 = vunpack.c.l.b16 %v6579
      %v6724 = vunpack.c.l.b16 %v6580
      %v6725 = vunpack.c.l.b16 %v6581
      %v6726 = vunpack.c.l.b16 %v6582
      %v6727 = vunpack.c.l.b16 %v6583
      %v6728 = vunpack.c.l.b16 %v6584
      %v6729 = vunpack.c.l.b16 %v6585
      %v6730 = vunpack.c.l.b16 %v6586
      %v6731 = vunpack.c.l.b16 %v6587
      %v6732 = vunpack.c.l.b16 %v6588
      %v6733 = vunpack.c.l.b16 %v6589
      %v6734 = vunpack.c.l.b16 %v6590
      %v6735 = vunpack.c.l.b16 %v6591
      %v6736 = vunpack.c.l.b16 %v6592
      %v6737 = vunpack.c.l.b16 %v6593
      %v6738 = vunpack.c.l.b16 %v6594
      %v6739 = vunpack.c.l.b16 %v6595
      %v6740 = vunpack.c.l.b16 %v6596
      %v6741 = vunpack.c.l.b16 %v6597
      %v6742 = vunpack.c.l.b16 %v6598
      %v6743 = vunpack.c.l.b16 %v6599
      %v6744 = vunpack.c.l.b16 %v6600
      %v6745 = vunpack.c.l.b16 %v6601
      %v6746 = vunpack.c.l.b16 %v6602
      %v6747 = vunpack.c.l.b16 %v6603
      %v6748 = vunpack.c.l.b16 %v6604
      %v6749 = vunpack.c.l.b16 %v6605
      %v6750 = vunpack.c.l.b16 %v6606
      %v6751 = vunpack.c.l.b16 %v6607
      %v6752 = vunpack.c.l.b16 %v6608
      %v6753 = vunpack.c.l.b16 %v6609
      %v6754 = vunpack.c.l.b16 %v6610
      %v6755 = vunpack.c.l.b16 %v6611
      %v6756 = vunpack.c.l.b16 %v6612
      %v6757 = vunpack.c.l.b16 %v6613
      %v6758 = vunpack.c.l.b16 %v6614
      %v6759 = vunpack.c.l.b16 %v6615
      %v6760 = vunpack.c.l.b16 %v6616
      %v6761 = vunpack.c.l.b16 %v6617
      %v6762 = vunpack.c.l.b16 %v6618
      %v6763 = vpack.c.b16 %v6692, %v6691
      %v6764 = vpack.c.b16 %v6694, %v6693
      %v6765 = vpack.c.b16 %v6696, %v6695
      %v6766 = vpack.c.b16 %v6698, %v6697
      %v6767 = vpack.c.b16 %v6700, %v6699
      %v6768 = vpack.c.b16 %v6702, %v6701
      %v6769 = vpack.c.b16 %v6704, %v6703
      %v6770 = vpack.c.b16 %v6706, %v6705
      %v6771 = vpack.c.b16 %v6708, %v6707
      %v6772 = vpack.c.b16 %v6710, %v6709
      %v6773 = vpack.c.b16 %v6712, %v6711
      %v6774 = vpack.c.b16 %v6714, %v6713
      %v6775 = vpack.c.b16 %v6716, %v6715
      %v6776 = vpack.c.b16 %v6718, %v6717
      %v6777 = vpack.c.b16 %v6720, %v6719
      %v6778 = vpack.c.b16 %v6722, %v6721
      %v6779 = vpack.c.b16 %v6724, %v6723
      %v6780 = vpack.c.b16 %v6726, %v6725
      %v6781 = vpack.c.b16 %v6728, %v6727
      %v6782 = vpack.c.b16 %v6730, %v6729
      %v6783 = vpack.c.b16 %v6732, %v6731
      %v6784 = vpack.c.b16 %v6734, %v6733
      %v6785 = vpack.c.b16 %v6736, %v6735
      %v6786 = vpack.c.b16 %v6738, %v6737
      %v6787 = vpack.c.b16 %v6740, %v6739
      %v6788 = vpack.c.b16 %v6742, %v6741
      %v6789 = vpack.c.b16 %v6744, %v6743
      %v6790 = vpack.c.b16 %v6746, %v6745
      %v6791 = vpack.c.b16 %v6748, %v6747
      %v6792 = vpack.c.b16 %v6750, %v6749
      %v6793 = vpack.c.b16 %v6752, %v6751
      %v6794 = vpack.c.b16 %v6754, %v6753
      %v6795 = vpack.c.b16 %v6756, %v6755
      %v6796 = vpack.c.b16 %v6758, %v6757
      %v6797 = vpack.c.b16 %v6760, %v6759
      %v6798 = vpack.c.b16 %v6762, %v6761
      %v6836 = vsel %vm4808, %v6481, 0
      %v6839 = vsel %vm4808, %v6486, 0
      %v6842 = vsel %vm4808, %v6491, 0
      %v6845 = vsel %vm4808, %v6496, 0
      %v6848 = vsel %vm4808, %v6501, 0
      %v6851 = vsel %vm4808, %v6506, 0
      %v6854 = vsel %vm4808, %v6511, 0
      %v6857 = vsel %vm4808, %v6516, 0
      %v6860 = vsel %vm4808, %v6521, 0
      %v6863 = vsel %vm4808, %v6526, 0
      %v6866 = vsel %vm4808, %v6531, 0
      %v6869 = vsel %vm4808, %v6536, 0
      %v6872 = vsel %vm4808, %v6541, 0
      %v6875 = vsel %vm4808, %v6546, 0
      %6877 = vmatprep.subr.bf16.mxu0 0
      %6878 = vmatpush1.bf16.msra.mxu0 %v6763
      %6879 = vmatprep.subr.bf16.mxu0 0
      %6880 = vmatpush1.bf16.msra.mxu0 %v6764
      %6881 = vmatprep.subr.bf16.mxu0 0
      %6882 = vmatpush1.bf16.msra.mxu0 %v6765
      %6883 = vmatprep.subr.bf16.mxu0 0
      %6884 = vmatpush1.bf16.msra.mxu0 %v6766
      %6885 = vmatprep.subr.bf16.mxu0 0
      %6886 = vmatpush1.bf16.msra.mxu0 %v6767
      %6887 = vmatprep.subr.bf16.mxu0 0
      %6888 = vmatpush1.bf16.msra.mxu0 %v6768
      %6889 = vmatprep.subr.bf16.mxu0 0
      %6890 = vmatpush1.bf16.msra.mxu0 %v6769
      %6891 = vmatprep.subr.bf16.mxu0 0
      %6892 = vmatpush1.bf16.msra.mxu0 %v6770
      %6893 = vmatprep.subr.bf16.mxu0 0
      %6894 = vmatpush1.bf16.msra.mxu0 %v6771
      %6895 = vmatprep.subr.bf16.mxu0 0
      %6896 = vmatpush1.bf16.msra.mxu0 %v6772
      %6897 = vmatprep.subr.bf16.mxu0 0
      %6898 = vmatpush1.bf16.msra.mxu0 %v6773
      %6899 = vmatprep.subr.bf16.mxu0 0
      %6900 = vmatpush1.bf16.msra.mxu0 %v6774
      %6901 = vmatprep.subr.bf16.mxu0 0
      %6902 = vmatpush1.bf16.msra.mxu0 %v6775
      %6903 = vmatprep.subr.bf16.mxu0 0
      %6904 = vmatpush1.bf16.msra.mxu0 %v6776
      %6905 = vmatprep.subr.bf16.mxu0 0
      %6906 = vmatpush1.bf16.msra.mxu0 %v6777
      %6907 = vmatprep.subr.bf16.mxu0 0
      %6908 = vmatpush1.bf16.msra.mxu0 %v6778
      %6909 = vmatprep.mubr.bf16.mxu0 %v6478
      %6910 = vmatmul.mubr.bf16.gmra.mrb[0].mxu0 %v6477
      %v6911 = vpop.f32.mrb[0].mxu0
      %v6912 = vadd.f32 0.0, %v6911
      %v6913 = vpop.f32.mrb[0].mxu0
      %v6914 = vpop.f32.mrb[0].mxu0
      %v6915 = vadd.f32 0.0, %v6914
      %v6916 = vpop.f32.mrb[0].mxu0
      %6917 = vmatprep.mubr.bf16.mxu0 %v6483
      %6918 = vmatmul.mubr.bf16.gmra.mrb[0].mxu0 %v6482
      %v6919 = vpop.f32.mrb[0].mxu0
      %v6920 = vadd.f32 0.0, %v6919
      %v6921 = vpop.f32.mrb[0].mxu0
      %v6922 = vpop.f32.mrb[0].mxu0
      %v6923 = vadd.f32 0.0, %v6922
      %v6924 = vpop.f32.mrb[0].mxu0
      %6925 = vmatprep.mubr.bf16.mxu0 %v6488
      %6926 = vmatmul.mubr.bf16.gmra.mrb[0].mxu0 %v6487
      %v6927 = vpop.f32.mrb[0].mxu0
      %v6928 = vadd.f32 0.0, %v6927
      %v6929 = vpop.f32.mrb[0].mxu0
      %v6930 = vpop.f32.mrb[0].mxu0
      %v6931 = vadd.f32 0.0, %v6930
      %v6932 = vpop.f32.mrb[0].mxu0
      %6933 = vmatprep.mubr.bf16.mxu0 %v6493
      %6934 = vmatmul.mubr.bf16.gmra.mrb[0].mxu0 %v6492
      %v6935 = vpop.f32.mrb[0].mxu0
      %v6936 = vadd.f32 0.0, %v6935
      %v6937 = vpop.f32.mrb[0].mxu0
      %v6938 = vpop.f32.mrb[0].mxu0
      %v6939 = vadd.f32 0.0, %v6938
      %v6940 = vpop.f32.mrb[0].mxu0
      %6941 = vmatprep.mubr.bf16.mxu0 %v6498
      %6942 = vmatmul.mubr.bf16.gmra.mrb[0].mxu0 %v6497
      %v6943 = vpop.f32.mrb[0].mxu0
      %v6944 = vadd.f32 0.0, %v6943
      %v6945 = vpop.f32.mrb[0].mxu0
      %v6946 = vpop.f32.mrb[0].mxu0
      %v6947 = vadd.f32 0.0, %v6946
      %v6948 = vpop.f32.mrb[0].mxu0
      %6949 = vmatprep.mubr.bf16.mxu0 %v6503
      %6950 = vmatmul.mubr.bf16.gmra.mrb[0].mxu0 %v6502
      %v6951 = vpop.f32.mrb[0].mxu0
      %v6952 = vadd.f32 0.0, %v6951
      %v6953 = vpop.f32.mrb[0].mxu0
      %v6954 = vpop.f32.mrb[0].mxu0
      %v6955 = vadd.f32 0.0, %v6954
      %v6956 = vpop.f32.mrb[0].mxu0
      %6957 = vmatprep.mubr.bf16.mxu0 %v6508
      %6958 = vmatmul.mubr.bf16.gmra.mrb[0].mxu0 %v6507
      %v6959 = vpop.f32.mrb[0].mxu0
      %v6960 = vadd.f32 0.0, %v6959
      %v6961 = vpop.f32.mrb[0].mxu0
      %v6962 = vpop.f32.mrb[0].mxu0
      %v6963 = vadd.f32 0.0, %v6962
      %v6964 = vpop.f32.mrb[0].mxu0
      %6965 = vmatprep.mubr.bf16.mxu0 %v6513
      %6966 = vmatmul.mubr.bf16.gmra.mrb[0].mxu0 %v6512
      %v6967 = vpop.f32.mrb[0].mxu0
      %v6968 = vadd.f32 0.0, %v6967
      %v6969 = vpop.f32.mrb[0].mxu0
      %v6970 = vpop.f32.mrb[0].mxu0
      %v6971 = vadd.f32 0.0, %v6970
      %v6972 = vpop.f32.mrb[0].mxu0
      %6973 = vmatprep.mubr.bf16.mxu0 %v6518
      %6974 = vmatmul.mubr.bf16.gmra.mrb[0].mxu0 %v6517
      %v6975 = vpop.f32.mrb[0].mxu0
      %v6976 = vadd.f32 0.0, %v6975
      %v6977 = vpop.f32.mrb[0].mxu0
      %v6978 = vpop.f32.mrb[0].mxu0
      %v6979 = vadd.f32 0.0, %v6978
      %v6980 = vpop.f32.mrb[0].mxu0
      %6981 = vmatprep.mubr.bf16.mxu0 %v6523
      %6982 = vmatmul.mubr.bf16.gmra.mrb[0].mxu0 %v6522
      %v6983 = vpop.f32.mrb[0].mxu0
      %v6984 = vadd.f32 0.0, %v6983
      %v6985 = vpop.f32.mrb[0].mxu0
      %v6986 = vpop.f32.mrb[0].mxu0
      %v6987 = vadd.f32 0.0, %v6986
      %v6988 = vpop.f32.mrb[0].mxu0
      %6989 = vmatprep.mubr.bf16.mxu0 %v6528
      %6990 = vmatmul.mubr.bf16.gmra.mrb[0].mxu0 %v6527
      %v6991 = vpop.f32.mrb[0].mxu0
      %v6992 = vadd.f32 0.0, %v6991
      %v6993 = vpop.f32.mrb[0].mxu0
      %v6994 = vpop.f32.mrb[0].mxu0
      %v6995 = vadd.f32 0.0, %v6994
      %v6996 = vpop.f32.mrb[0].mxu0
      %6997 = vmatprep.mubr.bf16.mxu0 %v6533
      %6998 = vmatmul.mubr.bf16.gmra.mrb[0].mxu0 %v6532
      %v6999 = vpop.f32.mrb[0].mxu0
      %v7000 = vadd.f32 0.0, %v6999
      %v7001 = vpop.f32.mrb[0].mxu0
      %v7002 = vpop.f32.mrb[0].mxu0
      %v7003 = vadd.f32 0.0, %v7002
      %v7004 = vpop.f32.mrb[0].mxu0
      %7005 = vmatprep.mubr.bf16.mxu0 %v6538
      %7006 = vmatmul.mubr.bf16.gmra.mrb[0].mxu0 %v6537
      %v7007 = vpop.f32.mrb[0].mxu0
      %v7008 = vadd.f32 0.0, %v7007
      %v7009 = vpop.f32.mrb[0].mxu0
      %v7010 = vpop.f32.mrb[0].mxu0
      %v7011 = vadd.f32 0.0, %v7010
      %v7012 = vpop.f32.mrb[0].mxu0
      %7013 = vmatprep.mubr.bf16.mxu0 %v6543
      %7014 = vmatmul.mubr.bf16.gmra.mrb[0].mxu0 %v6542
      %v7015 = vpop.f32.mrb[0].mxu0
      %v7016 = vadd.f32 0.0, %v7015
      %v7017 = vpop.f32.mrb[0].mxu0
      %v7018 = vpop.f32.mrb[0].mxu0
      %v7019 = vadd.f32 0.0, %v7018
      %v7020 = vpop.f32.mrb[0].mxu0
      %7021 = vdwg.mxu0
      %7022 = vmatprep.subr.bf16.mxu0 0
      %7023 = vmatpush1.bf16.msra.mxu0 %v6779
      %7024 = vmatprep.subr.bf16.mxu0 0
      %7025 = vmatpush1.bf16.msra.mxu0 %v6780
      %7026 = vmatprep.subr.bf16.mxu0 0
      %7027 = vmatpush1.bf16.msra.mxu0 %v6781
      %7028 = vmatprep.subr.bf16.mxu0 0
      %7029 = vmatpush1.bf16.msra.mxu0 %v6782
      %7030 = vmatprep.subr.bf16.mxu0 0
      %7031 = vmatpush1.bf16.msra.mxu0 %v6783
      %7032 = vmatprep.subr.bf16.mxu0 0
      %7033 = vmatpush1.bf16.msra.mxu0 %v6784
      %7034 = vmatprep.subr.bf16.mxu0 0
      %7035 = vmatpush1.bf16.msra.mxu0 %v6785
      %7036 = vmatprep.subr.bf16.mxu0 0
      %7037 = vmatpush1.bf16.msra.mxu0 %v6786
      %7038 = vmatprep.subr.bf16.mxu0 0
      %7039 = vmatpush1.bf16.msra.mxu0 %v6787
      %7040 = vmatprep.subr.bf16.mxu0 0
      %7041 = vmatpush1.bf16.msra.mxu0 %v6788
      %7042 = vmatprep.subr.bf16.mxu0 0
      %7043 = vmatpush1.bf16.msra.mxu0 %v6789
      %7044 = vmatprep.subr.bf16.mxu0 0
      %7045 = vmatpush1.bf16.msra.mxu0 %v6790
      %7046 = vmatprep.subr.bf16.mxu0 0
      %7047 = vmatpush1.bf16.msra.mxu0 %v6791
      %7048 = vmatprep.subr.bf16.mxu0 0
      %7049 = vmatpush1.bf16.msra.mxu0 %v6792
      %7050 = vmatprep.subr.bf16.mxu0 0
      %7051 = vmatpush1.bf16.msra.mxu0 %v6793
      %7052 = vmatprep.subr.bf16.mxu0 0
      %7053 = vmatpush1.bf16.msra.mxu0 %v6794
      %7054 = vmatprep.mubr.bf16.mxu0 %v6480
      %7055 = vmatmul.mubr.bf16.gmra.mrb[0].mxu0 %v6479
      %v7056 = vpop.f32.mrb[0].mxu0
      %v7057 = vadd.f32 %v6912, %v7056
      %v7058 = vpop.f32.mrb[0].mxu0
      %v7059 = vpop.f32.mrb[0].mxu0
      %v7060 = vadd.f32 %v6915, %v7059
      %v7061 = vpop.f32.mrb[0].mxu0
      %7062 = vmatprep.mubr.bf16.mxu0 %v6485
      %7063 = vmatmul.mubr.bf16.gmra.mrb[0].mxu0 %v6484
      %v7064 = vpop.f32.mrb[0].mxu0
      %v7065 = vadd.f32 %v6920, %v7064
      %v7066 = vpop.f32.mrb[0].mxu0
      %v7067 = vpop.f32.mrb[0].mxu0
      %v7068 = vadd.f32 %v6923, %v7067
      %v7069 = vpop.f32.mrb[0].mxu0
      %7070 = vmatprep.mubr.bf16.mxu0 %v6490
      %7071 = vmatmul.mubr.bf16.gmra.mrb[0].mxu0 %v6489
      %v7072 = vpop.f32.mrb[0].mxu0
      %v7073 = vadd.f32 %v6928, %v7072
      %v7074 = vpop.f32.mrb[0].mxu0
      %v7075 = vpop.f32.mrb[0].mxu0
      %v7076 = vadd.f32 %v6931, %v7075
      %v7077 = vpop.f32.mrb[0].mxu0
      %7078 = vmatprep.mubr.bf16.mxu0 %v6495
      %7079 = vmatmul.mubr.bf16.gmra.mrb[0].mxu0 %v6494
      %v7080 = vpop.f32.mrb[0].mxu0
      %v7081 = vadd.f32 %v6936, %v7080
      %v7082 = vpop.f32.mrb[0].mxu0
      %v7083 = vpop.f32.mrb[0].mxu0
      %v7084 = vadd.f32 %v6939, %v7083
      %v7085 = vpop.f32.mrb[0].mxu0
      %7086 = vmatprep.mubr.bf16.mxu0 %v6500
      %7087 = vmatmul.mubr.bf16.gmra.mrb[0].mxu0 %v6499
      %v7088 = vpop.f32.mrb[0].mxu0
      %v7089 = vadd.f32 %v6944, %v7088
      %v7090 = vpop.f32.mrb[0].mxu0
      %v7091 = vpop.f32.mrb[0].mxu0
      %v7092 = vadd.f32 %v6947, %v7091
      %v7093 = vpop.f32.mrb[0].mxu0
      %7094 = vmatprep.mubr.bf16.mxu0 %v6505
      %7095 = vmatmul.mubr.bf16.gmra.mrb[0].mxu0 %v6504
      %v7096 = vpop.f32.mrb[0].mxu0
      %v7097 = vadd.f32 %v6952, %v7096
      %v7098 = vpop.f32.mrb[0].mxu0
      %v7099 = vpop.f32.mrb[0].mxu0
      %v7100 = vadd.f32 %v6955, %v7099
      %v7101 = vpop.f32.mrb[0].mxu0
      %7102 = vmatprep.mubr.bf16.mxu0 %v6510
      %7103 = vmatmul.mubr.bf16.gmra.mrb[0].mxu0 %v6509
      %v7104 = vpop.f32.mrb[0].mxu0
      %v7105 = vadd.f32 %v6960, %v7104
      %v7106 = vpop.f32.mrb[0].mxu0
      %v7107 = vpop.f32.mrb[0].mxu0
      %v7108 = vadd.f32 %v6963, %v7107
      %v7109 = vpop.f32.mrb[0].mxu0
      %7110 = vmatprep.mubr.bf16.mxu0 %v6515
      %7111 = vmatmul.mubr.bf16.gmra.mrb[0].mxu0 %v6514
      %v7112 = vpop.f32.mrb[0].mxu0
      %v7113 = vadd.f32 %v6968, %v7112
      %v7114 = vpop.f32.mrb[0].mxu0
      %v7115 = vpop.f32.mrb[0].mxu0
      %v7116 = vadd.f32 %v6971, %v7115
      %v7117 = vpop.f32.mrb[0].mxu0
      %7118 = vmatprep.mubr.bf16.mxu0 %v6520
      %7119 = vmatmul.mubr.bf16.gmra.mrb[0].mxu0 %v6519
      %v7120 = vpop.f32.mrb[0].mxu0
      %v7121 = vadd.f32 %v6976, %v7120
      %v7122 = vpop.f32.mrb[0].mxu0
      %v7123 = vpop.f32.mrb[0].mxu0
      %v7124 = vadd.f32 %v6979, %v7123
      %v7125 = vpop.f32.mrb[0].mxu0
      %7126 = vmatprep.mubr.bf16.mxu0 %v6525
      %7127 = vmatmul.mubr.bf16.gmra.mrb[0].mxu0 %v6524
      %v7128 = vpop.f32.mrb[0].mxu0
      %v7129 = vadd.f32 %v6984, %v7128
      %v7130 = vpop.f32.mrb[0].mxu0
      %v7131 = vpop.f32.mrb[0].mxu0
      %v7132 = vadd.f32 %v6987, %v7131
      %v7133 = vpop.f32.mrb[0].mxu0
      %7134 = vmatprep.mubr.bf16.mxu0 %v6530
      %7135 = vmatmul.mubr.bf16.gmra.mrb[0].mxu0 %v6529
      %v7136 = vpop.f32.mrb[0].mxu0
      %v7137 = vadd.f32 %v6992, %v7136
      %v7138 = vpop.f32.mrb[0].mxu0
      %v7139 = vpop.f32.mrb[0].mxu0
      %v7140 = vadd.f32 %v6995, %v7139
      %v7141 = vpop.f32.mrb[0].mxu0
      %7142 = vmatprep.mubr.bf16.mxu0 %v6535
      %7143 = vmatmul.mubr.bf16.gmra.mrb[0].mxu0 %v6534
      %v7144 = vpop.f32.mrb[0].mxu0
      %v7145 = vadd.f32 %v7000, %v7144
      %v7146 = vpop.f32.mrb[0].mxu0
      %v7147 = vpop.f32.mrb[0].mxu0
      %v7148 = vadd.f32 %v7003, %v7147
      %v7149 = vpop.f32.mrb[0].mxu0
      %7150 = vmatprep.mubr.bf16.mxu0 %v6540
      %7151 = vmatmul.mubr.bf16.gmra.mrb[0].mxu0 %v6539
      %v7152 = vpop.f32.mrb[0].mxu0
      %v7153 = vadd.f32 %v7008, %v7152
      %v7154 = vpop.f32.mrb[0].mxu0
      %v7155 = vpop.f32.mrb[0].mxu0
      %v7156 = vadd.f32 %v7011, %v7155
      %v7157 = vpop.f32.mrb[0].mxu0
      %7158 = vmatprep.mubr.bf16.mxu0 %v6545
      %7159 = vmatmul.mubr.bf16.gmra.mrb[0].mxu0 %v6544
      %v7160 = vpop.f32.mrb[0].mxu0
      %v7161 = vadd.f32 %v7016, %v7160
      %v7162 = vpop.f32.mrb[0].mxu0
      %v7163 = vpop.f32.mrb[0].mxu0
      %v7164 = vadd.f32 %v7019, %v7163
      %v7165 = vpop.f32.mrb[0].mxu0
      %7166 = vdwg.mxu0
      %7167 = vmatprep.subr.bf16.mxu0 0
      %7168 = vmatpush1.bf16.msra.mxu0 %v6795
      %7169 = vmatprep.subr.bf16.mxu0 0
      %7170 = vmatpush1.bf16.msra.mxu0 %v6796
      %7171 = vmatprep.subr.bf16.mxu0 0
      %7172 = vmatpush1.bf16.msra.mxu0 %v6797
      %7173 = vmatprep.subr.bf16.mxu0 0
      %7174 = vmatpush1.bf16.msra.mxu0 %v6798
      %7175 = vmatprep.subr.bf16.mxu0 0
      %7176 = vmatpush1.bf16.msra.mxu0 0
      %7177 = vmatprep.subr.bf16.mxu0 0
      %7178 = vmatpush1.bf16.msra.mxu0 0
      %7179 = vmatprep.subr.bf16.mxu0 0
      %7180 = vmatpush1.bf16.msra.mxu0 0
      %7181 = vmatprep.subr.bf16.mxu0 0
      %7182 = vmatpush1.bf16.msra.mxu0 0
      %7183 = vmatprep.subr.bf16.mxu0 0
      %7184 = vmatpush1.bf16.msra.mxu0 0
      %7185 = vmatprep.subr.bf16.mxu0 0
      %7186 = vmatpush1.bf16.msra.mxu0 0
      %7187 = vmatprep.subr.bf16.mxu0 0
      %7188 = vmatpush1.bf16.msra.mxu0 0
      %7189 = vmatprep.subr.bf16.mxu0 0
      %7190 = vmatpush1.bf16.msra.mxu0 0
      %7191 = vmatprep.subr.bf16.mxu0 0
      %7192 = vmatpush1.bf16.msra.mxu0 0
      %7193 = vmatprep.subr.bf16.mxu0 0
      %7194 = vmatpush1.bf16.msra.mxu0 0
      %7195 = vmatprep.subr.bf16.mxu0 0
      %7196 = vmatpush1.bf16.msra.mxu0 0
      %7197 = vmatprep.subr.bf16.mxu0 0
      %7198 = vmatpush1.bf16.msra.mxu0 0
      %7199 = vmatprep.mubr.bf16.mxu0 0
      %7200 = vmatmul.mubr.bf16.gmra.mrb[0].mxu0 %v6836
      %v7201 = vpop.f32.mrb[0].mxu0
      %v7202 = vadd.f32 %v7057, %v7201
      %v7203 = vpop.f32.mrb[0].mxu0
      %v7204 = vpop.f32.mrb[0].mxu0
      %v7205 = vadd.f32 %v7060, %v7204
      %v7206 = vpop.f32.mrb[0].mxu0
      %7207 = vmatprep.mubr.bf16.mxu0 0
      %7208 = vmatmul.mubr.bf16.gmra.mrb[0].mxu0 %v6839
      %v7209 = vpop.f32.mrb[0].mxu0
      %v7210 = vadd.f32 %v7065, %v7209
      %v7211 = vpop.f32.mrb[0].mxu0
      %v7212 = vpop.f32.mrb[0].mxu0
      %v7213 = vadd.f32 %v7068, %v7212
      %v7214 = vpop.f32.mrb[0].mxu0
      %7215 = vmatprep.mubr.bf16.mxu0 0
      %7216 = vmatmul.mubr.bf16.gmra.mrb[0].mxu0 %v6842
      %v7217 = vpop.f32.mrb[0].mxu0
      %v7218 = vadd.f32 %v7073, %v7217
      %v7219 = vpop.f32.mrb[0].mxu0
      %v7220 = vpop.f32.mrb[0].mxu0
      %v7221 = vadd.f32 %v7076, %v7220
      %v7222 = vpop.f32.mrb[0].mxu0
      %7223 = vmatprep.mubr.bf16.mxu0 0
      %7224 = vmatmul.mubr.bf16.gmra.mrb[0].mxu0 %v6845
      %v7225 = vpop.f32.mrb[0].mxu0
      %v7226 = vadd.f32 %v7081, %v7225
      %v7227 = vpop.f32.mrb[0].mxu0
      %v7228 = vpop.f32.mrb[0].mxu0
      %v7229 = vadd.f32 %v7084, %v7228
      %v7230 = vpop.f32.mrb[0].mxu0
      %7231 = vmatprep.mubr.bf16.mxu0 0
      %7232 = vmatmul.mubr.bf16.gmra.mrb[0].mxu0 %v6848
      %v7233 = vpop.f32.mrb[0].mxu0
      %v7234 = vadd.f32 %v7089, %v7233
      %v7235 = vpop.f32.mrb[0].mxu0
      %v7236 = vpop.f32.mrb[0].mxu0
      %v7237 = vadd.f32 %v7092, %v7236
      %v7238 = vpop.f32.mrb[0].mxu0
      %7239 = vmatprep.mubr.bf16.mxu0 0
      %7240 = vmatmul.mubr.bf16.gmra.mrb[0].mxu0 %v6851
      %v7241 = vpop.f32.mrb[0].mxu0
      %v7242 = vadd.f32 %v7097, %v7241
      %v7243 = vpop.f32.mrb[0].mxu0
      %v7244 = vpop.f32.mrb[0].mxu0
      %v7245 = vadd.f32 %v7100, %v7244
      %v7246 = vpop.f32.mrb[0].mxu0
      %7247 = vmatprep.mubr.bf16.mxu0 0
      %7248 = vmatmul.mubr.bf16.gmra.mrb[0].mxu0 %v6854
      %v7249 = vpop.f32.mrb[0].mxu0
      %v7250 = vadd.f32 %v7105, %v7249
      %v7251 = vpop.f32.mrb[0].mxu0
      %v7252 = vpop.f32.mrb[0].mxu0
      %v7253 = vadd.f32 %v7108, %v7252
      %v7254 = vpop.f32.mrb[0].mxu0
      %7255 = vmatprep.mubr.bf16.mxu0 0
      %7256 = vmatmul.mubr.bf16.gmra.mrb[0].mxu0 %v6857
      %v7257 = vpop.f32.mrb[0].mxu0
      %v7258 = vadd.f32 %v7113, %v7257
      %v7259 = vpop.f32.mrb[0].mxu0
      %v7260 = vpop.f32.mrb[0].mxu0
      %v7261 = vadd.f32 %v7116, %v7260
      %v7262 = vpop.f32.mrb[0].mxu0
      %7263 = vmatprep.mubr.bf16.mxu0 0
      %7264 = vmatmul.mubr.bf16.gmra.mrb[0].mxu0 %v6860
      %v7265 = vpop.f32.mrb[0].mxu0
      %v7266 = vadd.f32 %v7121, %v7265
      %v7267 = vpop.f32.mrb[0].mxu0
      %v7268 = vpop.f32.mrb[0].mxu0
      %v7269 = vadd.f32 %v7124, %v7268
      %v7270 = vpop.f32.mrb[0].mxu0
      %7271 = vmatprep.mubr.bf16.mxu0 0
      %7272 = vmatmul.mubr.bf16.gmra.mrb[0].mxu0 %v6863
      %v7273 = vpop.f32.mrb[0].mxu0
      %v7274 = vadd.f32 %v7129, %v7273
      %v7275 = vpop.f32.mrb[0].mxu0
      %v7276 = vpop.f32.mrb[0].mxu0
      %v7277 = vadd.f32 %v7132, %v7276
      %v7278 = vpop.f32.mrb[0].mxu0
      %7279 = vmatprep.mubr.bf16.mxu0 0
      %7280 = vmatmul.mubr.bf16.gmra.mrb[0].mxu0 %v6866
      %v7281 = vpop.f32.mrb[0].mxu0
      %v7282 = vadd.f32 %v7137, %v7281
      %v7283 = vpop.f32.mrb[0].mxu0
      %v7284 = vpop.f32.mrb[0].mxu0
      %v7285 = vadd.f32 %v7140, %v7284
      %v7286 = vpop.f32.mrb[0].mxu0
      %7287 = vmatprep.mubr.bf16.mxu0 0
      %7288 = vmatmul.mubr.bf16.gmra.mrb[0].mxu0 %v6869
      %v7289 = vpop.f32.mrb[0].mxu0
      %v7290 = vadd.f32 %v7145, %v7289
      %v7291 = vpop.f32.mrb[0].mxu0
      %v7292 = vpop.f32.mrb[0].mxu0
      %v7293 = vadd.f32 %v7148, %v7292
      %v7294 = vpop.f32.mrb[0].mxu0
      %7295 = vmatprep.mubr.bf16.mxu0 0
      %7296 = vmatmul.mubr.bf16.gmra.mrb[0].mxu0 %v6872
      %v7297 = vpop.f32.mrb[0].mxu0
      %v7298 = vadd.f32 %v7153, %v7297
      %v7299 = vpop.f32.mrb[0].mxu0
      %v7300 = vpop.f32.mrb[0].mxu0
      %v7301 = vadd.f32 %v7156, %v7300
      %v7302 = vpop.f32.mrb[0].mxu0
      %7303 = vmatprep.mubr.bf16.mxu0 0
      %7304 = vmatmul.mubr.bf16.gmra.mrb[0].mxu0 %v6875
      %v7305 = vpop.f32.mrb[0].mxu0
      %v7306 = vadd.f32 %v7161, %v7305
      %v7307 = vpop.f32.mrb[0].mxu0
      %v7308 = vpop.f32.mrb[0].mxu0
      %v7309 = vadd.f32 %v7164, %v7308
      %v7310 = vpop.f32.mrb[0].mxu0
      %7311 = vdwg.mxu0
      %7312 = vst [vmem:[#allocation6] sm:$0xff] %v7202
      %7313 = vst [vmem:[#allocation6 + $0x8] sm:$0xff] %v7205
      %7314 = vst [vmem:[#allocation6 + $0x10] sm:$0xff] %v7210
      %7315 = vst [vmem:[#allocation6 + $0x18] sm:$0xff] %v7213
      %7316 = vst [vmem:[#allocation6 + $0x20] sm:$0xff] %v7218
      %7317 = vst [vmem:[#allocation6 + $0x28] sm:$0xff] %v7221
      %7318 = vst [vmem:[#allocation6 + $0x30] sm:$0xff] %v7226
      %7319 = vst [vmem:[#allocation6 + $0x38] sm:$0xff] %v7229
      %7320 = vst [vmem:[#allocation6 + $0x40] sm:$0xff] %v7234
      %7321 = vst [vmem:[#allocation6 + $0x48] sm:$0xff] %v7237
      %7322 = vst [vmem:[#allocation6 + $0x50] sm:$0xff] %v7242
      %7323 = vst [vmem:[#allocation6 + $0x58] sm:$0xff] %v7245
      %7324 = vst [vmem:[#allocation6 + $0x60] sm:$0xff] %v7250
      %7325 = vst [vmem:[#allocation6 + $0x68] sm:$0xff] %v7253
      %7326 = vst [vmem:[#allocation6 + $0x70] sm:$0xff] %v7258
      %7327 = vst [vmem:[#allocation6 + $0x78] sm:$0xff] %v7261
      %7328 = vst [vmem:[#allocation6 + $0x80] sm:$0xff] %v7266
      %7329 = vst [vmem:[#allocation6 + $0x88] sm:$0xff] %v7269
      %7330 = vst [vmem:[#allocation6 + $0x90] sm:$0xff] %v7274
      %7331 = vst [vmem:[#allocation6 + $0x98] sm:$0xff] %v7277
      %7332 = vst [vmem:[#allocation6 + $0xa0] sm:$0xff] %v7282
      %7333 = vst [vmem:[#allocation6 + $0xa8] sm:$0xff] %v7285
      %7334 = vst [vmem:[#allocation6 + $0xb0] sm:$0xff] %v7290
      %7335 = vst [vmem:[#allocation6 + $0xb8] sm:$0xff] %v7293
      %7336 = vst [vmem:[#allocation6 + $0xc0] sm:$0xff] %v7298
      %7337 = vst [vmem:[#allocation6 + $0xc8] sm:$0xff] %v7301
      %7338 = vst [vmem:[#allocation6 + $0xd0] sm:$0xff] %v7306
      %7339 = vst [vmem:[#allocation6 + $0xd8] sm:$0xff] %v7309
      %v7340 = vld [vmem:[#allocation6] sm:$0xff]
      %v7341 = vld [vmem:[#allocation6 + $0x8] sm:$0xff]
      %v7342 = vld [vmem:[#allocation6 + $0x10] sm:$0xff]
      %v7343 = vld [vmem:[#allocation6 + $0x18] sm:$0xff]
      %v7344 = vld [vmem:[#allocation6 + $0x20] sm:$0xff]
      %v7345 = vld [vmem:[#allocation6 + $0x28] sm:$0xff]
      %v7346 = vld [vmem:[#allocation6 + $0x30] sm:$0xff]
      %v7347 = vld [vmem:[#allocation6 + $0x38] sm:$0xff]
      %v7348 = vld [vmem:[#allocation6 + $0x40] sm:$0xff]
      %v7349 = vld [vmem:[#allocation6 + $0x48] sm:$0xff]
      %v7350 = vld [vmem:[#allocation6 + $0x50] sm:$0xff]
      %v7351 = vld [vmem:[#allocation6 + $0x58] sm:$0xff]
      %v7352 = vld [vmem:[#allocation6 + $0x60] sm:$0xff]
      %v7353 = vld [vmem:[#allocation6 + $0x68] sm:$0xff]
      %v7354 = vld [vmem:[#allocation6 + $0x70] sm:$0xff]
      %v7355 = vld [vmem:[#allocation6 + $0x78] sm:$0xff]
      %v7356 = vld [vmem:[#allocation6 + $0x80] sm:$0xff]
      %v7357 = vld [vmem:[#allocation6 + $0x88] sm:$0xff]
      %v7358 = vld [vmem:[#allocation6 + $0x90] sm:$0xff]
      %v7359 = vld [vmem:[#allocation6 + $0x98] sm:$0xff]
      %v7360 = vld [vmem:[#allocation6 + $0xa0] sm:$0xff]
      %v7361 = vld [vmem:[#allocation6 + $0xa8] sm:$0xff]
      %v7362 = vld [vmem:[#allocation6 + $0xb0] sm:$0xff]
      %v7363 = vld [vmem:[#allocation6 + $0xb8] sm:$0xff]
      %v7364 = vld [vmem:[#allocation6 + $0xc0] sm:$0xff]
      %v7365 = vld [vmem:[#allocation6 + $0xc8] sm:$0xff]
      %v7366 = vld [vmem:[#allocation6 + $0xd0] sm:$0xff]
      %v7367 = vld [vmem:[#allocation6 + $0xd8] sm:$0xff]
      %v7368 = vld [vmem:[%s4] sm:$0x1]
      %v7370 = vlaneseq
      %v7371 = vshrl.u32 %v7370, 7
      %v7372 = vsub.s32 0, %v7371
      %v7373 = vrot.slane %v7368, %v7372
      %v7375 = vadd.f32 %v7340, %v7373
      %v7376 = vadd.f32 %v7341, %v7373
      %v7377 = vadd.f32 %v7342, %v7373
      %v7378 = vadd.f32 %v7343, %v7373
      %v7379 = vadd.f32 %v7344, %v7373
      %v7380 = vadd.f32 %v7345, %v7373
      %v7381 = vadd.f32 %v7346, %v7373
      %v7382 = vadd.f32 %v7347, %v7373
      %v7383 = vadd.f32 %v7348, %v7373
      %v7384 = vadd.f32 %v7349, %v7373
      %v7385 = vadd.f32 %v7350, %v7373
      %v7386 = vadd.f32 %v7351, %v7373
      %v7387 = vadd.f32 %v7352, %v7373
      %v7388 = vadd.f32 %v7353, %v7373
      %v7389 = vadd.f32 %v7354, %v7373
      %v7390 = vadd.f32 %v7355, %v7373
      %v7391 = vadd.f32 %v7356, %v7373
      %v7392 = vadd.f32 %v7357, %v7373
      %v7393 = vadd.f32 %v7358, %v7373
      %v7394 = vadd.f32 %v7359, %v7373
      %v7395 = vadd.f32 %v7360, %v7373
      %v7396 = vadd.f32 %v7361, %v7373
      %v7397 = vadd.f32 %v7362, %v7373
      %v7398 = vadd.f32 %v7363, %v7373
      %v7399 = vadd.f32 %v7364, %v7373
      %v7400 = vadd.f32 %v7365, %v7373
      %v7401 = vadd.f32 %v7366, %v7373
      %v7402 = vadd.f32 %v7367, %v7373
      %v7403 = vmax.f32 %v7375, 0.0
      %v7404 = vmax.f32 %v7376, 0.0
      %v7405 = vmax.f32 %v7377, 0.0
      %v7406 = vmax.f32 %v7378, 0.0
      %v7407 = vmax.f32 %v7379, 0.0
      %v7408 = vmax.f32 %v7380, 0.0
      %v7409 = vmax.f32 %v7381, 0.0
      %v7410 = vmax.f32 %v7382, 0.0
      %v7411 = vmax.f32 %v7383, 0.0
      %v7412 = vmax.f32 %v7384, 0.0
      %v7413 = vmax.f32 %v7385, 0.0
      %v7414 = vmax.f32 %v7386, 0.0
      %v7415 = vmax.f32 %v7387, 0.0
      %v7416 = vmax.f32 %v7388, 0.0
      %v7417 = vmax.f32 %v7389, 0.0
      %v7418 = vmax.f32 %v7390, 0.0
      %v7419 = vmax.f32 %v7391, 0.0
      %v7420 = vmax.f32 %v7392, 0.0
      %v7421 = vmax.f32 %v7393, 0.0
      %v7422 = vmax.f32 %v7394, 0.0
      %v7423 = vmax.f32 %v7395, 0.0
      %v7424 = vmax.f32 %v7396, 0.0
      %v7425 = vmax.f32 %v7397, 0.0
      %v7426 = vmax.f32 %v7398, 0.0
      %v7427 = vmax.f32 %v7399, 0.0
      %v7428 = vmax.f32 %v7400, 0.0
      %v7429 = vmax.f32 %v7401, 0.0
      %v7430 = vmax.f32 %v7402, 0.0
      %7431 = vst [vmem:[#allocation6] sm:$0xff] %v7403
      %7432 = vst [vmem:[#allocation6 + $0x8] sm:$0xff] %v7404
      %7433 = vst [vmem:[#allocation6 + $0x10] sm:$0xff] %v7405
      %7434 = vst [vmem:[#allocation6 + $0x18] sm:$0xff] %v7406
      %7435 = vst [vmem:[#allocation6 + $0x20] sm:$0xff] %v7407
      %7436 = vst [vmem:[#allocation6 + $0x28] sm:$0xff] %v7408
      %7437 = vst [vmem:[#allocation6 + $0x30] sm:$0xff] %v7409
      %7438 = vst [vmem:[#allocation6 + $0x38] sm:$0xff] %v7410
      %7439 = vst [vmem:[#allocation6 + $0x40] sm:$0xff] %v7411
      %7440 = vst [vmem:[#allocation6 + $0x48] sm:$0xff] %v7412
      %7441 = vst [vmem:[#allocation6 + $0x50] sm:$0xff] %v7413
      %7442 = vst [vmem:[#allocation6 + $0x58] sm:$0xff] %v7414
      %7443 = vst [vmem:[#allocation6 + $0x60] sm:$0xff] %v7415
      %7444 = vst [vmem:[#allocation6 + $0x68] sm:$0xff] %v7416
      %7445 = vst [vmem:[#allocation6 + $0x70] sm:$0xff] %v7417
      %7446 = vst [vmem:[#allocation6 + $0x78] sm:$0xff] %v7418
      %7447 = vst [vmem:[#allocation6 + $0x80] sm:$0xff] %v7419
      %7448 = vst [vmem:[#allocation6 + $0x88] sm:$0xff] %v7420
      %7449 = vst [vmem:[#allocation6 + $0x90] sm:$0xff] %v7421
      %7450 = vst [vmem:[#allocation6 + $0x98] sm:$0xff] %v7422
      %7451 = vst [vmem:[#allocation6 + $0xa0] sm:$0xff] %v7423
      %7452 = vst [vmem:[#allocation6 + $0xa8] sm:$0xff] %v7424
      %7453 = vst [vmem:[#allocation6 + $0xb0] sm:$0xff] %v7425
      %7454 = vst [vmem:[#allocation6 + $0xb8] sm:$0xff] %v7426
      %7455 = vst [vmem:[#allocation6 + $0xc0] sm:$0xff] %v7427
      %7456 = vst [vmem:[#allocation6 + $0xc8] sm:$0xff] %v7428
      %7457 = vst [vmem:[#allocation6 + $0xd0] sm:$0xff] %v7429
      %7458 = vst [vmem:[#allocation6 + $0xd8] sm:$0xff] %v7430
      %v7459 = vld [vmem:[#allocation6] ss:$2 sm:$0x7f]
      %s7460 = scalar_lea.vmem [#allocation6], 1
      %v7461 = vld [vmem:[%s7460] ss:$2 sm:$0x7f]
      %v7462 = vmax.f32 %v7459, %v7461
      %s7463 = scalar_lea.vmem [#allocation6], 16
      %v7464 = vld [vmem:[%s7463] ss:$2 sm:$0x7f]
      %s7465 = scalar_lea.vmem [#allocation6], 17
      %v7466 = vld [vmem:[%s7465] ss:$2 sm:$0x7f]
      %v7467 = vmax.f32 %v7464, %v7466
      %v7468 = vmax.f32 %v7462, %v7467
      %7469 = vst [vmem:[%s224] sm:$0x7f] %v7468
      %s7470 = scalar_lea.vmem [#allocation6], 32
      %v7471 = vld [vmem:[%s7470] ss:$2 sm:$0x7f]
      %s7472 = scalar_lea.vmem [#allocation6], 33
      %v7473 = vld [vmem:[%s7472] ss:$2 sm:$0x7f]
      %v7474 = vmax.f32 %v7471, %v7473
      %s7475 = scalar_lea.vmem [#allocation6], 48
      %v7476 = vld [vmem:[%s7475] ss:$2 sm:$0x7f]
      %s7477 = scalar_lea.vmem [#allocation6], 49
      %v7478 = vld [vmem:[%s7477] ss:$2 sm:$0x7f]
      %v7479 = vmax.f32 %v7476, %v7478
      %v7480 = vmax.f32 %v7474, %v7479
      %7481 = vst [vmem:[%s224 + $0x7] sm:$0x7f] %v7480
      %s7482 = scalar_lea.vmem [#allocation6], 64
      %v7483 = vld [vmem:[%s7482] ss:$2 sm:$0x7f]
      %s7484 = scalar_lea.vmem [#allocation6], 65
      %v7485 = vld [vmem:[%s7484] ss:$2 sm:$0x7f]
      %v7486 = vmax.f32 %v7483, %v7485
      %s7487 = scalar_lea.vmem [#allocation6], 80
      %v7488 = vld [vmem:[%s7487] ss:$2 sm:$0x7f]
      %s7489 = scalar_lea.vmem [#allocation6], 81
      %v7490 = vld [vmem:[%s7489] ss:$2 sm:$0x7f]
      %v7491 = vmax.f32 %v7488, %v7490
      %v7492 = vmax.f32 %v7486, %v7491
      %7493 = vst [vmem:[%s224 + $0xe] sm:$0x7f] %v7492
      %s7494 = scalar_lea.vmem [#allocation6], 96
      %v7495 = vld [vmem:[%s7494] ss:$2 sm:$0x7f]
      %s7496 = scalar_lea.vmem [#allocation6], 97
      %v7497 = vld [vmem:[%s7496] ss:$2 sm:$0x7f]
      %v7498 = vmax.f32 %v7495, %v7497
      %s7499 = scalar_lea.vmem [#allocation6], 112
      %v7500 = vld [vmem:[%s7499] ss:$2 sm:$0x7f]
      %s7501 = scalar_lea.vmem [#allocation6], 113
      %v7502 = vld [vmem:[%s7501] ss:$2 sm:$0x7f]
      %v7503 = vmax.f32 %v7500, %v7502
      %v7504 = vmax.f32 %v7498, %v7503
      %7505 = vst [vmem:[%s224 + $0x15] sm:$0x7f] %v7504
      %s7506 = scalar_lea.vmem [#allocation6], 128
      %v7507 = vld [vmem:[%s7506] ss:$2 sm:$0x7f]
      %s7508 = scalar_lea.vmem [#allocation6], 129
      %v7509 = vld [vmem:[%s7508] ss:$2 sm:$0x7f]
      %v7510 = vmax.f32 %v7507, %v7509
      %s7511 = scalar_lea.vmem [#allocation6], 144
      %v7512 = vld [vmem:[%s7511] ss:$2 sm:$0x7f]
      %s7513 = scalar_lea.vmem [#allocation6], 145
      %v7514 = vld [vmem:[%s7513] ss:$2 sm:$0x7f]
      %v7515 = vmax.f32 %v7512, %v7514
      %v7516 = vmax.f32 %v7510, %v7515
      %7517 = vst [vmem:[%s224 + $0x1c] sm:$0x7f] %v7516
      %s7518 = scalar_lea.vmem [#allocation6], 160
      %v7519 = vld [vmem:[%s7518] ss:$2 sm:$0x7f]
      %s7520 = scalar_lea.vmem [#allocation6], 161
      %v7521 = vld [vmem:[%s7520] ss:$2 sm:$0x7f]
      %v7522 = vmax.f32 %v7519, %v7521
      %s7523 = scalar_lea.vmem [#allocation6], 176
      %v7524 = vld [vmem:[%s7523] ss:$2 sm:$0x7f]
      %s7525 = scalar_lea.vmem [#allocation6], 177
      %v7526 = vld [vmem:[%s7525] ss:$2 sm:$0x7f]
      %v7527 = vmax.f32 %v7524, %v7526
      %v7528 = vmax.f32 %v7522, %v7527
      %7529 = vst [vmem:[%s224 + $0x23] sm:$0x7f] %v7528
      %s7530 = scalar_lea.vmem [#allocation6], 192
      %v7531 = vld [vmem:[%s7530] ss:$2 sm:$0x7f]
      %s7532 = scalar_lea.vmem [#allocation6], 193
      %v7533 = vld [vmem:[%s7532] ss:$2 sm:$0x7f]
      %v7534 = vmax.f32 %v7531, %v7533
      %s7535 = scalar_lea.vmem [#allocation6], 208
      %v7536 = vld [vmem:[%s7535] ss:$2 sm:$0x7f]
      %s7537 = scalar_lea.vmem [#allocation6], 209
      %v7538 = vld [vmem:[%s7537] ss:$2 sm:$0x7f]
      %v7539 = vmax.f32 %v7536, %v7538
      %v7540 = vmax.f32 %v7534, %v7539
      %7541 = vst [vmem:[%s224 + $0x2a] sm:$0x7f] %v7540
      %p7542 = scmp.lt.s32.totalorder %s16, 1
      %s7543 = scalar_select %p7542, %s16, 1
      %s7544 = smul.addr %s7543, 7
      %s7545 = smul.addr %s7544, 8
      %s7546 = scalar_lea.vmem %s5, %s7545
      // Predicated region
      $region41: #{blood_mnist_forward.2} parent=39 // pred_check
        %p7547 = pneg %p144
      $region42: #{blood_mnist_forward.2} parent=39 // pred_check_branch
        %7549 = sbr.rel (%p7547) target = $region44
      $region43: #{blood_mnist_forward.2} parent=39 // pred_region
        _
      $region44: #{blood_mnist_forward.2} parent=39 // pred_fallthru
        _
    $region40: #{blood_mnist_forward.2} parent=5 // pred_fallthru
      _
    %p7550 = scmp.le.s32.totalorder 2, %s11
    // Predicated region
    $region45: #{blood_mnist_forward.2} parent=5 // pred_check
      %p7551 = pneg %p7550
    $region46: #{blood_mnist_forward.2} parent=5 // pred_check_branch
      %7553 = sbr.rel (%p7551) target = $region48
    $region47: #{blood_mnist_forward.2} parent=5 // pred_region
      %s7554 = ssub.s32 %s11, 2
      // Predicated region
      $region49: #{blood_mnist_forward.2} parent=47 // pred_check
        %p7555 = pneg %p150
      $region50: #{blood_mnist_forward.2} parent=47 // pred_check_branch
        %7557 = sbr.rel (%p7555) target = $region52
      $region51: #{blood_mnist_forward.2} parent=47 // pred_region
        %p7558 = scmp.lt.s32.totalorder %s17, 1
        %s7559 = scalar_select %p7558, %s17, 1
        %s7560 = smul.addr %s7559, 7
        %s7561 = smul.addr %s7560, 8
        %s7562 = scalar_lea.vmem %s5, %s7561
      $region52: #{blood_mnist_forward.2} parent=47 // pred_fallthru
        _
    $region48: #{blood_mnist_forward.2} parent=5 // pred_fallthru
      _
  $region6: #{blood_mnist_forward.2} parent=0 // loop_footer
    %s15 = sadd.s32 1, %s11
  $region7: #{blood_mnist_forward.2} parent=0 // loop_footer_branch
    %10 = sbr.rel target = $region3
  $region8: #{blood_mnist_forward.2} parent=0 // loop_exit
    _

</llo_original>
